<compile_context>
chip_gen: v6e
topology: v6e:2x2x1
jax: 0.10.0
libtpu: 0.0.40
codegen_flags: <defaults>
</compile_context>

<pallas_src>
import functools

import jax
import jax.numpy as jnp
from jax import lax
from jax.experimental import pallas as pl
from jax.experimental.pallas import tpu as pltpu

EPS = 1e-5


def _round_up(x, m):
    return ((x + m - 1) // m) * m


def _pick_row_tile(H, W, C, budget_bytes=128 * 1024):
    """Largest row tile (dividing H) whose f32 accumulator stays <= ~32 vregs."""
    th = H
    while th * W * C * 4 > budget_bytes and th % 2 == 0:
        th //= 2
    return th


def _resnet_block_kernel(x_ref, w1_ref, w2_ref, o_ref, pad_ref, y_ref,
                         *, H, W, C, TH):
    """Fused reflect-pad -> conv3x3 -> IN -> ReLU -> reflect-pad -> conv3x3 -> IN -> +x.

    x_ref  : (1, H, W, C)      f32   one batch image (NHWC)
    w1_ref : (9, C, C)         bf16  conv1 per-tap weights (tap = kh*3+kw, Cin x Cout)
    w2_ref : (9, C, C)         bf16  conv2 per-tap weights
    o_ref  : (1, H, W, C)      f32   output
    pad_ref: (H+2, Wp, C)      bf16  reflect-pad scratch (reused for both stages)
    y_ref  : (H, W, C)         f32   raw conv output scratch (reused for both stages)
    """
    NT = H // TH
    inv_n = 1.0 / float(H * W)

    x_img = x_ref.at[0]          # (H, W, C) f32 view
    o_img = o_ref.at[0]          # (H, W, C) f32 view

    def _hint(r0):
        # r0 = t*TH is a multiple of TH by construction; hint it for alignment.
        if TH > 1 and (TH & (TH - 1)) == 0:
            return pl.multiple_of(r0, TH)
        return r0

    def write_pad_interior(make_tile_bf16):
        """Fill pad_ref (bf16) tile-by-tile from make_tile_bf16(r0) -> (TH, W, C).

        Left/right halo columns come from the tile value (no RAW on pad_ref);
        top/bottom halo rows are copied afterwards so they carry the corners.
        """
        def body(t, carry):
            r0 = _hint(t * TH)
            tile = make_tile_bf16(r0)
            pad_ref[pl.ds(1 + r0, TH), 1:W + 1, :] = tile
            pad_ref[pl.ds(1 + r0, TH), 0:1, :] = tile[:, 1:2, :]
            pad_ref[pl.ds(1 + r0, TH), W + 1:W + 2, :] = tile[:, W - 2:W - 1, :]
            return carry

        lax.fori_loop(0, NT, body, 0)
        # top / bottom reflected rows (already include reflected corners)
        pad_ref[0:1, :, :] = pad_ref[2:3, :, :]
        pad_ref[H + 1:H + 2, :, :] = pad_ref[H - 1:H, :, :]

    def conv3x3(w_ref):
        """3x3 valid conv over pad_ref as 9 accumulating per-tap MXU matmuls per
        row tile (no im2col buffer).  Raw output -> y_ref (f32); per-channel
        sum / sum-of-squares accumulated for instance norm.
        Returns (mean, rstd), each (1, 1, C) f32."""
        def body(t, carry):
            s, ss = carry
            r0 = _hint(t * TH)
            acc = jnp.zeros((TH * W, C), jnp.float32)
            for dh in range(3):
                for dw in range(3):
                    win = pad_ref[pl.ds(r0 + dh, TH), dw:dw + W, :]   # (TH, W, C) bf16
                    acc = acc + jnp.dot(win.reshape(TH * W, C),
                                        w_ref[dh * 3 + dw],
                                        preferred_element_type=jnp.float32)
            y_ref[pl.ds(r0, TH), :, :] = acc.reshape(TH, W, C)
            s = s + jnp.sum(acc, axis=0, keepdims=True)
            ss = ss + jnp.sum(acc * acc, axis=0, keepdims=True)
            return s, ss

        zero = jnp.zeros((1, C), jnp.float32)
        s, ss = lax.fori_loop(0, NT, body, (zero, zero))
        mean = s * inv_n
        var = jnp.maximum(ss * inv_n - mean * mean, 0.0)   # clamp single-pass var
        rstd = lax.rsqrt(var + EPS)
        return mean.reshape(1, 1, C), rstd.reshape(1, 1, C)

    # ---- stage 1: reflect-pad(x) -> conv1 -> IN -> ReLU (written into pad_ref) ----
    write_pad_interior(lambda r0: x_img[pl.ds(r0, TH), :, :].astype(jnp.bfloat16))
    mean1, rstd1 = conv3x3(w1_ref)

    def relu_norm_tile(r0):
        y = y_ref[pl.ds(r0, TH), :, :]
        return jnp.maximum((y - mean1) * rstd1, 0.0).astype(jnp.bfloat16)

    write_pad_interior(relu_norm_tile)

    # ---- stage 2: conv2 -> IN -> residual add, fused into the o_ref store ----
    mean2, rstd2 = conv3x3(w2_ref)

    def epilogue(t, carry):
        r0 = _hint(t * TH)
        y = y_ref[pl.ds(r0, TH), :, :]
        o_img[pl.ds(r0, TH), :, :] = (
            x_img[pl.ds(r0, TH), :, :] + (y - mean2) * rstd2)
        return carry

    lax.fori_loop(0, NT, epilogue, 0)


def conv_weight_to_taps(w):
    """PyTorch Conv2d weight (Cout, Cin, 3, 3) -> (9, Cin, Cout) bf16, tap = kh*3+kw."""
    cout, cin, kh, kw = w.shape
    return jnp.transpose(w, (2, 3, 1, 0)).reshape(kh * kw, cin, cout).astype(jnp.bfloat16)


def resnet_block_nhwc(x_nhwc, w1_tap, w2_tap):
    """One fused ResnetBlock on NHWC f32 activations. w*_tap: (9, C, C) bf16."""
    B, H, W, C = x_nhwc.shape
    TH = _pick_row_tile(H, W, C)
    Wp = _round_up(W + 2, 8)

    kernel = functools.partial(_resnet_block_kernel, H=H, W=W, C=C, TH=TH)

    # VMEM budget from the actual footprint (v7x-safe cap of 56 MiB).
    pad_bytes = (H + 2) * Wp * C * 2
    y_bytes = H * W * C * 4
    io_bytes = 2 * (2 * H * W * C * 4)          # x + out blocks, double-buffered
    w_bytes = 2 * (2 * 9 * C * C * 2)           # both weights, double-buffered
    need = pad_bytes + y_bytes + io_bytes + w_bytes
    vmem_limit = int(min(max(need * 1.5 + (4 << 20), 32 << 20), 56 << 20))

    return pl.pallas_call(
        kernel,
        out_shape=jax.ShapeDtypeStruct((B, H, W, C), jnp.float32),
        grid=(B,),
        in_specs=[
            pl.BlockSpec((1, H, W, C), lambda b: (b, 0, 0, 0)),
            pl.BlockSpec((9, C, C), lambda b: (0, 0, 0)),
            pl.BlockSpec((9, C, C), lambda b: (0, 0, 0)),
        ],
        out_specs=pl.BlockSpec((1, H, W, C), lambda b: (b, 0, 0, 0)),
        scratch_shapes=[
            pltpu.VMEM((H + 2, Wp, C), jnp.bfloat16),   # reflect-pad buffer (both stages)
            pltpu.VMEM((H, W, C), jnp.float32),         # raw conv output (both stages)
        ],
        compiler_params=pltpu.CompilerParams(
            dimension_semantics=("parallel",),          # batch split across TCs (v7x)
            vmem_limit_bytes=vmem_limit,
        ),
    )(x_nhwc, w1_tap, w2_tap)


def resnet_blocks_forward(x_nchw, block_weights):
    """Apply a stack of ResnetBlocks.  NCHW<->NHWC transposes happen ONCE at the
    boundary (hoisted out of the per-block wrapper); activations stay NHWC."""
    x = jnp.transpose(x_nchw, (0, 2, 3, 1)).astype(jnp.float32)
    for w1, w2 in block_weights:
        x = resnet_block_nhwc(x, conv_weight_to_taps(w1), conv_weight_to_taps(w2))
    return jnp.transpose(x, (0, 3, 1, 2))


def _reference(x_nchw, block_weights):
    """Pure-JAX f32 reference of the same ResnetBlock stack."""
    x = jnp.transpose(x_nchw, (0, 2, 3, 1))

    def conv_in(inp, w):
        p = jnp.pad(inp, ((0, 0), (1, 1), (1, 1), (0, 0)), mode="reflect")
        wk = jnp.transpose(w, (2, 3, 1, 0))                # HWIO
        y = lax.conv_general_dilated(
            p, wk, (1, 1), "VALID",
            dimension_numbers=("NHWC", "HWIO", "NHWC"),
            precision=lax.Precision.HIGHEST)
        mean = jnp.mean(y, axis=(1, 2), keepdims=True)
        var = jnp.mean((y - mean) ** 2, axis=(1, 2), keepdims=True)
        return (y - mean) * lax.rsqrt(var + EPS)

    for w1, w2 in block_weights:
        y1 = jnp.maximum(conv_in(x, w1), 0.0)
        x = x + conv_in(y1, w2)
    return jnp.transpose(x, (0, 3, 1, 2))


if __name__ == "__main__":
    B, C, H, W = 2, 4, 16, 16       # dim=4, small spatial
    n_blocks = 2                    # chain two blocks to exercise the hoisted-transpose path

    key = jax.random.PRNGKey(0)
    keys = jax.random.split(key, 1 + 2 * n_blocks)
    x = jax.random.normal(keys[0], (B, C, H, W), dtype=jnp.float32)
    block_weights = []
    for i in range(n_blocks):
        w1 = 0.1 * jax.random.normal(keys[1 + 2 * i], (C, C, 3, 3), dtype=jnp.float32)
        w2 = 0.1 * jax.random.normal(keys[2 + 2 * i], (C, C, 3, 3), dtype=jnp.float32)
        block_weights.append((w1, w2))

    out = jax.block_until_ready(resnet_blocks_forward(x, block_weights))
    assert out.shape == (B, C, H, W), out.shape
    assert bool(jnp.all(jnp.isfinite(out)))

    # loose tolerance: kernel uses bf16 MXU operands (f32 accumulate / epilogue)
    ref = jax.block_until_ready(_reference(x, block_weights))
    max_err = float(jnp.max(jnp.abs(out - ref)))
    assert max_err < 2e-1, f"max abs error vs reference: {max_err}"

    print("KERNEL_OK")
</pallas_src>

<mosaic_0001>
module attributes {stable_mosaic.version = 11 : i64} {
  func.func @_resnet_block_kernel(%arg0: i32, %arg1: memref<1x16x16x4xf32, #tpu.memory_space<vmem>>, %arg2: memref<9x4x4xbf16, #tpu.memory_space<vmem>>, %arg3: memref<9x4x4xbf16, #tpu.memory_space<vmem>>, %arg4: memref<1x16x16x4xf32, #tpu.memory_space<vmem>>, %arg5: memref<18x24x4xbf16, #tpu.memory_space<vmem>>, %arg6: memref<16x16x4xf32, #tpu.memory_space<vmem>>) attributes {dimension_semantics = [#tpu.dimension_semantics<parallel>], iteration_bounds = array<i64: 2>, scalar_prefetch = 0 : i64, scratch_operands = 2 : i64, tpu.core_type = #tpu.core_type<tc>, window_params = [{transform_indices = @transform_0, window_bounds = array<i64: 1, 16, 16, 4>}, {pipeline_mode = #tpu.pipeline_mode<synchronous>, transform_indices = @transform_1, window_bounds = array<i64: 9, 4, 4>}, {pipeline_mode = #tpu.pipeline_mode<synchronous>, transform_indices = @transform_2, window_bounds = array<i64: 9, 4, 4>}, {transform_indices = @transform_3, window_bounds = array<i64: 1, 16, 16, 4>}]} {
    %c0_i32 = arith.constant 0 : i32
    %c0_i32_0 = arith.constant 0 : i32
    %c16_i32 = arith.constant 16 : i32
    %0 = arith.muli %c0_i32_0, %c16_i32 : i32
    %1 = tpu.assume_multiple %0, 16 : i32
    %c0_i32_1 = arith.constant 0 : i32
    %c0_i32_2 = arith.constant 0 : i32
    %c0_i32_3 = arith.constant 0 : i32
    %2 = tpu.memref_slice %arg1[%c0_i32, %c0_i32_1, %c0_i32_2, %c0_i32_3] : memref<1x16x16x4xf32, #tpu.memory_space<vmem>> -> memref<1x16x16x4xf32, #tpu.memory_space<vmem>>
    %3 = tpu.memref_squeeze %2 : memref<1x16x16x4xf32, #tpu.memory_space<vmem>> -> memref<16x16x4xf32, #tpu.memory_space<vmem>>
    %4 = arith.index_cast %1 : i32 to index
    %c0 = arith.constant 0 : index
    %c0_4 = arith.constant 0 : index
    %5 = vector.load %3[%4, %c0, %c0_4] : memref<16x16x4xf32, #tpu.memory_space<vmem>>, vector<16x16x4xf32>
    %6 = arith.truncf %5 : vector<16x16x4xf32> to vector<16x16x4xbf16>
    %c1_i32 = arith.constant 1 : i32
    %7 = arith.addi %c1_i32, %1 : i32
    %8 = arith.index_cast %7 : i32 to index
    %c1 = arith.constant 1 : index
    %c0_5 = arith.constant 0 : index
    %9 = vector.load %arg5[%8, %c1, %c0_5] : memref<18x24x4xbf16, #tpu.memory_space<vmem>>, vector<16x16x4xbf16>
    tpu.vector_store %arg5[%8, %c1, %c0_5], %6 {strides = array<i32>} : memref<18x24x4xbf16, #tpu.memory_space<vmem>>, vector<16x16x4xbf16>,
    %10 = vector.extract_strided_slice %6 {offsets = [0, 1, 0], sizes = [16, 1, 4], strides = [1, 1, 1]} : vector<16x16x4xbf16> to vector<16x1x4xbf16>
    %c1_i32_6 = arith.constant 1 : i32
    %11 = arith.addi %c1_i32_6, %1 : i32
    %12 = arith.index_cast %11 : i32 to index
    %c0_7 = arith.constant 0 : index
    %c0_8 = arith.constant 0 : index
    %13 = vector.load %arg5[%12, %c0_7, %c0_8] : memref<18x24x4xbf16, #tpu.memory_space<vmem>>, vector<16x1x4xbf16>
    tpu.vector_store %arg5[%12, %c0_7, %c0_8], %10 {strides = array<i32>} : memref<18x24x4xbf16, #tpu.memory_space<vmem>>, vector<16x1x4xbf16>,
    %14 = vector.extract_strided_slice %6 {offsets = [0, 14, 0], sizes = [16, 1, 4], strides = [1, 1, 1]} : vector<16x16x4xbf16> to vector<16x1x4xbf16>
    %c1_i32_9 = arith.constant 1 : i32
    %15 = arith.addi %c1_i32_9, %1 : i32
    %16 = arith.index_cast %15 : i32 to index
    %c17 = arith.constant 17 : index
    %c0_10 = arith.constant 0 : index
    %17 = vector.load %arg5[%16, %c17, %c0_10] : memref<18x24x4xbf16, #tpu.memory_space<vmem>>, vector<16x1x4xbf16>
    tpu.vector_store %arg5[%16, %c17, %c0_10], %14 {strides = array<i32>} : memref<18x24x4xbf16, #tpu.memory_space<vmem>>, vector<16x1x4xbf16>,
    %c1_i32_11 = arith.constant 1 : i32
    %c2 = arith.constant 2 : index
    %c0_12 = arith.constant 0 : index
    %c0_13 = arith.constant 0 : index
    %18 = vector.load %arg5[%c2, %c0_12, %c0_13] : memref<18x24x4xbf16, #tpu.memory_space<vmem>>, vector<1x24x4xbf16>
    %c0_14 = arith.constant 0 : index
    %c0_15 = arith.constant 0 : index
    %c0_16 = arith.constant 0 : index
    %19 = vector.load %arg5[%c0_14, %c0_15, %c0_16] : memref<18x24x4xbf16, #tpu.memory_space<vmem>>, vector<1x24x4xbf16>
    tpu.vector_store %arg5[%c0_14, %c0_15, %c0_16], %18 {strides = array<i32>} : memref<18x24x4xbf16, #tpu.memory_space<vmem>>, vector<1x24x4xbf16>,
    %c15 = arith.constant 15 : index
    %c0_17 = arith.constant 0 : index
    %c0_18 = arith.constant 0 : index
    %20 = vector.load %arg5[%c15, %c0_17, %c0_18] : memref<18x24x4xbf16, #tpu.memory_space<vmem>>, vector<1x24x4xbf16>
    %c17_19 = arith.constant 17 : index
    %c0_20 = arith.constant 0 : index
    %c0_21 = arith.constant 0 : index
    %21 = vector.load %arg5[%c17_19, %c0_20, %c0_21] : memref<18x24x4xbf16, #tpu.memory_space<vmem>>, vector<1x24x4xbf16>
    tpu.vector_store %arg5[%c17_19, %c0_20, %c0_21], %20 {strides = array<i32>} : memref<18x24x4xbf16, #tpu.memory_space<vmem>>, vector<1x24x4xbf16>,
    %cst = arith.constant 0.000000e+00 : f32
    %22 = vector.broadcast %cst : f32 to vector<1x4xf32>
    %c0_i32_22 = arith.constant 0 : i32
    %c16_i32_23 = arith.constant 16 : i32
    %23 = arith.muli %c0_i32_22, %c16_i32_23 : i32
    %24 = tpu.assume_multiple %23, 16 : i32
    %cst_24 = arith.constant 0.000000e+00 : f32
    %25 = vector.broadcast %cst_24 : f32 to vector<256x4xf32>
    %c0_i32_25 = arith.constant 0 : i32
    %26 = arith.addi %24, %c0_i32_25 : i32
    %27 = arith.index_cast %26 : i32 to index
    %c0_26 = arith.constant 0 : index
    %c0_27 = arith.constant 0 : index
    %28 = vector.load %arg5[%27, %c0_26, %c0_27] : memref<18x24x4xbf16, #tpu.memory_space<vmem>>, vector<16x16x4xbf16>
    %29 = vector.shape_cast %28 : vector<16x16x4xbf16> to vector<256x4xbf16>
    %c0_28 = arith.constant 0 : index
    %c0_29 = arith.constant 0 : index
    %c0_30 = arith.constant 0 : index
    %30 = vector.load %arg2[%c0_28, %c0_29, %c0_30] : memref<9x4x4xbf16, #tpu.memory_space<vmem>>, vector<1x4x4xbf16>
    %31 = vector.shape_cast %30 : vector<1x4x4xbf16> to vector<4x4xbf16>
    %cst_31 = arith.constant dense<0.000000e+00> : vector<256x4xf32>
    %32 = tpu.matmul %29, %31, %cst_31 {dimension_numbers = #tpu.dot_dimension_numbers<[1], [0], [0], [1], [0, 0, 1, 1], [], []>} : vector<256x4xbf16>, vector<4x4xbf16>, vector<256x4xf32> -> vector<256x4xf32>
    %33 = arith.addf %25, %32 : vector<256x4xf32>
    %c0_i32_32 = arith.constant 0 : i32
    %34 = arith.addi %24, %c0_i32_32 : i32
    %35 = arith.index_cast %34 : i32 to index
    %c1_33 = arith.constant 1 : index
    %c0_34 = arith.constant 0 : index
    %36 = vector.load %arg5[%35, %c1_33, %c0_34] : memref<18x24x4xbf16, #tpu.memory_space<vmem>>, vector<16x16x4xbf16>
    %37 = vector.shape_cast %36 : vector<16x16x4xbf16> to vector<256x4xbf16>
    %c1_35 = arith.constant 1 : index
    %c0_36 = arith.constant 0 : index
    %c0_37 = arith.constant 0 : index
    %38 = vector.load %arg2[%c1_35, %c0_36, %c0_37] : memref<9x4x4xbf16, #tpu.memory_space<vmem>>, vector<1x4x4xbf16>
    %39 = vector.shape_cast %38 : vector<1x4x4xbf16> to vector<4x4xbf16>
    %cst_38 = arith.constant dense<0.000000e+00> : vector<256x4xf32>
    %40 = tpu.matmul %37, %39, %cst_38 {dimension_numbers = #tpu.dot_dimension_numbers<[1], [0], [0], [1], [0, 0, 1, 1], [], []>} : vector<256x4xbf16>, vector<4x4xbf16>, vector<256x4xf32> -> vector<256x4xf32>
    %41 = arith.addf %33, %40 : vector<256x4xf32>
    %c0_i32_39 = arith.constant 0 : i32
    %42 = arith.addi %24, %c0_i32_39 : i32
    %43 = arith.index_cast %42 : i32 to index
    %c2_40 = arith.constant 2 : index
    %c0_41 = arith.constant 0 : index
    %44 = vector.load %arg5[%43, %c2_40, %c0_41] : memref<18x24x4xbf16, #tpu.memory_space<vmem>>, vector<16x16x4xbf16>
    %45 = vector.shape_cast %44 : vector<16x16x4xbf16> to vector<256x4xbf16>
    %c2_42 = arith.constant 2 : index
    %c0_43 = arith.constant 0 : index
    %c0_44 = arith.constant 0 : index
    %46 = vector.load %arg2[%c2_42, %c0_43, %c0_44] : memref<9x4x4xbf16, #tpu.memory_space<vmem>>, vector<1x4x4xbf16>
    %47 = vector.shape_cast %46 : vector<1x4x4xbf16> to vector<4x4xbf16>
    %cst_45 = arith.constant dense<0.000000e+00> : vector<256x4xf32>
    %48 = tpu.matmul %45, %47, %cst_45 {dimension_numbers = #tpu.dot_dimension_numbers<[1], [0], [0], [1], [0, 0, 1, 1], [], []>} : vector<256x4xbf16>, vector<4x4xbf16>, vector<256x4xf32> -> vector<256x4xf32>
    %49 = arith.addf %41, %48 : vector<256x4xf32>
    %c1_i32_46 = arith.constant 1 : i32
    %50 = arith.addi %24, %c1_i32_46 : i32
    %51 = arith.index_cast %50 : i32 to index
    %c0_47 = arith.constant 0 : index
    %c0_48 = arith.constant 0 : index
    %52 = vector.load %arg5[%51, %c0_47, %c0_48] : memref<18x24x4xbf16, #tpu.memory_space<vmem>>, vector<16x16x4xbf16>
    %53 = vector.shape_cast %52 : vector<16x16x4xbf16> to vector<256x4xbf16>
    %c3 = arith.constant 3 : index
    %c0_49 = arith.constant 0 : index
    %c0_50 = arith.constant 0 : index
    %54 = vector.load %arg2[%c3, %c0_49, %c0_50] : memref<9x4x4xbf16, #tpu.memory_space<vmem>>, vector<1x4x4xbf16>
    %55 = vector.shape_cast %54 : vector<1x4x4xbf16> to vector<4x4xbf16>
    %cst_51 = arith.constant dense<0.000000e+00> : vector<256x4xf32>
    %56 = tpu.matmul %53, %55, %cst_51 {dimension_numbers = #tpu.dot_dimension_numbers<[1], [0], [0], [1], [0, 0, 1, 1], [], []>} : vector<256x4xbf16>, vector<4x4xbf16>, vector<256x4xf32> -> vector<256x4xf32>
    %57 = arith.addf %49, %56 : vector<256x4xf32>
    %c1_i32_52 = arith.constant 1 : i32
    %58 = arith.addi %24, %c1_i32_52 : i32
    %59 = arith.index_cast %58 : i32 to index
    %c1_53 = arith.constant 1 : index
    %c0_54 = arith.constant 0 : index
    %60 = vector.load %arg5[%59, %c1_53, %c0_54] : memref<18x24x4xbf16, #tpu.memory_space<vmem>>, vector<16x16x4xbf16>
    %61 = vector.shape_cast %60 : vector<16x16x4xbf16> to vector<256x4xbf16>
    %c4 = arith.constant 4 : index
    %c0_55 = arith.constant 0 : index
    %c0_56 = arith.constant 0 : index
    %62 = vector.load %arg2[%c4, %c0_55, %c0_56] : memref<9x4x4xbf16, #tpu.memory_space<vmem>>, vector<1x4x4xbf16>
    %63 = vector.shape_cast %62 : vector<1x4x4xbf16> to vector<4x4xbf16>
    %cst_57 = arith.constant dense<0.000000e+00> : vector<256x4xf32>
    %64 = tpu.matmul %61, %63, %cst_57 {dimension_numbers = #tpu.dot_dimension_numbers<[1], [0], [0], [1], [0, 0, 1, 1], [], []>} : vector<256x4xbf16>, vector<4x4xbf16>, vector<256x4xf32> -> vector<256x4xf32>
    %65 = arith.addf %57, %64 : vector<256x4xf32>
    %c1_i32_58 = arith.constant 1 : i32
    %66 = arith.addi %24, %c1_i32_58 : i32
    %67 = arith.index_cast %66 : i32 to index
    %c2_59 = arith.constant 2 : index
    %c0_60 = arith.constant 0 : index
    %68 = vector.load %arg5[%67, %c2_59, %c0_60] : memref<18x24x4xbf16, #tpu.memory_space<vmem>>, vector<16x16x4xbf16>
    %69 = vector.shape_cast %68 : vector<16x16x4xbf16> to vector<256x4xbf16>
    %c5 = arith.constant 5 : index
    %c0_61 = arith.constant 0 : index
    %c0_62 = arith.constant 0 : index
    %70 = vector.load %arg2[%c5, %c0_61, %c0_62] : memref<9x4x4xbf16, #tpu.memory_space<vmem>>, vector<1x4x4xbf16>
    %71 = vector.shape_cast %70 : vector<1x4x4xbf16> to vector<4x4xbf16>
    %cst_63 = arith.constant dense<0.000000e+00> : vector<256x4xf32>
    %72 = tpu.matmul %69, %71, %cst_63 {dimension_numbers = #tpu.dot_dimension_numbers<[1], [0], [0], [1], [0, 0, 1, 1], [], []>} : vector<256x4xbf16>, vector<4x4xbf16>, vector<256x4xf32> -> vector<256x4xf32>
    %73 = arith.addf %65, %72 : vector<256x4xf32>
    %c2_i32 = arith.constant 2 : i32
    %74 = arith.addi %24, %c2_i32 : i32
    %75 = arith.index_cast %74 : i32 to index
    %c0_64 = arith.constant 0 : index
    %c0_65 = arith.constant 0 : index
    %76 = vector.load %arg5[%75, %c0_64, %c0_65] : memref<18x24x4xbf16, #tpu.memory_space<vmem>>, vector<16x16x4xbf16>
    %77 = vector.shape_cast %76 : vector<16x16x4xbf16> to vector<256x4xbf16>
    %c6 = arith.constant 6 : index
    %c0_66 = arith.constant 0 : index
    %c0_67 = arith.constant 0 : index
    %78 = vector.load %arg2[%c6, %c0_66, %c0_67] : memref<9x4x4xbf16, #tpu.memory_space<vmem>>, vector<1x4x4xbf16>
    %79 = vector.shape_cast %78 : vector<1x4x4xbf16> to vector<4x4xbf16>
    %cst_68 = arith.constant dense<0.000000e+00> : vector<256x4xf32>
    %80 = tpu.matmul %77, %79, %cst_68 {dimension_numbers = #tpu.dot_dimension_numbers<[1], [0], [0], [1], [0, 0, 1, 1], [], []>} : vector<256x4xbf16>, vector<4x4xbf16>, vector<256x4xf32> -> vector<256x4xf32>
    %81 = arith.addf %73, %80 : vector<256x4xf32>
    %c2_i32_69 = arith.constant 2 : i32
    %82 = arith.addi %24, %c2_i32_69 : i32
    %83 = arith.index_cast %82 : i32 to index
    %c1_70 = arith.constant 1 : index
    %c0_71 = arith.constant 0 : index
    %84 = vector.load %arg5[%83, %c1_70, %c0_71] : memref<18x24x4xbf16, #tpu.memory_space<vmem>>, vector<16x16x4xbf16>
    %85 = vector.shape_cast %84 : vector<16x16x4xbf16> to vector<256x4xbf16>
    %c7 = arith.constant 7 : index
    %c0_72 = arith.constant 0 : index
    %c0_73 = arith.constant 0 : index
    %86 = vector.load %arg2[%c7, %c0_72, %c0_73] : memref<9x4x4xbf16, #tpu.memory_space<vmem>>, vector<1x4x4xbf16>
    %87 = vector.shape_cast %86 : vector<1x4x4xbf16> to vector<4x4xbf16>
    %cst_74 = arith.constant dense<0.000000e+00> : vector<256x4xf32>
    %88 = tpu.matmul %85, %87, %cst_74 {dimension_numbers = #tpu.dot_dimension_numbers<[1], [0], [0], [1], [0, 0, 1, 1], [], []>} : vector<256x4xbf16>, vector<4x4xbf16>, vector<256x4xf32> -> vector<256x4xf32>
    %89 = arith.addf %81, %88 : vector<256x4xf32>
    %c2_i32_75 = arith.constant 2 : i32
    %90 = arith.addi %24, %c2_i32_75 : i32
    %91 = arith.index_cast %90 : i32 to index
    %c2_76 = arith.constant 2 : index
    %c0_77 = arith.constant 0 : index
    %92 = vector.load %arg5[%91, %c2_76, %c0_77] : memref<18x24x4xbf16, #tpu.memory_space<vmem>>, vector<16x16x4xbf16>
    %93 = vector.shape_cast %92 : vector<16x16x4xbf16> to vector<256x4xbf16>
    %c8 = arith.constant 8 : index
    %c0_78 = arith.constant 0 : index
    %c0_79 = arith.constant 0 : index
    %94 = vector.load %arg2[%c8, %c0_78, %c0_79] : memref<9x4x4xbf16, #tpu.memory_space<vmem>>, vector<1x4x4xbf16>
    %95 = vector.shape_cast %94 : vector<1x4x4xbf16> to vector<4x4xbf16>
    %cst_80 = arith.constant dense<0.000000e+00> : vector<256x4xf32>
    %96 = tpu.matmul %93, %95, %cst_80 {dimension_numbers = #tpu.dot_dimension_numbers<[1], [0], [0], [1], [0, 0, 1, 1], [], []>} : vector<256x4xbf16>, vector<4x4xbf16>, vector<256x4xf32> -> vector<256x4xf32>
    %97 = arith.addf %89, %96 : vector<256x4xf32>
    %98 = vector.shape_cast %97 : vector<256x4xf32> to vector<16x16x4xf32>
    %99 = arith.index_cast %24 : i32 to index
    %c0_81 = arith.constant 0 : index
    %c0_82 = arith.constant 0 : index
    %100 = vector.load %arg6[%99, %c0_81, %c0_82] : memref<16x16x4xf32, #tpu.memory_space<vmem>>, vector<16x16x4xf32>
    tpu.vector_store %arg6[%99, %c0_81, %c0_82], %98 {strides = array<i32>} : memref<16x16x4xf32, #tpu.memory_space<vmem>>, vector<16x16x4xf32>,
    %cst_83 = arith.constant dense<0.000000e+00> : vector<4xf32>
    %101 = vector.multi_reduction <add>, %97, %cst_83 [0] : vector<256x4xf32> to vector<4xf32>
    %102 = vector.shape_cast %101 : vector<4xf32> to vector<1x4xf32>
    %103 = arith.addf %22, %102 : vector<1x4xf32>
    %104 = arith.mulf %97, %97 : vector<256x4xf32>
    %cst_84 = arith.constant dense<0.000000e+00> : vector<4xf32>
    %105 = vector.multi_reduction <add>, %104, %cst_84 [0] : vector<256x4xf32> to vector<4xf32>
    %106 = vector.shape_cast %105 : vector<4xf32> to vector<1x4xf32>
    %107 = arith.addf %22, %106 : vector<1x4xf32>
    %c1_i32_85 = arith.constant 1 : i32
    %cst_86 = arith.constant 3.906250e-03 : f32
    %108 = vector.broadcast %cst_86 : f32 to vector<1x4xf32>
    %109 = arith.mulf %103, %108 : vector<1x4xf32>
    %cst_87 = arith.constant 3.906250e-03 : f32
    %110 = vector.broadcast %cst_87 : f32 to vector<1x4xf32>
    %111 = arith.mulf %107, %110 : vector<1x4xf32>
    %112 = arith.mulf %109, %109 : vector<1x4xf32>
    %113 = arith.subf %111, %112 : vector<1x4xf32>
    %cst_88 = arith.constant 0.000000e+00 : f32
    %114 = vector.broadcast %cst_88 : f32 to vector<1x4xf32>
    %115 = arith.maximumf %113, %114 : vector<1x4xf32>
    %cst_89 = arith.constant 9.99999974E-6 : f32
    %116 = vector.broadcast %cst_89 : f32 to vector<1x4xf32>
    %117 = arith.addf %115, %116 : vector<1x4xf32>
    %118 = math.rsqrt %117 : vector<1x4xf32>
    %119 = vector.shape_cast %109 : vector<1x4xf32> to vector<1x1x4xf32>
    %120 = vector.shape_cast %118 : vector<1x4xf32> to vector<1x1x4xf32>
    %c0_i32_90 = arith.constant 0 : i32
    %c16_i32_91 = arith.constant 16 : i32
    %121 = arith.muli %c0_i32_90, %c16_i32_91 : i32
    %122 = tpu.assume_multiple %121, 16 : i32
    %123 = arith.index_cast %122 : i32 to index
    %c0_92 = arith.constant 0 : index
    %c0_93 = arith.constant 0 : index
    %124 = vector.load %arg6[%123, %c0_92, %c0_93] : memref<16x16x4xf32, #tpu.memory_space<vmem>>, vector<16x16x4xf32>
    %125 = vector.broadcast %119 : vector<1x1x4xf32> to vector<16x16x4xf32>
    %126 = arith.subf %124, %125 : vector<16x16x4xf32>
    %127 = vector.broadcast %120 : vector<1x1x4xf32> to vector<16x16x4xf32>
    %128 = arith.mulf %126, %127 : vector<16x16x4xf32>
    %cst_94 = arith.constant 0.000000e+00 : f32
    %129 = vector.broadcast %cst_94 : f32 to vector<16x16x4xf32>
    %130 = arith.maximumf %128, %129 : vector<16x16x4xf32>
    %131 = arith.truncf %130 : vector<16x16x4xf32> to vector<16x16x4xbf16>
    %c1_i32_95 = arith.constant 1 : i32
    %132 = arith.addi %c1_i32_95, %122 : i32
    %133 = arith.index_cast %132 : i32 to index
    %c1_96 = arith.constant 1 : index
    %c0_97 = arith.constant 0 : index
    %134 = vector.load %arg5[%133, %c1_96, %c0_97] : memref<18x24x4xbf16, #tpu.memory_space<vmem>>, vector<16x16x4xbf16>
    tpu.vector_store %arg5[%133, %c1_96, %c0_97], %131 {strides = array<i32>} : memref<18x24x4xbf16, #tpu.memory_space<vmem>>, vector<16x16x4xbf16>,
    %135 = vector.extract_strided_slice %131 {offsets = [0, 1, 0], sizes = [16, 1, 4], strides = [1, 1, 1]} : vector<16x16x4xbf16> to vector<16x1x4xbf16>
    %c1_i32_98 = arith.constant 1 : i32
    %136 = arith.addi %c1_i32_98, %122 : i32
    %137 = arith.index_cast %136 : i32 to index
    %c0_99 = arith.constant 0 : index
    %c0_100 = arith.constant 0 : index
    %138 = vector.load %arg5[%137, %c0_99, %c0_100] : memref<18x24x4xbf16, #tpu.memory_space<vmem>>, vector<16x1x4xbf16>
    tpu.vector_store %arg5[%137, %c0_99, %c0_100], %135 {strides = array<i32>} : memref<18x24x4xbf16, #tpu.memory_space<vmem>>, vector<16x1x4xbf16>,
    %139 = vector.extract_strided_slice %131 {offsets = [0, 14, 0], sizes = [16, 1, 4], strides = [1, 1, 1]} : vector<16x16x4xbf16> to vector<16x1x4xbf16>
    %c1_i32_101 = arith.constant 1 : i32
    %140 = arith.addi %c1_i32_101, %122 : i32
    %141 = arith.index_cast %140 : i32 to index
    %c17_102 = arith.constant 17 : index
    %c0_103 = arith.constant 0 : index
    %142 = vector.load %arg5[%141, %c17_102, %c0_103] : memref<18x24x4xbf16, #tpu.memory_space<vmem>>, vector<16x1x4xbf16>
    tpu.vector_store %arg5[%141, %c17_102, %c0_103], %139 {strides = array<i32>} : memref<18x24x4xbf16, #tpu.memory_space<vmem>>, vector<16x1x4xbf16>,
    %c1_i32_104 = arith.constant 1 : i32
    %c2_105 = arith.constant 2 : index
    %c0_106 = arith.constant 0 : index
    %c0_107 = arith.constant 0 : index
    %143 = vector.load %arg5[%c2_105, %c0_106, %c0_107] : memref<18x24x4xbf16, #tpu.memory_space<vmem>>, vector<1x24x4xbf16>
    %c0_108 = arith.constant 0 : index
    %c0_109 = arith.constant 0 : index
    %c0_110 = arith.constant 0 : index
    %144 = vector.load %arg5[%c0_108, %c0_109, %c0_110] : memref<18x24x4xbf16, #tpu.memory_space<vmem>>, vector<1x24x4xbf16>
    tpu.vector_store %arg5[%c0_108, %c0_109, %c0_110], %143 {strides = array<i32>} : memref<18x24x4xbf16, #tpu.memory_space<vmem>>, vector<1x24x4xbf16>,
    %c15_111 = arith.constant 15 : index
    %c0_112 = arith.constant 0 : index
    %c0_113 = arith.constant 0 : index
    %145 = vector.load %arg5[%c15_111, %c0_112, %c0_113] : memref<18x24x4xbf16, #tpu.memory_space<vmem>>, vector<1x24x4xbf16>
    %c17_114 = arith.constant 17 : index
    %c0_115 = arith.constant 0 : index
    %c0_116 = arith.constant 0 : index
    %146 = vector.load %arg5[%c17_114, %c0_115, %c0_116] : memref<18x24x4xbf16, #tpu.memory_space<vmem>>, vector<1x24x4xbf16>
    tpu.vector_store %arg5[%c17_114, %c0_115, %c0_116], %145 {strides = array<i32>} : memref<18x24x4xbf16, #tpu.memory_space<vmem>>, vector<1x24x4xbf16>,
    %cst_117 = arith.constant 0.000000e+00 : f32
    %147 = vector.broadcast %cst_117 : f32 to vector<1x4xf32>
    %c0_i32_118 = arith.constant 0 : i32
    %c16_i32_119 = arith.constant 16 : i32
    %148 = arith.muli %c0_i32_118, %c16_i32_119 : i32
    %149 = tpu.assume_multiple %148, 16 : i32
    %cst_120 = arith.constant 0.000000e+00 : f32
    %150 = vector.broadcast %cst_120 : f32 to vector<256x4xf32>
    %c0_i32_121 = arith.constant 0 : i32
    %151 = arith.addi %149, %c0_i32_121 : i32
    %152 = arith.index_cast %151 : i32 to index
    %c0_122 = arith.constant 0 : index
    %c0_123 = arith.constant 0 : index
    %153 = vector.load %arg5[%152, %c0_122, %c0_123] : memref<18x24x4xbf16, #tpu.memory_space<vmem>>, vector<16x16x4xbf16>
    %154 = vector.shape_cast %153 : vector<16x16x4xbf16> to vector<256x4xbf16>
    %c0_124 = arith.constant 0 : index
    %c0_125 = arith.constant 0 : index
    %c0_126 = arith.constant 0 : index
    %155 = vector.load %arg3[%c0_124, %c0_125, %c0_126] : memref<9x4x4xbf16, #tpu.memory_space<vmem>>, vector<1x4x4xbf16>
    %156 = vector.shape_cast %155 : vector<1x4x4xbf16> to vector<4x4xbf16>
    %cst_127 = arith.constant dense<0.000000e+00> : vector<256x4xf32>
    %157 = tpu.matmul %154, %156, %cst_127 {dimension_numbers = #tpu.dot_dimension_numbers<[1], [0], [0], [1], [0, 0, 1, 1], [], []>} : vector<256x4xbf16>, vector<4x4xbf16>, vector<256x4xf32> -> vector<256x4xf32>
    %158 = arith.addf %150, %157 : vector<256x4xf32>
    %c0_i32_128 = arith.constant 0 : i32
    %159 = arith.addi %149, %c0_i32_128 : i32
    %160 = arith.index_cast %159 : i32 to index
    %c1_129 = arith.constant 1 : index
    %c0_130 = arith.constant 0 : index
    %161 = vector.load %arg5[%160, %c1_129, %c0_130] : memref<18x24x4xbf16, #tpu.memory_space<vmem>>, vector<16x16x4xbf16>
    %162 = vector.shape_cast %161 : vector<16x16x4xbf16> to vector<256x4xbf16>
    %c1_131 = arith.constant 1 : index
    %c0_132 = arith.constant 0 : index
    %c0_133 = arith.constant 0 : index
    %163 = vector.load %arg3[%c1_131, %c0_132, %c0_133] : memref<9x4x4xbf16, #tpu.memory_space<vmem>>, vector<1x4x4xbf16>
    %164 = vector.shape_cast %163 : vector<1x4x4xbf16> to vector<4x4xbf16>
    %cst_134 = arith.constant dense<0.000000e+00> : vector<256x4xf32>
    %165 = tpu.matmul %162, %164, %cst_134 {dimension_numbers = #tpu.dot_dimension_numbers<[1], [0], [0], [1], [0, 0, 1, 1], [], []>} : vector<256x4xbf16>, vector<4x4xbf16>, vector<256x4xf32> -> vector<256x4xf32>
    %166 = arith.addf %158, %165 : vector<256x4xf32>
    %c0_i32_135 = arith.constant 0 : i32
    %167 = arith.addi %149, %c0_i32_135 : i32
    %168 = arith.index_cast %167 : i32 to index
    %c2_136 = arith.constant 2 : index
    %c0_137 = arith.constant 0 : index
    %169 = vector.load %arg5[%168, %c2_136, %c0_137] : memref<18x24x4xbf16, #tpu.memory_space<vmem>>, vector<16x16x4xbf16>
    %170 = vector.shape_cast %169 : vector<16x16x4xbf16> to vector<256x4xbf16>
    %c2_138 = arith.constant 2 : index
    %c0_139 = arith.constant 0 : index
    %c0_140 = arith.constant 0 : index
    %171 = vector.load %arg3[%c2_138, %c0_139, %c0_140] : memref<9x4x4xbf16, #tpu.memory_space<vmem>>, vector<1x4x4xbf16>
    %172 = vector.shape_cast %171 : vector<1x4x4xbf16> to vector<4x4xbf16>
    %cst_141 = arith.constant dense<0.000000e+00> : vector<256x4xf32>
    %173 = tpu.matmul %170, %172, %cst_141 {dimension_numbers = #tpu.dot_dimension_numbers<[1], [0], [0], [1], [0, 0, 1, 1], [], []>} : vector<256x4xbf16>, vector<4x4xbf16>, vector<256x4xf32> -> vector<256x4xf32>
    %174 = arith.addf %166, %173 : vector<256x4xf32>
    %c1_i32_142 = arith.constant 1 : i32
    %175 = arith.addi %149, %c1_i32_142 : i32
    %176 = arith.index_cast %175 : i32 to index
    %c0_143 = arith.constant 0 : index
    %c0_144 = arith.constant 0 : index
    %177 = vector.load %arg5[%176, %c0_143, %c0_144] : memref<18x24x4xbf16, #tpu.memory_space<vmem>>, vector<16x16x4xbf16>
    %178 = vector.shape_cast %177 : vector<16x16x4xbf16> to vector<256x4xbf16>
    %c3_145 = arith.constant 3 : index
    %c0_146 = arith.constant 0 : index
    %c0_147 = arith.constant 0 : index
    %179 = vector.load %arg3[%c3_145, %c0_146, %c0_147] : memref<9x4x4xbf16, #tpu.memory_space<vmem>>, vector<1x4x4xbf16>
    %180 = vector.shape_cast %179 : vector<1x4x4xbf16> to vector<4x4xbf16>
    %cst_148 = arith.constant dense<0.000000e+00> : vector<256x4xf32>
    %181 = tpu.matmul %178, %180, %cst_148 {dimension_numbers = #tpu.dot_dimension_numbers<[1], [0], [0], [1], [0, 0, 1, 1], [], []>} : vector<256x4xbf16>, vector<4x4xbf16>, vector<256x4xf32> -> vector<256x4xf32>
    %182 = arith.addf %174, %181 : vector<256x4xf32>
    %c1_i32_149 = arith.constant 1 : i32
    %183 = arith.addi %149, %c1_i32_149 : i32
    %184 = arith.index_cast %183 : i32 to index
    %c1_150 = arith.constant 1 : index
    %c0_151 = arith.constant 0 : index
    %185 = vector.load %arg5[%184, %c1_150, %c0_151] : memref<18x24x4xbf16, #tpu.memory_space<vmem>>, vector<16x16x4xbf16>
    %186 = vector.shape_cast %185 : vector<16x16x4xbf16> to vector<256x4xbf16>
    %c4_152 = arith.constant 4 : index
    %c0_153 = arith.constant 0 : index
    %c0_154 = arith.constant 0 : index
    %187 = vector.load %arg3[%c4_152, %c0_153, %c0_154] : memref<9x4x4xbf16, #tpu.memory_space<vmem>>, vector<1x4x4xbf16>
    %188 = vector.shape_cast %187 : vector<1x4x4xbf16> to vector<4x4xbf16>
    %cst_155 = arith.constant dense<0.000000e+00> : vector<256x4xf32>
    %189 = tpu.matmul %186, %188, %cst_155 {dimension_numbers = #tpu.dot_dimension_numbers<[1], [0], [0], [1], [0, 0, 1, 1], [], []>} : vector<256x4xbf16>, vector<4x4xbf16>, vector<256x4xf32> -> vector<256x4xf32>
    %190 = arith.addf %182, %189 : vector<256x4xf32>
    %c1_i32_156 = arith.constant 1 : i32
    %191 = arith.addi %149, %c1_i32_156 : i32
    %192 = arith.index_cast %191 : i32 to index
    %c2_157 = arith.constant 2 : index
    %c0_158 = arith.constant 0 : index
    %193 = vector.load %arg5[%192, %c2_157, %c0_158] : memref<18x24x4xbf16, #tpu.memory_space<vmem>>, vector<16x16x4xbf16>
    %194 = vector.shape_cast %193 : vector<16x16x4xbf16> to vector<256x4xbf16>
    %c5_159 = arith.constant 5 : index
    %c0_160 = arith.constant 0 : index
    %c0_161 = arith.constant 0 : index
    %195 = vector.load %arg3[%c5_159, %c0_160, %c0_161] : memref<9x4x4xbf16, #tpu.memory_space<vmem>>, vector<1x4x4xbf16>
    %196 = vector.shape_cast %195 : vector<1x4x4xbf16> to vector<4x4xbf16>
    %cst_162 = arith.constant dense<0.000000e+00> : vector<256x4xf32>
    %197 = tpu.matmul %194, %196, %cst_162 {dimension_numbers = #tpu.dot_dimension_numbers<[1], [0], [0], [1], [0, 0, 1, 1], [], []>} : vector<256x4xbf16>, vector<4x4xbf16>, vector<256x4xf32> -> vector<256x4xf32>
    %198 = arith.addf %190, %197 : vector<256x4xf32>
    %c2_i32_163 = arith.constant 2 : i32
    %199 = arith.addi %149, %c2_i32_163 : i32
    %200 = arith.index_cast %199 : i32 to index
    %c0_164 = arith.constant 0 : index
    %c0_165 = arith.constant 0 : index
    %201 = vector.load %arg5[%200, %c0_164, %c0_165] : memref<18x24x4xbf16, #tpu.memory_space<vmem>>, vector<16x16x4xbf16>
    %202 = vector.shape_cast %201 : vector<16x16x4xbf16> to vector<256x4xbf16>
    %c6_166 = arith.constant 6 : index
    %c0_167 = arith.constant 0 : index
    %c0_168 = arith.constant 0 : index
    %203 = vector.load %arg3[%c6_166, %c0_167, %c0_168] : memref<9x4x4xbf16, #tpu.memory_space<vmem>>, vector<1x4x4xbf16>
    %204 = vector.shape_cast %203 : vector<1x4x4xbf16> to vector<4x4xbf16>
    %cst_169 = arith.constant dense<0.000000e+00> : vector<256x4xf32>
    %205 = tpu.matmul %202, %204, %cst_169 {dimension_numbers = #tpu.dot_dimension_numbers<[1], [0], [0], [1], [0, 0, 1, 1], [], []>} : vector<256x4xbf16>, vector<4x4xbf16>, vector<256x4xf32> -> vector<256x4xf32>
    %206 = arith.addf %198, %205 : vector<256x4xf32>
    %c2_i32_170 = arith.constant 2 : i32
    %207 = arith.addi %149, %c2_i32_170 : i32
    %208 = arith.index_cast %207 : i32 to index
    %c1_171 = arith.constant 1 : index
    %c0_172 = arith.constant 0 : index
    %209 = vector.load %arg5[%208, %c1_171, %c0_172] : memref<18x24x4xbf16, #tpu.memory_space<vmem>>, vector<16x16x4xbf16>
    %210 = vector.shape_cast %209 : vector<16x16x4xbf16> to vector<256x4xbf16>
    %c7_173 = arith.constant 7 : index
    %c0_174 = arith.constant 0 : index
    %c0_175 = arith.constant 0 : index
    %211 = vector.load %arg3[%c7_173, %c0_174, %c0_175] : memref<9x4x4xbf16, #tpu.memory_space<vmem>>, vector<1x4x4xbf16>
    %212 = vector.shape_cast %211 : vector<1x4x4xbf16> to vector<4x4xbf16>
    %cst_176 = arith.constant dense<0.000000e+00> : vector<256x4xf32>
    %213 = tpu.matmul %210, %212, %cst_176 {dimension_numbers = #tpu.dot_dimension_numbers<[1], [0], [0], [1], [0, 0, 1, 1], [], []>} : vector<256x4xbf16>, vector<4x4xbf16>, vector<256x4xf32> -> vector<256x4xf32>
    %214 = arith.addf %206, %213 : vector<256x4xf32>
    %c2_i32_177 = arith.constant 2 : i32
    %215 = arith.addi %149, %c2_i32_177 : i32
    %216 = arith.index_cast %215 : i32 to index
    %c2_178 = arith.constant 2 : index
    %c0_179 = arith.constant 0 : index
    %217 = vector.load %arg5[%216, %c2_178, %c0_179] : memref<18x24x4xbf16, #tpu.memory_space<vmem>>, vector<16x16x4xbf16>
    %218 = vector.shape_cast %217 : vector<16x16x4xbf16> to vector<256x4xbf16>
    %c8_180 = arith.constant 8 : index
    %c0_181 = arith.constant 0 : index
    %c0_182 = arith.constant 0 : index
    %219 = vector.load %arg3[%c8_180, %c0_181, %c0_182] : memref<9x4x4xbf16, #tpu.memory_space<vmem>>, vector<1x4x4xbf16>
    %220 = vector.shape_cast %219 : vector<1x4x4xbf16> to vector<4x4xbf16>
    %cst_183 = arith.constant dense<0.000000e+00> : vector<256x4xf32>
    %221 = tpu.matmul %218, %220, %cst_183 {dimension_numbers = #tpu.dot_dimension_numbers<[1], [0], [0], [1], [0, 0, 1, 1], [], []>} : vector<256x4xbf16>, vector<4x4xbf16>, vector<256x4xf32> -> vector<256x4xf32>
    %222 = arith.addf %214, %221 : vector<256x4xf32>
    %223 = vector.shape_cast %222 : vector<256x4xf32> to vector<16x16x4xf32>
    %224 = arith.index_cast %149 : i32 to index
    %c0_184 = arith.constant 0 : index
    %c0_185 = arith.constant 0 : index
    %225 = vector.load %arg6[%224, %c0_184, %c0_185] : memref<16x16x4xf32, #tpu.memory_space<vmem>>, vector<16x16x4xf32>
    tpu.vector_store %arg6[%224, %c0_184, %c0_185], %223 {strides = array<i32>} : memref<16x16x4xf32, #tpu.memory_space<vmem>>, vector<16x16x4xf32>,
    %cst_186 = arith.constant dense<0.000000e+00> : vector<4xf32>
    %226 = vector.multi_reduction <add>, %222, %cst_186 [0] : vector<256x4xf32> to vector<4xf32>
    %227 = vector.shape_cast %226 : vector<4xf32> to vector<1x4xf32>
    %228 = arith.addf %147, %227 : vector<1x4xf32>
    %229 = arith.mulf %222, %222 : vector<256x4xf32>
    %cst_187 = arith.constant dense<0.000000e+00> : vector<4xf32>
    %230 = vector.multi_reduction <add>, %229, %cst_187 [0] : vector<256x4xf32> to vector<4xf32>
    %231 = vector.shape_cast %230 : vector<4xf32> to vector<1x4xf32>
    %232 = arith.addf %147, %231 : vector<1x4xf32>
    %c1_i32_188 = arith.constant 1 : i32
    %cst_189 = arith.constant 3.906250e-03 : f32
    %233 = vector.broadcast %cst_189 : f32 to vector<1x4xf32>
    %234 = arith.mulf %228, %233 : vector<1x4xf32>
    %cst_190 = arith.constant 3.906250e-03 : f32
    %235 = vector.broadcast %cst_190 : f32 to vector<1x4xf32>
    %236 = arith.mulf %232, %235 : vector<1x4xf32>
    %237 = arith.mulf %234, %234 : vector<1x4xf32>
    %238 = arith.subf %236, %237 : vector<1x4xf32>
    %cst_191 = arith.constant 0.000000e+00 : f32
    %239 = vector.broadcast %cst_191 : f32 to vector<1x4xf32>
    %240 = arith.maximumf %238, %239 : vector<1x4xf32>
    %cst_192 = arith.constant 9.99999974E-6 : f32
    %241 = vector.broadcast %cst_192 : f32 to vector<1x4xf32>
    %242 = arith.addf %240, %241 : vector<1x4xf32>
    %243 = math.rsqrt %242 : vector<1x4xf32>
    %244 = vector.shape_cast %234 : vector<1x4xf32> to vector<1x1x4xf32>
    %245 = vector.shape_cast %243 : vector<1x4xf32> to vector<1x1x4xf32>
    %c0_i32_193 = arith.constant 0 : i32
    %c0_i32_194 = arith.constant 0 : i32
    %c0_i32_195 = arith.constant 0 : i32
    %c16_i32_196 = arith.constant 16 : i32
    %246 = arith.muli %c0_i32_195, %c16_i32_196 : i32
    %247 = tpu.assume_multiple %246, 16 : i32
    %248 = arith.index_cast %247 : i32 to index
    %c0_197 = arith.constant 0 : index
    %c0_198 = arith.constant 0 : index
    %249 = vector.load %arg6[%248, %c0_197, %c0_198] : memref<16x16x4xf32, #tpu.memory_space<vmem>>, vector<16x16x4xf32>
    %c0_i32_199 = arith.constant 0 : i32
    %c0_i32_200 = arith.constant 0 : i32
    %c0_i32_201 = arith.constant 0 : i32
    %250 = tpu.memref_slice %arg1[%c0_i32_193, %c0_i32_199, %c0_i32_200, %c0_i32_201] : memref<1x16x16x4xf32, #tpu.memory_space<vmem>> -> memref<1x16x16x4xf32, #tpu.memory_space<vmem>>
    %251 = tpu.memref_squeeze %250 : memref<1x16x16x4xf32, #tpu.memory_space<vmem>> -> memref<16x16x4xf32, #tpu.memory_space<vmem>>
    %252 = arith.index_cast %247 : i32 to index
    %c0_202 = arith.constant 0 : index
    %c0_203 = arith.constant 0 : index
    %253 = vector.load %251[%252, %c0_202, %c0_203] : memref<16x16x4xf32, #tpu.memory_space<vmem>>, vector<16x16x4xf32>
    %254 = vector.broadcast %244 : vector<1x1x4xf32> to vector<16x16x4xf32>
    %255 = arith.subf %249, %254 : vector<16x16x4xf32>
    %256 = vector.broadcast %245 : vector<1x1x4xf32> to vector<16x16x4xf32>
    %257 = arith.mulf %255, %256 : vector<16x16x4xf32>
    %258 = arith.addf %253, %257 : vector<16x16x4xf32>
    %c0_i32_204 = arith.constant 0 : i32
    %c0_i32_205 = arith.constant 0 : i32
    %c0_i32_206 = arith.constant 0 : i32
    %259 = tpu.memref_slice %arg4[%c0_i32_194, %c0_i32_204, %c0_i32_205, %c0_i32_206] : memref<1x16x16x4xf32, #tpu.memory_space<vmem>> -> memref<1x16x16x4xf32, #tpu.memory_space<vmem>>
    %260 = tpu.memref_squeeze %259 : memref<1x16x16x4xf32, #tpu.memory_space<vmem>> -> memref<16x16x4xf32, #tpu.memory_space<vmem>>
    %261 = arith.index_cast %247 : i32 to index
    %c0_207 = arith.constant 0 : index
    %c0_208 = arith.constant 0 : index
    %262 = vector.load %260[%261, %c0_207, %c0_208] : memref<16x16x4xf32, #tpu.memory_space<vmem>>, vector<16x16x4xf32>
    tpu.vector_store %260[%261, %c0_207, %c0_208], %258 {strides = array<i32>} : memref<16x16x4xf32, #tpu.memory_space<vmem>>, vector<16x16x4xf32>,
    %c1_i32_209 = arith.constant 1 : i32
    return
  }
  func.func @transform_0(%arg0: i32) -> (i32, i32, i32, i32) {
    %c0_i32 = arith.constant 0 : i32
    %c0_i32_0 = arith.constant 0 : i32
    %c0_i32_1 = arith.constant 0 : i32
    %c0_i32_2 = arith.constant 0 : i32
    return %arg0, %c0_i32, %c0_i32_0, %c0_i32_1 : i32, i32, i32, i32
  }
  func.func @transform_1(%arg0: i32) -> (i32, i32, i32) {
    %c0_i32 = arith.constant 0 : i32
    %c0_i32_0 = arith.constant 0 : i32
    %c0_i32_1 = arith.constant 0 : i32
    %c0_i32_2 = arith.constant 0 : i32
    return %c0_i32, %c0_i32_0, %c0_i32_1 : i32, i32, i32
  }
  func.func @transform_2(%arg0: i32) -> (i32, i32, i32) {
    %c0_i32 = arith.constant 0 : i32
    %c0_i32_0 = arith.constant 0 : i32
    %c0_i32_1 = arith.constant 0 : i32
    %c0_i32_2 = arith.constant 0 : i32
    return %c0_i32, %c0_i32_0, %c0_i32_1 : i32, i32, i32
  }
  func.func @transform_3(%arg0: i32) -> (i32, i32, i32, i32) {
    %c0_i32 = arith.constant 0 : i32
    %c0_i32_0 = arith.constant 0 : i32
    %c0_i32_1 = arith.constant 0 : i32
    %c0_i32_2 = arith.constant 0 : i32
    return %arg0, %c0_i32, %c0_i32_0, %c0_i32_1 : i32, i32, i32, i32
  }
}

</mosaic_0001>

<llo_original>
// kernel: tpu_custom_call.1
$region0: #{tpu_custom_call.1}
  #allocation0 [shape = 'u32[]', space=smem, size = 0x4, offset = 0x4, fixed_abs, tag = 'smem constant byte address 0x4 - core index']
  #allocation1 [shape = 'u32[144,128]{1,0:T(1,128)}', space=vmem, size = 0x12000, scoped, tag = 'internal scratch']
  #allocation2 [shape = 'bf16[18,24,4]{2,1,0:T(8,128)(2,1)}', space=vmem, size = 0x1b000, scoped, tag = 'scratch operand']
  #allocation3 [shape = 'f32[16,16,4]{2,1,0:T(8,128)}', space=vmem, size = 0x20000, scoped, tag = 'scratch operand']
  %s0 = inlined_call_operand.vmem [shape: f32[2,16,16,4], index: 0, kind: input, shape index: {}]
  %s1 = inlined_call_operand.vmem [shape: bf16[9,4,4], index: 1, kind: input, shape index: {}]
  %s2 = inlined_call_operand.vmem [shape: bf16[9,4,4], index: 2, kind: input, shape index: {}]
  %s3 = inlined_call_operand.vmem [shape: f32[2,16,16,4], index: 3, kind: output, shape index: {}]
  %s4 = sld [smem:[#allocation0]]
  $region45: #{tpu_custom_call.1} parent=0
    _
  %s6 = ssub.s32 1, %s4
  %s7 = scalar_select 0, %s6, %s4
  loop: start=0, step=1, limit=4
  $region2: #{tpu_custom_call.1} parent=0 // loop_pre_header
    _
  $region3: #{tpu_custom_call.1} parent=0 // loop_header
    %s9 = sphi 0, %s13
    %p10 = scmp.ge.s32.totalorder %s9, 4
    %s19 = sphi 0, %s21
    %s22 = sphi 0, %s19
    %s23 = sphi 0, %s22
    %s39 = sphi 0, %s23
    %s43 = sphi 0, %s43
    %s45 = sphi 0, %s43
    %s46 = sphi 0, %s45
    %s60 = sphi 0, %s46
    %s64 = sphi 0, %s64
    %s66 = sphi 0, %s64
    %s67 = sphi 0, %s66
    %s81 = sphi 0, %s67
    %s87 = sphi 0, %s89
    %s90 = sphi 0, %s87
    %s91 = sphi 0, %s90
    %s107 = sphi 0, %s91
  $region4: #{tpu_custom_call.1} parent=0 // loop_header_branch
    %12 = sbr.rel (%p10) target = $region8
  $region5: #{tpu_custom_call.1} parent=0 // loop_body
    %s14 = ssub.s32 %s9, 1
    %s15 = ssub.s32 %s9, 2
    %s16 = sadd.s32 %s9, 1
    %s17 = ssub.s32 %s9, %s16
    %p18 = scmp.eq.s32.totalorder %s17, 0
    %s20 = sadd.s32 %s19, 1
    %s21 = scalar_select %p18, %s19, %s20
    %p24 = pneg %p18
    %p25 = scmp.eq.s32.totalorder %s9, 1
    %p26 = por %p24, %p25
    %p27 = scmp.ne.s32.totalorder %s19, %s22
    %p28 = scmp.eq.s32.totalorder %s9, 0
    %p29 = por %p27, %p28
    %p30 = scmp.ne.s32.totalorder %s19, %s22
    %p31 = scmp.eq.s32.totalorder %s14, 1
    %p32 = por %p30, %p31
    %p33 = scmp.ne.s32.totalorder %s22, %s23
    %p34 = scmp.eq.s32.totalorder %s14, 0
    %p35 = por %p33, %p34
    %p36 = scmp.ne.s32.totalorder %s22, %s23
    %p37 = scmp.eq.s32.totalorder %s15, 1
    %p38 = por %p36, %p37
    %p40 = scmp.ne.s32.totalorder %s23, %s39
    %p41 = scmp.eq.s32.totalorder %s15, 0
    %p42 = por %p40, %p41
    %s44 = sadd.s32 %s43, 1
    %p47 = scmp.eq.s32.totalorder %s9, 1
    %p48 = scmp.ne.s32.totalorder %s43, %s45
    %p49 = scmp.eq.s32.totalorder %s9, 0
    %p50 = por %p48, %p49
    %p51 = scmp.ne.s32.totalorder %s43, %s45
    %p52 = scmp.eq.s32.totalorder %s14, 1
    %p53 = por %p51, %p52
    %p54 = scmp.ne.s32.totalorder %s45, %s46
    %p55 = scmp.eq.s32.totalorder %s14, 0
    %p56 = por %p54, %p55
    %p57 = scmp.ne.s32.totalorder %s45, %s46
    %p58 = scmp.eq.s32.totalorder %s15, 1
    %p59 = por %p57, %p58
    %p61 = scmp.ne.s32.totalorder %s46, %s60
    %p62 = scmp.eq.s32.totalorder %s15, 0
    %p63 = por %p61, %p62
    %s65 = sadd.s32 %s64, 1
    %p68 = scmp.eq.s32.totalorder %s9, 1
    %p69 = scmp.ne.s32.totalorder %s64, %s66
    %p70 = scmp.eq.s32.totalorder %s9, 0
    %p71 = por %p69, %p70
    %p72 = scmp.ne.s32.totalorder %s64, %s66
    %p73 = scmp.eq.s32.totalorder %s14, 1
    %p74 = por %p72, %p73
    %p75 = scmp.ne.s32.totalorder %s66, %s67
    %p76 = scmp.eq.s32.totalorder %s14, 0
    %p77 = por %p75, %p76
    %p78 = scmp.ne.s32.totalorder %s66, %s67
    %p79 = scmp.eq.s32.totalorder %s15, 1
    %p80 = por %p78, %p79
    %p82 = scmp.ne.s32.totalorder %s67, %s81
    %p83 = scmp.eq.s32.totalorder %s15, 0
    %p84 = por %p82, %p83
    %s85 = ssub.s32 %s9, %s16
    %p86 = scmp.eq.s32.totalorder %s85, 0
    %s88 = sadd.s32 %s87, 1
    %s89 = scalar_select %p86, %s87, %s88
    %p92 = pneg %p86
    %p93 = scmp.eq.s32.totalorder %s9, 1
    %p94 = por %p92, %p93
    %p95 = scmp.ne.s32.totalorder %s87, %s90
    %p96 = scmp.eq.s32.totalorder %s9, 0
    %p97 = por %p95, %p96
    %p98 = scmp.ne.s32.totalorder %s87, %s90
    %p99 = scmp.eq.s32.totalorder %s14, 1
    %p100 = por %p98, %p99
    %p101 = scmp.ne.s32.totalorder %s90, %s91
    %p102 = scmp.eq.s32.totalorder %s14, 0
    %p103 = por %p101, %p102
    %p104 = scmp.ne.s32.totalorder %s90, %s91
    %p105 = scmp.eq.s32.totalorder %s15, 1
    %p106 = por %p104, %p105
    %p108 = scmp.ne.s32.totalorder %s91, %s107
    %p109 = scmp.eq.s32.totalorder %s15, 0
    %p110 = por %p108, %p109
    %p111 = scmp.le.s32.totalorder 1, %s9
    %p112 = scmp.lt.s32.totalorder %s9, 3
    %p113 = pnand %p111, %p112
    %p114 = pneg %p113
    // Predicated region
    $region9: #{tpu_custom_call.1} parent=5 // pred_check
      _
    $region10: #{tpu_custom_call.1} parent=5 // pred_check_branch
      %116 = sbr.rel (%p113) target = $region12
    $region11: #{tpu_custom_call.1} parent=5 // pred_region
      %s117 = ssub.s32 %s9, 1
      // Predicated region
      $region13: #{tpu_custom_call.1} parent=11 // pred_check
        %p118 = pneg %p56
      $region14: #{tpu_custom_call.1} parent=11 // pred_check_branch
        %120 = sbr.rel (%p118) target = $region16
      $region15: #{tpu_custom_call.1} parent=11 // pred_region
        _
      $region16: #{tpu_custom_call.1} parent=11 // pred_fallthru
        _
      // Predicated region
      $region17: #{tpu_custom_call.1} parent=11 // pred_check
        %p121 = pneg %p77
      $region18: #{tpu_custom_call.1} parent=11 // pred_check_branch
        %123 = sbr.rel (%p121) target = $region20
      $region19: #{tpu_custom_call.1} parent=11 // pred_region
        _
      $region20: #{tpu_custom_call.1} parent=11 // pred_fallthru
        _
    $region12: #{tpu_custom_call.1} parent=5 // pred_fallthru
      _
    %p124 = scmp.lt.s32.totalorder %s9, 2
    // Predicated region
    $region21: #{tpu_custom_call.1} parent=5 // pred_check
      %p125 = pneg %p124
    $region22: #{tpu_custom_call.1} parent=5 // pred_check_branch
      %127 = sbr.rel (%p125) target = $region24
    $region23: #{tpu_custom_call.1} parent=5 // pred_region
      // Predicated region
      $region25: #{tpu_custom_call.1} parent=23 // pred_check
        %p128 = pneg %p29
      $region26: #{tpu_custom_call.1} parent=23 // pred_check_branch
        %130 = sbr.rel (%p128) target = $region28
      $region27: #{tpu_custom_call.1} parent=23 // pred_region
        %p131 = scmp.lt.s32.totalorder %s9, 1
        %s132 = scalar_select %p131, %s9, 1
        %s133 = smul.addr %s132, 32
        %s134 = smul.addr %s133, 8
        %s135 = scalar_lea.vmem %s0, %s134
      $region28: #{tpu_custom_call.1} parent=23 // pred_fallthru
        _
    $region24: #{tpu_custom_call.1} parent=5 // pred_fallthru
      _
    %p136 = scmp.le.s32.totalorder 1, %s9
    %p137 = scmp.lt.s32.totalorder %s9, 3
    %p138 = pnand %p136, %p137
    %p139 = pneg %p138
    // Predicated region
    $region29: #{tpu_custom_call.1} parent=5 // pred_check
      _
    $region30: #{tpu_custom_call.1} parent=5 // pred_check_branch
      %141 = sbr.rel (%p138) target = $region32
    $region31: #{tpu_custom_call.1} parent=5 // pred_region
      %s142 = ssub.s32 %s9, 1
      %p143 = scmp.lt.s32.totalorder %s14, 1
      %s144 = scalar_select %p143, %s14, 1
      %s145 = smul.addr %s144, 32
      %s146 = smul.addr %s145, 8
      %s147 = scalar_lea.vmem %s0, %s146
      %p148 = pneg %p35
      %p149 = pneg %p32
      %p150 = pneg %p56
      %p151 = pneg %p53
      %p152 = pneg %p77
      %p153 = pneg %p74
      %p154 = pneg %p103
      %p155 = pneg %p100
      %p156 = scmp.lt.s32.totalorder %s14, 1
      %s157 = scalar_select %p156, %s14, 1
      %s158 = smul.addr %s157, 32
      %s159 = smul.addr %s158, 8
      %s160 = scalar_lea.vmem %s3, %s159
      %p161 = scmp.lt.s32.totalorder %s14, 1
      %s162 = scalar_select %p161, %s14, 1
      %s163 = smul.addr %s162, 32
      %s164 = smul.addr %s163, 8
      %s165 = scalar_lea.vmem %s0, %s164
      %p166 = scmp.lt.s32.totalorder %s14, 1
      %s167 = scalar_select %p166, %s14, 1
      %s168 = smul.addr %s167, 32
      %s169 = smul.addr %s168, 8
      %s170 = scalar_lea.vmem %s3, %s169
      %s172 = smul.u32 0, 16
      %s173 = scalar_lea.vmem %s165, %s172
      %v174 = vld [vmem:[%s173] sm:$0xff]
      %v175 = vld [vmem:[%s173 + $0x8] sm:$0xff]
      %v176 = vld [vmem:[%s173 + $0x10] sm:$0xff]
      %v177 = vld [vmem:[%s173 + $0x18] sm:$0xff]
      %v178 = vld [vmem:[%s173 + $0x20] sm:$0xff]
      %v179 = vld [vmem:[%s173 + $0x28] sm:$0xff]
      %v180 = vld [vmem:[%s173 + $0x30] sm:$0xff]
      %v181 = vld [vmem:[%s173 + $0x38] sm:$0xff]
      %v182 = vld [vmem:[%s173 + $0x40] sm:$0xff]
      %v183 = vld [vmem:[%s173 + $0x48] sm:$0xff]
      %v184 = vld [vmem:[%s173 + $0x50] sm:$0xff]
      %v185 = vld [vmem:[%s173 + $0x58] sm:$0xff]
      %v186 = vld [vmem:[%s173 + $0x60] sm:$0xff]
      %v187 = vld [vmem:[%s173 + $0x68] sm:$0xff]
      %v188 = vld [vmem:[%s173 + $0x70] sm:$0xff]
      %v189 = vld [vmem:[%s173 + $0x78] sm:$0xff]
      %v190 = vld [vmem:[%s173 + $0x80] sm:$0xff]
      %v191 = vld [vmem:[%s173 + $0x88] sm:$0xff]
      %v192 = vld [vmem:[%s173 + $0x90] sm:$0xff]
      %v193 = vld [vmem:[%s173 + $0x98] sm:$0xff]
      %v194 = vld [vmem:[%s173 + $0xa0] sm:$0xff]
      %v195 = vld [vmem:[%s173 + $0xa8] sm:$0xff]
      %v196 = vld [vmem:[%s173 + $0xb0] sm:$0xff]
      %v197 = vld [vmem:[%s173 + $0xb8] sm:$0xff]
      %v198 = vld [vmem:[%s173 + $0xc0] sm:$0xff]
      %v199 = vld [vmem:[%s173 + $0xc8] sm:$0xff]
      %v200 = vld [vmem:[%s173 + $0xd0] sm:$0xff]
      %v201 = vld [vmem:[%s173 + $0xd8] sm:$0xff]
      %v202 = vld [vmem:[%s173 + $0xe0] sm:$0xff]
      %v203 = vld [vmem:[%s173 + $0xe8] sm:$0xff]
      %v204 = vld [vmem:[%s173 + $0xf0] sm:$0xff]
      %v205 = vld [vmem:[%s173 + $0xf8] sm:$0xff]
      %v206 = vpack.c.bf16 %v175, %v174
      %v207 = vpack.c.bf16 %v177, %v176
      %v208 = vpack.c.bf16 %v179, %v178
      %v209 = vpack.c.bf16 %v181, %v180
      %v210 = vpack.c.bf16 %v183, %v182
      %v211 = vpack.c.bf16 %v185, %v184
      %v212 = vpack.c.bf16 %v187, %v186
      %v213 = vpack.c.bf16 %v189, %v188
      %v214 = vpack.c.bf16 %v191, %v190
      %v215 = vpack.c.bf16 %v193, %v192
      %v216 = vpack.c.bf16 %v195, %v194
      %v217 = vpack.c.bf16 %v197, %v196
      %v218 = vpack.c.bf16 %v199, %v198
      %v219 = vpack.c.bf16 %v201, %v200
      %v220 = vpack.c.bf16 %v203, %v202
      %v221 = vpack.c.bf16 %v205, %v204
      %s222 = sadd.s32 0, 1
      %v239 = vunpack.c.l.b16 %v206
      %v240 = vunpack.c.h.b16 %v206
      %v241 = vunpack.c.l.b16 %v207
      %v242 = vunpack.c.h.b16 %v207
      %v243 = vunpack.c.l.b16 %v208
      %v244 = vunpack.c.h.b16 %v208
      %v245 = vunpack.c.l.b16 %v209
      %v246 = vunpack.c.h.b16 %v209
      %v247 = vunpack.c.l.b16 %v210
      %v248 = vunpack.c.h.b16 %v210
      %v249 = vunpack.c.l.b16 %v211
      %v250 = vunpack.c.h.b16 %v211
      %v251 = vunpack.c.l.b16 %v212
      %v252 = vunpack.c.h.b16 %v212
      %v253 = vunpack.c.l.b16 %v213
      %v254 = vunpack.c.h.b16 %v213
      %v255 = vunpack.c.l.b16 %v214
      %v256 = vunpack.c.h.b16 %v214
      %v257 = vunpack.c.l.b16 %v215
      %v258 = vunpack.c.h.b16 %v215
      %v259 = vunpack.c.l.b16 %v216
      %v260 = vunpack.c.h.b16 %v216
      %v261 = vunpack.c.l.b16 %v217
      %v262 = vunpack.c.h.b16 %v217
      %v263 = vunpack.c.l.b16 %v218
      %v264 = vunpack.c.h.b16 %v218
      %v265 = vunpack.c.l.b16 %v219
      %v266 = vunpack.c.h.b16 %v219
      %v267 = vunpack.c.l.b16 %v220
      %v268 = vunpack.c.h.b16 %v220
      %v269 = vunpack.c.l.b16 %v221
      %v270 = vunpack.c.h.b16 %v221
      %v271 = vpack.c.b16 %v239, %v239
      %v272 = vpack.c.b16 %v240, %v240
      %v273 = vpack.c.b16 %v241, %v241
      %v274 = vpack.c.b16 %v242, %v242
      %v275 = vpack.c.b16 %v243, %v243
      %v276 = vpack.c.b16 %v244, %v244
      %v277 = vpack.c.b16 %v245, %v245
      %v278 = vpack.c.b16 %v246, %v246
      %v279 = vpack.c.b16 %v247, %v247
      %v280 = vpack.c.b16 %v248, %v248
      %v281 = vpack.c.b16 %v249, %v249
      %v282 = vpack.c.b16 %v250, %v250
      %v283 = vpack.c.b16 %v251, %v251
      %v284 = vpack.c.b16 %v252, %v252
      %v285 = vpack.c.b16 %v253, %v253
      %v286 = vpack.c.b16 %v254, %v254
      %v287 = vpack.c.b16 %v255, %v255
      %v288 = vpack.c.b16 %v256, %v256
      %v289 = vpack.c.b16 %v257, %v257
      %v290 = vpack.c.b16 %v258, %v258
      %v291 = vpack.c.b16 %v259, %v259
      %v292 = vpack.c.b16 %v260, %v260
      %v293 = vpack.c.b16 %v261, %v261
      %v294 = vpack.c.b16 %v262, %v262
      %v295 = vpack.c.b16 %v263, %v263
      %v296 = vpack.c.b16 %v264, %v264
      %v297 = vpack.c.b16 %v265, %v265
      %v298 = vpack.c.b16 %v266, %v266
      %v299 = vpack.c.b16 %v267, %v267
      %v300 = vpack.c.b16 %v268, %v268
      %v301 = vpack.c.b16 %v269, %v269
      %v302 = vpack.c.b16 %v270, %v270
      %vm303 = vsmask.f32 256
      %vm304 = vsmask.f32 4368
      %vm305 = vmor %vm303, %vm304
      %v307 = vshrl.u32 %v271, 16
      %v309 = vrot.slane %v307, 7
      %v310 = vshll.u32 %v271, 16
      %v312 = vor.u32 %v309, %v310
      %v313 = vrot.slane %v309, 4
      %v315 = vshrl.u32 %v272, 16
      %v317 = vrot.slane %v315, 7
      %v318 = vshll.u32 %v272, 16
      %v320 = vor.u32 %v317, %v318
      %v321 = vsel %vm305, %v313, %v320
      %v322 = vrot.slane %v317, 4
      %v324 = vshrl.u32 %v273, 16
      %v326 = vrot.slane %v324, 7
      %v327 = vshll.u32 %v273, 16
      %v329 = vor.u32 %v326, %v327
      %v330 = vrot.slane %v326, 4
      %v332 = vshrl.u32 %v274, 16
      %v334 = vrot.slane %v332, 7
      %v335 = vshll.u32 %v274, 16
      %v337 = vor.u32 %v334, %v335
      %v338 = vsel %vm305, %v330, %v337
      %v339 = vrot.slane %v334, 4
      %v341 = vshrl.u32 %v275, 16
      %v343 = vrot.slane %v341, 7
      %v344 = vshll.u32 %v275, 16
      %v346 = vor.u32 %v343, %v344
      %v347 = vrot.slane %v343, 4
      %v349 = vshrl.u32 %v276, 16
      %v351 = vrot.slane %v349, 7
      %v352 = vshll.u32 %v276, 16
      %v354 = vor.u32 %v351, %v352
      %v355 = vsel %vm305, %v347, %v354
      %v356 = vrot.slane %v351, 4
      %v358 = vshrl.u32 %v277, 16
      %v360 = vrot.slane %v358, 7
      %v361 = vshll.u32 %v277, 16
      %v363 = vor.u32 %v360, %v361
      %v364 = vrot.slane %v360, 4
      %v366 = vshrl.u32 %v278, 16
      %v368 = vrot.slane %v366, 7
      %v369 = vshll.u32 %v278, 16
      %v371 = vor.u32 %v368, %v369
      %v372 = vsel %vm305, %v364, %v371
      %v373 = vrot.slane %v368, 4
      %v375 = vshrl.u32 %v279, 16
      %v377 = vrot.slane %v375, 7
      %v378 = vshll.u32 %v279, 16
      %v380 = vor.u32 %v377, %v378
      %v381 = vrot.slane %v377, 4
      %v383 = vshrl.u32 %v280, 16
      %v385 = vrot.slane %v383, 7
      %v386 = vshll.u32 %v280, 16
      %v388 = vor.u32 %v385, %v386
      %v389 = vsel %vm305, %v381, %v388
      %v390 = vrot.slane %v385, 4
      %v392 = vshrl.u32 %v281, 16
      %v394 = vrot.slane %v392, 7
      %v395 = vshll.u32 %v281, 16
      %v397 = vor.u32 %v394, %v395
      %v398 = vrot.slane %v394, 4
      %v400 = vshrl.u32 %v282, 16
      %v402 = vrot.slane %v400, 7
      %v403 = vshll.u32 %v282, 16
      %v405 = vor.u32 %v402, %v403
      %v406 = vsel %vm305, %v398, %v405
      %v407 = vrot.slane %v402, 4
      %v409 = vshrl.u32 %v283, 16
      %v411 = vrot.slane %v409, 7
      %v412 = vshll.u32 %v283, 16
      %v414 = vor.u32 %v411, %v412
      %v415 = vrot.slane %v411, 4
      %v417 = vshrl.u32 %v284, 16
      %v419 = vrot.slane %v417, 7
      %v420 = vshll.u32 %v284, 16
      %v422 = vor.u32 %v419, %v420
      %v423 = vsel %vm305, %v415, %v422
      %v424 = vrot.slane %v419, 4
      %v426 = vshrl.u32 %v285, 16
      %v428 = vrot.slane %v426, 7
      %v429 = vshll.u32 %v285, 16
      %v431 = vor.u32 %v428, %v429
      %v432 = vrot.slane %v428, 4
      %v434 = vshrl.u32 %v286, 16
      %v436 = vrot.slane %v434, 7
      %v437 = vshll.u32 %v286, 16
      %v439 = vor.u32 %v436, %v437
      %v440 = vsel %vm305, %v432, %v439
      %v441 = vrot.slane %v436, 4
      %v443 = vshrl.u32 %v287, 16
      %v445 = vrot.slane %v443, 7
      %v446 = vshll.u32 %v287, 16
      %v448 = vor.u32 %v445, %v446
      %v449 = vrot.slane %v445, 4
      %v451 = vshrl.u32 %v288, 16
      %v453 = vrot.slane %v451, 7
      %v454 = vshll.u32 %v288, 16
      %v456 = vor.u32 %v453, %v454
      %v457 = vsel %vm305, %v449, %v456
      %v458 = vrot.slane %v453, 4
      %v460 = vshrl.u32 %v289, 16
      %v462 = vrot.slane %v460, 7
      %v463 = vshll.u32 %v289, 16
      %v465 = vor.u32 %v462, %v463
      %v466 = vrot.slane %v462, 4
      %v468 = vshrl.u32 %v290, 16
      %v470 = vrot.slane %v468, 7
      %v471 = vshll.u32 %v290, 16
      %v473 = vor.u32 %v470, %v471
      %v474 = vsel %vm305, %v466, %v473
      %v475 = vrot.slane %v470, 4
      %v477 = vshrl.u32 %v291, 16
      %v479 = vrot.slane %v477, 7
      %v480 = vshll.u32 %v291, 16
      %v482 = vor.u32 %v479, %v480
      %v483 = vrot.slane %v479, 4
      %v485 = vshrl.u32 %v292, 16
      %v487 = vrot.slane %v485, 7
      %v488 = vshll.u32 %v292, 16
      %v490 = vor.u32 %v487, %v488
      %v491 = vsel %vm305, %v483, %v490
      %v492 = vrot.slane %v487, 4
      %v494 = vshrl.u32 %v293, 16
      %v496 = vrot.slane %v494, 7
      %v497 = vshll.u32 %v293, 16
      %v499 = vor.u32 %v496, %v497
      %v500 = vrot.slane %v496, 4
      %v502 = vshrl.u32 %v294, 16
      %v504 = vrot.slane %v502, 7
      %v505 = vshll.u32 %v294, 16
      %v507 = vor.u32 %v504, %v505
      %v508 = vsel %vm305, %v500, %v507
      %v509 = vrot.slane %v504, 4
      %v511 = vshrl.u32 %v295, 16
      %v513 = vrot.slane %v511, 7
      %v514 = vshll.u32 %v295, 16
      %v516 = vor.u32 %v513, %v514
      %v517 = vrot.slane %v513, 4
      %v519 = vshrl.u32 %v296, 16
      %v521 = vrot.slane %v519, 7
      %v522 = vshll.u32 %v296, 16
      %v524 = vor.u32 %v521, %v522
      %v525 = vsel %vm305, %v517, %v524
      %v526 = vrot.slane %v521, 4
      %v528 = vshrl.u32 %v297, 16
      %v530 = vrot.slane %v528, 7
      %v531 = vshll.u32 %v297, 16
      %v533 = vor.u32 %v530, %v531
      %v534 = vrot.slane %v530, 4
      %v536 = vshrl.u32 %v298, 16
      %v538 = vrot.slane %v536, 7
      %v539 = vshll.u32 %v298, 16
      %v541 = vor.u32 %v538, %v539
      %v542 = vsel %vm305, %v534, %v541
      %v543 = vrot.slane %v538, 4
      %v545 = vshrl.u32 %v299, 16
      %v547 = vrot.slane %v545, 7
      %v548 = vshll.u32 %v299, 16
      %v550 = vor.u32 %v547, %v548
      %v551 = vrot.slane %v547, 4
      %v553 = vshrl.u32 %v300, 16
      %v555 = vrot.slane %v553, 7
      %v556 = vshll.u32 %v300, 16
      %v558 = vor.u32 %v555, %v556
      %v559 = vsel %vm305, %v551, %v558
      %v560 = vrot.slane %v555, 4
      %v562 = vshrl.u32 %v301, 16
      %v564 = vrot.slane %v562, 7
      %v565 = vshll.u32 %v301, 16
      %v567 = vor.u32 %v564, %v565
      %v568 = vrot.slane %v564, 4
      %v570 = vshrl.u32 %v302, 16
      %v572 = vrot.slane %v570, 7
      %v573 = vshll.u32 %v302, 16
      %v575 = vor.u32 %v572, %v573
      %v576 = vsel %vm305, %v568, %v575
      %v577 = vrot.slane %v572, 4
      %s626 = smul.u32 %s222, 3
      %s627 = smul.addr %s626, 4
      %s628 = scalar_lea.vmem [#allocation2], %s627
      %vm629 = vcmask 27648
      %vm630 = vsmask.f32 7938
      %vm631 = vmand %vm629, %vm630
      %v632 = vld [vmem:[%s628] sm:$0xf]
      %v633 = vsel %vm631, %v312, %v632
      %634 = vst [vmem:[%s628] sm:$0xf] %v633
      %vm635 = vcmask 27648
      %636 = vst.msk [vmem:[%s628 + $0x4] sm:$0xf] %vm635, %v321
      %vm637 = vcmask 24576
      %vm638 = vmand %vm637, %vm303
      %v639 = vld [vmem:[%s628 + $0x8] sm:$0x1]
      %v640 = vsel %vm638, %v322, %v639
      %641 = vst [vmem:[%s628 + $0x8] sm:$0x1] %v640
      %v642 = vld [vmem:[%s628 + $0xc] sm:$0xf]
      %v643 = vsel %vm631, %v329, %v642
      %644 = vst [vmem:[%s628 + $0xc] sm:$0xf] %v643
      %645 = vst.msk [vmem:[%s628 + $0x10] sm:$0xf] %vm635, %v338
      %v646 = vld [vmem:[%s628 + $0x14] sm:$0x1]
      %v647 = vsel %vm638, %v339, %v646
      %648 = vst [vmem:[%s628 + $0x14] sm:$0x1] %v647
      %v649 = vld [vmem:[%s628 + $0x18] sm:$0xf]
      %v650 = vsel %vm631, %v346, %v649
      %651 = vst [vmem:[%s628 + $0x18] sm:$0xf] %v650
      %652 = vst.msk [vmem:[%s628 + $0x1c] sm:$0xf] %vm635, %v355
      %v653 = vld [vmem:[%s628 + $0x20] sm:$0x1]
      %v654 = vsel %vm638, %v356, %v653
      %655 = vst [vmem:[%s628 + $0x20] sm:$0x1] %v654
      %v656 = vld [vmem:[%s628 + $0x24] sm:$0xf]
      %v657 = vsel %vm631, %v363, %v656
      %658 = vst [vmem:[%s628 + $0x24] sm:$0xf] %v657
      %659 = vst.msk [vmem:[%s628 + $0x28] sm:$0xf] %vm635, %v372
      %v660 = vld [vmem:[%s628 + $0x2c] sm:$0x1]
      %v661 = vsel %vm638, %v373, %v660
      %662 = vst [vmem:[%s628 + $0x2c] sm:$0x1] %v661
      %v663 = vld [vmem:[%s628 + $0x30] sm:$0xf]
      %v664 = vsel %vm631, %v380, %v663
      %665 = vst [vmem:[%s628 + $0x30] sm:$0xf] %v664
      %666 = vst.msk [vmem:[%s628 + $0x34] sm:$0xf] %vm635, %v389
      %v667 = vld [vmem:[%s628 + $0x38] sm:$0x1]
      %v668 = vsel %vm638, %v390, %v667
      %669 = vst [vmem:[%s628 + $0x38] sm:$0x1] %v668
      %v670 = vld [vmem:[%s628 + $0x3c] sm:$0xf]
      %v671 = vsel %vm631, %v397, %v670
      %672 = vst [vmem:[%s628 + $0x3c] sm:$0xf] %v671
      %673 = vst.msk [vmem:[%s628 + $0x40] sm:$0xf] %vm635, %v406
      %v674 = vld [vmem:[%s628 + $0x44] sm:$0x1]
      %v675 = vsel %vm638, %v407, %v674
      %676 = vst [vmem:[%s628 + $0x44] sm:$0x1] %v675
      %v677 = vld [vmem:[%s628 + $0x48] sm:$0xf]
      %v678 = vsel %vm631, %v414, %v677
      %679 = vst [vmem:[%s628 + $0x48] sm:$0xf] %v678
      %680 = vst.msk [vmem:[%s628 + $0x4c] sm:$0xf] %vm635, %v423
      %v681 = vld [vmem:[%s628 + $0x50] sm:$0x1]
      %v682 = vsel %vm638, %v424, %v681
      %683 = vst [vmem:[%s628 + $0x50] sm:$0x1] %v682
      %v684 = vld [vmem:[%s628 + $0x54] sm:$0xf]
      %v685 = vsel %vm631, %v431, %v684
      %686 = vst [vmem:[%s628 + $0x54] sm:$0xf] %v685
      %687 = vst.msk [vmem:[%s628 + $0x58] sm:$0xf] %vm635, %v440
      %v688 = vld [vmem:[%s628 + $0x5c] sm:$0x1]
      %v689 = vsel %vm638, %v441, %v688
      %690 = vst [vmem:[%s628 + $0x5c] sm:$0x1] %v689
      %v691 = vld [vmem:[%s628 + $0x60] sm:$0xf]
      %v692 = vsel %vm631, %v448, %v691
      %693 = vst [vmem:[%s628 + $0x60] sm:$0xf] %v692
      %694 = vst.msk [vmem:[%s628 + $0x64] sm:$0xf] %vm635, %v457
      %v695 = vld [vmem:[%s628 + $0x68] sm:$0x1]
      %v696 = vsel %vm638, %v458, %v695
      %697 = vst [vmem:[%s628 + $0x68] sm:$0x1] %v696
      %v698 = vld [vmem:[%s628 + $0x6c] sm:$0xf]
      %v699 = vsel %vm631, %v465, %v698
      %700 = vst [vmem:[%s628 + $0x6c] sm:$0xf] %v699
      %701 = vst.msk [vmem:[%s628 + $0x70] sm:$0xf] %vm635, %v474
      %v702 = vld [vmem:[%s628 + $0x74] sm:$0x1]
      %v703 = vsel %vm638, %v475, %v702
      %704 = vst [vmem:[%s628 + $0x74] sm:$0x1] %v703
      %v705 = vld [vmem:[%s628 + $0x78] sm:$0xf]
      %v706 = vsel %vm631, %v482, %v705
      %707 = vst [vmem:[%s628 + $0x78] sm:$0xf] %v706
      %708 = vst.msk [vmem:[%s628 + $0x7c] sm:$0xf] %vm635, %v491
      %v709 = vld [vmem:[%s628 + $0x80] sm:$0x1]
      %v710 = vsel %vm638, %v492, %v709
      %711 = vst [vmem:[%s628 + $0x80] sm:$0x1] %v710
      %v712 = vld [vmem:[%s628 + $0x84] sm:$0xf]
      %v713 = vsel %vm631, %v499, %v712
      %714 = vst [vmem:[%s628 + $0x84] sm:$0xf] %v713
      %715 = vst.msk [vmem:[%s628 + $0x88] sm:$0xf] %vm635, %v508
      %v716 = vld [vmem:[%s628 + $0x8c] sm:$0x1]
      %v717 = vsel %vm638, %v509, %v716
      %718 = vst [vmem:[%s628 + $0x8c] sm:$0x1] %v717
      %v719 = vld [vmem:[%s628 + $0x90] sm:$0xf]
      %v720 = vsel %vm631, %v516, %v719
      %721 = vst [vmem:[%s628 + $0x90] sm:$0xf] %v720
      %722 = vst.msk [vmem:[%s628 + $0x94] sm:$0xf] %vm635, %v525
      %v723 = vld [vmem:[%s628 + $0x98] sm:$0x1]
      %v724 = vsel %vm638, %v526, %v723
      %725 = vst [vmem:[%s628 + $0x98] sm:$0x1] %v724
      %v726 = vld [vmem:[%s628 + $0x9c] sm:$0xf]
      %v727 = vsel %vm631, %v533, %v726
      %728 = vst [vmem:[%s628 + $0x9c] sm:$0xf] %v727
      %729 = vst.msk [vmem:[%s628 + $0xa0] sm:$0xf] %vm635, %v542
      %v730 = vld [vmem:[%s628 + $0xa4] sm:$0x1]
      %v731 = vsel %vm638, %v543, %v730
      %732 = vst [vmem:[%s628 + $0xa4] sm:$0x1] %v731
      %v733 = vld [vmem:[%s628 + $0xa8] sm:$0xf]
      %v734 = vsel %vm631, %v550, %v733
      %735 = vst [vmem:[%s628 + $0xa8] sm:$0xf] %v734
      %736 = vst.msk [vmem:[%s628 + $0xac] sm:$0xf] %vm635, %v559
      %v737 = vld [vmem:[%s628 + $0xb0] sm:$0x1]
      %v738 = vsel %vm638, %v560, %v737
      %739 = vst [vmem:[%s628 + $0xb0] sm:$0x1] %v738
      %v740 = vld [vmem:[%s628 + $0xb4] sm:$0xf]
      %v741 = vsel %vm631, %v567, %v740
      %742 = vst [vmem:[%s628 + $0xb4] sm:$0xf] %v741
      %743 = vst.msk [vmem:[%s628 + $0xb8] sm:$0xf] %vm635, %v576
      %v744 = vld [vmem:[%s628 + $0xbc] sm:$0x1]
      %v745 = vsel %vm638, %v577, %v744
      %746 = vst [vmem:[%s628 + $0xbc] sm:$0x1] %v745
      %v747 = vrot.slane %v307, 4
      %v748 = vrot.slane %v747, 4
      %v749 = vrot.slane %v324, 4
      %v750 = vrot.slane %v749, 4
      %v751 = vrot.slane %v341, 4
      %v752 = vrot.slane %v751, 4
      %v753 = vrot.slane %v358, 4
      %v754 = vrot.slane %v753, 4
      %v755 = vrot.slane %v375, 4
      %v756 = vrot.slane %v755, 4
      %v757 = vrot.slane %v392, 4
      %v758 = vrot.slane %v757, 4
      %v759 = vrot.slane %v409, 4
      %v760 = vrot.slane %v759, 4
      %v761 = vrot.slane %v426, 4
      %v762 = vrot.slane %v761, 4
      %v763 = vrot.slane %v443, 4
      %v764 = vrot.slane %v763, 4
      %v765 = vrot.slane %v460, 4
      %v766 = vrot.slane %v765, 4
      %v767 = vrot.slane %v477, 4
      %v768 = vrot.slane %v767, 4
      %v769 = vrot.slane %v494, 4
      %v770 = vrot.slane %v769, 4
      %v771 = vrot.slane %v511, 4
      %v772 = vrot.slane %v771, 4
      %v773 = vrot.slane %v528, 4
      %v774 = vrot.slane %v773, 4
      %v775 = vrot.slane %v545, 4
      %v776 = vrot.slane %v775, 4
      %v777 = vrot.slane %v562, 4
      %v778 = vrot.slane %v777, 4
      %v795 = vld [vmem:[%s628] sm:$0x1]
      %v796 = vsel %vm638, %v748, %v795
      %797 = vst [vmem:[%s628] sm:$0x1] %v796
      %v798 = vld [vmem:[%s628 + $0xc] sm:$0x1]
      %v799 = vsel %vm638, %v750, %v798
      %800 = vst [vmem:[%s628 + $0xc] sm:$0x1] %v799
      %v801 = vld [vmem:[%s628 + $0x18] sm:$0x1]
      %v802 = vsel %vm638, %v752, %v801
      %803 = vst [vmem:[%s628 + $0x18] sm:$0x1] %v802
      %v804 = vld [vmem:[%s628 + $0x24] sm:$0x1]
      %v805 = vsel %vm638, %v754, %v804
      %806 = vst [vmem:[%s628 + $0x24] sm:$0x1] %v805
      %v807 = vld [vmem:[%s628 + $0x30] sm:$0x1]
      %v808 = vsel %vm638, %v756, %v807
      %809 = vst [vmem:[%s628 + $0x30] sm:$0x1] %v808
      %v810 = vld [vmem:[%s628 + $0x3c] sm:$0x1]
      %v811 = vsel %vm638, %v758, %v810
      %812 = vst [vmem:[%s628 + $0x3c] sm:$0x1] %v811
      %v813 = vld [vmem:[%s628 + $0x48] sm:$0x1]
      %v814 = vsel %vm638, %v760, %v813
      %815 = vst [vmem:[%s628 + $0x48] sm:$0x1] %v814
      %v816 = vld [vmem:[%s628 + $0x54] sm:$0x1]
      %v817 = vsel %vm638, %v762, %v816
      %818 = vst [vmem:[%s628 + $0x54] sm:$0x1] %v817
      %v819 = vld [vmem:[%s628 + $0x60] sm:$0x1]
      %v820 = vsel %vm638, %v764, %v819
      %821 = vst [vmem:[%s628 + $0x60] sm:$0x1] %v820
      %v822 = vld [vmem:[%s628 + $0x6c] sm:$0x1]
      %v823 = vsel %vm638, %v766, %v822
      %824 = vst [vmem:[%s628 + $0x6c] sm:$0x1] %v823
      %v825 = vld [vmem:[%s628 + $0x78] sm:$0x1]
      %v826 = vsel %vm638, %v768, %v825
      %827 = vst [vmem:[%s628 + $0x78] sm:$0x1] %v826
      %v828 = vld [vmem:[%s628 + $0x84] sm:$0x1]
      %v829 = vsel %vm638, %v770, %v828
      %830 = vst [vmem:[%s628 + $0x84] sm:$0x1] %v829
      %v831 = vld [vmem:[%s628 + $0x90] sm:$0x1]
      %v832 = vsel %vm638, %v772, %v831
      %833 = vst [vmem:[%s628 + $0x90] sm:$0x1] %v832
      %v834 = vld [vmem:[%s628 + $0x9c] sm:$0x1]
      %v835 = vsel %vm638, %v774, %v834
      %836 = vst [vmem:[%s628 + $0x9c] sm:$0x1] %v835
      %v837 = vld [vmem:[%s628 + $0xa8] sm:$0x1]
      %v838 = vsel %vm638, %v776, %v837
      %839 = vst [vmem:[%s628 + $0xa8] sm:$0x1] %v838
      %v840 = vld [vmem:[%s628 + $0xb4] sm:$0x1]
      %v841 = vsel %vm638, %v778, %v840
      %842 = vst [vmem:[%s628 + $0xb4] sm:$0x1] %v841
      %v843 = vrot.slane %v318, 7
      %v844 = vrot.slane %v843, 4
      %v845 = vrot.slane %v335, 7
      %v846 = vrot.slane %v845, 4
      %v847 = vrot.slane %v352, 7
      %v848 = vrot.slane %v847, 4
      %v849 = vrot.slane %v369, 7
      %v850 = vrot.slane %v849, 4
      %v851 = vrot.slane %v386, 7
      %v852 = vrot.slane %v851, 4
      %v853 = vrot.slane %v403, 7
      %v854 = vrot.slane %v853, 4
      %v855 = vrot.slane %v420, 7
      %v856 = vrot.slane %v855, 4
      %v857 = vrot.slane %v437, 7
      %v858 = vrot.slane %v857, 4
      %v859 = vrot.slane %v454, 7
      %v860 = vrot.slane %v859, 4
      %v861 = vrot.slane %v471, 7
      %v862 = vrot.slane %v861, 4
      %v863 = vrot.slane %v488, 7
      %v864 = vrot.slane %v863, 4
      %v865 = vrot.slane %v505, 7
      %v866 = vrot.slane %v865, 4
      %v867 = vrot.slane %v522, 7
      %v868 = vrot.slane %v867, 4
      %v869 = vrot.slane %v539, 7
      %v870 = vrot.slane %v869, 4
      %v871 = vrot.slane %v556, 7
      %v872 = vrot.slane %v871, 4
      %v873 = vrot.slane %v573, 7
      %v874 = vrot.slane %v873, 4
      %vm891 = vmand %vm637, %vm630
      %v892 = vld [vmem:[%s628 + $0x8] sm:$0x1]
      %v893 = vsel %vm891, %v844, %v892
      %894 = vst [vmem:[%s628 + $0x8] sm:$0x1] %v893
      %v895 = vld [vmem:[%s628 + $0x14] sm:$0x1]
      %v896 = vsel %vm891, %v846, %v895
      %897 = vst [vmem:[%s628 + $0x14] sm:$0x1] %v896
      %v898 = vld [vmem:[%s628 + $0x20] sm:$0x1]
      %v899 = vsel %vm891, %v848, %v898
      %900 = vst [vmem:[%s628 + $0x20] sm:$0x1] %v899
      %v901 = vld [vmem:[%s628 + $0x2c] sm:$0x1]
      %v902 = vsel %vm891, %v850, %v901
      %903 = vst [vmem:[%s628 + $0x2c] sm:$0x1] %v902
      %v904 = vld [vmem:[%s628 + $0x38] sm:$0x1]
      %v905 = vsel %vm891, %v852, %v904
      %906 = vst [vmem:[%s628 + $0x38] sm:$0x1] %v905
      %v907 = vld [vmem:[%s628 + $0x44] sm:$0x1]
      %v908 = vsel %vm891, %v854, %v907
      %909 = vst [vmem:[%s628 + $0x44] sm:$0x1] %v908
      %v910 = vld [vmem:[%s628 + $0x50] sm:$0x1]
      %v911 = vsel %vm891, %v856, %v910
      %912 = vst [vmem:[%s628 + $0x50] sm:$0x1] %v911
      %v913 = vld [vmem:[%s628 + $0x5c] sm:$0x1]
      %v914 = vsel %vm891, %v858, %v913
      %915 = vst [vmem:[%s628 + $0x5c] sm:$0x1] %v914
      %v916 = vld [vmem:[%s628 + $0x68] sm:$0x1]
      %v917 = vsel %vm891, %v860, %v916
      %918 = vst [vmem:[%s628 + $0x68] sm:$0x1] %v917
      %v919 = vld [vmem:[%s628 + $0x74] sm:$0x1]
      %v920 = vsel %vm891, %v862, %v919
      %921 = vst [vmem:[%s628 + $0x74] sm:$0x1] %v920
      %v922 = vld [vmem:[%s628 + $0x80] sm:$0x1]
      %v923 = vsel %vm891, %v864, %v922
      %924 = vst [vmem:[%s628 + $0x80] sm:$0x1] %v923
      %v925 = vld [vmem:[%s628 + $0x8c] sm:$0x1]
      %v926 = vsel %vm891, %v866, %v925
      %927 = vst [vmem:[%s628 + $0x8c] sm:$0x1] %v926
      %v928 = vld [vmem:[%s628 + $0x98] sm:$0x1]
      %v929 = vsel %vm891, %v868, %v928
      %930 = vst [vmem:[%s628 + $0x98] sm:$0x1] %v929
      %v931 = vld [vmem:[%s628 + $0xa4] sm:$0x1]
      %v932 = vsel %vm891, %v870, %v931
      %933 = vst [vmem:[%s628 + $0xa4] sm:$0x1] %v932
      %v934 = vld [vmem:[%s628 + $0xb0] sm:$0x1]
      %v935 = vsel %vm891, %v872, %v934
      %936 = vst [vmem:[%s628 + $0xb0] sm:$0x1] %v935
      %v937 = vld [vmem:[%s628 + $0xbc] sm:$0x1]
      %v938 = vsel %vm891, %v874, %v937
      %939 = vst [vmem:[%s628 + $0xbc] sm:$0x1] %v938
      %s940 = scalar_lea.vmem [#allocation2], 24
      %v941 = vld [vmem:[%s940] sm:$0xf]
      %v942 = vld [vmem:[%s940 + $0x4] sm:$0xf]
      %v943 = vld [vmem:[%s940 + $0x8] sm:$0xf]
      %944 = vst.msk [vmem:[#allocation2] sm:$0xf] %vm635, %v941
      %945 = vst.msk [vmem:[#allocation2 + $0x4] sm:$0xf] %vm635, %v942
      %946 = vst.msk [vmem:[#allocation2 + $0x8] sm:$0xf] %vm635, %v943
      %s947 = scalar_lea.vmem [#allocation2], 180
      %v948 = vld [vmem:[%s947] sm:$0xf]
      %v949 = vld [vmem:[%s947 + $0x4] sm:$0xf]
      %v950 = vld [vmem:[%s947 + $0x8] sm:$0xf]
      %s951 = scalar_lea.vmem [#allocation2], 204
      %952 = vst.msk [vmem:[%s951] sm:$0xf] %vm635, %v948
      %953 = vst.msk [vmem:[%s951 + $0x4] sm:$0xf] %vm635, %v949
      %954 = vst.msk [vmem:[%s951 + $0x8] sm:$0xf] %vm635, %v950
      %s955 = smul.u32 0, 3
      %s956 = smul.addr %s955, 4
      %s957 = scalar_lea.vmem [#allocation2], %s956
      %v958 = vld [vmem:[%s957] sm:$0xf]
      %v959 = vld [vmem:[%s957 + $0x4] sm:$0xf]
      %v960 = vld [vmem:[%s957 + $0xc] sm:$0xf]
      %v961 = vld [vmem:[%s957 + $0x10] sm:$0xf]
      %v962 = vld [vmem:[%s957 + $0x18] sm:$0xf]
      %v963 = vld [vmem:[%s957 + $0x1c] sm:$0xf]
      %v964 = vld [vmem:[%s957 + $0x24] sm:$0xf]
      %v965 = vld [vmem:[%s957 + $0x28] sm:$0xf]
      %v966 = vld [vmem:[%s957 + $0x30] sm:$0xf]
      %v967 = vld [vmem:[%s957 + $0x34] sm:$0xf]
      %v968 = vld [vmem:[%s957 + $0x3c] sm:$0xf]
      %v969 = vld [vmem:[%s957 + $0x40] sm:$0xf]
      %v970 = vld [vmem:[%s957 + $0x48] sm:$0xf]
      %v971 = vld [vmem:[%s957 + $0x4c] sm:$0xf]
      %v972 = vld [vmem:[%s957 + $0x54] sm:$0xf]
      %v973 = vld [vmem:[%s957 + $0x58] sm:$0xf]
      %v974 = vld [vmem:[%s957 + $0x60] sm:$0xf]
      %v975 = vld [vmem:[%s957 + $0x64] sm:$0xf]
      %v976 = vld [vmem:[%s957 + $0x6c] sm:$0xf]
      %v977 = vld [vmem:[%s957 + $0x70] sm:$0xf]
      %v978 = vld [vmem:[%s957 + $0x78] sm:$0xf]
      %v979 = vld [vmem:[%s957 + $0x7c] sm:$0xf]
      %v980 = vld [vmem:[%s957 + $0x84] sm:$0xf]
      %v981 = vld [vmem:[%s957 + $0x88] sm:$0xf]
      %v982 = vld [vmem:[%s957 + $0x90] sm:$0xf]
      %v983 = vld [vmem:[%s957 + $0x94] sm:$0xf]
      %v984 = vld [vmem:[%s957 + $0x9c] sm:$0xf]
      %v985 = vld [vmem:[%s957 + $0xa0] sm:$0xf]
      %v986 = vld [vmem:[%s957 + $0xa8] sm:$0xf]
      %v987 = vld [vmem:[%s957 + $0xac] sm:$0xf]
      %v988 = vld [vmem:[%s957 + $0xb4] sm:$0xf]
      %v989 = vld [vmem:[%s957 + $0xb8] sm:$0xf]
      %v990 = vld [vmem:[%s1] sm:$0x3]
      %v991 = vld [vmem:[%s957 + $0x8] sm:$0x1]
      %v992 = vld [vmem:[%s957 + $0x14] sm:$0x1]
      %v993 = vld [vmem:[%s957 + $0x20] sm:$0x1]
      %v994 = vld [vmem:[%s957 + $0x2c] sm:$0x1]
      %v995 = vld [vmem:[%s957 + $0x38] sm:$0x1]
      %v996 = vld [vmem:[%s957 + $0x44] sm:$0x1]
      %v997 = vld [vmem:[%s957 + $0x50] sm:$0x1]
      %v998 = vld [vmem:[%s957 + $0x5c] sm:$0x1]
      %v999 = vld [vmem:[%s957 + $0x68] sm:$0x1]
      %v1000 = vld [vmem:[%s957 + $0x74] sm:$0x1]
      %v1001 = vld [vmem:[%s957 + $0x80] sm:$0x1]
      %v1002 = vld [vmem:[%s957 + $0x8c] sm:$0x1]
      %v1003 = vld [vmem:[%s957 + $0x98] sm:$0x1]
      %v1004 = vld [vmem:[%s957 + $0xa4] sm:$0x1]
      %v1005 = vld [vmem:[%s957 + $0xb0] sm:$0x1]
      %v1006 = vld [vmem:[%s957 + $0xbc] sm:$0x1]
      %vm1007 = vsmask.f32 3328
      %vm1008 = vsmask.f32 7440
      %vm1009 = vmor %vm1007, %vm1008
      %v1011 = vshrl.u32 %v958, 16
      %v1013 = vrot.slane %v1011, 4
      %v1014 = vshll.u32 %v958, 16
      %v1016 = vrot.slane %v1014, 5
      %v1017 = vor.u32 %v1013, %v1016
      %v1018 = vrot.slane %v1017, 4
      %v1020 = vshll.u32 %v959, 16
      %v1022 = vrot.slane %v1020, 5
      %v1023 = vsel %vm1009, %v1018, %v1022
      %v1024 = vshrl.u32 %v959, 16
      %v1026 = vrot.slane %v1024, 4
      %v1027 = vor.u32 %v1026, %v1022
      %v1028 = vrot.slane %v1027, 4
      %v1030 = vshll.u32 %v991, 16
      %v1032 = vrot.slane %v1030, 5
      %v1033 = vsel %vm1009, %v1028, %v1032
      %v1035 = vshrl.u32 %v960, 16
      %v1037 = vrot.slane %v1035, 4
      %v1038 = vshll.u32 %v960, 16
      %v1040 = vrot.slane %v1038, 5
      %v1041 = vor.u32 %v1037, %v1040
      %v1042 = vrot.slane %v1041, 4
      %v1044 = vshll.u32 %v961, 16
      %v1046 = vrot.slane %v1044, 5
      %v1047 = vsel %vm1009, %v1042, %v1046
      %v1048 = vshrl.u32 %v961, 16
      %v1050 = vrot.slane %v1048, 4
      %v1051 = vor.u32 %v1050, %v1046
      %v1052 = vrot.slane %v1051, 4
      %v1054 = vshll.u32 %v992, 16
      %v1056 = vrot.slane %v1054, 5
      %v1057 = vsel %vm1009, %v1052, %v1056
      %v1059 = vshrl.u32 %v962, 16
      %v1061 = vrot.slane %v1059, 4
      %v1062 = vshll.u32 %v962, 16
      %v1064 = vrot.slane %v1062, 5
      %v1065 = vor.u32 %v1061, %v1064
      %v1066 = vrot.slane %v1065, 4
      %v1068 = vshll.u32 %v963, 16
      %v1070 = vrot.slane %v1068, 5
      %v1071 = vsel %vm1009, %v1066, %v1070
      %v1072 = vshrl.u32 %v963, 16
      %v1074 = vrot.slane %v1072, 4
      %v1075 = vor.u32 %v1074, %v1070
      %v1076 = vrot.slane %v1075, 4
      %v1078 = vshll.u32 %v993, 16
      %v1080 = vrot.slane %v1078, 5
      %v1081 = vsel %vm1009, %v1076, %v1080
      %v1083 = vshrl.u32 %v964, 16
      %v1085 = vrot.slane %v1083, 4
      %v1086 = vshll.u32 %v964, 16
      %v1088 = vrot.slane %v1086, 5
      %v1089 = vor.u32 %v1085, %v1088
      %v1090 = vrot.slane %v1089, 4
      %v1092 = vshll.u32 %v965, 16
      %v1094 = vrot.slane %v1092, 5
      %v1095 = vsel %vm1009, %v1090, %v1094
      %v1096 = vshrl.u32 %v965, 16
      %v1098 = vrot.slane %v1096, 4
      %v1099 = vor.u32 %v1098, %v1094
      %v1100 = vrot.slane %v1099, 4
      %v1102 = vshll.u32 %v994, 16
      %v1104 = vrot.slane %v1102, 5
      %v1105 = vsel %vm1009, %v1100, %v1104
      %v1107 = vshrl.u32 %v966, 16
      %v1109 = vrot.slane %v1107, 4
      %v1110 = vshll.u32 %v966, 16
      %v1112 = vrot.slane %v1110, 5
      %v1113 = vor.u32 %v1109, %v1112
      %v1114 = vrot.slane %v1113, 4
      %v1116 = vshll.u32 %v967, 16
      %v1118 = vrot.slane %v1116, 5
      %v1119 = vsel %vm1009, %v1114, %v1118
      %v1120 = vshrl.u32 %v967, 16
      %v1122 = vrot.slane %v1120, 4
      %v1123 = vor.u32 %v1122, %v1118
      %v1124 = vrot.slane %v1123, 4
      %v1126 = vshll.u32 %v995, 16
      %v1128 = vrot.slane %v1126, 5
      %v1129 = vsel %vm1009, %v1124, %v1128
      %v1131 = vshrl.u32 %v968, 16
      %v1133 = vrot.slane %v1131, 4
      %v1134 = vshll.u32 %v968, 16
      %v1136 = vrot.slane %v1134, 5
      %v1137 = vor.u32 %v1133, %v1136
      %v1138 = vrot.slane %v1137, 4
      %v1140 = vshll.u32 %v969, 16
      %v1142 = vrot.slane %v1140, 5
      %v1143 = vsel %vm1009, %v1138, %v1142
      %v1144 = vshrl.u32 %v969, 16
      %v1146 = vrot.slane %v1144, 4
      %v1147 = vor.u32 %v1146, %v1142
      %v1148 = vrot.slane %v1147, 4
      %v1150 = vshll.u32 %v996, 16
      %v1152 = vrot.slane %v1150, 5
      %v1153 = vsel %vm1009, %v1148, %v1152
      %v1155 = vshrl.u32 %v970, 16
      %v1157 = vrot.slane %v1155, 4
      %v1158 = vshll.u32 %v970, 16
      %v1160 = vrot.slane %v1158, 5
      %v1161 = vor.u32 %v1157, %v1160
      %v1162 = vrot.slane %v1161, 4
      %v1164 = vshll.u32 %v971, 16
      %v1166 = vrot.slane %v1164, 5
      %v1167 = vsel %vm1009, %v1162, %v1166
      %v1168 = vshrl.u32 %v971, 16
      %v1170 = vrot.slane %v1168, 4
      %v1171 = vor.u32 %v1170, %v1166
      %v1172 = vrot.slane %v1171, 4
      %v1174 = vshll.u32 %v997, 16
      %v1176 = vrot.slane %v1174, 5
      %v1177 = vsel %vm1009, %v1172, %v1176
      %v1179 = vshrl.u32 %v972, 16
      %v1181 = vrot.slane %v1179, 4
      %v1182 = vshll.u32 %v972, 16
      %v1184 = vrot.slane %v1182, 5
      %v1185 = vor.u32 %v1181, %v1184
      %v1186 = vrot.slane %v1185, 4
      %v1188 = vshll.u32 %v973, 16
      %v1190 = vrot.slane %v1188, 5
      %v1191 = vsel %vm1009, %v1186, %v1190
      %v1192 = vshrl.u32 %v973, 16
      %v1194 = vrot.slane %v1192, 4
      %v1195 = vor.u32 %v1194, %v1190
      %v1196 = vrot.slane %v1195, 4
      %v1198 = vshll.u32 %v998, 16
      %v1200 = vrot.slane %v1198, 5
      %v1201 = vsel %vm1009, %v1196, %v1200
      %v1203 = vshrl.u32 %v974, 16
      %v1205 = vrot.slane %v1203, 4
      %v1206 = vshll.u32 %v974, 16
      %v1208 = vrot.slane %v1206, 5
      %v1209 = vor.u32 %v1205, %v1208
      %v1210 = vrot.slane %v1209, 4
      %v1212 = vshll.u32 %v975, 16
      %v1214 = vrot.slane %v1212, 5
      %v1215 = vsel %vm1009, %v1210, %v1214
      %v1216 = vshrl.u32 %v975, 16
      %v1218 = vrot.slane %v1216, 4
      %v1219 = vor.u32 %v1218, %v1214
      %v1220 = vrot.slane %v1219, 4
      %v1222 = vshll.u32 %v999, 16
      %v1224 = vrot.slane %v1222, 5
      %v1225 = vsel %vm1009, %v1220, %v1224
      %v1227 = vshrl.u32 %v976, 16
      %v1229 = vrot.slane %v1227, 4
      %v1230 = vshll.u32 %v976, 16
      %v1232 = vrot.slane %v1230, 5
      %v1233 = vor.u32 %v1229, %v1232
      %v1234 = vrot.slane %v1233, 4
      %v1236 = vshll.u32 %v977, 16
      %v1238 = vrot.slane %v1236, 5
      %v1239 = vsel %vm1009, %v1234, %v1238
      %v1240 = vshrl.u32 %v977, 16
      %v1242 = vrot.slane %v1240, 4
      %v1243 = vor.u32 %v1242, %v1238
      %v1244 = vrot.slane %v1243, 4
      %v1246 = vshll.u32 %v1000, 16
      %v1248 = vrot.slane %v1246, 5
      %v1249 = vsel %vm1009, %v1244, %v1248
      %v1251 = vshrl.u32 %v978, 16
      %v1253 = vrot.slane %v1251, 4
      %v1254 = vshll.u32 %v978, 16
      %v1256 = vrot.slane %v1254, 5
      %v1257 = vor.u32 %v1253, %v1256
      %v1258 = vrot.slane %v1257, 4
      %v1260 = vshll.u32 %v979, 16
      %v1262 = vrot.slane %v1260, 5
      %v1263 = vsel %vm1009, %v1258, %v1262
      %v1264 = vshrl.u32 %v979, 16
      %v1266 = vrot.slane %v1264, 4
      %v1267 = vor.u32 %v1266, %v1262
      %v1268 = vrot.slane %v1267, 4
      %v1270 = vshll.u32 %v1001, 16
      %v1272 = vrot.slane %v1270, 5
      %v1273 = vsel %vm1009, %v1268, %v1272
      %v1275 = vshrl.u32 %v980, 16
      %v1277 = vrot.slane %v1275, 4
      %v1278 = vshll.u32 %v980, 16
      %v1280 = vrot.slane %v1278, 5
      %v1281 = vor.u32 %v1277, %v1280
      %v1282 = vrot.slane %v1281, 4
      %v1284 = vshll.u32 %v981, 16
      %v1286 = vrot.slane %v1284, 5
      %v1287 = vsel %vm1009, %v1282, %v1286
      %v1288 = vshrl.u32 %v981, 16
      %v1290 = vrot.slane %v1288, 4
      %v1291 = vor.u32 %v1290, %v1286
      %v1292 = vrot.slane %v1291, 4
      %v1294 = vshll.u32 %v1002, 16
      %v1296 = vrot.slane %v1294, 5
      %v1297 = vsel %vm1009, %v1292, %v1296
      %v1299 = vshrl.u32 %v982, 16
      %v1301 = vrot.slane %v1299, 4
      %v1302 = vshll.u32 %v982, 16
      %v1304 = vrot.slane %v1302, 5
      %v1305 = vor.u32 %v1301, %v1304
      %v1306 = vrot.slane %v1305, 4
      %v1308 = vshll.u32 %v983, 16
      %v1310 = vrot.slane %v1308, 5
      %v1311 = vsel %vm1009, %v1306, %v1310
      %v1312 = vshrl.u32 %v983, 16
      %v1314 = vrot.slane %v1312, 4
      %v1315 = vor.u32 %v1314, %v1310
      %v1316 = vrot.slane %v1315, 4
      %v1318 = vshll.u32 %v1003, 16
      %v1320 = vrot.slane %v1318, 5
      %v1321 = vsel %vm1009, %v1316, %v1320
      %v1323 = vshrl.u32 %v984, 16
      %v1325 = vrot.slane %v1323, 4
      %v1326 = vshll.u32 %v984, 16
      %v1328 = vrot.slane %v1326, 5
      %v1329 = vor.u32 %v1325, %v1328
      %v1330 = vrot.slane %v1329, 4
      %v1332 = vshll.u32 %v985, 16
      %v1334 = vrot.slane %v1332, 5
      %v1335 = vsel %vm1009, %v1330, %v1334
      %v1336 = vshrl.u32 %v985, 16
      %v1338 = vrot.slane %v1336, 4
      %v1339 = vor.u32 %v1338, %v1334
      %v1340 = vrot.slane %v1339, 4
      %v1342 = vshll.u32 %v1004, 16
      %v1344 = vrot.slane %v1342, 5
      %v1345 = vsel %vm1009, %v1340, %v1344
      %v1347 = vshrl.u32 %v986, 16
      %v1349 = vrot.slane %v1347, 4
      %v1350 = vshll.u32 %v986, 16
      %v1352 = vrot.slane %v1350, 5
      %v1353 = vor.u32 %v1349, %v1352
      %v1354 = vrot.slane %v1353, 4
      %v1356 = vshll.u32 %v987, 16
      %v1358 = vrot.slane %v1356, 5
      %v1359 = vsel %vm1009, %v1354, %v1358
      %v1360 = vshrl.u32 %v987, 16
      %v1362 = vrot.slane %v1360, 4
      %v1363 = vor.u32 %v1362, %v1358
      %v1364 = vrot.slane %v1363, 4
      %v1366 = vshll.u32 %v1005, 16
      %v1368 = vrot.slane %v1366, 5
      %v1369 = vsel %vm1009, %v1364, %v1368
      %v1371 = vshrl.u32 %v988, 16
      %v1373 = vrot.slane %v1371, 4
      %v1374 = vshll.u32 %v988, 16
      %v1376 = vrot.slane %v1374, 5
      %v1377 = vor.u32 %v1373, %v1376
      %v1378 = vrot.slane %v1377, 4
      %v1380 = vshll.u32 %v989, 16
      %v1382 = vrot.slane %v1380, 5
      %v1383 = vsel %vm1009, %v1378, %v1382
      %v1384 = vshrl.u32 %v989, 16
      %v1386 = vrot.slane %v1384, 4
      %v1387 = vor.u32 %v1386, %v1382
      %v1388 = vrot.slane %v1387, 4
      %v1390 = vshll.u32 %v1006, 16
      %v1392 = vrot.slane %v1390, 5
      %v1393 = vsel %vm1009, %v1388, %v1392
      %s1394 = scalar_lea.vmem %s1, 2
      %v1395 = vld [vmem:[%s1394] sm:$0x3]
      %v1396 = vunpack.c.l.b16 %v1023
      %v1397 = vunpack.c.l.b16 %v1033
      %v1398 = vunpack.c.l.b16 %v1047
      %v1399 = vunpack.c.l.b16 %v1057
      %v1400 = vunpack.c.l.b16 %v1071
      %v1401 = vunpack.c.l.b16 %v1081
      %v1402 = vunpack.c.l.b16 %v1095
      %v1403 = vunpack.c.l.b16 %v1105
      %v1404 = vunpack.c.l.b16 %v1119
      %v1405 = vunpack.c.l.b16 %v1129
      %v1406 = vunpack.c.l.b16 %v1143
      %v1407 = vunpack.c.l.b16 %v1153
      %v1408 = vunpack.c.l.b16 %v1167
      %v1409 = vunpack.c.l.b16 %v1177
      %v1410 = vunpack.c.l.b16 %v1191
      %v1411 = vunpack.c.l.b16 %v1201
      %v1412 = vunpack.c.l.b16 %v1215
      %v1413 = vunpack.c.l.b16 %v1225
      %v1414 = vunpack.c.l.b16 %v1239
      %v1415 = vunpack.c.l.b16 %v1249
      %v1416 = vunpack.c.l.b16 %v1263
      %v1417 = vunpack.c.l.b16 %v1273
      %v1418 = vunpack.c.l.b16 %v1287
      %v1419 = vunpack.c.l.b16 %v1297
      %v1420 = vunpack.c.l.b16 %v1311
      %v1421 = vunpack.c.l.b16 %v1321
      %v1422 = vunpack.c.l.b16 %v1335
      %v1423 = vunpack.c.l.b16 %v1345
      %v1424 = vunpack.c.l.b16 %v1359
      %v1425 = vunpack.c.l.b16 %v1369
      %v1426 = vunpack.c.l.b16 %v1383
      %v1427 = vunpack.c.l.b16 %v1393
      %v1428 = vpack.c.b16 %v1397, %v1396
      %v1429 = vpack.c.b16 %v1399, %v1398
      %v1430 = vpack.c.b16 %v1401, %v1400
      %v1431 = vpack.c.b16 %v1403, %v1402
      %v1432 = vpack.c.b16 %v1405, %v1404
      %v1433 = vpack.c.b16 %v1407, %v1406
      %v1434 = vpack.c.b16 %v1409, %v1408
      %v1435 = vpack.c.b16 %v1411, %v1410
      %v1436 = vpack.c.b16 %v1413, %v1412
      %v1437 = vpack.c.b16 %v1415, %v1414
      %v1438 = vpack.c.b16 %v1417, %v1416
      %v1439 = vpack.c.b16 %v1419, %v1418
      %v1440 = vpack.c.b16 %v1421, %v1420
      %v1441 = vpack.c.b16 %v1423, %v1422
      %v1442 = vpack.c.b16 %v1425, %v1424
      %v1443 = vpack.c.b16 %v1427, %v1426
      %vm1444 = vcmask 31744
      %v1446 = vsel %vm1444, %v1428, 0
      %v1449 = vsel %vm1444, %v1429, 0
      %v1452 = vsel %vm1444, %v1430, 0
      %v1455 = vsel %vm1444, %v1431, 0
      %v1458 = vsel %vm1444, %v1432, 0
      %v1461 = vsel %vm1444, %v1433, 0
      %v1464 = vsel %vm1444, %v1434, 0
      %v1467 = vsel %vm1444, %v1435, 0
      %v1470 = vsel %vm1444, %v1436, 0
      %v1473 = vsel %vm1444, %v1437, 0
      %v1476 = vsel %vm1444, %v1438, 0
      %v1479 = vsel %vm1444, %v1439, 0
      %v1482 = vsel %vm1444, %v1440, 0
      %v1485 = vsel %vm1444, %v1441, 0
      %v1488 = vsel %vm1444, %v1442, 0
      %v1491 = vsel %vm1444, %v1443, 0
      %vm1493 = vcmask 1041408
      %v1495 = vsel %vm1493, %v1395, 0
      %1497 = vmatprep.subr.bf16.mxu0 0
      %1498 = vmatpush1.bf16.msra.mxu0 0
      %1499 = vmatprep.subr.bf16.mxu0 0
      %1500 = vmatpush1.bf16.msra.mxu0 0
      %1501 = vmatprep.subr.bf16.mxu0 0
      %1502 = vmatpush1.bf16.msra.mxu0 0
      %1503 = vmatprep.subr.bf16.mxu0 0
      %1504 = vmatpush1.bf16.msra.mxu0 0
      %1505 = vmatprep.subr.bf16.mxu0 0
      %1506 = vmatpush1.bf16.msra.mxu0 0
      %1507 = vmatprep.subr.bf16.mxu0 0
      %1508 = vmatpush1.bf16.msra.mxu0 0
      %1509 = vmatprep.subr.bf16.mxu0 0
      %1510 = vmatpush1.bf16.msra.mxu0 0
      %1511 = vmatprep.subr.bf16.mxu0 0
      %1512 = vmatpush1.bf16.msra.mxu0 %v1495
      %1513 = vmatprep.subr.bf16.mxu0 0
      %1514 = vmatpush2.bf16.msra.mxu0 0
      %1515 = vmatprep.subr.bf16.mxu0 0
      %1516 = vmatpush2.bf16.msra.mxu0 0
      %1517 = vmatprep.subr.bf16.mxu0 0
      %1518 = vmatpush2.bf16.msra.mxu0 0
      %1519 = vmatprep.subr.bf16.mxu0 0
      %1520 = vmatpush2.bf16.msra.mxu0 0
      %1521 = vmatprep.subr.bf16.mxu0 0
      %1522 = vmatpush2.bf16.msra.mxu0 0
      %1523 = vmatprep.subr.bf16.mxu0 0
      %1524 = vmatpush2.bf16.msra.mxu0 0
      %1525 = vmatprep.subr.bf16.mxu0 0
      %1526 = vmatpush2.bf16.msra.mxu0 0
      %1527 = vmatprep.subr.bf16.mxu0 0
      %1528 = vmatpush2.bf16.msra.mxu0 0
      %1529 = vmatprep.mubr.bf16.mxu0 0
      %1530 = vmatmul.mubr.bf16.gmra.mxu0 %v1446
      %v1531 = vpop.f32.mrf.mxu0
      %v1532 = vadd.f32 0.0, %v1531
      %v1533 = vpop.f32.mrf.mxu0
      %v1534 = vpop.f32.mrf.mxu0
      %v1535 = vadd.f32 0.0, %v1534
      %v1536 = vpop.f32.mrf.mxu0
      %1537 = vmatprep.mubr.bf16.mxu0 0
      %1538 = vmatmul.mubr.bf16.gmra.mxu0 %v1449
      %v1539 = vpop.f32.mrf.mxu0
      %v1540 = vadd.f32 0.0, %v1539
      %v1541 = vpop.f32.mrf.mxu0
      %v1542 = vpop.f32.mrf.mxu0
      %v1543 = vadd.f32 0.0, %v1542
      %v1544 = vpop.f32.mrf.mxu0
      %1545 = vmatprep.mubr.bf16.mxu0 0
      %1546 = vmatmul.mubr.bf16.gmra.mxu0 %v1452
      %v1547 = vpop.f32.mrf.mxu0
      %v1548 = vadd.f32 0.0, %v1547
      %v1549 = vpop.f32.mrf.mxu0
      %v1550 = vpop.f32.mrf.mxu0
      %v1551 = vadd.f32 0.0, %v1550
      %v1552 = vpop.f32.mrf.mxu0
      %1553 = vmatprep.mubr.bf16.mxu0 0
      %1554 = vmatmul.mubr.bf16.gmra.mxu0 %v1455
      %v1555 = vpop.f32.mrf.mxu0
      %v1556 = vadd.f32 0.0, %v1555
      %v1557 = vpop.f32.mrf.mxu0
      %v1558 = vpop.f32.mrf.mxu0
      %v1559 = vadd.f32 0.0, %v1558
      %v1560 = vpop.f32.mrf.mxu0
      %1561 = vmatprep.mubr.bf16.mxu0 0
      %1562 = vmatmul.mubr.bf16.gmra.mxu0 %v1458
      %v1563 = vpop.f32.mrf.mxu0
      %v1564 = vadd.f32 0.0, %v1563
      %v1565 = vpop.f32.mrf.mxu0
      %v1566 = vpop.f32.mrf.mxu0
      %v1567 = vadd.f32 0.0, %v1566
      %v1568 = vpop.f32.mrf.mxu0
      %1569 = vmatprep.mubr.bf16.mxu0 0
      %1570 = vmatmul.mubr.bf16.gmra.mxu0 %v1461
      %v1571 = vpop.f32.mrf.mxu0
      %v1572 = vadd.f32 0.0, %v1571
      %v1573 = vpop.f32.mrf.mxu0
      %v1574 = vpop.f32.mrf.mxu0
      %v1575 = vadd.f32 0.0, %v1574
      %v1576 = vpop.f32.mrf.mxu0
      %1577 = vmatprep.mubr.bf16.mxu0 0
      %1578 = vmatmul.mubr.bf16.gmra.mxu0 %v1464
      %v1579 = vpop.f32.mrf.mxu0
      %v1580 = vadd.f32 0.0, %v1579
      %v1581 = vpop.f32.mrf.mxu0
      %v1582 = vpop.f32.mrf.mxu0
      %v1583 = vadd.f32 0.0, %v1582
      %v1584 = vpop.f32.mrf.mxu0
      %1585 = vmatprep.mubr.bf16.mxu0 0
      %1586 = vmatmul.mubr.bf16.gmra.mxu0 %v1467
      %v1587 = vpop.f32.mrf.mxu0
      %v1588 = vadd.f32 0.0, %v1587
      %v1589 = vpop.f32.mrf.mxu0
      %v1590 = vpop.f32.mrf.mxu0
      %v1591 = vadd.f32 0.0, %v1590
      %v1592 = vpop.f32.mrf.mxu0
      %1593 = vmatprep.mubr.bf16.mxu0 0
      %1594 = vmatmul.mubr.bf16.gmra.mxu0 %v1470
      %v1595 = vpop.f32.mrf.mxu0
      %v1596 = vadd.f32 0.0, %v1595
      %v1597 = vpop.f32.mrf.mxu0
      %v1598 = vpop.f32.mrf.mxu0
      %v1599 = vadd.f32 0.0, %v1598
      %v1600 = vpop.f32.mrf.mxu0
      %1601 = vmatprep.mubr.bf16.mxu0 0
      %1602 = vmatmul.mubr.bf16.gmra.mxu0 %v1473
      %v1603 = vpop.f32.mrf.mxu0
      %v1604 = vadd.f32 0.0, %v1603
      %v1605 = vpop.f32.mrf.mxu0
      %v1606 = vpop.f32.mrf.mxu0
      %v1607 = vadd.f32 0.0, %v1606
      %v1608 = vpop.f32.mrf.mxu0
      %1609 = vmatprep.mubr.bf16.mxu0 0
      %1610 = vmatmul.mubr.bf16.gmra.mxu0 %v1476
      %v1611 = vpop.f32.mrf.mxu0
      %v1612 = vadd.f32 0.0, %v1611
      %v1613 = vpop.f32.mrf.mxu0
      %v1614 = vpop.f32.mrf.mxu0
      %v1615 = vadd.f32 0.0, %v1614
      %v1616 = vpop.f32.mrf.mxu0
      %1617 = vmatprep.mubr.bf16.mxu0 0
      %1618 = vmatmul.mubr.bf16.gmra.mxu0 %v1479
      %v1619 = vpop.f32.mrf.mxu0
      %v1620 = vadd.f32 0.0, %v1619
      %v1621 = vpop.f32.mrf.mxu0
      %v1622 = vpop.f32.mrf.mxu0
      %v1623 = vadd.f32 0.0, %v1622
      %v1624 = vpop.f32.mrf.mxu0
      %1625 = vmatprep.mubr.bf16.mxu0 0
      %1626 = vmatmul.mubr.bf16.gmra.mxu0 %v1482
      %v1627 = vpop.f32.mrf.mxu0
      %v1628 = vadd.f32 0.0, %v1627
      %v1629 = vpop.f32.mrf.mxu0
      %v1630 = vpop.f32.mrf.mxu0
      %v1631 = vadd.f32 0.0, %v1630
      %v1632 = vpop.f32.mrf.mxu0
      %1633 = vmatprep.mubr.bf16.mxu0 0
      %1634 = vmatmul.mubr.bf16.gmra.mxu0 %v1485
      %v1635 = vpop.f32.mrf.mxu0
      %v1636 = vadd.f32 0.0, %v1635
      %v1637 = vpop.f32.mrf.mxu0
      %v1638 = vpop.f32.mrf.mxu0
      %v1639 = vadd.f32 0.0, %v1638
      %v1640 = vpop.f32.mrf.mxu0
      %1641 = vmatprep.mubr.bf16.mxu0 0
      %1642 = vmatmul.mubr.bf16.gmra.mxu0 %v1488
      %v1643 = vpop.f32.mrf.mxu0
      %v1644 = vadd.f32 0.0, %v1643
      %v1645 = vpop.f32.mrf.mxu0
      %v1646 = vpop.f32.mrf.mxu0
      %v1647 = vadd.f32 0.0, %v1646
      %v1648 = vpop.f32.mrf.mxu0
      %1649 = vmatprep.mubr.bf16.mxu0 0
      %1650 = vmatmul.mubr.bf16.gmra.mxu0 %v1491
      %v1651 = vpop.f32.mrf.mxu0
      %v1652 = vadd.f32 0.0, %v1651
      %v1653 = vpop.f32.mrf.mxu0
      %v1654 = vpop.f32.mrf.mxu0
      %v1655 = vadd.f32 0.0, %v1654
      %v1656 = vpop.f32.mrf.mxu0
      %1657 = vdwg.mxu0
      %v1690 = vunpack.c.l.b16 %v958
      %v1691 = vunpack.c.l.b16 %v959
      %v1692 = vunpack.c.l.b16 %v960
      %v1693 = vunpack.c.l.b16 %v961
      %v1694 = vunpack.c.l.b16 %v962
      %v1695 = vunpack.c.l.b16 %v963
      %v1696 = vunpack.c.l.b16 %v964
      %v1697 = vunpack.c.l.b16 %v965
      %v1698 = vunpack.c.l.b16 %v966
      %v1699 = vunpack.c.l.b16 %v967
      %v1700 = vunpack.c.l.b16 %v968
      %v1701 = vunpack.c.l.b16 %v969
      %v1702 = vunpack.c.l.b16 %v970
      %v1703 = vunpack.c.l.b16 %v971
      %v1704 = vunpack.c.l.b16 %v972
      %v1705 = vunpack.c.l.b16 %v973
      %v1706 = vunpack.c.l.b16 %v974
      %v1707 = vunpack.c.l.b16 %v975
      %v1708 = vunpack.c.l.b16 %v976
      %v1709 = vunpack.c.l.b16 %v977
      %v1710 = vunpack.c.l.b16 %v978
      %v1711 = vunpack.c.l.b16 %v979
      %v1712 = vunpack.c.l.b16 %v980
      %v1713 = vunpack.c.l.b16 %v981
      %v1714 = vunpack.c.l.b16 %v982
      %v1715 = vunpack.c.l.b16 %v983
      %v1716 = vunpack.c.l.b16 %v984
      %v1717 = vunpack.c.l.b16 %v985
      %v1718 = vunpack.c.l.b16 %v986
      %v1719 = vunpack.c.l.b16 %v987
      %v1720 = vunpack.c.l.b16 %v988
      %v1721 = vunpack.c.l.b16 %v989
      %v1722 = vpack.c.b16 %v1691, %v1690
      %v1723 = vpack.c.b16 %v1693, %v1692
      %v1724 = vpack.c.b16 %v1695, %v1694
      %v1725 = vpack.c.b16 %v1697, %v1696
      %v1726 = vpack.c.b16 %v1699, %v1698
      %v1727 = vpack.c.b16 %v1701, %v1700
      %v1728 = vpack.c.b16 %v1703, %v1702
      %v1729 = vpack.c.b16 %v1705, %v1704
      %v1730 = vpack.c.b16 %v1707, %v1706
      %v1731 = vpack.c.b16 %v1709, %v1708
      %v1732 = vpack.c.b16 %v1711, %v1710
      %v1733 = vpack.c.b16 %v1713, %v1712
      %v1734 = vpack.c.b16 %v1715, %v1714
      %v1735 = vpack.c.b16 %v1717, %v1716
      %v1736 = vpack.c.b16 %v1719, %v1718
      %v1737 = vpack.c.b16 %v1721, %v1720
      %v1739 = vsel %vm1444, %v1722, 0
      %v1742 = vsel %vm1444, %v1723, 0
      %v1745 = vsel %vm1444, %v1724, 0
      %v1748 = vsel %vm1444, %v1725, 0
      %v1751 = vsel %vm1444, %v1726, 0
      %v1754 = vsel %vm1444, %v1727, 0
      %v1757 = vsel %vm1444, %v1728, 0
      %v1760 = vsel %vm1444, %v1729, 0
      %v1763 = vsel %vm1444, %v1730, 0
      %v1766 = vsel %vm1444, %v1731, 0
      %v1769 = vsel %vm1444, %v1732, 0
      %v1772 = vsel %vm1444, %v1733, 0
      %v1775 = vsel %vm1444, %v1734, 0
      %v1778 = vsel %vm1444, %v1735, 0
      %v1781 = vsel %vm1444, %v1736, 0
      %v1784 = vsel %vm1444, %v1737, 0
      %v1787 = vsel %vm1493, %v990, 0
      %1789 = vmatprep.subr.bf16.mxu0 0
      %1790 = vmatpush1.bf16.msra.mxu0 0
      %1791 = vmatprep.subr.bf16.mxu0 0
      %1792 = vmatpush1.bf16.msra.mxu0 0
      %1793 = vmatprep.subr.bf16.mxu0 0
      %1794 = vmatpush1.bf16.msra.mxu0 0
      %1795 = vmatprep.subr.bf16.mxu0 0
      %1796 = vmatpush1.bf16.msra.mxu0 0
      %1797 = vmatprep.subr.bf16.mxu0 0
      %1798 = vmatpush1.bf16.msra.mxu0 0
      %1799 = vmatprep.subr.bf16.mxu0 0
      %1800 = vmatpush1.bf16.msra.mxu0 0
      %1801 = vmatprep.subr.bf16.mxu0 0
      %1802 = vmatpush1.bf16.msra.mxu0 0
      %1803 = vmatprep.subr.bf16.mxu0 0
      %1804 = vmatpush1.bf16.msra.mxu0 %v1787
      %1805 = vmatprep.subr.bf16.mxu0 0
      %1806 = vmatpush2.bf16.msra.mxu0 0
      %1807 = vmatprep.subr.bf16.mxu0 0
      %1808 = vmatpush2.bf16.msra.mxu0 0
      %1809 = vmatprep.subr.bf16.mxu0 0
      %1810 = vmatpush2.bf16.msra.mxu0 0
      %1811 = vmatprep.subr.bf16.mxu0 0
      %1812 = vmatpush2.bf16.msra.mxu0 0
      %1813 = vmatprep.subr.bf16.mxu0 0
      %1814 = vmatpush2.bf16.msra.mxu0 0
      %1815 = vmatprep.subr.bf16.mxu0 0
      %1816 = vmatpush2.bf16.msra.mxu0 0
      %1817 = vmatprep.subr.bf16.mxu0 0
      %1818 = vmatpush2.bf16.msra.mxu0 0
      %1819 = vmatprep.subr.bf16.mxu0 0
      %1820 = vmatpush2.bf16.msra.mxu0 0
      %1821 = vmatprep.mubr.bf16.mxu0 0
      %1822 = vmatmul.mubr.bf16.gmra.mxu0 %v1739
      %v1823 = vpop.f32.mrf.mxu0
      %v1824 = vadd.f32 %v1532, %v1823
      %v1825 = vpop.f32.mrf.mxu0
      %v1826 = vpop.f32.mrf.mxu0
      %v1827 = vadd.f32 %v1535, %v1826
      %v1828 = vpop.f32.mrf.mxu0
      %1829 = vmatprep.mubr.bf16.mxu0 0
      %1830 = vmatmul.mubr.bf16.gmra.mxu0 %v1742
      %v1831 = vpop.f32.mrf.mxu0
      %v1832 = vadd.f32 %v1540, %v1831
      %v1833 = vpop.f32.mrf.mxu0
      %v1834 = vpop.f32.mrf.mxu0
      %v1835 = vadd.f32 %v1543, %v1834
      %v1836 = vpop.f32.mrf.mxu0
      %1837 = vmatprep.mubr.bf16.mxu0 0
      %1838 = vmatmul.mubr.bf16.gmra.mxu0 %v1745
      %v1839 = vpop.f32.mrf.mxu0
      %v1840 = vadd.f32 %v1548, %v1839
      %v1841 = vpop.f32.mrf.mxu0
      %v1842 = vpop.f32.mrf.mxu0
      %v1843 = vadd.f32 %v1551, %v1842
      %v1844 = vpop.f32.mrf.mxu0
      %1845 = vmatprep.mubr.bf16.mxu0 0
      %1846 = vmatmul.mubr.bf16.gmra.mxu0 %v1748
      %v1847 = vpop.f32.mrf.mxu0
      %v1848 = vadd.f32 %v1556, %v1847
      %v1849 = vpop.f32.mrf.mxu0
      %v1850 = vpop.f32.mrf.mxu0
      %v1851 = vadd.f32 %v1559, %v1850
      %v1852 = vpop.f32.mrf.mxu0
      %1853 = vmatprep.mubr.bf16.mxu0 0
      %1854 = vmatmul.mubr.bf16.gmra.mxu0 %v1751
      %v1855 = vpop.f32.mrf.mxu0
      %v1856 = vadd.f32 %v1564, %v1855
      %v1857 = vpop.f32.mrf.mxu0
      %v1858 = vpop.f32.mrf.mxu0
      %v1859 = vadd.f32 %v1567, %v1858
      %v1860 = vpop.f32.mrf.mxu0
      %1861 = vmatprep.mubr.bf16.mxu0 0
      %1862 = vmatmul.mubr.bf16.gmra.mxu0 %v1754
      %v1863 = vpop.f32.mrf.mxu0
      %v1864 = vadd.f32 %v1572, %v1863
      %v1865 = vpop.f32.mrf.mxu0
      %v1866 = vpop.f32.mrf.mxu0
      %v1867 = vadd.f32 %v1575, %v1866
      %v1868 = vpop.f32.mrf.mxu0
      %1869 = vmatprep.mubr.bf16.mxu0 0
      %1870 = vmatmul.mubr.bf16.gmra.mxu0 %v1757
      %v1871 = vpop.f32.mrf.mxu0
      %v1872 = vadd.f32 %v1580, %v1871
      %v1873 = vpop.f32.mrf.mxu0
      %v1874 = vpop.f32.mrf.mxu0
      %v1875 = vadd.f32 %v1583, %v1874
      %v1876 = vpop.f32.mrf.mxu0
      %1877 = vmatprep.mubr.bf16.mxu0 0
      %1878 = vmatmul.mubr.bf16.gmra.mxu0 %v1760
      %v1879 = vpop.f32.mrf.mxu0
      %v1880 = vadd.f32 %v1588, %v1879
      %v1881 = vpop.f32.mrf.mxu0
      %v1882 = vpop.f32.mrf.mxu0
      %v1883 = vadd.f32 %v1591, %v1882
      %v1884 = vpop.f32.mrf.mxu0
      %1885 = vmatprep.mubr.bf16.mxu0 0
      %1886 = vmatmul.mubr.bf16.gmra.mxu0 %v1763
      %v1887 = vpop.f32.mrf.mxu0
      %v1888 = vadd.f32 %v1596, %v1887
      %v1889 = vpop.f32.mrf.mxu0
      %v1890 = vpop.f32.mrf.mxu0
      %v1891 = vadd.f32 %v1599, %v1890
      %v1892 = vpop.f32.mrf.mxu0
      %1893 = vmatprep.mubr.bf16.mxu0 0
      %1894 = vmatmul.mubr.bf16.gmra.mxu0 %v1766
      %v1895 = vpop.f32.mrf.mxu0
      %v1896 = vadd.f32 %v1604, %v1895
      %v1897 = vpop.f32.mrf.mxu0
      %v1898 = vpop.f32.mrf.mxu0
      %v1899 = vadd.f32 %v1607, %v1898
      %v1900 = vpop.f32.mrf.mxu0
      %1901 = vmatprep.mubr.bf16.mxu0 0
      %1902 = vmatmul.mubr.bf16.gmra.mxu0 %v1769
      %v1903 = vpop.f32.mrf.mxu0
      %v1904 = vadd.f32 %v1612, %v1903
      %v1905 = vpop.f32.mrf.mxu0
      %v1906 = vpop.f32.mrf.mxu0
      %v1907 = vadd.f32 %v1615, %v1906
      %v1908 = vpop.f32.mrf.mxu0
      %1909 = vmatprep.mubr.bf16.mxu0 0
      %1910 = vmatmul.mubr.bf16.gmra.mxu0 %v1772
      %v1911 = vpop.f32.mrf.mxu0
      %v1912 = vadd.f32 %v1620, %v1911
      %v1913 = vpop.f32.mrf.mxu0
      %v1914 = vpop.f32.mrf.mxu0
      %v1915 = vadd.f32 %v1623, %v1914
      %v1916 = vpop.f32.mrf.mxu0
      %1917 = vmatprep.mubr.bf16.mxu0 0
      %1918 = vmatmul.mubr.bf16.gmra.mxu0 %v1775
      %v1919 = vpop.f32.mrf.mxu0
      %v1920 = vadd.f32 %v1628, %v1919
      %v1921 = vpop.f32.mrf.mxu0
      %v1922 = vpop.f32.mrf.mxu0
      %v1923 = vadd.f32 %v1631, %v1922
      %v1924 = vpop.f32.mrf.mxu0
      %1925 = vmatprep.mubr.bf16.mxu0 0
      %1926 = vmatmul.mubr.bf16.gmra.mxu0 %v1778
      %v1927 = vpop.f32.mrf.mxu0
      %v1928 = vadd.f32 %v1636, %v1927
      %v1929 = vpop.f32.mrf.mxu0
      %v1930 = vpop.f32.mrf.mxu0
      %v1931 = vadd.f32 %v1639, %v1930
      %v1932 = vpop.f32.mrf.mxu0
      %1933 = vmatprep.mubr.bf16.mxu0 0
      %1934 = vmatmul.mubr.bf16.gmra.mxu0 %v1781
      %v1935 = vpop.f32.mrf.mxu0
      %v1936 = vadd.f32 %v1644, %v1935
      %v1937 = vpop.f32.mrf.mxu0
      %v1938 = vpop.f32.mrf.mxu0
      %v1939 = vadd.f32 %v1647, %v1938
      %v1940 = vpop.f32.mrf.mxu0
      %1941 = vmatprep.mubr.bf16.mxu0 0
      %1942 = vmatmul.mubr.bf16.gmra.mxu0 %v1784
      %v1943 = vpop.f32.mrf.mxu0
      %v1944 = vadd.f32 %v1652, %v1943
      %v1945 = vpop.f32.mrf.mxu0
      %v1946 = vpop.f32.mrf.mxu0
      %v1947 = vadd.f32 %v1655, %v1946
      %v1948 = vpop.f32.mrf.mxu0
      %1949 = vdwg.mxu0
      %v1950 = vld [vmem:[%s957] sm:$0xe]
      %v1951 = vld [vmem:[%s957 + $0xc] sm:$0xe]
      %v1952 = vld [vmem:[%s957 + $0x18] sm:$0xe]
      %v1953 = vld [vmem:[%s957 + $0x24] sm:$0xe]
      %v1954 = vld [vmem:[%s957 + $0x30] sm:$0xe]
      %v1955 = vld [vmem:[%s957 + $0x3c] sm:$0xe]
      %v1956 = vld [vmem:[%s957 + $0x48] sm:$0xe]
      %v1957 = vld [vmem:[%s957 + $0x54] sm:$0xe]
      %v1958 = vld [vmem:[%s957 + $0x60] sm:$0xe]
      %v1959 = vld [vmem:[%s957 + $0x6c] sm:$0xe]
      %v1960 = vld [vmem:[%s957 + $0x78] sm:$0xe]
      %v1961 = vld [vmem:[%s957 + $0x84] sm:$0xe]
      %v1962 = vld [vmem:[%s957 + $0x90] sm:$0xe]
      %v1963 = vld [vmem:[%s957 + $0x9c] sm:$0xe]
      %v1964 = vld [vmem:[%s957 + $0xa8] sm:$0xe]
      %v1965 = vld [vmem:[%s957 + $0xb4] sm:$0xe]
      %vm1998 = vcmask 1042432
      %vm1999 = vcmask 1046532
      %vm2000 = vmor %vm1998, %vm1999
      %v2001 = vrot.slane %v1950, 5
      %v2002 = vrot.slane %v2001, 4
      %v2003 = vrot.slane %v959, 5
      %v2004 = vsel %vm2000, %v2002, %v2003
      %v2005 = vrot.slane %v2003, 4
      %v2006 = vrot.slane %v991, 5
      %v2007 = vsel %vm2000, %v2005, %v2006
      %v2008 = vrot.slane %v1951, 5
      %v2009 = vrot.slane %v2008, 4
      %v2010 = vrot.slane %v961, 5
      %v2011 = vsel %vm2000, %v2009, %v2010
      %v2012 = vrot.slane %v2010, 4
      %v2013 = vrot.slane %v992, 5
      %v2014 = vsel %vm2000, %v2012, %v2013
      %v2015 = vrot.slane %v1952, 5
      %v2016 = vrot.slane %v2015, 4
      %v2017 = vrot.slane %v963, 5
      %v2018 = vsel %vm2000, %v2016, %v2017
      %v2019 = vrot.slane %v2017, 4
      %v2020 = vrot.slane %v993, 5
      %v2021 = vsel %vm2000, %v2019, %v2020
      %v2022 = vrot.slane %v1953, 5
      %v2023 = vrot.slane %v2022, 4
      %v2024 = vrot.slane %v965, 5
      %v2025 = vsel %vm2000, %v2023, %v2024
      %v2026 = vrot.slane %v2024, 4
      %v2027 = vrot.slane %v994, 5
      %v2028 = vsel %vm2000, %v2026, %v2027
      %v2029 = vrot.slane %v1954, 5
      %v2030 = vrot.slane %v2029, 4
      %v2031 = vrot.slane %v967, 5
      %v2032 = vsel %vm2000, %v2030, %v2031
      %v2033 = vrot.slane %v2031, 4
      %v2034 = vrot.slane %v995, 5
      %v2035 = vsel %vm2000, %v2033, %v2034
      %v2036 = vrot.slane %v1955, 5
      %v2037 = vrot.slane %v2036, 4
      %v2038 = vrot.slane %v969, 5
      %v2039 = vsel %vm2000, %v2037, %v2038
      %v2040 = vrot.slane %v2038, 4
      %v2041 = vrot.slane %v996, 5
      %v2042 = vsel %vm2000, %v2040, %v2041
      %v2043 = vrot.slane %v1956, 5
      %v2044 = vrot.slane %v2043, 4
      %v2045 = vrot.slane %v971, 5
      %v2046 = vsel %vm2000, %v2044, %v2045
      %v2047 = vrot.slane %v2045, 4
      %v2048 = vrot.slane %v997, 5
      %v2049 = vsel %vm2000, %v2047, %v2048
      %v2050 = vrot.slane %v1957, 5
      %v2051 = vrot.slane %v2050, 4
      %v2052 = vrot.slane %v973, 5
      %v2053 = vsel %vm2000, %v2051, %v2052
      %v2054 = vrot.slane %v2052, 4
      %v2055 = vrot.slane %v998, 5
      %v2056 = vsel %vm2000, %v2054, %v2055
      %v2057 = vrot.slane %v1958, 5
      %v2058 = vrot.slane %v2057, 4
      %v2059 = vrot.slane %v975, 5
      %v2060 = vsel %vm2000, %v2058, %v2059
      %v2061 = vrot.slane %v2059, 4
      %v2062 = vrot.slane %v999, 5
      %v2063 = vsel %vm2000, %v2061, %v2062
      %v2064 = vrot.slane %v1959, 5
      %v2065 = vrot.slane %v2064, 4
      %v2066 = vrot.slane %v977, 5
      %v2067 = vsel %vm2000, %v2065, %v2066
      %v2068 = vrot.slane %v2066, 4
      %v2069 = vrot.slane %v1000, 5
      %v2070 = vsel %vm2000, %v2068, %v2069
      %v2071 = vrot.slane %v1960, 5
      %v2072 = vrot.slane %v2071, 4
      %v2073 = vrot.slane %v979, 5
      %v2074 = vsel %vm2000, %v2072, %v2073
      %v2075 = vrot.slane %v2073, 4
      %v2076 = vrot.slane %v1001, 5
      %v2077 = vsel %vm2000, %v2075, %v2076
      %v2078 = vrot.slane %v1961, 5
      %v2079 = vrot.slane %v2078, 4
      %v2080 = vrot.slane %v981, 5
      %v2081 = vsel %vm2000, %v2079, %v2080
      %v2082 = vrot.slane %v2080, 4
      %v2083 = vrot.slane %v1002, 5
      %v2084 = vsel %vm2000, %v2082, %v2083
      %v2085 = vrot.slane %v1962, 5
      %v2086 = vrot.slane %v2085, 4
      %v2087 = vrot.slane %v983, 5
      %v2088 = vsel %vm2000, %v2086, %v2087
      %v2089 = vrot.slane %v2087, 4
      %v2090 = vrot.slane %v1003, 5
      %v2091 = vsel %vm2000, %v2089, %v2090
      %v2092 = vrot.slane %v1963, 5
      %v2093 = vrot.slane %v2092, 4
      %v2094 = vrot.slane %v985, 5
      %v2095 = vsel %vm2000, %v2093, %v2094
      %v2096 = vrot.slane %v2094, 4
      %v2097 = vrot.slane %v1004, 5
      %v2098 = vsel %vm2000, %v2096, %v2097
      %v2099 = vrot.slane %v1964, 5
      %v2100 = vrot.slane %v2099, 4
      %v2101 = vrot.slane %v987, 5
      %v2102 = vsel %vm2000, %v2100, %v2101
      %v2103 = vrot.slane %v2101, 4
      %v2104 = vrot.slane %v1005, 5
      %v2105 = vsel %vm2000, %v2103, %v2104
      %v2106 = vrot.slane %v1965, 5
      %v2107 = vrot.slane %v2106, 4
      %v2108 = vrot.slane %v989, 5
      %v2109 = vsel %vm2000, %v2107, %v2108
      %v2110 = vrot.slane %v2108, 4
      %v2111 = vrot.slane %v1006, 5
      %v2112 = vsel %vm2000, %v2110, %v2111
      %s2113 = scalar_lea.vmem %s1, 4
      %v2114 = vld [vmem:[%s2113] sm:$0x3]
      %v2115 = vunpack.c.l.b16 %v2004
      %v2116 = vunpack.c.l.b16 %v2007
      %v2117 = vunpack.c.l.b16 %v2011
      %v2118 = vunpack.c.l.b16 %v2014
      %v2119 = vunpack.c.l.b16 %v2018
      %v2120 = vunpack.c.l.b16 %v2021
      %v2121 = vunpack.c.l.b16 %v2025
      %v2122 = vunpack.c.l.b16 %v2028
      %v2123 = vunpack.c.l.b16 %v2032
      %v2124 = vunpack.c.l.b16 %v2035
      %v2125 = vunpack.c.l.b16 %v2039
      %v2126 = vunpack.c.l.b16 %v2042
      %v2127 = vunpack.c.l.b16 %v2046
      %v2128 = vunpack.c.l.b16 %v2049
      %v2129 = vunpack.c.l.b16 %v2053
      %v2130 = vunpack.c.l.b16 %v2056
      %v2131 = vunpack.c.l.b16 %v2060
      %v2132 = vunpack.c.l.b16 %v2063
      %v2133 = vunpack.c.l.b16 %v2067
      %v2134 = vunpack.c.l.b16 %v2070
      %v2135 = vunpack.c.l.b16 %v2074
      %v2136 = vunpack.c.l.b16 %v2077
      %v2137 = vunpack.c.l.b16 %v2081
      %v2138 = vunpack.c.l.b16 %v2084
      %v2139 = vunpack.c.l.b16 %v2088
      %v2140 = vunpack.c.l.b16 %v2091
      %v2141 = vunpack.c.l.b16 %v2095
      %v2142 = vunpack.c.l.b16 %v2098
      %v2143 = vunpack.c.l.b16 %v2102
      %v2144 = vunpack.c.l.b16 %v2105
      %v2145 = vunpack.c.l.b16 %v2109
      %v2146 = vunpack.c.l.b16 %v2112
      %v2147 = vpack.c.b16 %v2116, %v2115
      %v2148 = vpack.c.b16 %v2118, %v2117
      %v2149 = vpack.c.b16 %v2120, %v2119
      %v2150 = vpack.c.b16 %v2122, %v2121
      %v2151 = vpack.c.b16 %v2124, %v2123
      %v2152 = vpack.c.b16 %v2126, %v2125
      %v2153 = vpack.c.b16 %v2128, %v2127
      %v2154 = vpack.c.b16 %v2130, %v2129
      %v2155 = vpack.c.b16 %v2132, %v2131
      %v2156 = vpack.c.b16 %v2134, %v2133
      %v2157 = vpack.c.b16 %v2136, %v2135
      %v2158 = vpack.c.b16 %v2138, %v2137
      %v2159 = vpack.c.b16 %v2140, %v2139
      %v2160 = vpack.c.b16 %v2142, %v2141
      %v2161 = vpack.c.b16 %v2144, %v2143
      %v2162 = vpack.c.b16 %v2146, %v2145
      %v2164 = vsel %vm1444, %v2147, 0
      %v2167 = vsel %vm1444, %v2148, 0
      %v2170 = vsel %vm1444, %v2149, 0
      %v2173 = vsel %vm1444, %v2150, 0
      %v2176 = vsel %vm1444, %v2151, 0
      %v2179 = vsel %vm1444, %v2152, 0
      %v2182 = vsel %vm1444, %v2153, 0
      %v2185 = vsel %vm1444, %v2154, 0
      %v2188 = vsel %vm1444, %v2155, 0
      %v2191 = vsel %vm1444, %v2156, 0
      %v2194 = vsel %vm1444, %v2157, 0
      %v2197 = vsel %vm1444, %v2158, 0
      %v2200 = vsel %vm1444, %v2159, 0
      %v2203 = vsel %vm1444, %v2160, 0
      %v2206 = vsel %vm1444, %v2161, 0
      %v2209 = vsel %vm1444, %v2162, 0
      %v2212 = vsel %vm1493, %v2114, 0
      %2214 = vmatprep.subr.bf16.mxu0 0
      %2215 = vmatpush1.bf16.msra.mxu0 0
      %2216 = vmatprep.subr.bf16.mxu0 0
      %2217 = vmatpush1.bf16.msra.mxu0 0
      %2218 = vmatprep.subr.bf16.mxu0 0
      %2219 = vmatpush1.bf16.msra.mxu0 0
      %2220 = vmatprep.subr.bf16.mxu0 0
      %2221 = vmatpush1.bf16.msra.mxu0 0
      %2222 = vmatprep.subr.bf16.mxu0 0
      %2223 = vmatpush1.bf16.msra.mxu0 0
      %2224 = vmatprep.subr.bf16.mxu0 0
      %2225 = vmatpush1.bf16.msra.mxu0 0
      %2226 = vmatprep.subr.bf16.mxu0 0
      %2227 = vmatpush1.bf16.msra.mxu0 0
      %2228 = vmatprep.subr.bf16.mxu0 0
      %2229 = vmatpush1.bf16.msra.mxu0 %v2212
      %2230 = vmatprep.subr.bf16.mxu0 0
      %2231 = vmatpush2.bf16.msra.mxu0 0
      %2232 = vmatprep.subr.bf16.mxu0 0
      %2233 = vmatpush2.bf16.msra.mxu0 0
      %2234 = vmatprep.subr.bf16.mxu0 0
      %2235 = vmatpush2.bf16.msra.mxu0 0
      %2236 = vmatprep.subr.bf16.mxu0 0
      %2237 = vmatpush2.bf16.msra.mxu0 0
      %2238 = vmatprep.subr.bf16.mxu0 0
      %2239 = vmatpush2.bf16.msra.mxu0 0
      %2240 = vmatprep.subr.bf16.mxu0 0
      %2241 = vmatpush2.bf16.msra.mxu0 0
      %2242 = vmatprep.subr.bf16.mxu0 0
      %2243 = vmatpush2.bf16.msra.mxu0 0
      %2244 = vmatprep.subr.bf16.mxu0 0
      %2245 = vmatpush2.bf16.msra.mxu0 0
      %2246 = vmatprep.mubr.bf16.mxu0 0
      %2247 = vmatmul.mubr.bf16.gmra.mxu0 %v2164
      %v2248 = vpop.f32.mrf.mxu0
      %v2249 = vadd.f32 0.0, %v2248
      %v2250 = vpop.f32.mrf.mxu0
      %v2251 = vpop.f32.mrf.mxu0
      %v2252 = vadd.f32 0.0, %v2251
      %v2253 = vpop.f32.mrf.mxu0
      %2254 = vmatprep.mubr.bf16.mxu0 0
      %2255 = vmatmul.mubr.bf16.gmra.mxu0 %v2167
      %v2256 = vpop.f32.mrf.mxu0
      %v2257 = vadd.f32 0.0, %v2256
      %v2258 = vpop.f32.mrf.mxu0
      %v2259 = vpop.f32.mrf.mxu0
      %v2260 = vadd.f32 0.0, %v2259
      %v2261 = vpop.f32.mrf.mxu0
      %2262 = vmatprep.mubr.bf16.mxu0 0
      %2263 = vmatmul.mubr.bf16.gmra.mxu0 %v2170
      %v2264 = vpop.f32.mrf.mxu0
      %v2265 = vadd.f32 0.0, %v2264
      %v2266 = vpop.f32.mrf.mxu0
      %v2267 = vpop.f32.mrf.mxu0
      %v2268 = vadd.f32 0.0, %v2267
      %v2269 = vpop.f32.mrf.mxu0
      %2270 = vmatprep.mubr.bf16.mxu0 0
      %2271 = vmatmul.mubr.bf16.gmra.mxu0 %v2173
      %v2272 = vpop.f32.mrf.mxu0
      %v2273 = vadd.f32 0.0, %v2272
      %v2274 = vpop.f32.mrf.mxu0
      %v2275 = vpop.f32.mrf.mxu0
      %v2276 = vadd.f32 0.0, %v2275
      %v2277 = vpop.f32.mrf.mxu0
      %2278 = vmatprep.mubr.bf16.mxu0 0
      %2279 = vmatmul.mubr.bf16.gmra.mxu0 %v2176
      %v2280 = vpop.f32.mrf.mxu0
      %v2281 = vadd.f32 0.0, %v2280
      %v2282 = vpop.f32.mrf.mxu0
      %v2283 = vpop.f32.mrf.mxu0
      %v2284 = vadd.f32 0.0, %v2283
      %v2285 = vpop.f32.mrf.mxu0
      %2286 = vmatprep.mubr.bf16.mxu0 0
      %2287 = vmatmul.mubr.bf16.gmra.mxu0 %v2179
      %v2288 = vpop.f32.mrf.mxu0
      %v2289 = vadd.f32 0.0, %v2288
      %v2290 = vpop.f32.mrf.mxu0
      %v2291 = vpop.f32.mrf.mxu0
      %v2292 = vadd.f32 0.0, %v2291
      %v2293 = vpop.f32.mrf.mxu0
      %2294 = vmatprep.mubr.bf16.mxu0 0
      %2295 = vmatmul.mubr.bf16.gmra.mxu0 %v2182
      %v2296 = vpop.f32.mrf.mxu0
      %v2297 = vadd.f32 0.0, %v2296
      %v2298 = vpop.f32.mrf.mxu0
      %v2299 = vpop.f32.mrf.mxu0
      %v2300 = vadd.f32 0.0, %v2299
      %v2301 = vpop.f32.mrf.mxu0
      %2302 = vmatprep.mubr.bf16.mxu0 0
      %2303 = vmatmul.mubr.bf16.gmra.mxu0 %v2185
      %v2304 = vpop.f32.mrf.mxu0
      %v2305 = vadd.f32 0.0, %v2304
      %v2306 = vpop.f32.mrf.mxu0
      %v2307 = vpop.f32.mrf.mxu0
      %v2308 = vadd.f32 0.0, %v2307
      %v2309 = vpop.f32.mrf.mxu0
      %2310 = vmatprep.mubr.bf16.mxu0 0
      %2311 = vmatmul.mubr.bf16.gmra.mxu0 %v2188
      %v2312 = vpop.f32.mrf.mxu0
      %v2313 = vadd.f32 0.0, %v2312
      %v2314 = vpop.f32.mrf.mxu0
      %v2315 = vpop.f32.mrf.mxu0
      %v2316 = vadd.f32 0.0, %v2315
      %v2317 = vpop.f32.mrf.mxu0
      %2318 = vmatprep.mubr.bf16.mxu0 0
      %2319 = vmatmul.mubr.bf16.gmra.mxu0 %v2191
      %v2320 = vpop.f32.mrf.mxu0
      %v2321 = vadd.f32 0.0, %v2320
      %v2322 = vpop.f32.mrf.mxu0
      %v2323 = vpop.f32.mrf.mxu0
      %v2324 = vadd.f32 0.0, %v2323
      %v2325 = vpop.f32.mrf.mxu0
      %2326 = vmatprep.mubr.bf16.mxu0 0
      %2327 = vmatmul.mubr.bf16.gmra.mxu0 %v2194
      %v2328 = vpop.f32.mrf.mxu0
      %v2329 = vadd.f32 0.0, %v2328
      %v2330 = vpop.f32.mrf.mxu0
      %v2331 = vpop.f32.mrf.mxu0
      %v2332 = vadd.f32 0.0, %v2331
      %v2333 = vpop.f32.mrf.mxu0
      %2334 = vmatprep.mubr.bf16.mxu0 0
      %2335 = vmatmul.mubr.bf16.gmra.mxu0 %v2197
      %v2336 = vpop.f32.mrf.mxu0
      %v2337 = vadd.f32 0.0, %v2336
      %v2338 = vpop.f32.mrf.mxu0
      %v2339 = vpop.f32.mrf.mxu0
      %v2340 = vadd.f32 0.0, %v2339
      %v2341 = vpop.f32.mrf.mxu0
      %2342 = vmatprep.mubr.bf16.mxu0 0
      %2343 = vmatmul.mubr.bf16.gmra.mxu0 %v2200
      %v2344 = vpop.f32.mrf.mxu0
      %v2345 = vadd.f32 0.0, %v2344
      %v2346 = vpop.f32.mrf.mxu0
      %v2347 = vpop.f32.mrf.mxu0
      %v2348 = vadd.f32 0.0, %v2347
      %v2349 = vpop.f32.mrf.mxu0
      %2350 = vmatprep.mubr.bf16.mxu0 0
      %2351 = vmatmul.mubr.bf16.gmra.mxu0 %v2203
      %v2352 = vpop.f32.mrf.mxu0
      %v2353 = vadd.f32 0.0, %v2352
      %v2354 = vpop.f32.mrf.mxu0
      %v2355 = vpop.f32.mrf.mxu0
      %v2356 = vadd.f32 0.0, %v2355
      %v2357 = vpop.f32.mrf.mxu0
      %2358 = vmatprep.mubr.bf16.mxu0 0
      %2359 = vmatmul.mubr.bf16.gmra.mxu0 %v2206
      %v2360 = vpop.f32.mrf.mxu0
      %v2361 = vadd.f32 0.0, %v2360
      %v2362 = vpop.f32.mrf.mxu0
      %v2363 = vpop.f32.mrf.mxu0
      %v2364 = vadd.f32 0.0, %v2363
      %v2365 = vpop.f32.mrf.mxu0
      %2366 = vmatprep.mubr.bf16.mxu0 0
      %2367 = vmatmul.mubr.bf16.gmra.mxu0 %v2209
      %v2368 = vpop.f32.mrf.mxu0
      %v2369 = vadd.f32 0.0, %v2368
      %v2370 = vpop.f32.mrf.mxu0
      %v2371 = vpop.f32.mrf.mxu0
      %v2372 = vadd.f32 0.0, %v2371
      %v2373 = vpop.f32.mrf.mxu0
      %2374 = vdwg.mxu0
      %v2375 = vadd.f32 %v1824, %v2249
      %v2376 = vadd.f32 %v1827, %v2252
      %v2377 = vadd.f32 %v1832, %v2257
      %v2378 = vadd.f32 %v1835, %v2260
      %v2379 = vadd.f32 %v1840, %v2265
      %v2380 = vadd.f32 %v1843, %v2268
      %v2381 = vadd.f32 %v1848, %v2273
      %v2382 = vadd.f32 %v1851, %v2276
      %v2383 = vadd.f32 %v1856, %v2281
      %v2384 = vadd.f32 %v1859, %v2284
      %v2385 = vadd.f32 %v1864, %v2289
      %v2386 = vadd.f32 %v1867, %v2292
      %v2387 = vadd.f32 %v1872, %v2297
      %v2388 = vadd.f32 %v1875, %v2300
      %v2389 = vadd.f32 %v1880, %v2305
      %v2390 = vadd.f32 %v1883, %v2308
      %v2391 = vadd.f32 %v1888, %v2313
      %v2392 = vadd.f32 %v1891, %v2316
      %v2393 = vadd.f32 %v1896, %v2321
      %v2394 = vadd.f32 %v1899, %v2324
      %v2395 = vadd.f32 %v1904, %v2329
      %v2396 = vadd.f32 %v1907, %v2332
      %v2397 = vadd.f32 %v1912, %v2337
      %v2398 = vadd.f32 %v1915, %v2340
      %v2399 = vadd.f32 %v1920, %v2345
      %v2400 = vadd.f32 %v1923, %v2348
      %v2401 = vadd.f32 %v1928, %v2353
      %v2402 = vadd.f32 %v1931, %v2356
      %v2403 = vadd.f32 %v1936, %v2361
      %v2404 = vadd.f32 %v1939, %v2364
      %v2405 = vadd.f32 %v1944, %v2369
      %v2406 = vadd.f32 %v1947, %v2372
      %v2407 = vld [vmem:[%s628] sm:$0xf]
      %v2408 = vld [vmem:[%s628 + $0x4] sm:$0xf]
      %v2409 = vld [vmem:[%s628 + $0xc] sm:$0xf]
      %v2410 = vld [vmem:[%s628 + $0x10] sm:$0xf]
      %v2411 = vld [vmem:[%s628 + $0x18] sm:$0xf]
      %v2412 = vld [vmem:[%s628 + $0x1c] sm:$0xf]
      %v2413 = vld [vmem:[%s628 + $0x24] sm:$0xf]
      %v2414 = vld [vmem:[%s628 + $0x28] sm:$0xf]
      %v2415 = vld [vmem:[%s628 + $0x30] sm:$0xf]
      %v2416 = vld [vmem:[%s628 + $0x34] sm:$0xf]
      %v2417 = vld [vmem:[%s628 + $0x3c] sm:$0xf]
      %v2418 = vld [vmem:[%s628 + $0x40] sm:$0xf]
      %v2419 = vld [vmem:[%s628 + $0x48] sm:$0xf]
      %v2420 = vld [vmem:[%s628 + $0x4c] sm:$0xf]
      %v2421 = vld [vmem:[%s628 + $0x54] sm:$0xf]
      %v2422 = vld [vmem:[%s628 + $0x58] sm:$0xf]
      %v2423 = vld [vmem:[%s628 + $0x60] sm:$0xf]
      %v2424 = vld [vmem:[%s628 + $0x64] sm:$0xf]
      %v2425 = vld [vmem:[%s628 + $0x6c] sm:$0xf]
      %v2426 = vld [vmem:[%s628 + $0x70] sm:$0xf]
      %v2427 = vld [vmem:[%s628 + $0x78] sm:$0xf]
      %v2428 = vld [vmem:[%s628 + $0x7c] sm:$0xf]
      %v2429 = vld [vmem:[%s628 + $0x84] sm:$0xf]
      %v2430 = vld [vmem:[%s628 + $0x88] sm:$0xf]
      %v2431 = vld [vmem:[%s628 + $0x90] sm:$0xf]
      %v2432 = vld [vmem:[%s628 + $0x94] sm:$0xf]
      %v2433 = vld [vmem:[%s628 + $0x9c] sm:$0xf]
      %v2434 = vld [vmem:[%s628 + $0xa0] sm:$0xf]
      %v2435 = vld [vmem:[%s628 + $0xa8] sm:$0xf]
      %v2436 = vld [vmem:[%s628 + $0xac] sm:$0xf]
      %v2437 = vld [vmem:[%s628 + $0xb4] sm:$0xf]
      %v2438 = vld [vmem:[%s628 + $0xb8] sm:$0xf]
      %s2439 = scalar_lea.vmem %s1, 6
      %v2440 = vld [vmem:[%s2439] sm:$0x3]
      %v2473 = vunpack.c.l.b16 %v2407
      %v2474 = vunpack.c.l.b16 %v2408
      %v2475 = vunpack.c.l.b16 %v2409
      %v2476 = vunpack.c.l.b16 %v2410
      %v2477 = vunpack.c.l.b16 %v2411
      %v2478 = vunpack.c.l.b16 %v2412
      %v2479 = vunpack.c.l.b16 %v2413
      %v2480 = vunpack.c.l.b16 %v2414
      %v2481 = vunpack.c.l.b16 %v2415
      %v2482 = vunpack.c.l.b16 %v2416
      %v2483 = vunpack.c.l.b16 %v2417
      %v2484 = vunpack.c.l.b16 %v2418
      %v2485 = vunpack.c.l.b16 %v2419
      %v2486 = vunpack.c.l.b16 %v2420
      %v2487 = vunpack.c.l.b16 %v2421
      %v2488 = vunpack.c.l.b16 %v2422
      %v2489 = vunpack.c.l.b16 %v2423
      %v2490 = vunpack.c.l.b16 %v2424
      %v2491 = vunpack.c.l.b16 %v2425
      %v2492 = vunpack.c.l.b16 %v2426
      %v2493 = vunpack.c.l.b16 %v2427
      %v2494 = vunpack.c.l.b16 %v2428
      %v2495 = vunpack.c.l.b16 %v2429
      %v2496 = vunpack.c.l.b16 %v2430
      %v2497 = vunpack.c.l.b16 %v2431
      %v2498 = vunpack.c.l.b16 %v2432
      %v2499 = vunpack.c.l.b16 %v2433
      %v2500 = vunpack.c.l.b16 %v2434
      %v2501 = vunpack.c.l.b16 %v2435
      %v2502 = vunpack.c.l.b16 %v2436
      %v2503 = vunpack.c.l.b16 %v2437
      %v2504 = vunpack.c.l.b16 %v2438
      %v2505 = vpack.c.b16 %v2474, %v2473
      %v2506 = vpack.c.b16 %v2476, %v2475
      %v2507 = vpack.c.b16 %v2478, %v2477
      %v2508 = vpack.c.b16 %v2480, %v2479
      %v2509 = vpack.c.b16 %v2482, %v2481
      %v2510 = vpack.c.b16 %v2484, %v2483
      %v2511 = vpack.c.b16 %v2486, %v2485
      %v2512 = vpack.c.b16 %v2488, %v2487
      %v2513 = vpack.c.b16 %v2490, %v2489
      %v2514 = vpack.c.b16 %v2492, %v2491
      %v2515 = vpack.c.b16 %v2494, %v2493
      %v2516 = vpack.c.b16 %v2496, %v2495
      %v2517 = vpack.c.b16 %v2498, %v2497
      %v2518 = vpack.c.b16 %v2500, %v2499
      %v2519 = vpack.c.b16 %v2502, %v2501
      %v2520 = vpack.c.b16 %v2504, %v2503
      %v2522 = vsel %vm1444, %v2505, 0
      %v2525 = vsel %vm1444, %v2506, 0
      %v2528 = vsel %vm1444, %v2507, 0
      %v2531 = vsel %vm1444, %v2508, 0
      %v2534 = vsel %vm1444, %v2509, 0
      %v2537 = vsel %vm1444, %v2510, 0
      %v2540 = vsel %vm1444, %v2511, 0
      %v2543 = vsel %vm1444, %v2512, 0
      %v2546 = vsel %vm1444, %v2513, 0
      %v2549 = vsel %vm1444, %v2514, 0
      %v2552 = vsel %vm1444, %v2515, 0
      %v2555 = vsel %vm1444, %v2516, 0
      %v2558 = vsel %vm1444, %v2517, 0
      %v2561 = vsel %vm1444, %v2518, 0
      %v2564 = vsel %vm1444, %v2519, 0
      %v2567 = vsel %vm1444, %v2520, 0
      %v2570 = vsel %vm1493, %v2440, 0
      %2572 = vmatprep.subr.bf16.mxu0 0
      %2573 = vmatpush1.bf16.msra.mxu0 0
      %2574 = vmatprep.subr.bf16.mxu0 0
      %2575 = vmatpush1.bf16.msra.mxu0 0
      %2576 = vmatprep.subr.bf16.mxu0 0
      %2577 = vmatpush1.bf16.msra.mxu0 0
      %2578 = vmatprep.subr.bf16.mxu0 0
      %2579 = vmatpush1.bf16.msra.mxu0 0
      %2580 = vmatprep.subr.bf16.mxu0 0
      %2581 = vmatpush1.bf16.msra.mxu0 0
      %2582 = vmatprep.subr.bf16.mxu0 0
      %2583 = vmatpush1.bf16.msra.mxu0 0
      %2584 = vmatprep.subr.bf16.mxu0 0
      %2585 = vmatpush1.bf16.msra.mxu0 0
      %2586 = vmatprep.subr.bf16.mxu0 0
      %2587 = vmatpush1.bf16.msra.mxu0 %v2570
      %2588 = vmatprep.subr.bf16.mxu0 0
      %2589 = vmatpush2.bf16.msra.mxu0 0
      %2590 = vmatprep.subr.bf16.mxu0 0
      %2591 = vmatpush2.bf16.msra.mxu0 0
      %2592 = vmatprep.subr.bf16.mxu0 0
      %2593 = vmatpush2.bf16.msra.mxu0 0
      %2594 = vmatprep.subr.bf16.mxu0 0
      %2595 = vmatpush2.bf16.msra.mxu0 0
      %2596 = vmatprep.subr.bf16.mxu0 0
      %2597 = vmatpush2.bf16.msra.mxu0 0
      %2598 = vmatprep.subr.bf16.mxu0 0
      %2599 = vmatpush2.bf16.msra.mxu0 0
      %2600 = vmatprep.subr.bf16.mxu0 0
      %2601 = vmatpush2.bf16.msra.mxu0 0
      %2602 = vmatprep.subr.bf16.mxu0 0
      %2603 = vmatpush2.bf16.msra.mxu0 0
      %2604 = vmatprep.mubr.bf16.mxu0 0
      %2605 = vmatmul.mubr.bf16.gmra.mxu0 %v2522
      %v2606 = vpop.f32.mrf.mxu0
      %v2607 = vadd.f32 0.0, %v2606
      %v2608 = vpop.f32.mrf.mxu0
      %v2609 = vpop.f32.mrf.mxu0
      %v2610 = vadd.f32 0.0, %v2609
      %v2611 = vpop.f32.mrf.mxu0
      %2612 = vmatprep.mubr.bf16.mxu0 0
      %2613 = vmatmul.mubr.bf16.gmra.mxu0 %v2525
      %v2614 = vpop.f32.mrf.mxu0
      %v2615 = vadd.f32 0.0, %v2614
      %v2616 = vpop.f32.mrf.mxu0
      %v2617 = vpop.f32.mrf.mxu0
      %v2618 = vadd.f32 0.0, %v2617
      %v2619 = vpop.f32.mrf.mxu0
      %2620 = vmatprep.mubr.bf16.mxu0 0
      %2621 = vmatmul.mubr.bf16.gmra.mxu0 %v2528
      %v2622 = vpop.f32.mrf.mxu0
      %v2623 = vadd.f32 0.0, %v2622
      %v2624 = vpop.f32.mrf.mxu0
      %v2625 = vpop.f32.mrf.mxu0
      %v2626 = vadd.f32 0.0, %v2625
      %v2627 = vpop.f32.mrf.mxu0
      %2628 = vmatprep.mubr.bf16.mxu0 0
      %2629 = vmatmul.mubr.bf16.gmra.mxu0 %v2531
      %v2630 = vpop.f32.mrf.mxu0
      %v2631 = vadd.f32 0.0, %v2630
      %v2632 = vpop.f32.mrf.mxu0
      %v2633 = vpop.f32.mrf.mxu0
      %v2634 = vadd.f32 0.0, %v2633
      %v2635 = vpop.f32.mrf.mxu0
      %2636 = vmatprep.mubr.bf16.mxu0 0
      %2637 = vmatmul.mubr.bf16.gmra.mxu0 %v2534
      %v2638 = vpop.f32.mrf.mxu0
      %v2639 = vadd.f32 0.0, %v2638
      %v2640 = vpop.f32.mrf.mxu0
      %v2641 = vpop.f32.mrf.mxu0
      %v2642 = vadd.f32 0.0, %v2641
      %v2643 = vpop.f32.mrf.mxu0
      %2644 = vmatprep.mubr.bf16.mxu0 0
      %2645 = vmatmul.mubr.bf16.gmra.mxu0 %v2537
      %v2646 = vpop.f32.mrf.mxu0
      %v2647 = vadd.f32 0.0, %v2646
      %v2648 = vpop.f32.mrf.mxu0
      %v2649 = vpop.f32.mrf.mxu0
      %v2650 = vadd.f32 0.0, %v2649
      %v2651 = vpop.f32.mrf.mxu0
      %2652 = vmatprep.mubr.bf16.mxu0 0
      %2653 = vmatmul.mubr.bf16.gmra.mxu0 %v2540
      %v2654 = vpop.f32.mrf.mxu0
      %v2655 = vadd.f32 0.0, %v2654
      %v2656 = vpop.f32.mrf.mxu0
      %v2657 = vpop.f32.mrf.mxu0
      %v2658 = vadd.f32 0.0, %v2657
      %v2659 = vpop.f32.mrf.mxu0
      %2660 = vmatprep.mubr.bf16.mxu0 0
      %2661 = vmatmul.mubr.bf16.gmra.mxu0 %v2543
      %v2662 = vpop.f32.mrf.mxu0
      %v2663 = vadd.f32 0.0, %v2662
      %v2664 = vpop.f32.mrf.mxu0
      %v2665 = vpop.f32.mrf.mxu0
      %v2666 = vadd.f32 0.0, %v2665
      %v2667 = vpop.f32.mrf.mxu0
      %2668 = vmatprep.mubr.bf16.mxu0 0
      %2669 = vmatmul.mubr.bf16.gmra.mxu0 %v2546
      %v2670 = vpop.f32.mrf.mxu0
      %v2671 = vadd.f32 0.0, %v2670
      %v2672 = vpop.f32.mrf.mxu0
      %v2673 = vpop.f32.mrf.mxu0
      %v2674 = vadd.f32 0.0, %v2673
      %v2675 = vpop.f32.mrf.mxu0
      %2676 = vmatprep.mubr.bf16.mxu0 0
      %2677 = vmatmul.mubr.bf16.gmra.mxu0 %v2549
      %v2678 = vpop.f32.mrf.mxu0
      %v2679 = vadd.f32 0.0, %v2678
      %v2680 = vpop.f32.mrf.mxu0
      %v2681 = vpop.f32.mrf.mxu0
      %v2682 = vadd.f32 0.0, %v2681
      %v2683 = vpop.f32.mrf.mxu0
      %2684 = vmatprep.mubr.bf16.mxu0 0
      %2685 = vmatmul.mubr.bf16.gmra.mxu0 %v2552
      %v2686 = vpop.f32.mrf.mxu0
      %v2687 = vadd.f32 0.0, %v2686
      %v2688 = vpop.f32.mrf.mxu0
      %v2689 = vpop.f32.mrf.mxu0
      %v2690 = vadd.f32 0.0, %v2689
      %v2691 = vpop.f32.mrf.mxu0
      %2692 = vmatprep.mubr.bf16.mxu0 0
      %2693 = vmatmul.mubr.bf16.gmra.mxu0 %v2555
      %v2694 = vpop.f32.mrf.mxu0
      %v2695 = vadd.f32 0.0, %v2694
      %v2696 = vpop.f32.mrf.mxu0
      %v2697 = vpop.f32.mrf.mxu0
      %v2698 = vadd.f32 0.0, %v2697
      %v2699 = vpop.f32.mrf.mxu0
      %2700 = vmatprep.mubr.bf16.mxu0 0
      %2701 = vmatmul.mubr.bf16.gmra.mxu0 %v2558
      %v2702 = vpop.f32.mrf.mxu0
      %v2703 = vadd.f32 0.0, %v2702
      %v2704 = vpop.f32.mrf.mxu0
      %v2705 = vpop.f32.mrf.mxu0
      %v2706 = vadd.f32 0.0, %v2705
      %v2707 = vpop.f32.mrf.mxu0
      %2708 = vmatprep.mubr.bf16.mxu0 0
      %2709 = vmatmul.mubr.bf16.gmra.mxu0 %v2561
      %v2710 = vpop.f32.mrf.mxu0
      %v2711 = vadd.f32 0.0, %v2710
      %v2712 = vpop.f32.mrf.mxu0
      %v2713 = vpop.f32.mrf.mxu0
      %v2714 = vadd.f32 0.0, %v2713
      %v2715 = vpop.f32.mrf.mxu0
      %2716 = vmatprep.mubr.bf16.mxu0 0
      %2717 = vmatmul.mubr.bf16.gmra.mxu0 %v2564
      %v2718 = vpop.f32.mrf.mxu0
      %v2719 = vadd.f32 0.0, %v2718
      %v2720 = vpop.f32.mrf.mxu0
      %v2721 = vpop.f32.mrf.mxu0
      %v2722 = vadd.f32 0.0, %v2721
      %v2723 = vpop.f32.mrf.mxu0
      %2724 = vmatprep.mubr.bf16.mxu0 0
      %2725 = vmatmul.mubr.bf16.gmra.mxu0 %v2567
      %v2726 = vpop.f32.mrf.mxu0
      %v2727 = vadd.f32 0.0, %v2726
      %v2728 = vpop.f32.mrf.mxu0
      %v2729 = vpop.f32.mrf.mxu0
      %v2730 = vadd.f32 0.0, %v2729
      %v2731 = vpop.f32.mrf.mxu0
      %2732 = vdwg.mxu0
      %v2733 = vadd.f32 %v2375, %v2607
      %v2734 = vadd.f32 %v2376, %v2610
      %v2735 = vadd.f32 %v2377, %v2615
      %v2736 = vadd.f32 %v2378, %v2618
      %v2737 = vadd.f32 %v2379, %v2623
      %v2738 = vadd.f32 %v2380, %v2626
      %v2739 = vadd.f32 %v2381, %v2631
      %v2740 = vadd.f32 %v2382, %v2634
      %v2741 = vadd.f32 %v2383, %v2639
      %v2742 = vadd.f32 %v2384, %v2642
      %v2743 = vadd.f32 %v2385, %v2647
      %v2744 = vadd.f32 %v2386, %v2650
      %v2745 = vadd.f32 %v2387, %v2655
      %v2746 = vadd.f32 %v2388, %v2658
      %v2747 = vadd.f32 %v2389, %v2663
      %v2748 = vadd.f32 %v2390, %v2666
      %v2749 = vadd.f32 %v2391, %v2671
      %v2750 = vadd.f32 %v2392, %v2674
      %v2751 = vadd.f32 %v2393, %v2679
      %v2752 = vadd.f32 %v2394, %v2682
      %v2753 = vadd.f32 %v2395, %v2687
      %v2754 = vadd.f32 %v2396, %v2690
      %v2755 = vadd.f32 %v2397, %v2695
      %v2756 = vadd.f32 %v2398, %v2698
      %v2757 = vadd.f32 %v2399, %v2703
      %v2758 = vadd.f32 %v2400, %v2706
      %v2759 = vadd.f32 %v2401, %v2711
      %v2760 = vadd.f32 %v2402, %v2714
      %v2761 = vadd.f32 %v2403, %v2719
      %v2762 = vadd.f32 %v2404, %v2722
      %v2763 = vadd.f32 %v2405, %v2727
      %v2764 = vadd.f32 %v2406, %v2730
      %v2765 = vld [vmem:[%s628] sm:$0xf]
      %v2766 = vld [vmem:[%s628 + $0x4] sm:$0xf]
      %v2767 = vld [vmem:[%s628 + $0x8] sm:$0x1]
      %v2768 = vld [vmem:[%s628 + $0xc] sm:$0xf]
      %v2769 = vld [vmem:[%s628 + $0x10] sm:$0xf]
      %v2770 = vld [vmem:[%s628 + $0x14] sm:$0x1]
      %v2771 = vld [vmem:[%s628 + $0x18] sm:$0xf]
      %v2772 = vld [vmem:[%s628 + $0x1c] sm:$0xf]
      %v2773 = vld [vmem:[%s628 + $0x20] sm:$0x1]
      %v2774 = vld [vmem:[%s628 + $0x24] sm:$0xf]
      %v2775 = vld [vmem:[%s628 + $0x28] sm:$0xf]
      %v2776 = vld [vmem:[%s628 + $0x2c] sm:$0x1]
      %v2777 = vld [vmem:[%s628 + $0x30] sm:$0xf]
      %v2778 = vld [vmem:[%s628 + $0x34] sm:$0xf]
      %v2779 = vld [vmem:[%s628 + $0x38] sm:$0x1]
      %v2780 = vld [vmem:[%s628 + $0x3c] sm:$0xf]
      %v2781 = vld [vmem:[%s628 + $0x40] sm:$0xf]
      %v2782 = vld [vmem:[%s628 + $0x44] sm:$0x1]
      %v2783 = vld [vmem:[%s628 + $0x48] sm:$0xf]
      %v2784 = vld [vmem:[%s628 + $0x4c] sm:$0xf]
      %v2785 = vld [vmem:[%s628 + $0x50] sm:$0x1]
      %v2786 = vld [vmem:[%s628 + $0x54] sm:$0xf]
      %v2787 = vld [vmem:[%s628 + $0x58] sm:$0xf]
      %v2788 = vld [vmem:[%s628 + $0x5c] sm:$0x1]
      %v2789 = vld [vmem:[%s628 + $0x60] sm:$0xf]
      %v2790 = vld [vmem:[%s628 + $0x64] sm:$0xf]
      %v2791 = vld [vmem:[%s628 + $0x68] sm:$0x1]
      %v2792 = vld [vmem:[%s628 + $0x6c] sm:$0xf]
      %v2793 = vld [vmem:[%s628 + $0x70] sm:$0xf]
      %v2794 = vld [vmem:[%s628 + $0x74] sm:$0x1]
      %v2795 = vld [vmem:[%s628 + $0x78] sm:$0xf]
      %v2796 = vld [vmem:[%s628 + $0x7c] sm:$0xf]
      %v2797 = vld [vmem:[%s628 + $0x80] sm:$0x1]
      %v2798 = vld [vmem:[%s628 + $0x84] sm:$0xf]
      %v2799 = vld [vmem:[%s628 + $0x88] sm:$0xf]
      %v2800 = vld [vmem:[%s628 + $0x8c] sm:$0x1]
      %v2801 = vld [vmem:[%s628 + $0x90] sm:$0xf]
      %v2802 = vld [vmem:[%s628 + $0x94] sm:$0xf]
      %v2803 = vld [vmem:[%s628 + $0x98] sm:$0x1]
      %v2804 = vld [vmem:[%s628 + $0x9c] sm:$0xf]
      %v2805 = vld [vmem:[%s628 + $0xa0] sm:$0xf]
      %v2806 = vld [vmem:[%s628 + $0xa4] sm:$0x1]
      %v2807 = vld [vmem:[%s628 + $0xa8] sm:$0xf]
      %v2808 = vld [vmem:[%s628 + $0xac] sm:$0xf]
      %v2809 = vld [vmem:[%s628 + $0xb0] sm:$0x1]
      %v2810 = vld [vmem:[%s628 + $0xb4] sm:$0xf]
      %v2811 = vld [vmem:[%s628 + $0xb8] sm:$0xf]
      %v2812 = vld [vmem:[%s628 + $0xbc] sm:$0x1]
      %v2814 = vshrl.u32 %v2765, 16
      %v2816 = vrot.slane %v2814, 4
      %v2817 = vshll.u32 %v2765, 16
      %v2819 = vrot.slane %v2817, 5
      %v2820 = vor.u32 %v2816, %v2819
      %v2821 = vrot.slane %v2820, 4
      %v2823 = vshll.u32 %v2766, 16
      %v2825 = vrot.slane %v2823, 5
      %v2826 = vsel %vm1009, %v2821, %v2825
      %v2827 = vshrl.u32 %v2766, 16
      %v2829 = vrot.slane %v2827, 4
      %v2830 = vor.u32 %v2829, %v2825
      %v2831 = vrot.slane %v2830, 4
      %v2833 = vshll.u32 %v2767, 16
      %v2835 = vrot.slane %v2833, 5
      %v2836 = vsel %vm1009, %v2831, %v2835
      %v2838 = vshrl.u32 %v2768, 16
      %v2840 = vrot.slane %v2838, 4
      %v2841 = vshll.u32 %v2768, 16
      %v2843 = vrot.slane %v2841, 5
      %v2844 = vor.u32 %v2840, %v2843
      %v2845 = vrot.slane %v2844, 4
      %v2847 = vshll.u32 %v2769, 16
      %v2849 = vrot.slane %v2847, 5
      %v2850 = vsel %vm1009, %v2845, %v2849
      %v2851 = vshrl.u32 %v2769, 16
      %v2853 = vrot.slane %v2851, 4
      %v2854 = vor.u32 %v2853, %v2849
      %v2855 = vrot.slane %v2854, 4
      %v2857 = vshll.u32 %v2770, 16
      %v2859 = vrot.slane %v2857, 5
      %v2860 = vsel %vm1009, %v2855, %v2859
      %v2862 = vshrl.u32 %v2771, 16
      %v2864 = vrot.slane %v2862, 4
      %v2865 = vshll.u32 %v2771, 16
      %v2867 = vrot.slane %v2865, 5
      %v2868 = vor.u32 %v2864, %v2867
      %v2869 = vrot.slane %v2868, 4
      %v2871 = vshll.u32 %v2772, 16
      %v2873 = vrot.slane %v2871, 5
      %v2874 = vsel %vm1009, %v2869, %v2873
      %v2875 = vshrl.u32 %v2772, 16
      %v2877 = vrot.slane %v2875, 4
      %v2878 = vor.u32 %v2877, %v2873
      %v2879 = vrot.slane %v2878, 4
      %v2881 = vshll.u32 %v2773, 16
      %v2883 = vrot.slane %v2881, 5
      %v2884 = vsel %vm1009, %v2879, %v2883
      %v2886 = vshrl.u32 %v2774, 16
      %v2888 = vrot.slane %v2886, 4
      %v2889 = vshll.u32 %v2774, 16
      %v2891 = vrot.slane %v2889, 5
      %v2892 = vor.u32 %v2888, %v2891
      %v2893 = vrot.slane %v2892, 4
      %v2895 = vshll.u32 %v2775, 16
      %v2897 = vrot.slane %v2895, 5
      %v2898 = vsel %vm1009, %v2893, %v2897
      %v2899 = vshrl.u32 %v2775, 16
      %v2901 = vrot.slane %v2899, 4
      %v2902 = vor.u32 %v2901, %v2897
      %v2903 = vrot.slane %v2902, 4
      %v2905 = vshll.u32 %v2776, 16
      %v2907 = vrot.slane %v2905, 5
      %v2908 = vsel %vm1009, %v2903, %v2907
      %v2910 = vshrl.u32 %v2777, 16
      %v2912 = vrot.slane %v2910, 4
      %v2913 = vshll.u32 %v2777, 16
      %v2915 = vrot.slane %v2913, 5
      %v2916 = vor.u32 %v2912, %v2915
      %v2917 = vrot.slane %v2916, 4
      %v2919 = vshll.u32 %v2778, 16
      %v2921 = vrot.slane %v2919, 5
      %v2922 = vsel %vm1009, %v2917, %v2921
      %v2923 = vshrl.u32 %v2778, 16
      %v2925 = vrot.slane %v2923, 4
      %v2926 = vor.u32 %v2925, %v2921
      %v2927 = vrot.slane %v2926, 4
      %v2929 = vshll.u32 %v2779, 16
      %v2931 = vrot.slane %v2929, 5
      %v2932 = vsel %vm1009, %v2927, %v2931
      %v2934 = vshrl.u32 %v2780, 16
      %v2936 = vrot.slane %v2934, 4
      %v2937 = vshll.u32 %v2780, 16
      %v2939 = vrot.slane %v2937, 5
      %v2940 = vor.u32 %v2936, %v2939
      %v2941 = vrot.slane %v2940, 4
      %v2943 = vshll.u32 %v2781, 16
      %v2945 = vrot.slane %v2943, 5
      %v2946 = vsel %vm1009, %v2941, %v2945
      %v2947 = vshrl.u32 %v2781, 16
      %v2949 = vrot.slane %v2947, 4
      %v2950 = vor.u32 %v2949, %v2945
      %v2951 = vrot.slane %v2950, 4
      %v2953 = vshll.u32 %v2782, 16
      %v2955 = vrot.slane %v2953, 5
      %v2956 = vsel %vm1009, %v2951, %v2955
      %v2958 = vshrl.u32 %v2783, 16
      %v2960 = vrot.slane %v2958, 4
      %v2961 = vshll.u32 %v2783, 16
      %v2963 = vrot.slane %v2961, 5
      %v2964 = vor.u32 %v2960, %v2963
      %v2965 = vrot.slane %v2964, 4
      %v2967 = vshll.u32 %v2784, 16
      %v2969 = vrot.slane %v2967, 5
      %v2970 = vsel %vm1009, %v2965, %v2969
      %v2971 = vshrl.u32 %v2784, 16
      %v2973 = vrot.slane %v2971, 4
      %v2974 = vor.u32 %v2973, %v2969
      %v2975 = vrot.slane %v2974, 4
      %v2977 = vshll.u32 %v2785, 16
      %v2979 = vrot.slane %v2977, 5
      %v2980 = vsel %vm1009, %v2975, %v2979
      %v2982 = vshrl.u32 %v2786, 16
      %v2984 = vrot.slane %v2982, 4
      %v2985 = vshll.u32 %v2786, 16
      %v2987 = vrot.slane %v2985, 5
      %v2988 = vor.u32 %v2984, %v2987
      %v2989 = vrot.slane %v2988, 4
      %v2991 = vshll.u32 %v2787, 16
      %v2993 = vrot.slane %v2991, 5
      %v2994 = vsel %vm1009, %v2989, %v2993
      %v2995 = vshrl.u32 %v2787, 16
      %v2997 = vrot.slane %v2995, 4
      %v2998 = vor.u32 %v2997, %v2993
      %v2999 = vrot.slane %v2998, 4
      %v3001 = vshll.u32 %v2788, 16
      %v3003 = vrot.slane %v3001, 5
      %v3004 = vsel %vm1009, %v2999, %v3003
      %v3006 = vshrl.u32 %v2789, 16
      %v3008 = vrot.slane %v3006, 4
      %v3009 = vshll.u32 %v2789, 16
      %v3011 = vrot.slane %v3009, 5
      %v3012 = vor.u32 %v3008, %v3011
      %v3013 = vrot.slane %v3012, 4
      %v3015 = vshll.u32 %v2790, 16
      %v3017 = vrot.slane %v3015, 5
      %v3018 = vsel %vm1009, %v3013, %v3017
      %v3019 = vshrl.u32 %v2790, 16
      %v3021 = vrot.slane %v3019, 4
      %v3022 = vor.u32 %v3021, %v3017
      %v3023 = vrot.slane %v3022, 4
      %v3025 = vshll.u32 %v2791, 16
      %v3027 = vrot.slane %v3025, 5
      %v3028 = vsel %vm1009, %v3023, %v3027
      %v3030 = vshrl.u32 %v2792, 16
      %v3032 = vrot.slane %v3030, 4
      %v3033 = vshll.u32 %v2792, 16
      %v3035 = vrot.slane %v3033, 5
      %v3036 = vor.u32 %v3032, %v3035
      %v3037 = vrot.slane %v3036, 4
      %v3039 = vshll.u32 %v2793, 16
      %v3041 = vrot.slane %v3039, 5
      %v3042 = vsel %vm1009, %v3037, %v3041
      %v3043 = vshrl.u32 %v2793, 16
      %v3045 = vrot.slane %v3043, 4
      %v3046 = vor.u32 %v3045, %v3041
      %v3047 = vrot.slane %v3046, 4
      %v3049 = vshll.u32 %v2794, 16
      %v3051 = vrot.slane %v3049, 5
      %v3052 = vsel %vm1009, %v3047, %v3051
      %v3054 = vshrl.u32 %v2795, 16
      %v3056 = vrot.slane %v3054, 4
      %v3057 = vshll.u32 %v2795, 16
      %v3059 = vrot.slane %v3057, 5
      %v3060 = vor.u32 %v3056, %v3059
      %v3061 = vrot.slane %v3060, 4
      %v3063 = vshll.u32 %v2796, 16
      %v3065 = vrot.slane %v3063, 5
      %v3066 = vsel %vm1009, %v3061, %v3065
      %v3067 = vshrl.u32 %v2796, 16
      %v3069 = vrot.slane %v3067, 4
      %v3070 = vor.u32 %v3069, %v3065
      %v3071 = vrot.slane %v3070, 4
      %v3073 = vshll.u32 %v2797, 16
      %v3075 = vrot.slane %v3073, 5
      %v3076 = vsel %vm1009, %v3071, %v3075
      %v3078 = vshrl.u32 %v2798, 16
      %v3080 = vrot.slane %v3078, 4
      %v3081 = vshll.u32 %v2798, 16
      %v3083 = vrot.slane %v3081, 5
      %v3084 = vor.u32 %v3080, %v3083
      %v3085 = vrot.slane %v3084, 4
      %v3087 = vshll.u32 %v2799, 16
      %v3089 = vrot.slane %v3087, 5
      %v3090 = vsel %vm1009, %v3085, %v3089
      %v3091 = vshrl.u32 %v2799, 16
      %v3093 = vrot.slane %v3091, 4
      %v3094 = vor.u32 %v3093, %v3089
      %v3095 = vrot.slane %v3094, 4
      %v3097 = vshll.u32 %v2800, 16
      %v3099 = vrot.slane %v3097, 5
      %v3100 = vsel %vm1009, %v3095, %v3099
      %v3102 = vshrl.u32 %v2801, 16
      %v3104 = vrot.slane %v3102, 4
      %v3105 = vshll.u32 %v2801, 16
      %v3107 = vrot.slane %v3105, 5
      %v3108 = vor.u32 %v3104, %v3107
      %v3109 = vrot.slane %v3108, 4
      %v3111 = vshll.u32 %v2802, 16
      %v3113 = vrot.slane %v3111, 5
      %v3114 = vsel %vm1009, %v3109, %v3113
      %v3115 = vshrl.u32 %v2802, 16
      %v3117 = vrot.slane %v3115, 4
      %v3118 = vor.u32 %v3117, %v3113
      %v3119 = vrot.slane %v3118, 4
      %v3121 = vshll.u32 %v2803, 16
      %v3123 = vrot.slane %v3121, 5
      %v3124 = vsel %vm1009, %v3119, %v3123
      %v3126 = vshrl.u32 %v2804, 16
      %v3128 = vrot.slane %v3126, 4
      %v3129 = vshll.u32 %v2804, 16
      %v3131 = vrot.slane %v3129, 5
      %v3132 = vor.u32 %v3128, %v3131
      %v3133 = vrot.slane %v3132, 4
      %v3135 = vshll.u32 %v2805, 16
      %v3137 = vrot.slane %v3135, 5
      %v3138 = vsel %vm1009, %v3133, %v3137
      %v3139 = vshrl.u32 %v2805, 16
      %v3141 = vrot.slane %v3139, 4
      %v3142 = vor.u32 %v3141, %v3137
      %v3143 = vrot.slane %v3142, 4
      %v3145 = vshll.u32 %v2806, 16
      %v3147 = vrot.slane %v3145, 5
      %v3148 = vsel %vm1009, %v3143, %v3147
      %v3150 = vshrl.u32 %v2807, 16
      %v3152 = vrot.slane %v3150, 4
      %v3153 = vshll.u32 %v2807, 16
      %v3155 = vrot.slane %v3153, 5
      %v3156 = vor.u32 %v3152, %v3155
      %v3157 = vrot.slane %v3156, 4
      %v3159 = vshll.u32 %v2808, 16
      %v3161 = vrot.slane %v3159, 5
      %v3162 = vsel %vm1009, %v3157, %v3161
      %v3163 = vshrl.u32 %v2808, 16
      %v3165 = vrot.slane %v3163, 4
      %v3166 = vor.u32 %v3165, %v3161
      %v3167 = vrot.slane %v3166, 4
      %v3169 = vshll.u32 %v2809, 16
      %v3171 = vrot.slane %v3169, 5
      %v3172 = vsel %vm1009, %v3167, %v3171
      %v3174 = vshrl.u32 %v2810, 16
      %v3176 = vrot.slane %v3174, 4
      %v3177 = vshll.u32 %v2810, 16
      %v3179 = vrot.slane %v3177, 5
      %v3180 = vor.u32 %v3176, %v3179
      %v3181 = vrot.slane %v3180, 4
      %v3183 = vshll.u32 %v2811, 16
      %v3185 = vrot.slane %v3183, 5
      %v3186 = vsel %vm1009, %v3181, %v3185
      %v3187 = vshrl.u32 %v2811, 16
      %v3189 = vrot.slane %v3187, 4
      %v3190 = vor.u32 %v3189, %v3185
      %v3191 = vrot.slane %v3190, 4
      %v3193 = vshll.u32 %v2812, 16
      %v3195 = vrot.slane %v3193, 5
      %v3196 = vsel %vm1009, %v3191, %v3195
      %s3197 = scalar_lea.vmem %s1, 8
      %v3198 = vld [vmem:[%s3197] sm:$0x3]
      %v3199 = vunpack.c.l.b16 %v2826
      %v3200 = vunpack.c.l.b16 %v2836
      %v3201 = vunpack.c.l.b16 %v2850
      %v3202 = vunpack.c.l.b16 %v2860
      %v3203 = vunpack.c.l.b16 %v2874
      %v3204 = vunpack.c.l.b16 %v2884
      %v3205 = vunpack.c.l.b16 %v2898
      %v3206 = vunpack.c.l.b16 %v2908
      %v3207 = vunpack.c.l.b16 %v2922
      %v3208 = vunpack.c.l.b16 %v2932
      %v3209 = vunpack.c.l.b16 %v2946
      %v3210 = vunpack.c.l.b16 %v2956
      %v3211 = vunpack.c.l.b16 %v2970
      %v3212 = vunpack.c.l.b16 %v2980
      %v3213 = vunpack.c.l.b16 %v2994
      %v3214 = vunpack.c.l.b16 %v3004
      %v3215 = vunpack.c.l.b16 %v3018
      %v3216 = vunpack.c.l.b16 %v3028
      %v3217 = vunpack.c.l.b16 %v3042
      %v3218 = vunpack.c.l.b16 %v3052
      %v3219 = vunpack.c.l.b16 %v3066
      %v3220 = vunpack.c.l.b16 %v3076
      %v3221 = vunpack.c.l.b16 %v3090
      %v3222 = vunpack.c.l.b16 %v3100
      %v3223 = vunpack.c.l.b16 %v3114
      %v3224 = vunpack.c.l.b16 %v3124
      %v3225 = vunpack.c.l.b16 %v3138
      %v3226 = vunpack.c.l.b16 %v3148
      %v3227 = vunpack.c.l.b16 %v3162
      %v3228 = vunpack.c.l.b16 %v3172
      %v3229 = vunpack.c.l.b16 %v3186
      %v3230 = vunpack.c.l.b16 %v3196
      %v3231 = vpack.c.b16 %v3200, %v3199
      %v3232 = vpack.c.b16 %v3202, %v3201
      %v3233 = vpack.c.b16 %v3204, %v3203
      %v3234 = vpack.c.b16 %v3206, %v3205
      %v3235 = vpack.c.b16 %v3208, %v3207
      %v3236 = vpack.c.b16 %v3210, %v3209
      %v3237 = vpack.c.b16 %v3212, %v3211
      %v3238 = vpack.c.b16 %v3214, %v3213
      %v3239 = vpack.c.b16 %v3216, %v3215
      %v3240 = vpack.c.b16 %v3218, %v3217
      %v3241 = vpack.c.b16 %v3220, %v3219
      %v3242 = vpack.c.b16 %v3222, %v3221
      %v3243 = vpack.c.b16 %v3224, %v3223
      %v3244 = vpack.c.b16 %v3226, %v3225
      %v3245 = vpack.c.b16 %v3228, %v3227
      %v3246 = vpack.c.b16 %v3230, %v3229
      %v3248 = vsel %vm1444, %v3231, 0
      %v3251 = vsel %vm1444, %v3232, 0
      %v3254 = vsel %vm1444, %v3233, 0
      %v3257 = vsel %vm1444, %v3234, 0
      %v3260 = vsel %vm1444, %v3235, 0
      %v3263 = vsel %vm1444, %v3236, 0
      %v3266 = vsel %vm1444, %v3237, 0
      %v3269 = vsel %vm1444, %v3238, 0
      %v3272 = vsel %vm1444, %v3239, 0
      %v3275 = vsel %vm1444, %v3240, 0
      %v3278 = vsel %vm1444, %v3241, 0
      %v3281 = vsel %vm1444, %v3242, 0
      %v3284 = vsel %vm1444, %v3243, 0
      %v3287 = vsel %vm1444, %v3244, 0
      %v3290 = vsel %vm1444, %v3245, 0
      %v3293 = vsel %vm1444, %v3246, 0
      %v3296 = vsel %vm1493, %v3198, 0
      %3298 = vmatprep.subr.bf16.mxu0 0
      %3299 = vmatpush1.bf16.msra.mxu0 0
      %3300 = vmatprep.subr.bf16.mxu0 0
      %3301 = vmatpush1.bf16.msra.mxu0 0
      %3302 = vmatprep.subr.bf16.mxu0 0
      %3303 = vmatpush1.bf16.msra.mxu0 0
      %3304 = vmatprep.subr.bf16.mxu0 0
      %3305 = vmatpush1.bf16.msra.mxu0 0
      %3306 = vmatprep.subr.bf16.mxu0 0
      %3307 = vmatpush1.bf16.msra.mxu0 0
      %3308 = vmatprep.subr.bf16.mxu0 0
      %3309 = vmatpush1.bf16.msra.mxu0 0
      %3310 = vmatprep.subr.bf16.mxu0 0
      %3311 = vmatpush1.bf16.msra.mxu0 0
      %3312 = vmatprep.subr.bf16.mxu0 0
      %3313 = vmatpush1.bf16.msra.mxu0 %v3296
      %3314 = vmatprep.subr.bf16.mxu0 0
      %3315 = vmatpush2.bf16.msra.mxu0 0
      %3316 = vmatprep.subr.bf16.mxu0 0
      %3317 = vmatpush2.bf16.msra.mxu0 0
      %3318 = vmatprep.subr.bf16.mxu0 0
      %3319 = vmatpush2.bf16.msra.mxu0 0
      %3320 = vmatprep.subr.bf16.mxu0 0
      %3321 = vmatpush2.bf16.msra.mxu0 0
      %3322 = vmatprep.subr.bf16.mxu0 0
      %3323 = vmatpush2.bf16.msra.mxu0 0
      %3324 = vmatprep.subr.bf16.mxu0 0
      %3325 = vmatpush2.bf16.msra.mxu0 0
      %3326 = vmatprep.subr.bf16.mxu0 0
      %3327 = vmatpush2.bf16.msra.mxu0 0
      %3328 = vmatprep.subr.bf16.mxu0 0
      %3329 = vmatpush2.bf16.msra.mxu0 0
      %3330 = vmatprep.mubr.bf16.mxu0 0
      %3331 = vmatmul.mubr.bf16.gmra.mxu0 %v3248
      %v3332 = vpop.f32.mrf.mxu0
      %v3333 = vadd.f32 0.0, %v3332
      %v3334 = vpop.f32.mrf.mxu0
      %v3335 = vpop.f32.mrf.mxu0
      %v3336 = vadd.f32 0.0, %v3335
      %v3337 = vpop.f32.mrf.mxu0
      %3338 = vmatprep.mubr.bf16.mxu0 0
      %3339 = vmatmul.mubr.bf16.gmra.mxu0 %v3251
      %v3340 = vpop.f32.mrf.mxu0
      %v3341 = vadd.f32 0.0, %v3340
      %v3342 = vpop.f32.mrf.mxu0
      %v3343 = vpop.f32.mrf.mxu0
      %v3344 = vadd.f32 0.0, %v3343
      %v3345 = vpop.f32.mrf.mxu0
      %3346 = vmatprep.mubr.bf16.mxu0 0
      %3347 = vmatmul.mubr.bf16.gmra.mxu0 %v3254
      %v3348 = vpop.f32.mrf.mxu0
      %v3349 = vadd.f32 0.0, %v3348
      %v3350 = vpop.f32.mrf.mxu0
      %v3351 = vpop.f32.mrf.mxu0
      %v3352 = vadd.f32 0.0, %v3351
      %v3353 = vpop.f32.mrf.mxu0
      %3354 = vmatprep.mubr.bf16.mxu0 0
      %3355 = vmatmul.mubr.bf16.gmra.mxu0 %v3257
      %v3356 = vpop.f32.mrf.mxu0
      %v3357 = vadd.f32 0.0, %v3356
      %v3358 = vpop.f32.mrf.mxu0
      %v3359 = vpop.f32.mrf.mxu0
      %v3360 = vadd.f32 0.0, %v3359
      %v3361 = vpop.f32.mrf.mxu0
      %3362 = vmatprep.mubr.bf16.mxu0 0
      %3363 = vmatmul.mubr.bf16.gmra.mxu0 %v3260
      %v3364 = vpop.f32.mrf.mxu0
      %v3365 = vadd.f32 0.0, %v3364
      %v3366 = vpop.f32.mrf.mxu0
      %v3367 = vpop.f32.mrf.mxu0
      %v3368 = vadd.f32 0.0, %v3367
      %v3369 = vpop.f32.mrf.mxu0
      %3370 = vmatprep.mubr.bf16.mxu0 0
      %3371 = vmatmul.mubr.bf16.gmra.mxu0 %v3263
      %v3372 = vpop.f32.mrf.mxu0
      %v3373 = vadd.f32 0.0, %v3372
      %v3374 = vpop.f32.mrf.mxu0
      %v3375 = vpop.f32.mrf.mxu0
      %v3376 = vadd.f32 0.0, %v3375
      %v3377 = vpop.f32.mrf.mxu0
      %3378 = vmatprep.mubr.bf16.mxu0 0
      %3379 = vmatmul.mubr.bf16.gmra.mxu0 %v3266
      %v3380 = vpop.f32.mrf.mxu0
      %v3381 = vadd.f32 0.0, %v3380
      %v3382 = vpop.f32.mrf.mxu0
      %v3383 = vpop.f32.mrf.mxu0
      %v3384 = vadd.f32 0.0, %v3383
      %v3385 = vpop.f32.mrf.mxu0
      %3386 = vmatprep.mubr.bf16.mxu0 0
      %3387 = vmatmul.mubr.bf16.gmra.mxu0 %v3269
      %v3388 = vpop.f32.mrf.mxu0
      %v3389 = vadd.f32 0.0, %v3388
      %v3390 = vpop.f32.mrf.mxu0
      %v3391 = vpop.f32.mrf.mxu0
      %v3392 = vadd.f32 0.0, %v3391
      %v3393 = vpop.f32.mrf.mxu0
      %3394 = vmatprep.mubr.bf16.mxu0 0
      %3395 = vmatmul.mubr.bf16.gmra.mxu0 %v3272
      %v3396 = vpop.f32.mrf.mxu0
      %v3397 = vadd.f32 0.0, %v3396
      %v3398 = vpop.f32.mrf.mxu0
      %v3399 = vpop.f32.mrf.mxu0
      %v3400 = vadd.f32 0.0, %v3399
      %v3401 = vpop.f32.mrf.mxu0
      %3402 = vmatprep.mubr.bf16.mxu0 0
      %3403 = vmatmul.mubr.bf16.gmra.mxu0 %v3275
      %v3404 = vpop.f32.mrf.mxu0
      %v3405 = vadd.f32 0.0, %v3404
      %v3406 = vpop.f32.mrf.mxu0
      %v3407 = vpop.f32.mrf.mxu0
      %v3408 = vadd.f32 0.0, %v3407
      %v3409 = vpop.f32.mrf.mxu0
      %3410 = vmatprep.mubr.bf16.mxu0 0
      %3411 = vmatmul.mubr.bf16.gmra.mxu0 %v3278
      %v3412 = vpop.f32.mrf.mxu0
      %v3413 = vadd.f32 0.0, %v3412
      %v3414 = vpop.f32.mrf.mxu0
      %v3415 = vpop.f32.mrf.mxu0
      %v3416 = vadd.f32 0.0, %v3415
      %v3417 = vpop.f32.mrf.mxu0
      %3418 = vmatprep.mubr.bf16.mxu0 0
      %3419 = vmatmul.mubr.bf16.gmra.mxu0 %v3281
      %v3420 = vpop.f32.mrf.mxu0
      %v3421 = vadd.f32 0.0, %v3420
      %v3422 = vpop.f32.mrf.mxu0
      %v3423 = vpop.f32.mrf.mxu0
      %v3424 = vadd.f32 0.0, %v3423
      %v3425 = vpop.f32.mrf.mxu0
      %3426 = vmatprep.mubr.bf16.mxu0 0
      %3427 = vmatmul.mubr.bf16.gmra.mxu0 %v3284
      %v3428 = vpop.f32.mrf.mxu0
      %v3429 = vadd.f32 0.0, %v3428
      %v3430 = vpop.f32.mrf.mxu0
      %v3431 = vpop.f32.mrf.mxu0
      %v3432 = vadd.f32 0.0, %v3431
      %v3433 = vpop.f32.mrf.mxu0
      %3434 = vmatprep.mubr.bf16.mxu0 0
      %3435 = vmatmul.mubr.bf16.gmra.mxu0 %v3287
      %v3436 = vpop.f32.mrf.mxu0
      %v3437 = vadd.f32 0.0, %v3436
      %v3438 = vpop.f32.mrf.mxu0
      %v3439 = vpop.f32.mrf.mxu0
      %v3440 = vadd.f32 0.0, %v3439
      %v3441 = vpop.f32.mrf.mxu0
      %3442 = vmatprep.mubr.bf16.mxu0 0
      %3443 = vmatmul.mubr.bf16.gmra.mxu0 %v3290
      %v3444 = vpop.f32.mrf.mxu0
      %v3445 = vadd.f32 0.0, %v3444
      %v3446 = vpop.f32.mrf.mxu0
      %v3447 = vpop.f32.mrf.mxu0
      %v3448 = vadd.f32 0.0, %v3447
      %v3449 = vpop.f32.mrf.mxu0
      %3450 = vmatprep.mubr.bf16.mxu0 0
      %3451 = vmatmul.mubr.bf16.gmra.mxu0 %v3293
      %v3452 = vpop.f32.mrf.mxu0
      %v3453 = vadd.f32 0.0, %v3452
      %v3454 = vpop.f32.mrf.mxu0
      %v3455 = vpop.f32.mrf.mxu0
      %v3456 = vadd.f32 0.0, %v3455
      %v3457 = vpop.f32.mrf.mxu0
      %3458 = vdwg.mxu0
      %v3459 = vadd.f32 %v2733, %v3333
      %v3460 = vadd.f32 %v2734, %v3336
      %v3461 = vadd.f32 %v2735, %v3341
      %v3462 = vadd.f32 %v2736, %v3344
      %v3463 = vadd.f32 %v2737, %v3349
      %v3464 = vadd.f32 %v2738, %v3352
      %v3465 = vadd.f32 %v2739, %v3357
      %v3466 = vadd.f32 %v2740, %v3360
      %v3467 = vadd.f32 %v2741, %v3365
      %v3468 = vadd.f32 %v2742, %v3368
      %v3469 = vadd.f32 %v2743, %v3373
      %v3470 = vadd.f32 %v2744, %v3376
      %v3471 = vadd.f32 %v2745, %v3381
      %v3472 = vadd.f32 %v2746, %v3384
      %v3473 = vadd.f32 %v2747, %v3389
      %v3474 = vadd.f32 %v2748, %v3392
      %v3475 = vadd.f32 %v2749, %v3397
      %v3476 = vadd.f32 %v2750, %v3400
      %v3477 = vadd.f32 %v2751, %v3405
      %v3478 = vadd.f32 %v2752, %v3408
      %v3479 = vadd.f32 %v2753, %v3413
      %v3480 = vadd.f32 %v2754, %v3416
      %v3481 = vadd.f32 %v2755, %v3421
      %v3482 = vadd.f32 %v2756, %v3424
      %v3483 = vadd.f32 %v2757, %v3429
      %v3484 = vadd.f32 %v2758, %v3432
      %v3485 = vadd.f32 %v2759, %v3437
      %v3486 = vadd.f32 %v2760, %v3440
      %v3487 = vadd.f32 %v2761, %v3445
      %v3488 = vadd.f32 %v2762, %v3448
      %v3489 = vadd.f32 %v2763, %v3453
      %v3490 = vadd.f32 %v2764, %v3456
      %v3491 = vld [vmem:[%s628] sm:$0xe]
      %v3492 = vld [vmem:[%s628 + $0xc] sm:$0xe]
      %v3493 = vld [vmem:[%s628 + $0x18] sm:$0xe]
      %v3494 = vld [vmem:[%s628 + $0x24] sm:$0xe]
      %v3495 = vld [vmem:[%s628 + $0x30] sm:$0xe]
      %v3496 = vld [vmem:[%s628 + $0x3c] sm:$0xe]
      %v3497 = vld [vmem:[%s628 + $0x48] sm:$0xe]
      %v3498 = vld [vmem:[%s628 + $0x54] sm:$0xe]
      %v3499 = vld [vmem:[%s628 + $0x60] sm:$0xe]
      %v3500 = vld [vmem:[%s628 + $0x6c] sm:$0xe]
      %v3501 = vld [vmem:[%s628 + $0x78] sm:$0xe]
      %v3502 = vld [vmem:[%s628 + $0x84] sm:$0xe]
      %v3503 = vld [vmem:[%s628 + $0x90] sm:$0xe]
      %v3504 = vld [vmem:[%s628 + $0x9c] sm:$0xe]
      %v3505 = vld [vmem:[%s628 + $0xa8] sm:$0xe]
      %v3506 = vld [vmem:[%s628 + $0xb4] sm:$0xe]
      %v3555 = vrot.slane %v3491, 5
      %v3556 = vrot.slane %v3555, 4
      %v3557 = vrot.slane %v2766, 5
      %v3558 = vsel %vm2000, %v3556, %v3557
      %v3559 = vrot.slane %v3557, 4
      %v3560 = vrot.slane %v2767, 5
      %v3561 = vsel %vm2000, %v3559, %v3560
      %v3562 = vrot.slane %v3492, 5
      %v3563 = vrot.slane %v3562, 4
      %v3564 = vrot.slane %v2769, 5
      %v3565 = vsel %vm2000, %v3563, %v3564
      %v3566 = vrot.slane %v3564, 4
      %v3567 = vrot.slane %v2770, 5
      %v3568 = vsel %vm2000, %v3566, %v3567
      %v3569 = vrot.slane %v3493, 5
      %v3570 = vrot.slane %v3569, 4
      %v3571 = vrot.slane %v2772, 5
      %v3572 = vsel %vm2000, %v3570, %v3571
      %v3573 = vrot.slane %v3571, 4
      %v3574 = vrot.slane %v2773, 5
      %v3575 = vsel %vm2000, %v3573, %v3574
      %v3576 = vrot.slane %v3494, 5
      %v3577 = vrot.slane %v3576, 4
      %v3578 = vrot.slane %v2775, 5
      %v3579 = vsel %vm2000, %v3577, %v3578
      %v3580 = vrot.slane %v3578, 4
      %v3581 = vrot.slane %v2776, 5
      %v3582 = vsel %vm2000, %v3580, %v3581
      %v3583 = vrot.slane %v3495, 5
      %v3584 = vrot.slane %v3583, 4
      %v3585 = vrot.slane %v2778, 5
      %v3586 = vsel %vm2000, %v3584, %v3585
      %v3587 = vrot.slane %v3585, 4
      %v3588 = vrot.slane %v2779, 5
      %v3589 = vsel %vm2000, %v3587, %v3588
      %v3590 = vrot.slane %v3496, 5
      %v3591 = vrot.slane %v3590, 4
      %v3592 = vrot.slane %v2781, 5
      %v3593 = vsel %vm2000, %v3591, %v3592
      %v3594 = vrot.slane %v3592, 4
      %v3595 = vrot.slane %v2782, 5
      %v3596 = vsel %vm2000, %v3594, %v3595
      %v3597 = vrot.slane %v3497, 5
      %v3598 = vrot.slane %v3597, 4
      %v3599 = vrot.slane %v2784, 5
      %v3600 = vsel %vm2000, %v3598, %v3599
      %v3601 = vrot.slane %v3599, 4
      %v3602 = vrot.slane %v2785, 5
      %v3603 = vsel %vm2000, %v3601, %v3602
      %v3604 = vrot.slane %v3498, 5
      %v3605 = vrot.slane %v3604, 4
      %v3606 = vrot.slane %v2787, 5
      %v3607 = vsel %vm2000, %v3605, %v3606
      %v3608 = vrot.slane %v3606, 4
      %v3609 = vrot.slane %v2788, 5
      %v3610 = vsel %vm2000, %v3608, %v3609
      %v3611 = vrot.slane %v3499, 5
      %v3612 = vrot.slane %v3611, 4
      %v3613 = vrot.slane %v2790, 5
      %v3614 = vsel %vm2000, %v3612, %v3613
      %v3615 = vrot.slane %v3613, 4
      %v3616 = vrot.slane %v2791, 5
      %v3617 = vsel %vm2000, %v3615, %v3616
      %v3618 = vrot.slane %v3500, 5
      %v3619 = vrot.slane %v3618, 4
      %v3620 = vrot.slane %v2793, 5
      %v3621 = vsel %vm2000, %v3619, %v3620
      %v3622 = vrot.slane %v3620, 4
      %v3623 = vrot.slane %v2794, 5
      %v3624 = vsel %vm2000, %v3622, %v3623
      %v3625 = vrot.slane %v3501, 5
      %v3626 = vrot.slane %v3625, 4
      %v3627 = vrot.slane %v2796, 5
      %v3628 = vsel %vm2000, %v3626, %v3627
      %v3629 = vrot.slane %v3627, 4
      %v3630 = vrot.slane %v2797, 5
      %v3631 = vsel %vm2000, %v3629, %v3630
      %v3632 = vrot.slane %v3502, 5
      %v3633 = vrot.slane %v3632, 4
      %v3634 = vrot.slane %v2799, 5
      %v3635 = vsel %vm2000, %v3633, %v3634
      %v3636 = vrot.slane %v3634, 4
      %v3637 = vrot.slane %v2800, 5
      %v3638 = vsel %vm2000, %v3636, %v3637
      %v3639 = vrot.slane %v3503, 5
      %v3640 = vrot.slane %v3639, 4
      %v3641 = vrot.slane %v2802, 5
      %v3642 = vsel %vm2000, %v3640, %v3641
      %v3643 = vrot.slane %v3641, 4
      %v3644 = vrot.slane %v2803, 5
      %v3645 = vsel %vm2000, %v3643, %v3644
      %v3646 = vrot.slane %v3504, 5
      %v3647 = vrot.slane %v3646, 4
      %v3648 = vrot.slane %v2805, 5
      %v3649 = vsel %vm2000, %v3647, %v3648
      %v3650 = vrot.slane %v3648, 4
      %v3651 = vrot.slane %v2806, 5
      %v3652 = vsel %vm2000, %v3650, %v3651
      %v3653 = vrot.slane %v3505, 5
      %v3654 = vrot.slane %v3653, 4
      %v3655 = vrot.slane %v2808, 5
      %v3656 = vsel %vm2000, %v3654, %v3655
      %v3657 = vrot.slane %v3655, 4
      %v3658 = vrot.slane %v2809, 5
      %v3659 = vsel %vm2000, %v3657, %v3658
      %v3660 = vrot.slane %v3506, 5
      %v3661 = vrot.slane %v3660, 4
      %v3662 = vrot.slane %v2811, 5
      %v3663 = vsel %vm2000, %v3661, %v3662
      %v3664 = vrot.slane %v3662, 4
      %v3665 = vrot.slane %v2812, 5
      %v3666 = vsel %vm2000, %v3664, %v3665
      %s3667 = scalar_lea.vmem %s1, 10
      %v3668 = vld [vmem:[%s3667] sm:$0x3]
      %v3669 = vunpack.c.l.b16 %v3558
      %v3670 = vunpack.c.l.b16 %v3561
      %v3671 = vunpack.c.l.b16 %v3565
      %v3672 = vunpack.c.l.b16 %v3568
      %v3673 = vunpack.c.l.b16 %v3572
      %v3674 = vunpack.c.l.b16 %v3575
      %v3675 = vunpack.c.l.b16 %v3579
      %v3676 = vunpack.c.l.b16 %v3582
      %v3677 = vunpack.c.l.b16 %v3586
      %v3678 = vunpack.c.l.b16 %v3589
      %v3679 = vunpack.c.l.b16 %v3593
      %v3680 = vunpack.c.l.b16 %v3596
      %v3681 = vunpack.c.l.b16 %v3600
      %v3682 = vunpack.c.l.b16 %v3603
      %v3683 = vunpack.c.l.b16 %v3607
      %v3684 = vunpack.c.l.b16 %v3610
      %v3685 = vunpack.c.l.b16 %v3614
      %v3686 = vunpack.c.l.b16 %v3617
      %v3687 = vunpack.c.l.b16 %v3621
      %v3688 = vunpack.c.l.b16 %v3624
      %v3689 = vunpack.c.l.b16 %v3628
      %v3690 = vunpack.c.l.b16 %v3631
      %v3691 = vunpack.c.l.b16 %v3635
      %v3692 = vunpack.c.l.b16 %v3638
      %v3693 = vunpack.c.l.b16 %v3642
      %v3694 = vunpack.c.l.b16 %v3645
      %v3695 = vunpack.c.l.b16 %v3649
      %v3696 = vunpack.c.l.b16 %v3652
      %v3697 = vunpack.c.l.b16 %v3656
      %v3698 = vunpack.c.l.b16 %v3659
      %v3699 = vunpack.c.l.b16 %v3663
      %v3700 = vunpack.c.l.b16 %v3666
      %v3701 = vpack.c.b16 %v3670, %v3669
      %v3702 = vpack.c.b16 %v3672, %v3671
      %v3703 = vpack.c.b16 %v3674, %v3673
      %v3704 = vpack.c.b16 %v3676, %v3675
      %v3705 = vpack.c.b16 %v3678, %v3677
      %v3706 = vpack.c.b16 %v3680, %v3679
      %v3707 = vpack.c.b16 %v3682, %v3681
      %v3708 = vpack.c.b16 %v3684, %v3683
      %v3709 = vpack.c.b16 %v3686, %v3685
      %v3710 = vpack.c.b16 %v3688, %v3687
      %v3711 = vpack.c.b16 %v3690, %v3689
      %v3712 = vpack.c.b16 %v3692, %v3691
      %v3713 = vpack.c.b16 %v3694, %v3693
      %v3714 = vpack.c.b16 %v3696, %v3695
      %v3715 = vpack.c.b16 %v3698, %v3697
      %v3716 = vpack.c.b16 %v3700, %v3699
      %v3718 = vsel %vm1444, %v3701, 0
      %v3721 = vsel %vm1444, %v3702, 0
      %v3724 = vsel %vm1444, %v3703, 0
      %v3727 = vsel %vm1444, %v3704, 0
      %v3730 = vsel %vm1444, %v3705, 0
      %v3733 = vsel %vm1444, %v3706, 0
      %v3736 = vsel %vm1444, %v3707, 0
      %v3739 = vsel %vm1444, %v3708, 0
      %v3742 = vsel %vm1444, %v3709, 0
      %v3745 = vsel %vm1444, %v3710, 0
      %v3748 = vsel %vm1444, %v3711, 0
      %v3751 = vsel %vm1444, %v3712, 0
      %v3754 = vsel %vm1444, %v3713, 0
      %v3757 = vsel %vm1444, %v3714, 0
      %v3760 = vsel %vm1444, %v3715, 0
      %v3763 = vsel %vm1444, %v3716, 0
      %v3766 = vsel %vm1493, %v3668, 0
      %3768 = vmatprep.subr.bf16.mxu0 0
      %3769 = vmatpush1.bf16.msra.mxu0 0
      %3770 = vmatprep.subr.bf16.mxu0 0
      %3771 = vmatpush1.bf16.msra.mxu0 0
      %3772 = vmatprep.subr.bf16.mxu0 0
      %3773 = vmatpush1.bf16.msra.mxu0 0
      %3774 = vmatprep.subr.bf16.mxu0 0
      %3775 = vmatpush1.bf16.msra.mxu0 0
      %3776 = vmatprep.subr.bf16.mxu0 0
      %3777 = vmatpush1.bf16.msra.mxu0 0
      %3778 = vmatprep.subr.bf16.mxu0 0
      %3779 = vmatpush1.bf16.msra.mxu0 0
      %3780 = vmatprep.subr.bf16.mxu0 0
      %3781 = vmatpush1.bf16.msra.mxu0 0
      %3782 = vmatprep.subr.bf16.mxu0 0
      %3783 = vmatpush1.bf16.msra.mxu0 %v3766
      %3784 = vmatprep.subr.bf16.mxu0 0
      %3785 = vmatpush2.bf16.msra.mxu0 0
      %3786 = vmatprep.subr.bf16.mxu0 0
      %3787 = vmatpush2.bf16.msra.mxu0 0
      %3788 = vmatprep.subr.bf16.mxu0 0
      %3789 = vmatpush2.bf16.msra.mxu0 0
      %3790 = vmatprep.subr.bf16.mxu0 0
      %3791 = vmatpush2.bf16.msra.mxu0 0
      %3792 = vmatprep.subr.bf16.mxu0 0
      %3793 = vmatpush2.bf16.msra.mxu0 0
      %3794 = vmatprep.subr.bf16.mxu0 0
      %3795 = vmatpush2.bf16.msra.mxu0 0
      %3796 = vmatprep.subr.bf16.mxu0 0
      %3797 = vmatpush2.bf16.msra.mxu0 0
      %3798 = vmatprep.subr.bf16.mxu0 0
      %3799 = vmatpush2.bf16.msra.mxu0 0
      %3800 = vmatprep.mubr.bf16.mxu0 0
      %3801 = vmatmul.mubr.bf16.gmra.mxu0 %v3718
      %v3802 = vpop.f32.mrf.mxu0
      %v3803 = vadd.f32 0.0, %v3802
      %v3804 = vpop.f32.mrf.mxu0
      %v3805 = vpop.f32.mrf.mxu0
      %v3806 = vadd.f32 0.0, %v3805
      %v3807 = vpop.f32.mrf.mxu0
      %3808 = vmatprep.mubr.bf16.mxu0 0
      %3809 = vmatmul.mubr.bf16.gmra.mxu0 %v3721
      %v3810 = vpop.f32.mrf.mxu0
      %v3811 = vadd.f32 0.0, %v3810
      %v3812 = vpop.f32.mrf.mxu0
      %v3813 = vpop.f32.mrf.mxu0
      %v3814 = vadd.f32 0.0, %v3813
      %v3815 = vpop.f32.mrf.mxu0
      %3816 = vmatprep.mubr.bf16.mxu0 0
      %3817 = vmatmul.mubr.bf16.gmra.mxu0 %v3724
      %v3818 = vpop.f32.mrf.mxu0
      %v3819 = vadd.f32 0.0, %v3818
      %v3820 = vpop.f32.mrf.mxu0
      %v3821 = vpop.f32.mrf.mxu0
      %v3822 = vadd.f32 0.0, %v3821
      %v3823 = vpop.f32.mrf.mxu0
      %3824 = vmatprep.mubr.bf16.mxu0 0
      %3825 = vmatmul.mubr.bf16.gmra.mxu0 %v3727
      %v3826 = vpop.f32.mrf.mxu0
      %v3827 = vadd.f32 0.0, %v3826
      %v3828 = vpop.f32.mrf.mxu0
      %v3829 = vpop.f32.mrf.mxu0
      %v3830 = vadd.f32 0.0, %v3829
      %v3831 = vpop.f32.mrf.mxu0
      %3832 = vmatprep.mubr.bf16.mxu0 0
      %3833 = vmatmul.mubr.bf16.gmra.mxu0 %v3730
      %v3834 = vpop.f32.mrf.mxu0
      %v3835 = vadd.f32 0.0, %v3834
      %v3836 = vpop.f32.mrf.mxu0
      %v3837 = vpop.f32.mrf.mxu0
      %v3838 = vadd.f32 0.0, %v3837
      %v3839 = vpop.f32.mrf.mxu0
      %3840 = vmatprep.mubr.bf16.mxu0 0
      %3841 = vmatmul.mubr.bf16.gmra.mxu0 %v3733
      %v3842 = vpop.f32.mrf.mxu0
      %v3843 = vadd.f32 0.0, %v3842
      %v3844 = vpop.f32.mrf.mxu0
      %v3845 = vpop.f32.mrf.mxu0
      %v3846 = vadd.f32 0.0, %v3845
      %v3847 = vpop.f32.mrf.mxu0
      %3848 = vmatprep.mubr.bf16.mxu0 0
      %3849 = vmatmul.mubr.bf16.gmra.mxu0 %v3736
      %v3850 = vpop.f32.mrf.mxu0
      %v3851 = vadd.f32 0.0, %v3850
      %v3852 = vpop.f32.mrf.mxu0
      %v3853 = vpop.f32.mrf.mxu0
      %v3854 = vadd.f32 0.0, %v3853
      %v3855 = vpop.f32.mrf.mxu0
      %3856 = vmatprep.mubr.bf16.mxu0 0
      %3857 = vmatmul.mubr.bf16.gmra.mxu0 %v3739
      %v3858 = vpop.f32.mrf.mxu0
      %v3859 = vadd.f32 0.0, %v3858
      %v3860 = vpop.f32.mrf.mxu0
      %v3861 = vpop.f32.mrf.mxu0
      %v3862 = vadd.f32 0.0, %v3861
      %v3863 = vpop.f32.mrf.mxu0
      %3864 = vmatprep.mubr.bf16.mxu0 0
      %3865 = vmatmul.mubr.bf16.gmra.mxu0 %v3742
      %v3866 = vpop.f32.mrf.mxu0
      %v3867 = vadd.f32 0.0, %v3866
      %v3868 = vpop.f32.mrf.mxu0
      %v3869 = vpop.f32.mrf.mxu0
      %v3870 = vadd.f32 0.0, %v3869
      %v3871 = vpop.f32.mrf.mxu0
      %3872 = vmatprep.mubr.bf16.mxu0 0
      %3873 = vmatmul.mubr.bf16.gmra.mxu0 %v3745
      %v3874 = vpop.f32.mrf.mxu0
      %v3875 = vadd.f32 0.0, %v3874
      %v3876 = vpop.f32.mrf.mxu0
      %v3877 = vpop.f32.mrf.mxu0
      %v3878 = vadd.f32 0.0, %v3877
      %v3879 = vpop.f32.mrf.mxu0
      %3880 = vmatprep.mubr.bf16.mxu0 0
      %3881 = vmatmul.mubr.bf16.gmra.mxu0 %v3748
      %v3882 = vpop.f32.mrf.mxu0
      %v3883 = vadd.f32 0.0, %v3882
      %v3884 = vpop.f32.mrf.mxu0
      %v3885 = vpop.f32.mrf.mxu0
      %v3886 = vadd.f32 0.0, %v3885
      %v3887 = vpop.f32.mrf.mxu0
      %3888 = vmatprep.mubr.bf16.mxu0 0
      %3889 = vmatmul.mubr.bf16.gmra.mxu0 %v3751
      %v3890 = vpop.f32.mrf.mxu0
      %v3891 = vadd.f32 0.0, %v3890
      %v3892 = vpop.f32.mrf.mxu0
      %v3893 = vpop.f32.mrf.mxu0
      %v3894 = vadd.f32 0.0, %v3893
      %v3895 = vpop.f32.mrf.mxu0
      %3896 = vmatprep.mubr.bf16.mxu0 0
      %3897 = vmatmul.mubr.bf16.gmra.mxu0 %v3754
      %v3898 = vpop.f32.mrf.mxu0
      %v3899 = vadd.f32 0.0, %v3898
      %v3900 = vpop.f32.mrf.mxu0
      %v3901 = vpop.f32.mrf.mxu0
      %v3902 = vadd.f32 0.0, %v3901
      %v3903 = vpop.f32.mrf.mxu0
      %3904 = vmatprep.mubr.bf16.mxu0 0
      %3905 = vmatmul.mubr.bf16.gmra.mxu0 %v3757
      %v3906 = vpop.f32.mrf.mxu0
      %v3907 = vadd.f32 0.0, %v3906
      %v3908 = vpop.f32.mrf.mxu0
      %v3909 = vpop.f32.mrf.mxu0
      %v3910 = vadd.f32 0.0, %v3909
      %v3911 = vpop.f32.mrf.mxu0
      %3912 = vmatprep.mubr.bf16.mxu0 0
      %3913 = vmatmul.mubr.bf16.gmra.mxu0 %v3760
      %v3914 = vpop.f32.mrf.mxu0
      %v3915 = vadd.f32 0.0, %v3914
      %v3916 = vpop.f32.mrf.mxu0
      %v3917 = vpop.f32.mrf.mxu0
      %v3918 = vadd.f32 0.0, %v3917
      %v3919 = vpop.f32.mrf.mxu0
      %3920 = vmatprep.mubr.bf16.mxu0 0
      %3921 = vmatmul.mubr.bf16.gmra.mxu0 %v3763
      %v3922 = vpop.f32.mrf.mxu0
      %v3923 = vadd.f32 0.0, %v3922
      %v3924 = vpop.f32.mrf.mxu0
      %v3925 = vpop.f32.mrf.mxu0
      %v3926 = vadd.f32 0.0, %v3925
      %v3927 = vpop.f32.mrf.mxu0
      %3928 = vdwg.mxu0
      %v3929 = vadd.f32 %v3459, %v3803
      %v3930 = vadd.f32 %v3460, %v3806
      %v3931 = vadd.f32 %v3461, %v3811
      %v3932 = vadd.f32 %v3462, %v3814
      %v3933 = vadd.f32 %v3463, %v3819
      %v3934 = vadd.f32 %v3464, %v3822
      %v3935 = vadd.f32 %v3465, %v3827
      %v3936 = vadd.f32 %v3466, %v3830
      %v3937 = vadd.f32 %v3467, %v3835
      %v3938 = vadd.f32 %v3468, %v3838
      %v3939 = vadd.f32 %v3469, %v3843
      %v3940 = vadd.f32 %v3470, %v3846
      %v3941 = vadd.f32 %v3471, %v3851
      %v3942 = vadd.f32 %v3472, %v3854
      %v3943 = vadd.f32 %v3473, %v3859
      %v3944 = vadd.f32 %v3474, %v3862
      %v3945 = vadd.f32 %v3475, %v3867
      %v3946 = vadd.f32 %v3476, %v3870
      %v3947 = vadd.f32 %v3477, %v3875
      %v3948 = vadd.f32 %v3478, %v3878
      %v3949 = vadd.f32 %v3479, %v3883
      %v3950 = vadd.f32 %v3480, %v3886
      %v3951 = vadd.f32 %v3481, %v3891
      %v3952 = vadd.f32 %v3482, %v3894
      %v3953 = vadd.f32 %v3483, %v3899
      %v3954 = vadd.f32 %v3484, %v3902
      %v3955 = vadd.f32 %v3485, %v3907
      %v3956 = vadd.f32 %v3486, %v3910
      %v3957 = vadd.f32 %v3487, %v3915
      %v3958 = vadd.f32 %v3488, %v3918
      %v3959 = vadd.f32 %v3489, %v3923
      %v3960 = vadd.f32 %v3490, %v3926
      %s3961 = sadd.s32 0, 2
      %s3962 = smul.u32 %s3961, 3
      %s3963 = smul.addr %s3962, 4
      %s3964 = scalar_lea.vmem [#allocation2], %s3963
      %v3965 = vld [vmem:[%s3964] sm:$0xf]
      %v3966 = vld [vmem:[%s3964 + $0x4] sm:$0xf]
      %v3967 = vld [vmem:[%s3964 + $0xc] sm:$0xf]
      %v3968 = vld [vmem:[%s3964 + $0x10] sm:$0xf]
      %v3969 = vld [vmem:[%s3964 + $0x18] sm:$0xf]
      %v3970 = vld [vmem:[%s3964 + $0x1c] sm:$0xf]
      %v3971 = vld [vmem:[%s3964 + $0x24] sm:$0xf]
      %v3972 = vld [vmem:[%s3964 + $0x28] sm:$0xf]
      %v3973 = vld [vmem:[%s3964 + $0x30] sm:$0xf]
      %v3974 = vld [vmem:[%s3964 + $0x34] sm:$0xf]
      %v3975 = vld [vmem:[%s3964 + $0x3c] sm:$0xf]
      %v3976 = vld [vmem:[%s3964 + $0x40] sm:$0xf]
      %v3977 = vld [vmem:[%s3964 + $0x48] sm:$0xf]
      %v3978 = vld [vmem:[%s3964 + $0x4c] sm:$0xf]
      %v3979 = vld [vmem:[%s3964 + $0x54] sm:$0xf]
      %v3980 = vld [vmem:[%s3964 + $0x58] sm:$0xf]
      %v3981 = vld [vmem:[%s3964 + $0x60] sm:$0xf]
      %v3982 = vld [vmem:[%s3964 + $0x64] sm:$0xf]
      %v3983 = vld [vmem:[%s3964 + $0x6c] sm:$0xf]
      %v3984 = vld [vmem:[%s3964 + $0x70] sm:$0xf]
      %v3985 = vld [vmem:[%s3964 + $0x78] sm:$0xf]
      %v3986 = vld [vmem:[%s3964 + $0x7c] sm:$0xf]
      %v3987 = vld [vmem:[%s3964 + $0x84] sm:$0xf]
      %v3988 = vld [vmem:[%s3964 + $0x88] sm:$0xf]
      %v3989 = vld [vmem:[%s3964 + $0x90] sm:$0xf]
      %v3990 = vld [vmem:[%s3964 + $0x94] sm:$0xf]
      %v3991 = vld [vmem:[%s3964 + $0x9c] sm:$0xf]
      %v3992 = vld [vmem:[%s3964 + $0xa0] sm:$0xf]
      %v3993 = vld [vmem:[%s3964 + $0xa8] sm:$0xf]
      %v3994 = vld [vmem:[%s3964 + $0xac] sm:$0xf]
      %v3995 = vld [vmem:[%s3964 + $0xb4] sm:$0xf]
      %v3996 = vld [vmem:[%s3964 + $0xb8] sm:$0xf]
      %s3997 = scalar_lea.vmem %s1, 12
      %v3998 = vld [vmem:[%s3997] sm:$0x3]
      %v4031 = vunpack.c.l.b16 %v3965
      %v4032 = vunpack.c.l.b16 %v3966
      %v4033 = vunpack.c.l.b16 %v3967
      %v4034 = vunpack.c.l.b16 %v3968
      %v4035 = vunpack.c.l.b16 %v3969
      %v4036 = vunpack.c.l.b16 %v3970
      %v4037 = vunpack.c.l.b16 %v3971
      %v4038 = vunpack.c.l.b16 %v3972
      %v4039 = vunpack.c.l.b16 %v3973
      %v4040 = vunpack.c.l.b16 %v3974
      %v4041 = vunpack.c.l.b16 %v3975
      %v4042 = vunpack.c.l.b16 %v3976
      %v4043 = vunpack.c.l.b16 %v3977
      %v4044 = vunpack.c.l.b16 %v3978
      %v4045 = vunpack.c.l.b16 %v3979
      %v4046 = vunpack.c.l.b16 %v3980
      %v4047 = vunpack.c.l.b16 %v3981
      %v4048 = vunpack.c.l.b16 %v3982
      %v4049 = vunpack.c.l.b16 %v3983
      %v4050 = vunpack.c.l.b16 %v3984
      %v4051 = vunpack.c.l.b16 %v3985
      %v4052 = vunpack.c.l.b16 %v3986
      %v4053 = vunpack.c.l.b16 %v3987
      %v4054 = vunpack.c.l.b16 %v3988
      %v4055 = vunpack.c.l.b16 %v3989
      %v4056 = vunpack.c.l.b16 %v3990
      %v4057 = vunpack.c.l.b16 %v3991
      %v4058 = vunpack.c.l.b16 %v3992
      %v4059 = vunpack.c.l.b16 %v3993
      %v4060 = vunpack.c.l.b16 %v3994
      %v4061 = vunpack.c.l.b16 %v3995
      %v4062 = vunpack.c.l.b16 %v3996
      %v4063 = vpack.c.b16 %v4032, %v4031
      %v4064 = vpack.c.b16 %v4034, %v4033
      %v4065 = vpack.c.b16 %v4036, %v4035
      %v4066 = vpack.c.b16 %v4038, %v4037
      %v4067 = vpack.c.b16 %v4040, %v4039
      %v4068 = vpack.c.b16 %v4042, %v4041
      %v4069 = vpack.c.b16 %v4044, %v4043
      %v4070 = vpack.c.b16 %v4046, %v4045
      %v4071 = vpack.c.b16 %v4048, %v4047
      %v4072 = vpack.c.b16 %v4050, %v4049
      %v4073 = vpack.c.b16 %v4052, %v4051
      %v4074 = vpack.c.b16 %v4054, %v4053
      %v4075 = vpack.c.b16 %v4056, %v4055
      %v4076 = vpack.c.b16 %v4058, %v4057
      %v4077 = vpack.c.b16 %v4060, %v4059
      %v4078 = vpack.c.b16 %v4062, %v4061
      %v4080 = vsel %vm1444, %v4063, 0
      %v4083 = vsel %vm1444, %v4064, 0
      %v4086 = vsel %vm1444, %v4065, 0
      %v4089 = vsel %vm1444, %v4066, 0
      %v4092 = vsel %vm1444, %v4067, 0
      %v4095 = vsel %vm1444, %v4068, 0
      %v4098 = vsel %vm1444, %v4069, 0
      %v4101 = vsel %vm1444, %v4070, 0
      %v4104 = vsel %vm1444, %v4071, 0
      %v4107 = vsel %vm1444, %v4072, 0
      %v4110 = vsel %vm1444, %v4073, 0
      %v4113 = vsel %vm1444, %v4074, 0
      %v4116 = vsel %vm1444, %v4075, 0
      %v4119 = vsel %vm1444, %v4076, 0
      %v4122 = vsel %vm1444, %v4077, 0
      %v4125 = vsel %vm1444, %v4078, 0
      %v4128 = vsel %vm1493, %v3998, 0
      %4130 = vmatprep.subr.bf16.mxu0 0
      %4131 = vmatpush1.bf16.msra.mxu0 0
      %4132 = vmatprep.subr.bf16.mxu0 0
      %4133 = vmatpush1.bf16.msra.mxu0 0
      %4134 = vmatprep.subr.bf16.mxu0 0
      %4135 = vmatpush1.bf16.msra.mxu0 0
      %4136 = vmatprep.subr.bf16.mxu0 0
      %4137 = vmatpush1.bf16.msra.mxu0 0
      %4138 = vmatprep.subr.bf16.mxu0 0
      %4139 = vmatpush1.bf16.msra.mxu0 0
      %4140 = vmatprep.subr.bf16.mxu0 0
      %4141 = vmatpush1.bf16.msra.mxu0 0
      %4142 = vmatprep.subr.bf16.mxu0 0
      %4143 = vmatpush1.bf16.msra.mxu0 0
      %4144 = vmatprep.subr.bf16.mxu0 0
      %4145 = vmatpush1.bf16.msra.mxu0 %v4128
      %4146 = vmatprep.subr.bf16.mxu0 0
      %4147 = vmatpush2.bf16.msra.mxu0 0
      %4148 = vmatprep.subr.bf16.mxu0 0
      %4149 = vmatpush2.bf16.msra.mxu0 0
      %4150 = vmatprep.subr.bf16.mxu0 0
      %4151 = vmatpush2.bf16.msra.mxu0 0
      %4152 = vmatprep.subr.bf16.mxu0 0
      %4153 = vmatpush2.bf16.msra.mxu0 0
      %4154 = vmatprep.subr.bf16.mxu0 0
      %4155 = vmatpush2.bf16.msra.mxu0 0
      %4156 = vmatprep.subr.bf16.mxu0 0
      %4157 = vmatpush2.bf16.msra.mxu0 0
      %4158 = vmatprep.subr.bf16.mxu0 0
      %4159 = vmatpush2.bf16.msra.mxu0 0
      %4160 = vmatprep.subr.bf16.mxu0 0
      %4161 = vmatpush2.bf16.msra.mxu0 0
      %4162 = vmatprep.mubr.bf16.mxu0 0
      %4163 = vmatmul.mubr.bf16.gmra.mxu0 %v4080
      %v4164 = vpop.f32.mrf.mxu0
      %v4165 = vadd.f32 0.0, %v4164
      %v4166 = vpop.f32.mrf.mxu0
      %v4167 = vpop.f32.mrf.mxu0
      %v4168 = vadd.f32 0.0, %v4167
      %v4169 = vpop.f32.mrf.mxu0
      %4170 = vmatprep.mubr.bf16.mxu0 0
      %4171 = vmatmul.mubr.bf16.gmra.mxu0 %v4083
      %v4172 = vpop.f32.mrf.mxu0
      %v4173 = vadd.f32 0.0, %v4172
      %v4174 = vpop.f32.mrf.mxu0
      %v4175 = vpop.f32.mrf.mxu0
      %v4176 = vadd.f32 0.0, %v4175
      %v4177 = vpop.f32.mrf.mxu0
      %4178 = vmatprep.mubr.bf16.mxu0 0
      %4179 = vmatmul.mubr.bf16.gmra.mxu0 %v4086
      %v4180 = vpop.f32.mrf.mxu0
      %v4181 = vadd.f32 0.0, %v4180
      %v4182 = vpop.f32.mrf.mxu0
      %v4183 = vpop.f32.mrf.mxu0
      %v4184 = vadd.f32 0.0, %v4183
      %v4185 = vpop.f32.mrf.mxu0
      %4186 = vmatprep.mubr.bf16.mxu0 0
      %4187 = vmatmul.mubr.bf16.gmra.mxu0 %v4089
      %v4188 = vpop.f32.mrf.mxu0
      %v4189 = vadd.f32 0.0, %v4188
      %v4190 = vpop.f32.mrf.mxu0
      %v4191 = vpop.f32.mrf.mxu0
      %v4192 = vadd.f32 0.0, %v4191
      %v4193 = vpop.f32.mrf.mxu0
      %4194 = vmatprep.mubr.bf16.mxu0 0
      %4195 = vmatmul.mubr.bf16.gmra.mxu0 %v4092
      %v4196 = vpop.f32.mrf.mxu0
      %v4197 = vadd.f32 0.0, %v4196
      %v4198 = vpop.f32.mrf.mxu0
      %v4199 = vpop.f32.mrf.mxu0
      %v4200 = vadd.f32 0.0, %v4199
      %v4201 = vpop.f32.mrf.mxu0
      %4202 = vmatprep.mubr.bf16.mxu0 0
      %4203 = vmatmul.mubr.bf16.gmra.mxu0 %v4095
      %v4204 = vpop.f32.mrf.mxu0
      %v4205 = vadd.f32 0.0, %v4204
      %v4206 = vpop.f32.mrf.mxu0
      %v4207 = vpop.f32.mrf.mxu0
      %v4208 = vadd.f32 0.0, %v4207
      %v4209 = vpop.f32.mrf.mxu0
      %4210 = vmatprep.mubr.bf16.mxu0 0
      %4211 = vmatmul.mubr.bf16.gmra.mxu0 %v4098
      %v4212 = vpop.f32.mrf.mxu0
      %v4213 = vadd.f32 0.0, %v4212
      %v4214 = vpop.f32.mrf.mxu0
      %v4215 = vpop.f32.mrf.mxu0
      %v4216 = vadd.f32 0.0, %v4215
      %v4217 = vpop.f32.mrf.mxu0
      %4218 = vmatprep.mubr.bf16.mxu0 0
      %4219 = vmatmul.mubr.bf16.gmra.mxu0 %v4101
      %v4220 = vpop.f32.mrf.mxu0
      %v4221 = vadd.f32 0.0, %v4220
      %v4222 = vpop.f32.mrf.mxu0
      %v4223 = vpop.f32.mrf.mxu0
      %v4224 = vadd.f32 0.0, %v4223
      %v4225 = vpop.f32.mrf.mxu0
      %4226 = vmatprep.mubr.bf16.mxu0 0
      %4227 = vmatmul.mubr.bf16.gmra.mxu0 %v4104
      %v4228 = vpop.f32.mrf.mxu0
      %v4229 = vadd.f32 0.0, %v4228
      %v4230 = vpop.f32.mrf.mxu0
      %v4231 = vpop.f32.mrf.mxu0
      %v4232 = vadd.f32 0.0, %v4231
      %v4233 = vpop.f32.mrf.mxu0
      %4234 = vmatprep.mubr.bf16.mxu0 0
      %4235 = vmatmul.mubr.bf16.gmra.mxu0 %v4107
      %v4236 = vpop.f32.mrf.mxu0
      %v4237 = vadd.f32 0.0, %v4236
      %v4238 = vpop.f32.mrf.mxu0
      %v4239 = vpop.f32.mrf.mxu0
      %v4240 = vadd.f32 0.0, %v4239
      %v4241 = vpop.f32.mrf.mxu0
      %4242 = vmatprep.mubr.bf16.mxu0 0
      %4243 = vmatmul.mubr.bf16.gmra.mxu0 %v4110
      %v4244 = vpop.f32.mrf.mxu0
      %v4245 = vadd.f32 0.0, %v4244
      %v4246 = vpop.f32.mrf.mxu0
      %v4247 = vpop.f32.mrf.mxu0
      %v4248 = vadd.f32 0.0, %v4247
      %v4249 = vpop.f32.mrf.mxu0
      %4250 = vmatprep.mubr.bf16.mxu0 0
      %4251 = vmatmul.mubr.bf16.gmra.mxu0 %v4113
      %v4252 = vpop.f32.mrf.mxu0
      %v4253 = vadd.f32 0.0, %v4252
      %v4254 = vpop.f32.mrf.mxu0
      %v4255 = vpop.f32.mrf.mxu0
      %v4256 = vadd.f32 0.0, %v4255
      %v4257 = vpop.f32.mrf.mxu0
      %4258 = vmatprep.mubr.bf16.mxu0 0
      %4259 = vmatmul.mubr.bf16.gmra.mxu0 %v4116
      %v4260 = vpop.f32.mrf.mxu0
      %v4261 = vadd.f32 0.0, %v4260
      %v4262 = vpop.f32.mrf.mxu0
      %v4263 = vpop.f32.mrf.mxu0
      %v4264 = vadd.f32 0.0, %v4263
      %v4265 = vpop.f32.mrf.mxu0
      %4266 = vmatprep.mubr.bf16.mxu0 0
      %4267 = vmatmul.mubr.bf16.gmra.mxu0 %v4119
      %v4268 = vpop.f32.mrf.mxu0
      %v4269 = vadd.f32 0.0, %v4268
      %v4270 = vpop.f32.mrf.mxu0
      %v4271 = vpop.f32.mrf.mxu0
      %v4272 = vadd.f32 0.0, %v4271
      %v4273 = vpop.f32.mrf.mxu0
      %4274 = vmatprep.mubr.bf16.mxu0 0
      %4275 = vmatmul.mubr.bf16.gmra.mxu0 %v4122
      %v4276 = vpop.f32.mrf.mxu0
      %v4277 = vadd.f32 0.0, %v4276
      %v4278 = vpop.f32.mrf.mxu0
      %v4279 = vpop.f32.mrf.mxu0
      %v4280 = vadd.f32 0.0, %v4279
      %v4281 = vpop.f32.mrf.mxu0
      %4282 = vmatprep.mubr.bf16.mxu0 0
      %4283 = vmatmul.mubr.bf16.gmra.mxu0 %v4125
      %v4284 = vpop.f32.mrf.mxu0
      %v4285 = vadd.f32 0.0, %v4284
      %v4286 = vpop.f32.mrf.mxu0
      %v4287 = vpop.f32.mrf.mxu0
      %v4288 = vadd.f32 0.0, %v4287
      %v4289 = vpop.f32.mrf.mxu0
      %4290 = vdwg.mxu0
      %v4291 = vadd.f32 %v3929, %v4165
      %v4292 = vadd.f32 %v3930, %v4168
      %v4293 = vadd.f32 %v3931, %v4173
      %v4294 = vadd.f32 %v3932, %v4176
      %v4295 = vadd.f32 %v3933, %v4181
      %v4296 = vadd.f32 %v3934, %v4184
      %v4297 = vadd.f32 %v3935, %v4189
      %v4298 = vadd.f32 %v3936, %v4192
      %v4299 = vadd.f32 %v3937, %v4197
      %v4300 = vadd.f32 %v3938, %v4200
      %v4301 = vadd.f32 %v3939, %v4205
      %v4302 = vadd.f32 %v3940, %v4208
      %v4303 = vadd.f32 %v3941, %v4213
      %v4304 = vadd.f32 %v3942, %v4216
      %v4305 = vadd.f32 %v3943, %v4221
      %v4306 = vadd.f32 %v3944, %v4224
      %v4307 = vadd.f32 %v3945, %v4229
      %v4308 = vadd.f32 %v3946, %v4232
      %v4309 = vadd.f32 %v3947, %v4237
      %v4310 = vadd.f32 %v3948, %v4240
      %v4311 = vadd.f32 %v3949, %v4245
      %v4312 = vadd.f32 %v3950, %v4248
      %v4313 = vadd.f32 %v3951, %v4253
      %v4314 = vadd.f32 %v3952, %v4256
      %v4315 = vadd.f32 %v3953, %v4261
      %v4316 = vadd.f32 %v3954, %v4264
      %v4317 = vadd.f32 %v3955, %v4269
      %v4318 = vadd.f32 %v3956, %v4272
      %v4319 = vadd.f32 %v3957, %v4277
      %v4320 = vadd.f32 %v3958, %v4280
      %v4321 = vadd.f32 %v3959, %v4285
      %v4322 = vadd.f32 %v3960, %v4288
      %v4323 = vld [vmem:[%s3964] sm:$0xf]
      %v4324 = vld [vmem:[%s3964 + $0x4] sm:$0xf]
      %v4325 = vld [vmem:[%s3964 + $0x8] sm:$0x1]
      %v4326 = vld [vmem:[%s3964 + $0xc] sm:$0xf]
      %v4327 = vld [vmem:[%s3964 + $0x10] sm:$0xf]
      %v4328 = vld [vmem:[%s3964 + $0x14] sm:$0x1]
      %v4329 = vld [vmem:[%s3964 + $0x18] sm:$0xf]
      %v4330 = vld [vmem:[%s3964 + $0x1c] sm:$0xf]
      %v4331 = vld [vmem:[%s3964 + $0x20] sm:$0x1]
      %v4332 = vld [vmem:[%s3964 + $0x24] sm:$0xf]
      %v4333 = vld [vmem:[%s3964 + $0x28] sm:$0xf]
      %v4334 = vld [vmem:[%s3964 + $0x2c] sm:$0x1]
      %v4335 = vld [vmem:[%s3964 + $0x30] sm:$0xf]
      %v4336 = vld [vmem:[%s3964 + $0x34] sm:$0xf]
      %v4337 = vld [vmem:[%s3964 + $0x38] sm:$0x1]
      %v4338 = vld [vmem:[%s3964 + $0x3c] sm:$0xf]
      %v4339 = vld [vmem:[%s3964 + $0x40] sm:$0xf]
      %v4340 = vld [vmem:[%s3964 + $0x44] sm:$0x1]
      %v4341 = vld [vmem:[%s3964 + $0x48] sm:$0xf]
      %v4342 = vld [vmem:[%s3964 + $0x4c] sm:$0xf]
      %v4343 = vld [vmem:[%s3964 + $0x50] sm:$0x1]
      %v4344 = vld [vmem:[%s3964 + $0x54] sm:$0xf]
      %v4345 = vld [vmem:[%s3964 + $0x58] sm:$0xf]
      %v4346 = vld [vmem:[%s3964 + $0x5c] sm:$0x1]
      %v4347 = vld [vmem:[%s3964 + $0x60] sm:$0xf]
      %v4348 = vld [vmem:[%s3964 + $0x64] sm:$0xf]
      %v4349 = vld [vmem:[%s3964 + $0x68] sm:$0x1]
      %v4350 = vld [vmem:[%s3964 + $0x6c] sm:$0xf]
      %v4351 = vld [vmem:[%s3964 + $0x70] sm:$0xf]
      %v4352 = vld [vmem:[%s3964 + $0x74] sm:$0x1]
      %v4353 = vld [vmem:[%s3964 + $0x78] sm:$0xf]
      %v4354 = vld [vmem:[%s3964 + $0x7c] sm:$0xf]
      %v4355 = vld [vmem:[%s3964 + $0x80] sm:$0x1]
      %v4356 = vld [vmem:[%s3964 + $0x84] sm:$0xf]
      %v4357 = vld [vmem:[%s3964 + $0x88] sm:$0xf]
      %v4358 = vld [vmem:[%s3964 + $0x8c] sm:$0x1]
      %v4359 = vld [vmem:[%s3964 + $0x90] sm:$0xf]
      %v4360 = vld [vmem:[%s3964 + $0x94] sm:$0xf]
      %v4361 = vld [vmem:[%s3964 + $0x98] sm:$0x1]
      %v4362 = vld [vmem:[%s3964 + $0x9c] sm:$0xf]
      %v4363 = vld [vmem:[%s3964 + $0xa0] sm:$0xf]
      %v4364 = vld [vmem:[%s3964 + $0xa4] sm:$0x1]
      %v4365 = vld [vmem:[%s3964 + $0xa8] sm:$0xf]
      %v4366 = vld [vmem:[%s3964 + $0xac] sm:$0xf]
      %v4367 = vld [vmem:[%s3964 + $0xb0] sm:$0x1]
      %v4368 = vld [vmem:[%s3964 + $0xb4] sm:$0xf]
      %v4369 = vld [vmem:[%s3964 + $0xb8] sm:$0xf]
      %v4370 = vld [vmem:[%s3964 + $0xbc] sm:$0x1]
      %v4372 = vshrl.u32 %v4323, 16
      %v4374 = vrot.slane %v4372, 4
      %v4375 = vshll.u32 %v4323, 16
      %v4377 = vrot.slane %v4375, 5
      %v4378 = vor.u32 %v4374, %v4377
      %v4379 = vrot.slane %v4378, 4
      %v4381 = vshll.u32 %v4324, 16
      %v4383 = vrot.slane %v4381, 5
      %v4384 = vsel %vm1009, %v4379, %v4383
      %v4385 = vshrl.u32 %v4324, 16
      %v4387 = vrot.slane %v4385, 4
      %v4388 = vor.u32 %v4387, %v4383
      %v4389 = vrot.slane %v4388, 4
      %v4391 = vshll.u32 %v4325, 16
      %v4393 = vrot.slane %v4391, 5
      %v4394 = vsel %vm1009, %v4389, %v4393
      %v4396 = vshrl.u32 %v4326, 16
      %v4398 = vrot.slane %v4396, 4
      %v4399 = vshll.u32 %v4326, 16
      %v4401 = vrot.slane %v4399, 5
      %v4402 = vor.u32 %v4398, %v4401
      %v4403 = vrot.slane %v4402, 4
      %v4405 = vshll.u32 %v4327, 16
      %v4407 = vrot.slane %v4405, 5
      %v4408 = vsel %vm1009, %v4403, %v4407
      %v4409 = vshrl.u32 %v4327, 16
      %v4411 = vrot.slane %v4409, 4
      %v4412 = vor.u32 %v4411, %v4407
      %v4413 = vrot.slane %v4412, 4
      %v4415 = vshll.u32 %v4328, 16
      %v4417 = vrot.slane %v4415, 5
      %v4418 = vsel %vm1009, %v4413, %v4417
      %v4420 = vshrl.u32 %v4329, 16
      %v4422 = vrot.slane %v4420, 4
      %v4423 = vshll.u32 %v4329, 16
      %v4425 = vrot.slane %v4423, 5
      %v4426 = vor.u32 %v4422, %v4425
      %v4427 = vrot.slane %v4426, 4
      %v4429 = vshll.u32 %v4330, 16
      %v4431 = vrot.slane %v4429, 5
      %v4432 = vsel %vm1009, %v4427, %v4431
      %v4433 = vshrl.u32 %v4330, 16
      %v4435 = vrot.slane %v4433, 4
      %v4436 = vor.u32 %v4435, %v4431
      %v4437 = vrot.slane %v4436, 4
      %v4439 = vshll.u32 %v4331, 16
      %v4441 = vrot.slane %v4439, 5
      %v4442 = vsel %vm1009, %v4437, %v4441
      %v4444 = vshrl.u32 %v4332, 16
      %v4446 = vrot.slane %v4444, 4
      %v4447 = vshll.u32 %v4332, 16
      %v4449 = vrot.slane %v4447, 5
      %v4450 = vor.u32 %v4446, %v4449
      %v4451 = vrot.slane %v4450, 4
      %v4453 = vshll.u32 %v4333, 16
      %v4455 = vrot.slane %v4453, 5
      %v4456 = vsel %vm1009, %v4451, %v4455
      %v4457 = vshrl.u32 %v4333, 16
      %v4459 = vrot.slane %v4457, 4
      %v4460 = vor.u32 %v4459, %v4455
      %v4461 = vrot.slane %v4460, 4
      %v4463 = vshll.u32 %v4334, 16
      %v4465 = vrot.slane %v4463, 5
      %v4466 = vsel %vm1009, %v4461, %v4465
      %v4468 = vshrl.u32 %v4335, 16
      %v4470 = vrot.slane %v4468, 4
      %v4471 = vshll.u32 %v4335, 16
      %v4473 = vrot.slane %v4471, 5
      %v4474 = vor.u32 %v4470, %v4473
      %v4475 = vrot.slane %v4474, 4
      %v4477 = vshll.u32 %v4336, 16
      %v4479 = vrot.slane %v4477, 5
      %v4480 = vsel %vm1009, %v4475, %v4479
      %v4481 = vshrl.u32 %v4336, 16
      %v4483 = vrot.slane %v4481, 4
      %v4484 = vor.u32 %v4483, %v4479
      %v4485 = vrot.slane %v4484, 4
      %v4487 = vshll.u32 %v4337, 16
      %v4489 = vrot.slane %v4487, 5
      %v4490 = vsel %vm1009, %v4485, %v4489
      %v4492 = vshrl.u32 %v4338, 16
      %v4494 = vrot.slane %v4492, 4
      %v4495 = vshll.u32 %v4338, 16
      %v4497 = vrot.slane %v4495, 5
      %v4498 = vor.u32 %v4494, %v4497
      %v4499 = vrot.slane %v4498, 4
      %v4501 = vshll.u32 %v4339, 16
      %v4503 = vrot.slane %v4501, 5
      %v4504 = vsel %vm1009, %v4499, %v4503
      %v4505 = vshrl.u32 %v4339, 16
      %v4507 = vrot.slane %v4505, 4
      %v4508 = vor.u32 %v4507, %v4503
      %v4509 = vrot.slane %v4508, 4
      %v4511 = vshll.u32 %v4340, 16
      %v4513 = vrot.slane %v4511, 5
      %v4514 = vsel %vm1009, %v4509, %v4513
      %v4516 = vshrl.u32 %v4341, 16
      %v4518 = vrot.slane %v4516, 4
      %v4519 = vshll.u32 %v4341, 16
      %v4521 = vrot.slane %v4519, 5
      %v4522 = vor.u32 %v4518, %v4521
      %v4523 = vrot.slane %v4522, 4
      %v4525 = vshll.u32 %v4342, 16
      %v4527 = vrot.slane %v4525, 5
      %v4528 = vsel %vm1009, %v4523, %v4527
      %v4529 = vshrl.u32 %v4342, 16
      %v4531 = vrot.slane %v4529, 4
      %v4532 = vor.u32 %v4531, %v4527
      %v4533 = vrot.slane %v4532, 4
      %v4535 = vshll.u32 %v4343, 16
      %v4537 = vrot.slane %v4535, 5
      %v4538 = vsel %vm1009, %v4533, %v4537
      %v4540 = vshrl.u32 %v4344, 16
      %v4542 = vrot.slane %v4540, 4
      %v4543 = vshll.u32 %v4344, 16
      %v4545 = vrot.slane %v4543, 5
      %v4546 = vor.u32 %v4542, %v4545
      %v4547 = vrot.slane %v4546, 4
      %v4549 = vshll.u32 %v4345, 16
      %v4551 = vrot.slane %v4549, 5
      %v4552 = vsel %vm1009, %v4547, %v4551
      %v4553 = vshrl.u32 %v4345, 16
      %v4555 = vrot.slane %v4553, 4
      %v4556 = vor.u32 %v4555, %v4551
      %v4557 = vrot.slane %v4556, 4
      %v4559 = vshll.u32 %v4346, 16
      %v4561 = vrot.slane %v4559, 5
      %v4562 = vsel %vm1009, %v4557, %v4561
      %v4564 = vshrl.u32 %v4347, 16
      %v4566 = vrot.slane %v4564, 4
      %v4567 = vshll.u32 %v4347, 16
      %v4569 = vrot.slane %v4567, 5
      %v4570 = vor.u32 %v4566, %v4569
      %v4571 = vrot.slane %v4570, 4
      %v4573 = vshll.u32 %v4348, 16
      %v4575 = vrot.slane %v4573, 5
      %v4576 = vsel %vm1009, %v4571, %v4575
      %v4577 = vshrl.u32 %v4348, 16
      %v4579 = vrot.slane %v4577, 4
      %v4580 = vor.u32 %v4579, %v4575
      %v4581 = vrot.slane %v4580, 4
      %v4583 = vshll.u32 %v4349, 16
      %v4585 = vrot.slane %v4583, 5
      %v4586 = vsel %vm1009, %v4581, %v4585
      %v4588 = vshrl.u32 %v4350, 16
      %v4590 = vrot.slane %v4588, 4
      %v4591 = vshll.u32 %v4350, 16
      %v4593 = vrot.slane %v4591, 5
      %v4594 = vor.u32 %v4590, %v4593
      %v4595 = vrot.slane %v4594, 4
      %v4597 = vshll.u32 %v4351, 16
      %v4599 = vrot.slane %v4597, 5
      %v4600 = vsel %vm1009, %v4595, %v4599
      %v4601 = vshrl.u32 %v4351, 16
      %v4603 = vrot.slane %v4601, 4
      %v4604 = vor.u32 %v4603, %v4599
      %v4605 = vrot.slane %v4604, 4
      %v4607 = vshll.u32 %v4352, 16
      %v4609 = vrot.slane %v4607, 5
      %v4610 = vsel %vm1009, %v4605, %v4609
      %v4612 = vshrl.u32 %v4353, 16
      %v4614 = vrot.slane %v4612, 4
      %v4615 = vshll.u32 %v4353, 16
      %v4617 = vrot.slane %v4615, 5
      %v4618 = vor.u32 %v4614, %v4617
      %v4619 = vrot.slane %v4618, 4
      %v4621 = vshll.u32 %v4354, 16
      %v4623 = vrot.slane %v4621, 5
      %v4624 = vsel %vm1009, %v4619, %v4623
      %v4625 = vshrl.u32 %v4354, 16
      %v4627 = vrot.slane %v4625, 4
      %v4628 = vor.u32 %v4627, %v4623
      %v4629 = vrot.slane %v4628, 4
      %v4631 = vshll.u32 %v4355, 16
      %v4633 = vrot.slane %v4631, 5
      %v4634 = vsel %vm1009, %v4629, %v4633
      %v4636 = vshrl.u32 %v4356, 16
      %v4638 = vrot.slane %v4636, 4
      %v4639 = vshll.u32 %v4356, 16
      %v4641 = vrot.slane %v4639, 5
      %v4642 = vor.u32 %v4638, %v4641
      %v4643 = vrot.slane %v4642, 4
      %v4645 = vshll.u32 %v4357, 16
      %v4647 = vrot.slane %v4645, 5
      %v4648 = vsel %vm1009, %v4643, %v4647
      %v4649 = vshrl.u32 %v4357, 16
      %v4651 = vrot.slane %v4649, 4
      %v4652 = vor.u32 %v4651, %v4647
      %v4653 = vrot.slane %v4652, 4
      %v4655 = vshll.u32 %v4358, 16
      %v4657 = vrot.slane %v4655, 5
      %v4658 = vsel %vm1009, %v4653, %v4657
      %v4660 = vshrl.u32 %v4359, 16
      %v4662 = vrot.slane %v4660, 4
      %v4663 = vshll.u32 %v4359, 16
      %v4665 = vrot.slane %v4663, 5
      %v4666 = vor.u32 %v4662, %v4665
      %v4667 = vrot.slane %v4666, 4
      %v4669 = vshll.u32 %v4360, 16
      %v4671 = vrot.slane %v4669, 5
      %v4672 = vsel %vm1009, %v4667, %v4671
      %v4673 = vshrl.u32 %v4360, 16
      %v4675 = vrot.slane %v4673, 4
      %v4676 = vor.u32 %v4675, %v4671
      %v4677 = vrot.slane %v4676, 4
      %v4679 = vshll.u32 %v4361, 16
      %v4681 = vrot.slane %v4679, 5
      %v4682 = vsel %vm1009, %v4677, %v4681
      %v4684 = vshrl.u32 %v4362, 16
      %v4686 = vrot.slane %v4684, 4
      %v4687 = vshll.u32 %v4362, 16
      %v4689 = vrot.slane %v4687, 5
      %v4690 = vor.u32 %v4686, %v4689
      %v4691 = vrot.slane %v4690, 4
      %v4693 = vshll.u32 %v4363, 16
      %v4695 = vrot.slane %v4693, 5
      %v4696 = vsel %vm1009, %v4691, %v4695
      %v4697 = vshrl.u32 %v4363, 16
      %v4699 = vrot.slane %v4697, 4
      %v4700 = vor.u32 %v4699, %v4695
      %v4701 = vrot.slane %v4700, 4
      %v4703 = vshll.u32 %v4364, 16
      %v4705 = vrot.slane %v4703, 5
      %v4706 = vsel %vm1009, %v4701, %v4705
      %v4708 = vshrl.u32 %v4365, 16
      %v4710 = vrot.slane %v4708, 4
      %v4711 = vshll.u32 %v4365, 16
      %v4713 = vrot.slane %v4711, 5
      %v4714 = vor.u32 %v4710, %v4713
      %v4715 = vrot.slane %v4714, 4
      %v4717 = vshll.u32 %v4366, 16
      %v4719 = vrot.slane %v4717, 5
      %v4720 = vsel %vm1009, %v4715, %v4719
      %v4721 = vshrl.u32 %v4366, 16
      %v4723 = vrot.slane %v4721, 4
      %v4724 = vor.u32 %v4723, %v4719
      %v4725 = vrot.slane %v4724, 4
      %v4727 = vshll.u32 %v4367, 16
      %v4729 = vrot.slane %v4727, 5
      %v4730 = vsel %vm1009, %v4725, %v4729
      %v4732 = vshrl.u32 %v4368, 16
      %v4734 = vrot.slane %v4732, 4
      %v4735 = vshll.u32 %v4368, 16
      %v4737 = vrot.slane %v4735, 5
      %v4738 = vor.u32 %v4734, %v4737
      %v4739 = vrot.slane %v4738, 4
      %v4741 = vshll.u32 %v4369, 16
      %v4743 = vrot.slane %v4741, 5
      %v4744 = vsel %vm1009, %v4739, %v4743
      %v4745 = vshrl.u32 %v4369, 16
      %v4747 = vrot.slane %v4745, 4
      %v4748 = vor.u32 %v4747, %v4743
      %v4749 = vrot.slane %v4748, 4
      %v4751 = vshll.u32 %v4370, 16
      %v4753 = vrot.slane %v4751, 5
      %v4754 = vsel %vm1009, %v4749, %v4753
      %s4755 = scalar_lea.vmem %s1, 14
      %v4756 = vld [vmem:[%s4755] sm:$0x3]
      %v4757 = vunpack.c.l.b16 %v4384
      %v4758 = vunpack.c.l.b16 %v4394
      %v4759 = vunpack.c.l.b16 %v4408
      %v4760 = vunpack.c.l.b16 %v4418
      %v4761 = vunpack.c.l.b16 %v4432
      %v4762 = vunpack.c.l.b16 %v4442
      %v4763 = vunpack.c.l.b16 %v4456
      %v4764 = vunpack.c.l.b16 %v4466
      %v4765 = vunpack.c.l.b16 %v4480
      %v4766 = vunpack.c.l.b16 %v4490
      %v4767 = vunpack.c.l.b16 %v4504
      %v4768 = vunpack.c.l.b16 %v4514
      %v4769 = vunpack.c.l.b16 %v4528
      %v4770 = vunpack.c.l.b16 %v4538
      %v4771 = vunpack.c.l.b16 %v4552
      %v4772 = vunpack.c.l.b16 %v4562
      %v4773 = vunpack.c.l.b16 %v4576
      %v4774 = vunpack.c.l.b16 %v4586
      %v4775 = vunpack.c.l.b16 %v4600
      %v4776 = vunpack.c.l.b16 %v4610
      %v4777 = vunpack.c.l.b16 %v4624
      %v4778 = vunpack.c.l.b16 %v4634
      %v4779 = vunpack.c.l.b16 %v4648
      %v4780 = vunpack.c.l.b16 %v4658
      %v4781 = vunpack.c.l.b16 %v4672
      %v4782 = vunpack.c.l.b16 %v4682
      %v4783 = vunpack.c.l.b16 %v4696
      %v4784 = vunpack.c.l.b16 %v4706
      %v4785 = vunpack.c.l.b16 %v4720
      %v4786 = vunpack.c.l.b16 %v4730
      %v4787 = vunpack.c.l.b16 %v4744
      %v4788 = vunpack.c.l.b16 %v4754
      %v4789 = vpack.c.b16 %v4758, %v4757
      %v4790 = vpack.c.b16 %v4760, %v4759
      %v4791 = vpack.c.b16 %v4762, %v4761
      %v4792 = vpack.c.b16 %v4764, %v4763
      %v4793 = vpack.c.b16 %v4766, %v4765
      %v4794 = vpack.c.b16 %v4768, %v4767
      %v4795 = vpack.c.b16 %v4770, %v4769
      %v4796 = vpack.c.b16 %v4772, %v4771
      %v4797 = vpack.c.b16 %v4774, %v4773
      %v4798 = vpack.c.b16 %v4776, %v4775
      %v4799 = vpack.c.b16 %v4778, %v4777
      %v4800 = vpack.c.b16 %v4780, %v4779
      %v4801 = vpack.c.b16 %v4782, %v4781
      %v4802 = vpack.c.b16 %v4784, %v4783
      %v4803 = vpack.c.b16 %v4786, %v4785
      %v4804 = vpack.c.b16 %v4788, %v4787
      %v4806 = vsel %vm1444, %v4789, 0
      %v4809 = vsel %vm1444, %v4790, 0
      %v4812 = vsel %vm1444, %v4791, 0
      %v4815 = vsel %vm1444, %v4792, 0
      %v4818 = vsel %vm1444, %v4793, 0
      %v4821 = vsel %vm1444, %v4794, 0
      %v4824 = vsel %vm1444, %v4795, 0
      %v4827 = vsel %vm1444, %v4796, 0
      %v4830 = vsel %vm1444, %v4797, 0
      %v4833 = vsel %vm1444, %v4798, 0
      %v4836 = vsel %vm1444, %v4799, 0
      %v4839 = vsel %vm1444, %v4800, 0
      %v4842 = vsel %vm1444, %v4801, 0
      %v4845 = vsel %vm1444, %v4802, 0
      %v4848 = vsel %vm1444, %v4803, 0
      %v4851 = vsel %vm1444, %v4804, 0
      %v4854 = vsel %vm1493, %v4756, 0
      %4856 = vmatprep.subr.bf16.mxu0 0
      %4857 = vmatpush1.bf16.msra.mxu0 0
      %4858 = vmatprep.subr.bf16.mxu0 0
      %4859 = vmatpush1.bf16.msra.mxu0 0
      %4860 = vmatprep.subr.bf16.mxu0 0
      %4861 = vmatpush1.bf16.msra.mxu0 0
      %4862 = vmatprep.subr.bf16.mxu0 0
      %4863 = vmatpush1.bf16.msra.mxu0 0
      %4864 = vmatprep.subr.bf16.mxu0 0
      %4865 = vmatpush1.bf16.msra.mxu0 0
      %4866 = vmatprep.subr.bf16.mxu0 0
      %4867 = vmatpush1.bf16.msra.mxu0 0
      %4868 = vmatprep.subr.bf16.mxu0 0
      %4869 = vmatpush1.bf16.msra.mxu0 0
      %4870 = vmatprep.subr.bf16.mxu0 0
      %4871 = vmatpush1.bf16.msra.mxu0 %v4854
      %4872 = vmatprep.subr.bf16.mxu0 0
      %4873 = vmatpush2.bf16.msra.mxu0 0
      %4874 = vmatprep.subr.bf16.mxu0 0
      %4875 = vmatpush2.bf16.msra.mxu0 0
      %4876 = vmatprep.subr.bf16.mxu0 0
      %4877 = vmatpush2.bf16.msra.mxu0 0
      %4878 = vmatprep.subr.bf16.mxu0 0
      %4879 = vmatpush2.bf16.msra.mxu0 0
      %4880 = vmatprep.subr.bf16.mxu0 0
      %4881 = vmatpush2.bf16.msra.mxu0 0
      %4882 = vmatprep.subr.bf16.mxu0 0
      %4883 = vmatpush2.bf16.msra.mxu0 0
      %4884 = vmatprep.subr.bf16.mxu0 0
      %4885 = vmatpush2.bf16.msra.mxu0 0
      %4886 = vmatprep.subr.bf16.mxu0 0
      %4887 = vmatpush2.bf16.msra.mxu0 0
      %4888 = vmatprep.mubr.bf16.mxu0 0
      %4889 = vmatmul.mubr.bf16.gmra.mxu0 %v4806
      %v4890 = vpop.f32.mrf.mxu0
      %v4891 = vadd.f32 0.0, %v4890
      %v4892 = vpop.f32.mrf.mxu0
      %v4893 = vpop.f32.mrf.mxu0
      %v4894 = vadd.f32 0.0, %v4893
      %v4895 = vpop.f32.mrf.mxu0
      %4896 = vmatprep.mubr.bf16.mxu0 0
      %4897 = vmatmul.mubr.bf16.gmra.mxu0 %v4809
      %v4898 = vpop.f32.mrf.mxu0
      %v4899 = vadd.f32 0.0, %v4898
      %v4900 = vpop.f32.mrf.mxu0
      %v4901 = vpop.f32.mrf.mxu0
      %v4902 = vadd.f32 0.0, %v4901
      %v4903 = vpop.f32.mrf.mxu0
      %4904 = vmatprep.mubr.bf16.mxu0 0
      %4905 = vmatmul.mubr.bf16.gmra.mxu0 %v4812
      %v4906 = vpop.f32.mrf.mxu0
      %v4907 = vadd.f32 0.0, %v4906
      %v4908 = vpop.f32.mrf.mxu0
      %v4909 = vpop.f32.mrf.mxu0
      %v4910 = vadd.f32 0.0, %v4909
      %v4911 = vpop.f32.mrf.mxu0
      %4912 = vmatprep.mubr.bf16.mxu0 0
      %4913 = vmatmul.mubr.bf16.gmra.mxu0 %v4815
      %v4914 = vpop.f32.mrf.mxu0
      %v4915 = vadd.f32 0.0, %v4914
      %v4916 = vpop.f32.mrf.mxu0
      %v4917 = vpop.f32.mrf.mxu0
      %v4918 = vadd.f32 0.0, %v4917
      %v4919 = vpop.f32.mrf.mxu0
      %4920 = vmatprep.mubr.bf16.mxu0 0
      %4921 = vmatmul.mubr.bf16.gmra.mxu0 %v4818
      %v4922 = vpop.f32.mrf.mxu0
      %v4923 = vadd.f32 0.0, %v4922
      %v4924 = vpop.f32.mrf.mxu0
      %v4925 = vpop.f32.mrf.mxu0
      %v4926 = vadd.f32 0.0, %v4925
      %v4927 = vpop.f32.mrf.mxu0
      %4928 = vmatprep.mubr.bf16.mxu0 0
      %4929 = vmatmul.mubr.bf16.gmra.mxu0 %v4821
      %v4930 = vpop.f32.mrf.mxu0
      %v4931 = vadd.f32 0.0, %v4930
      %v4932 = vpop.f32.mrf.mxu0
      %v4933 = vpop.f32.mrf.mxu0
      %v4934 = vadd.f32 0.0, %v4933
      %v4935 = vpop.f32.mrf.mxu0
      %4936 = vmatprep.mubr.bf16.mxu0 0
      %4937 = vmatmul.mubr.bf16.gmra.mxu0 %v4824
      %v4938 = vpop.f32.mrf.mxu0
      %v4939 = vadd.f32 0.0, %v4938
      %v4940 = vpop.f32.mrf.mxu0
      %v4941 = vpop.f32.mrf.mxu0
      %v4942 = vadd.f32 0.0, %v4941
      %v4943 = vpop.f32.mrf.mxu0
      %4944 = vmatprep.mubr.bf16.mxu0 0
      %4945 = vmatmul.mubr.bf16.gmra.mxu0 %v4827
      %v4946 = vpop.f32.mrf.mxu0
      %v4947 = vadd.f32 0.0, %v4946
      %v4948 = vpop.f32.mrf.mxu0
      %v4949 = vpop.f32.mrf.mxu0
      %v4950 = vadd.f32 0.0, %v4949
      %v4951 = vpop.f32.mrf.mxu0
      %4952 = vmatprep.mubr.bf16.mxu0 0
      %4953 = vmatmul.mubr.bf16.gmra.mxu0 %v4830
      %v4954 = vpop.f32.mrf.mxu0
      %v4955 = vadd.f32 0.0, %v4954
      %v4956 = vpop.f32.mrf.mxu0
      %v4957 = vpop.f32.mrf.mxu0
      %v4958 = vadd.f32 0.0, %v4957
      %v4959 = vpop.f32.mrf.mxu0
      %4960 = vmatprep.mubr.bf16.mxu0 0
      %4961 = vmatmul.mubr.bf16.gmra.mxu0 %v4833
      %v4962 = vpop.f32.mrf.mxu0
      %v4963 = vadd.f32 0.0, %v4962
      %v4964 = vpop.f32.mrf.mxu0
      %v4965 = vpop.f32.mrf.mxu0
      %v4966 = vadd.f32 0.0, %v4965
      %v4967 = vpop.f32.mrf.mxu0
      %4968 = vmatprep.mubr.bf16.mxu0 0
      %4969 = vmatmul.mubr.bf16.gmra.mxu0 %v4836
      %v4970 = vpop.f32.mrf.mxu0
      %v4971 = vadd.f32 0.0, %v4970
      %v4972 = vpop.f32.mrf.mxu0
      %v4973 = vpop.f32.mrf.mxu0
      %v4974 = vadd.f32 0.0, %v4973
      %v4975 = vpop.f32.mrf.mxu0
      %4976 = vmatprep.mubr.bf16.mxu0 0
      %4977 = vmatmul.mubr.bf16.gmra.mxu0 %v4839
      %v4978 = vpop.f32.mrf.mxu0
      %v4979 = vadd.f32 0.0, %v4978
      %v4980 = vpop.f32.mrf.mxu0
      %v4981 = vpop.f32.mrf.mxu0
      %v4982 = vadd.f32 0.0, %v4981
      %v4983 = vpop.f32.mrf.mxu0
      %4984 = vmatprep.mubr.bf16.mxu0 0
      %4985 = vmatmul.mubr.bf16.gmra.mxu0 %v4842
      %v4986 = vpop.f32.mrf.mxu0
      %v4987 = vadd.f32 0.0, %v4986
      %v4988 = vpop.f32.mrf.mxu0
      %v4989 = vpop.f32.mrf.mxu0
      %v4990 = vadd.f32 0.0, %v4989
      %v4991 = vpop.f32.mrf.mxu0
      %4992 = vmatprep.mubr.bf16.mxu0 0
      %4993 = vmatmul.mubr.bf16.gmra.mxu0 %v4845
      %v4994 = vpop.f32.mrf.mxu0
      %v4995 = vadd.f32 0.0, %v4994
      %v4996 = vpop.f32.mrf.mxu0
      %v4997 = vpop.f32.mrf.mxu0
      %v4998 = vadd.f32 0.0, %v4997
      %v4999 = vpop.f32.mrf.mxu0
      %5000 = vmatprep.mubr.bf16.mxu0 0
      %5001 = vmatmul.mubr.bf16.gmra.mxu0 %v4848
      %v5002 = vpop.f32.mrf.mxu0
      %v5003 = vadd.f32 0.0, %v5002
      %v5004 = vpop.f32.mrf.mxu0
      %v5005 = vpop.f32.mrf.mxu0
      %v5006 = vadd.f32 0.0, %v5005
      %v5007 = vpop.f32.mrf.mxu0
      %5008 = vmatprep.mubr.bf16.mxu0 0
      %5009 = vmatmul.mubr.bf16.gmra.mxu0 %v4851
      %v5010 = vpop.f32.mrf.mxu0
      %v5011 = vadd.f32 0.0, %v5010
      %v5012 = vpop.f32.mrf.mxu0
      %v5013 = vpop.f32.mrf.mxu0
      %v5014 = vadd.f32 0.0, %v5013
      %v5015 = vpop.f32.mrf.mxu0
      %5016 = vdwg.mxu0
      %v5017 = vadd.f32 %v4291, %v4891
      %v5018 = vadd.f32 %v4292, %v4894
      %v5019 = vadd.f32 %v4293, %v4899
      %v5020 = vadd.f32 %v4294, %v4902
      %v5021 = vadd.f32 %v4295, %v4907
      %v5022 = vadd.f32 %v4296, %v4910
      %v5023 = vadd.f32 %v4297, %v4915
      %v5024 = vadd.f32 %v4298, %v4918
      %v5025 = vadd.f32 %v4299, %v4923
      %v5026 = vadd.f32 %v4300, %v4926
      %v5027 = vadd.f32 %v4301, %v4931
      %v5028 = vadd.f32 %v4302, %v4934
      %v5029 = vadd.f32 %v4303, %v4939
      %v5030 = vadd.f32 %v4304, %v4942
      %v5031 = vadd.f32 %v4305, %v4947
      %v5032 = vadd.f32 %v4306, %v4950
      %v5033 = vadd.f32 %v4307, %v4955
      %v5034 = vadd.f32 %v4308, %v4958
      %v5035 = vadd.f32 %v4309, %v4963
      %v5036 = vadd.f32 %v4310, %v4966
      %v5037 = vadd.f32 %v4311, %v4971
      %v5038 = vadd.f32 %v4312, %v4974
      %v5039 = vadd.f32 %v4313, %v4979
      %v5040 = vadd.f32 %v4314, %v4982
      %v5041 = vadd.f32 %v4315, %v4987
      %v5042 = vadd.f32 %v4316, %v4990
      %v5043 = vadd.f32 %v4317, %v4995
      %v5044 = vadd.f32 %v4318, %v4998
      %v5045 = vadd.f32 %v4319, %v5003
      %v5046 = vadd.f32 %v4320, %v5006
      %v5047 = vadd.f32 %v4321, %v5011
      %v5048 = vadd.f32 %v4322, %v5014
      %v5049 = vld [vmem:[%s3964] sm:$0xe]
      %v5050 = vld [vmem:[%s3964 + $0xc] sm:$0xe]
      %v5051 = vld [vmem:[%s3964 + $0x18] sm:$0xe]
      %v5052 = vld [vmem:[%s3964 + $0x24] sm:$0xe]
      %v5053 = vld [vmem:[%s3964 + $0x30] sm:$0xe]
      %v5054 = vld [vmem:[%s3964 + $0x3c] sm:$0xe]
      %v5055 = vld [vmem:[%s3964 + $0x48] sm:$0xe]
      %v5056 = vld [vmem:[%s3964 + $0x54] sm:$0xe]
      %v5057 = vld [vmem:[%s3964 + $0x60] sm:$0xe]
      %v5058 = vld [vmem:[%s3964 + $0x6c] sm:$0xe]
      %v5059 = vld [vmem:[%s3964 + $0x78] sm:$0xe]
      %v5060 = vld [vmem:[%s3964 + $0x84] sm:$0xe]
      %v5061 = vld [vmem:[%s3964 + $0x90] sm:$0xe]
      %v5062 = vld [vmem:[%s3964 + $0x9c] sm:$0xe]
      %v5063 = vld [vmem:[%s3964 + $0xa8] sm:$0xe]
      %v5064 = vld [vmem:[%s3964 + $0xb4] sm:$0xe]
      %v5113 = vrot.slane %v5049, 5
      %v5114 = vrot.slane %v5113, 4
      %v5115 = vrot.slane %v4324, 5
      %v5116 = vsel %vm2000, %v5114, %v5115
      %v5117 = vrot.slane %v5115, 4
      %v5118 = vrot.slane %v4325, 5
      %v5119 = vsel %vm2000, %v5117, %v5118
      %v5120 = vrot.slane %v5050, 5
      %v5121 = vrot.slane %v5120, 4
      %v5122 = vrot.slane %v4327, 5
      %v5123 = vsel %vm2000, %v5121, %v5122
      %v5124 = vrot.slane %v5122, 4
      %v5125 = vrot.slane %v4328, 5
      %v5126 = vsel %vm2000, %v5124, %v5125
      %v5127 = vrot.slane %v5051, 5
      %v5128 = vrot.slane %v5127, 4
      %v5129 = vrot.slane %v4330, 5
      %v5130 = vsel %vm2000, %v5128, %v5129
      %v5131 = vrot.slane %v5129, 4
      %v5132 = vrot.slane %v4331, 5
      %v5133 = vsel %vm2000, %v5131, %v5132
      %v5134 = vrot.slane %v5052, 5
      %v5135 = vrot.slane %v5134, 4
      %v5136 = vrot.slane %v4333, 5
      %v5137 = vsel %vm2000, %v5135, %v5136
      %v5138 = vrot.slane %v5136, 4
      %v5139 = vrot.slane %v4334, 5
      %v5140 = vsel %vm2000, %v5138, %v5139
      %v5141 = vrot.slane %v5053, 5
      %v5142 = vrot.slane %v5141, 4
      %v5143 = vrot.slane %v4336, 5
      %v5144 = vsel %vm2000, %v5142, %v5143
      %v5145 = vrot.slane %v5143, 4
      %v5146 = vrot.slane %v4337, 5
      %v5147 = vsel %vm2000, %v5145, %v5146
      %v5148 = vrot.slane %v5054, 5
      %v5149 = vrot.slane %v5148, 4
      %v5150 = vrot.slane %v4339, 5
      %v5151 = vsel %vm2000, %v5149, %v5150
      %v5152 = vrot.slane %v5150, 4
      %v5153 = vrot.slane %v4340, 5
      %v5154 = vsel %vm2000, %v5152, %v5153
      %v5155 = vrot.slane %v5055, 5
      %v5156 = vrot.slane %v5155, 4
      %v5157 = vrot.slane %v4342, 5
      %v5158 = vsel %vm2000, %v5156, %v5157
      %v5159 = vrot.slane %v5157, 4
      %v5160 = vrot.slane %v4343, 5
      %v5161 = vsel %vm2000, %v5159, %v5160
      %v5162 = vrot.slane %v5056, 5
      %v5163 = vrot.slane %v5162, 4
      %v5164 = vrot.slane %v4345, 5
      %v5165 = vsel %vm2000, %v5163, %v5164
      %v5166 = vrot.slane %v5164, 4
      %v5167 = vrot.slane %v4346, 5
      %v5168 = vsel %vm2000, %v5166, %v5167
      %v5169 = vrot.slane %v5057, 5
      %v5170 = vrot.slane %v5169, 4
      %v5171 = vrot.slane %v4348, 5
      %v5172 = vsel %vm2000, %v5170, %v5171
      %v5173 = vrot.slane %v5171, 4
      %v5174 = vrot.slane %v4349, 5
      %v5175 = vsel %vm2000, %v5173, %v5174
      %v5176 = vrot.slane %v5058, 5
      %v5177 = vrot.slane %v5176, 4
      %v5178 = vrot.slane %v4351, 5
      %v5179 = vsel %vm2000, %v5177, %v5178
      %v5180 = vrot.slane %v5178, 4
      %v5181 = vrot.slane %v4352, 5
      %v5182 = vsel %vm2000, %v5180, %v5181
      %v5183 = vrot.slane %v5059, 5
      %v5184 = vrot.slane %v5183, 4
      %v5185 = vrot.slane %v4354, 5
      %v5186 = vsel %vm2000, %v5184, %v5185
      %v5187 = vrot.slane %v5185, 4
      %v5188 = vrot.slane %v4355, 5
      %v5189 = vsel %vm2000, %v5187, %v5188
      %v5190 = vrot.slane %v5060, 5
      %v5191 = vrot.slane %v5190, 4
      %v5192 = vrot.slane %v4357, 5
      %v5193 = vsel %vm2000, %v5191, %v5192
      %v5194 = vrot.slane %v5192, 4
      %v5195 = vrot.slane %v4358, 5
      %v5196 = vsel %vm2000, %v5194, %v5195
      %v5197 = vrot.slane %v5061, 5
      %v5198 = vrot.slane %v5197, 4
      %v5199 = vrot.slane %v4360, 5
      %v5200 = vsel %vm2000, %v5198, %v5199
      %v5201 = vrot.slane %v5199, 4
      %v5202 = vrot.slane %v4361, 5
      %v5203 = vsel %vm2000, %v5201, %v5202
      %v5204 = vrot.slane %v5062, 5
      %v5205 = vrot.slane %v5204, 4
      %v5206 = vrot.slane %v4363, 5
      %v5207 = vsel %vm2000, %v5205, %v5206
      %v5208 = vrot.slane %v5206, 4
      %v5209 = vrot.slane %v4364, 5
      %v5210 = vsel %vm2000, %v5208, %v5209
      %v5211 = vrot.slane %v5063, 5
      %v5212 = vrot.slane %v5211, 4
      %v5213 = vrot.slane %v4366, 5
      %v5214 = vsel %vm2000, %v5212, %v5213
      %v5215 = vrot.slane %v5213, 4
      %v5216 = vrot.slane %v4367, 5
      %v5217 = vsel %vm2000, %v5215, %v5216
      %v5218 = vrot.slane %v5064, 5
      %v5219 = vrot.slane %v5218, 4
      %v5220 = vrot.slane %v4369, 5
      %v5221 = vsel %vm2000, %v5219, %v5220
      %v5222 = vrot.slane %v5220, 4
      %v5223 = vrot.slane %v4370, 5
      %v5224 = vsel %vm2000, %v5222, %v5223
      %s5225 = scalar_lea.vmem %s1, 16
      %v5226 = vld [vmem:[%s5225] sm:$0x3]
      %v5227 = vunpack.c.l.b16 %v5116
      %v5228 = vunpack.c.l.b16 %v5119
      %v5229 = vunpack.c.l.b16 %v5123
      %v5230 = vunpack.c.l.b16 %v5126
      %v5231 = vunpack.c.l.b16 %v5130
      %v5232 = vunpack.c.l.b16 %v5133
      %v5233 = vunpack.c.l.b16 %v5137
      %v5234 = vunpack.c.l.b16 %v5140
      %v5235 = vunpack.c.l.b16 %v5144
      %v5236 = vunpack.c.l.b16 %v5147
      %v5237 = vunpack.c.l.b16 %v5151
      %v5238 = vunpack.c.l.b16 %v5154
      %v5239 = vunpack.c.l.b16 %v5158
      %v5240 = vunpack.c.l.b16 %v5161
      %v5241 = vunpack.c.l.b16 %v5165
      %v5242 = vunpack.c.l.b16 %v5168
      %v5243 = vunpack.c.l.b16 %v5172
      %v5244 = vunpack.c.l.b16 %v5175
      %v5245 = vunpack.c.l.b16 %v5179
      %v5246 = vunpack.c.l.b16 %v5182
      %v5247 = vunpack.c.l.b16 %v5186
      %v5248 = vunpack.c.l.b16 %v5189
      %v5249 = vunpack.c.l.b16 %v5193
      %v5250 = vunpack.c.l.b16 %v5196
      %v5251 = vunpack.c.l.b16 %v5200
      %v5252 = vunpack.c.l.b16 %v5203
      %v5253 = vunpack.c.l.b16 %v5207
      %v5254 = vunpack.c.l.b16 %v5210
      %v5255 = vunpack.c.l.b16 %v5214
      %v5256 = vunpack.c.l.b16 %v5217
      %v5257 = vunpack.c.l.b16 %v5221
      %v5258 = vunpack.c.l.b16 %v5224
      %v5259 = vpack.c.b16 %v5228, %v5227
      %v5260 = vpack.c.b16 %v5230, %v5229
      %v5261 = vpack.c.b16 %v5232, %v5231
      %v5262 = vpack.c.b16 %v5234, %v5233
      %v5263 = vpack.c.b16 %v5236, %v5235
      %v5264 = vpack.c.b16 %v5238, %v5237
      %v5265 = vpack.c.b16 %v5240, %v5239
      %v5266 = vpack.c.b16 %v5242, %v5241
      %v5267 = vpack.c.b16 %v5244, %v5243
      %v5268 = vpack.c.b16 %v5246, %v5245
      %v5269 = vpack.c.b16 %v5248, %v5247
      %v5270 = vpack.c.b16 %v5250, %v5249
      %v5271 = vpack.c.b16 %v5252, %v5251
      %v5272 = vpack.c.b16 %v5254, %v5253
      %v5273 = vpack.c.b16 %v5256, %v5255
      %v5274 = vpack.c.b16 %v5258, %v5257
      %v5276 = vsel %vm1444, %v5259, 0
      %v5279 = vsel %vm1444, %v5260, 0
      %v5282 = vsel %vm1444, %v5261, 0
      %v5285 = vsel %vm1444, %v5262, 0
      %v5288 = vsel %vm1444, %v5263, 0
      %v5291 = vsel %vm1444, %v5264, 0
      %v5294 = vsel %vm1444, %v5265, 0
      %v5297 = vsel %vm1444, %v5266, 0
      %v5300 = vsel %vm1444, %v5267, 0
      %v5303 = vsel %vm1444, %v5268, 0
      %v5306 = vsel %vm1444, %v5269, 0
      %v5309 = vsel %vm1444, %v5270, 0
      %v5312 = vsel %vm1444, %v5271, 0
      %v5315 = vsel %vm1444, %v5272, 0
      %v5318 = vsel %vm1444, %v5273, 0
      %v5321 = vsel %vm1444, %v5274, 0
      %v5324 = vsel %vm1493, %v5226, 0
      %5326 = vmatprep.subr.bf16.mxu0 0
      %5327 = vmatpush1.bf16.msra.mxu0 0
      %5328 = vmatprep.subr.bf16.mxu0 0
      %5329 = vmatpush1.bf16.msra.mxu0 0
      %5330 = vmatprep.subr.bf16.mxu0 0
      %5331 = vmatpush1.bf16.msra.mxu0 0
      %5332 = vmatprep.subr.bf16.mxu0 0
      %5333 = vmatpush1.bf16.msra.mxu0 0
      %5334 = vmatprep.subr.bf16.mxu0 0
      %5335 = vmatpush1.bf16.msra.mxu0 0
      %5336 = vmatprep.subr.bf16.mxu0 0
      %5337 = vmatpush1.bf16.msra.mxu0 0
      %5338 = vmatprep.subr.bf16.mxu0 0
      %5339 = vmatpush1.bf16.msra.mxu0 0
      %5340 = vmatprep.subr.bf16.mxu0 0
      %5341 = vmatpush1.bf16.msra.mxu0 %v5324
      %5342 = vmatprep.subr.bf16.mxu0 0
      %5343 = vmatpush2.bf16.msra.mxu0 0
      %5344 = vmatprep.subr.bf16.mxu0 0
      %5345 = vmatpush2.bf16.msra.mxu0 0
      %5346 = vmatprep.subr.bf16.mxu0 0
      %5347 = vmatpush2.bf16.msra.mxu0 0
      %5348 = vmatprep.subr.bf16.mxu0 0
      %5349 = vmatpush2.bf16.msra.mxu0 0
      %5350 = vmatprep.subr.bf16.mxu0 0
      %5351 = vmatpush2.bf16.msra.mxu0 0
      %5352 = vmatprep.subr.bf16.mxu0 0
      %5353 = vmatpush2.bf16.msra.mxu0 0
      %5354 = vmatprep.subr.bf16.mxu0 0
      %5355 = vmatpush2.bf16.msra.mxu0 0
      %5356 = vmatprep.subr.bf16.mxu0 0
      %5357 = vmatpush2.bf16.msra.mxu0 0
      %5358 = vmatprep.mubr.bf16.mxu0 0
      %5359 = vmatmul.mubr.bf16.gmra.mxu0 %v5276
      %v5360 = vpop.f32.mrf.mxu0
      %v5361 = vadd.f32 0.0, %v5360
      %v5362 = vpop.f32.mrf.mxu0
      %v5363 = vpop.f32.mrf.mxu0
      %v5364 = vadd.f32 0.0, %v5363
      %v5365 = vpop.f32.mrf.mxu0
      %5366 = vmatprep.mubr.bf16.mxu0 0
      %5367 = vmatmul.mubr.bf16.gmra.mxu0 %v5279
      %v5368 = vpop.f32.mrf.mxu0
      %v5369 = vadd.f32 0.0, %v5368
      %v5370 = vpop.f32.mrf.mxu0
      %v5371 = vpop.f32.mrf.mxu0
      %v5372 = vadd.f32 0.0, %v5371
      %v5373 = vpop.f32.mrf.mxu0
      %5374 = vmatprep.mubr.bf16.mxu0 0
      %5375 = vmatmul.mubr.bf16.gmra.mxu0 %v5282
      %v5376 = vpop.f32.mrf.mxu0
      %v5377 = vadd.f32 0.0, %v5376
      %v5378 = vpop.f32.mrf.mxu0
      %v5379 = vpop.f32.mrf.mxu0
      %v5380 = vadd.f32 0.0, %v5379
      %v5381 = vpop.f32.mrf.mxu0
      %5382 = vmatprep.mubr.bf16.mxu0 0
      %5383 = vmatmul.mubr.bf16.gmra.mxu0 %v5285
      %v5384 = vpop.f32.mrf.mxu0
      %v5385 = vadd.f32 0.0, %v5384
      %v5386 = vpop.f32.mrf.mxu0
      %v5387 = vpop.f32.mrf.mxu0
      %v5388 = vadd.f32 0.0, %v5387
      %v5389 = vpop.f32.mrf.mxu0
      %5390 = vmatprep.mubr.bf16.mxu0 0
      %5391 = vmatmul.mubr.bf16.gmra.mxu0 %v5288
      %v5392 = vpop.f32.mrf.mxu0
      %v5393 = vadd.f32 0.0, %v5392
      %v5394 = vpop.f32.mrf.mxu0
      %v5395 = vpop.f32.mrf.mxu0
      %v5396 = vadd.f32 0.0, %v5395
      %v5397 = vpop.f32.mrf.mxu0
      %5398 = vmatprep.mubr.bf16.mxu0 0
      %5399 = vmatmul.mubr.bf16.gmra.mxu0 %v5291
      %v5400 = vpop.f32.mrf.mxu0
      %v5401 = vadd.f32 0.0, %v5400
      %v5402 = vpop.f32.mrf.mxu0
      %v5403 = vpop.f32.mrf.mxu0
      %v5404 = vadd.f32 0.0, %v5403
      %v5405 = vpop.f32.mrf.mxu0
      %5406 = vmatprep.mubr.bf16.mxu0 0
      %5407 = vmatmul.mubr.bf16.gmra.mxu0 %v5294
      %v5408 = vpop.f32.mrf.mxu0
      %v5409 = vadd.f32 0.0, %v5408
      %v5410 = vpop.f32.mrf.mxu0
      %v5411 = vpop.f32.mrf.mxu0
      %v5412 = vadd.f32 0.0, %v5411
      %v5413 = vpop.f32.mrf.mxu0
      %5414 = vmatprep.mubr.bf16.mxu0 0
      %5415 = vmatmul.mubr.bf16.gmra.mxu0 %v5297
      %v5416 = vpop.f32.mrf.mxu0
      %v5417 = vadd.f32 0.0, %v5416
      %v5418 = vpop.f32.mrf.mxu0
      %v5419 = vpop.f32.mrf.mxu0
      %v5420 = vadd.f32 0.0, %v5419
      %v5421 = vpop.f32.mrf.mxu0
      %5422 = vmatprep.mubr.bf16.mxu0 0
      %5423 = vmatmul.mubr.bf16.gmra.mxu0 %v5300
      %v5424 = vpop.f32.mrf.mxu0
      %v5425 = vadd.f32 0.0, %v5424
      %v5426 = vpop.f32.mrf.mxu0
      %v5427 = vpop.f32.mrf.mxu0
      %v5428 = vadd.f32 0.0, %v5427
      %v5429 = vpop.f32.mrf.mxu0
      %5430 = vmatprep.mubr.bf16.mxu0 0
      %5431 = vmatmul.mubr.bf16.gmra.mxu0 %v5303
      %v5432 = vpop.f32.mrf.mxu0
      %v5433 = vadd.f32 0.0, %v5432
      %v5434 = vpop.f32.mrf.mxu0
      %v5435 = vpop.f32.mrf.mxu0
      %v5436 = vadd.f32 0.0, %v5435
      %v5437 = vpop.f32.mrf.mxu0
      %5438 = vmatprep.mubr.bf16.mxu0 0
      %5439 = vmatmul.mubr.bf16.gmra.mxu0 %v5306
      %v5440 = vpop.f32.mrf.mxu0
      %v5441 = vadd.f32 0.0, %v5440
      %v5442 = vpop.f32.mrf.mxu0
      %v5443 = vpop.f32.mrf.mxu0
      %v5444 = vadd.f32 0.0, %v5443
      %v5445 = vpop.f32.mrf.mxu0
      %5446 = vmatprep.mubr.bf16.mxu0 0
      %5447 = vmatmul.mubr.bf16.gmra.mxu0 %v5309
      %v5448 = vpop.f32.mrf.mxu0
      %v5449 = vadd.f32 0.0, %v5448
      %v5450 = vpop.f32.mrf.mxu0
      %v5451 = vpop.f32.mrf.mxu0
      %v5452 = vadd.f32 0.0, %v5451
      %v5453 = vpop.f32.mrf.mxu0
      %5454 = vmatprep.mubr.bf16.mxu0 0
      %5455 = vmatmul.mubr.bf16.gmra.mxu0 %v5312
      %v5456 = vpop.f32.mrf.mxu0
      %v5457 = vadd.f32 0.0, %v5456
      %v5458 = vpop.f32.mrf.mxu0
      %v5459 = vpop.f32.mrf.mxu0
      %v5460 = vadd.f32 0.0, %v5459
      %v5461 = vpop.f32.mrf.mxu0
      %5462 = vmatprep.mubr.bf16.mxu0 0
      %5463 = vmatmul.mubr.bf16.gmra.mxu0 %v5315
      %v5464 = vpop.f32.mrf.mxu0
      %v5465 = vadd.f32 0.0, %v5464
      %v5466 = vpop.f32.mrf.mxu0
      %v5467 = vpop.f32.mrf.mxu0
      %v5468 = vadd.f32 0.0, %v5467
      %v5469 = vpop.f32.mrf.mxu0
      %5470 = vmatprep.mubr.bf16.mxu0 0
      %5471 = vmatmul.mubr.bf16.gmra.mxu0 %v5318
      %v5472 = vpop.f32.mrf.mxu0
      %v5473 = vadd.f32 0.0, %v5472
      %v5474 = vpop.f32.mrf.mxu0
      %v5475 = vpop.f32.mrf.mxu0
      %v5476 = vadd.f32 0.0, %v5475
      %v5477 = vpop.f32.mrf.mxu0
      %5478 = vmatprep.mubr.bf16.mxu0 0
      %5479 = vmatmul.mubr.bf16.gmra.mxu0 %v5321
      %v5480 = vpop.f32.mrf.mxu0
      %v5481 = vadd.f32 0.0, %v5480
      %v5482 = vpop.f32.mrf.mxu0
      %v5483 = vpop.f32.mrf.mxu0
      %v5484 = vadd.f32 0.0, %v5483
      %v5485 = vpop.f32.mrf.mxu0
      %5486 = vdwg.mxu0
      %v5487 = vadd.f32 %v5017, %v5361
      %v5488 = vadd.f32 %v5018, %v5364
      %v5489 = vadd.f32 %v5019, %v5369
      %v5490 = vadd.f32 %v5020, %v5372
      %v5491 = vadd.f32 %v5021, %v5377
      %v5492 = vadd.f32 %v5022, %v5380
      %v5493 = vadd.f32 %v5023, %v5385
      %v5494 = vadd.f32 %v5024, %v5388
      %v5495 = vadd.f32 %v5025, %v5393
      %v5496 = vadd.f32 %v5026, %v5396
      %v5497 = vadd.f32 %v5027, %v5401
      %v5498 = vadd.f32 %v5028, %v5404
      %v5499 = vadd.f32 %v5029, %v5409
      %v5500 = vadd.f32 %v5030, %v5412
      %v5501 = vadd.f32 %v5031, %v5417
      %v5502 = vadd.f32 %v5032, %v5420
      %v5503 = vadd.f32 %v5033, %v5425
      %v5504 = vadd.f32 %v5034, %v5428
      %v5505 = vadd.f32 %v5035, %v5433
      %v5506 = vadd.f32 %v5036, %v5436
      %v5507 = vadd.f32 %v5037, %v5441
      %v5508 = vadd.f32 %v5038, %v5444
      %v5509 = vadd.f32 %v5039, %v5449
      %v5510 = vadd.f32 %v5040, %v5452
      %v5511 = vadd.f32 %v5041, %v5457
      %v5512 = vadd.f32 %v5042, %v5460
      %v5513 = vadd.f32 %v5043, %v5465
      %v5514 = vadd.f32 %v5044, %v5468
      %v5515 = vadd.f32 %v5045, %v5473
      %v5516 = vadd.f32 %v5046, %v5476
      %v5517 = vadd.f32 %v5047, %v5481
      %v5518 = vadd.f32 %v5048, %v5484
      %s5519 = scalar_lea.vmem [#allocation3], %s172
      %5520 = vst.msk [vmem:[%s5519] sm:$0xff] %vm1444, %v5487
      %5521 = vst.msk [vmem:[%s5519 + $0x8] sm:$0xff] %vm1444, %v5488
      %5522 = vst.msk [vmem:[%s5519 + $0x10] sm:$0xff] %vm1444, %v5489
      %5523 = vst.msk [vmem:[%s5519 + $0x18] sm:$0xff] %vm1444, %v5490
      %5524 = vst.msk [vmem:[%s5519 + $0x20] sm:$0xff] %vm1444, %v5491
      %5525 = vst.msk [vmem:[%s5519 + $0x28] sm:$0xff] %vm1444, %v5492
      %5526 = vst.msk [vmem:[%s5519 + $0x30] sm:$0xff] %vm1444, %v5493
      %5527 = vst.msk [vmem:[%s5519 + $0x38] sm:$0xff] %vm1444, %v5494
      %5528 = vst.msk [vmem:[%s5519 + $0x40] sm:$0xff] %vm1444, %v5495
      %5529 = vst.msk [vmem:[%s5519 + $0x48] sm:$0xff] %vm1444, %v5496
      %5530 = vst.msk [vmem:[%s5519 + $0x50] sm:$0xff] %vm1444, %v5497
      %5531 = vst.msk [vmem:[%s5519 + $0x58] sm:$0xff] %vm1444, %v5498
      %5532 = vst.msk [vmem:[%s5519 + $0x60] sm:$0xff] %vm1444, %v5499
      %5533 = vst.msk [vmem:[%s5519 + $0x68] sm:$0xff] %vm1444, %v5500
      %5534 = vst.msk [vmem:[%s5519 + $0x70] sm:$0xff] %vm1444, %v5501
      %5535 = vst.msk [vmem:[%s5519 + $0x78] sm:$0xff] %vm1444, %v5502
      %5536 = vst.msk [vmem:[%s5519 + $0x80] sm:$0xff] %vm1444, %v5503
      %5537 = vst.msk [vmem:[%s5519 + $0x88] sm:$0xff] %vm1444, %v5504
      %5538 = vst.msk [vmem:[%s5519 + $0x90] sm:$0xff] %vm1444, %v5505
      %5539 = vst.msk [vmem:[%s5519 + $0x98] sm:$0xff] %vm1444, %v5506
      %5540 = vst.msk [vmem:[%s5519 + $0xa0] sm:$0xff] %vm1444, %v5507
      %5541 = vst.msk [vmem:[%s5519 + $0xa8] sm:$0xff] %vm1444, %v5508
      %5542 = vst.msk [vmem:[%s5519 + $0xb0] sm:$0xff] %vm1444, %v5509
      %5543 = vst.msk [vmem:[%s5519 + $0xb8] sm:$0xff] %vm1444, %v5510
      %5544 = vst.msk [vmem:[%s5519 + $0xc0] sm:$0xff] %vm1444, %v5511
      %5545 = vst.msk [vmem:[%s5519 + $0xc8] sm:$0xff] %vm1444, %v5512
      %5546 = vst.msk [vmem:[%s5519 + $0xd0] sm:$0xff] %vm1444, %v5513
      %5547 = vst.msk [vmem:[%s5519 + $0xd8] sm:$0xff] %vm1444, %v5514
      %5548 = vst.msk [vmem:[%s5519 + $0xe0] sm:$0xff] %vm1444, %v5515
      %5549 = vst.msk [vmem:[%s5519 + $0xe8] sm:$0xff] %vm1444, %v5516
      %5550 = vst.msk [vmem:[%s5519 + $0xf0] sm:$0xff] %vm1444, %v5517
      %5551 = vst.msk [vmem:[%s5519 + $0xf8] sm:$0xff] %vm1444, %v5518
      %v5552 = vsel %vm1444, %v5487, 0.0
      %v5553 = vsel %vm1444, %v5488, 0.0
      %v5554 = vadd.f32 %v5552, %v5553
      %v5555 = vsel %vm1444, %v5489, 0.0
      %v5556 = vadd.f32 %v5554, %v5555
      %v5557 = vsel %vm1444, %v5490, 0.0
      %v5558 = vadd.f32 %v5556, %v5557
      %v5559 = vsel %vm1444, %v5491, 0.0
      %v5560 = vadd.f32 %v5558, %v5559
      %v5561 = vsel %vm1444, %v5492, 0.0
      %v5562 = vadd.f32 %v5560, %v5561
      %v5563 = vsel %vm1444, %v5493, 0.0
      %v5564 = vadd.f32 %v5562, %v5563
      %v5565 = vsel %vm1444, %v5494, 0.0
      %v5566 = vadd.f32 %v5564, %v5565
      %v5567 = vsel %vm1444, %v5495, 0.0
      %v5568 = vadd.f32 %v5566, %v5567
      %v5569 = vsel %vm1444, %v5496, 0.0
      %v5570 = vadd.f32 %v5568, %v5569
      %v5571 = vsel %vm1444, %v5497, 0.0
      %v5572 = vadd.f32 %v5570, %v5571
      %v5573 = vsel %vm1444, %v5498, 0.0
      %v5574 = vadd.f32 %v5572, %v5573
      %v5575 = vsel %vm1444, %v5499, 0.0
      %v5576 = vadd.f32 %v5574, %v5575
      %v5577 = vsel %vm1444, %v5500, 0.0
      %v5578 = vadd.f32 %v5576, %v5577
      %v5579 = vsel %vm1444, %v5501, 0.0
      %v5580 = vadd.f32 %v5578, %v5579
      %v5581 = vsel %vm1444, %v5502, 0.0
      %v5582 = vadd.f32 %v5580, %v5581
      %v5583 = vsel %vm1444, %v5503, 0.0
      %v5584 = vadd.f32 %v5582, %v5583
      %v5585 = vsel %vm1444, %v5504, 0.0
      %v5586 = vadd.f32 %v5584, %v5585
      %v5587 = vsel %vm1444, %v5505, 0.0
      %v5588 = vadd.f32 %v5586, %v5587
      %v5589 = vsel %vm1444, %v5506, 0.0
      %v5590 = vadd.f32 %v5588, %v5589
      %v5591 = vsel %vm1444, %v5507, 0.0
      %v5592 = vadd.f32 %v5590, %v5591
      %v5593 = vsel %vm1444, %v5508, 0.0
      %v5594 = vadd.f32 %v5592, %v5593
      %v5595 = vsel %vm1444, %v5509, 0.0
      %v5596 = vadd.f32 %v5594, %v5595
      %v5597 = vsel %vm1444, %v5510, 0.0
      %v5598 = vadd.f32 %v5596, %v5597
      %v5599 = vsel %vm1444, %v5511, 0.0
      %v5600 = vadd.f32 %v5598, %v5599
      %v5601 = vsel %vm1444, %v5512, 0.0
      %v5602 = vadd.f32 %v5600, %v5601
      %v5603 = vsel %vm1444, %v5513, 0.0
      %v5604 = vadd.f32 %v5602, %v5603
      %v5605 = vsel %vm1444, %v5514, 0.0
      %v5606 = vadd.f32 %v5604, %v5605
      %v5607 = vsel %vm1444, %v5515, 0.0
      %v5608 = vadd.f32 %v5606, %v5607
      %v5609 = vsel %vm1444, %v5516, 0.0
      %v5610 = vadd.f32 %v5608, %v5609
      %v5611 = vsel %vm1444, %v5517, 0.0
      %v5612 = vadd.f32 %v5610, %v5611
      %v5613 = vsel %vm1444, %v5518, 0.0
      %v5614 = vadd.f32 %v5612, %v5613
      %v5615 = vrot.slane %v5614, 4
      %v5616 = vadd.f32 %v5614, %v5615
      %v5617 = vrot.slane %v5616, 2
      %v5618 = vadd.f32 %v5616, %v5617
      %v5619 = vrot.slane %v5618, 1
      %v5620 = vadd.f32 %v5618, %v5619
      %v5621 = vadd.f32 %v5620, 0.0
      %v5622 = vmul.f32 %v5487, %v5487
      %v5623 = vmul.f32 %v5488, %v5488
      %v5624 = vmul.f32 %v5489, %v5489
      %v5625 = vmul.f32 %v5490, %v5490
      %v5626 = vmul.f32 %v5491, %v5491
      %v5627 = vmul.f32 %v5492, %v5492
      %v5628 = vmul.f32 %v5493, %v5493
      %v5629 = vmul.f32 %v5494, %v5494
      %v5630 = vmul.f32 %v5495, %v5495
      %v5631 = vmul.f32 %v5496, %v5496
      %v5632 = vmul.f32 %v5497, %v5497
      %v5633 = vmul.f32 %v5498, %v5498
      %v5634 = vmul.f32 %v5499, %v5499
      %v5635 = vmul.f32 %v5500, %v5500
      %v5636 = vmul.f32 %v5501, %v5501
      %v5637 = vmul.f32 %v5502, %v5502
      %v5638 = vmul.f32 %v5503, %v5503
      %v5639 = vmul.f32 %v5504, %v5504
      %v5640 = vmul.f32 %v5505, %v5505
      %v5641 = vmul.f32 %v5506, %v5506
      %v5642 = vmul.f32 %v5507, %v5507
      %v5643 = vmul.f32 %v5508, %v5508
      %v5644 = vmul.f32 %v5509, %v5509
      %v5645 = vmul.f32 %v5510, %v5510
      %v5646 = vmul.f32 %v5511, %v5511
      %v5647 = vmul.f32 %v5512, %v5512
      %v5648 = vmul.f32 %v5513, %v5513
      %v5649 = vmul.f32 %v5514, %v5514
      %v5650 = vmul.f32 %v5515, %v5515
      %v5651 = vmul.f32 %v5516, %v5516
      %v5652 = vmul.f32 %v5517, %v5517
      %v5653 = vmul.f32 %v5518, %v5518
      %v5654 = vsel %vm1444, %v5622, 0.0
      %v5655 = vsel %vm1444, %v5623, 0.0
      %v5656 = vadd.f32 %v5654, %v5655
      %v5657 = vsel %vm1444, %v5624, 0.0
      %v5658 = vadd.f32 %v5656, %v5657
      %v5659 = vsel %vm1444, %v5625, 0.0
      %v5660 = vadd.f32 %v5658, %v5659
      %v5661 = vsel %vm1444, %v5626, 0.0
      %v5662 = vadd.f32 %v5660, %v5661
      %v5663 = vsel %vm1444, %v5627, 0.0
      %v5664 = vadd.f32 %v5662, %v5663
      %v5665 = vsel %vm1444, %v5628, 0.0
      %v5666 = vadd.f32 %v5664, %v5665
      %v5667 = vsel %vm1444, %v5629, 0.0
      %v5668 = vadd.f32 %v5666, %v5667
      %v5669 = vsel %vm1444, %v5630, 0.0
      %v5670 = vadd.f32 %v5668, %v5669
      %v5671 = vsel %vm1444, %v5631, 0.0
      %v5672 = vadd.f32 %v5670, %v5671
      %v5673 = vsel %vm1444, %v5632, 0.0
      %v5674 = vadd.f32 %v5672, %v5673
      %v5675 = vsel %vm1444, %v5633, 0.0
      %v5676 = vadd.f32 %v5674, %v5675
      %v5677 = vsel %vm1444, %v5634, 0.0
      %v5678 = vadd.f32 %v5676, %v5677
      %v5679 = vsel %vm1444, %v5635, 0.0
      %v5680 = vadd.f32 %v5678, %v5679
      %v5681 = vsel %vm1444, %v5636, 0.0
      %v5682 = vadd.f32 %v5680, %v5681
      %v5683 = vsel %vm1444, %v5637, 0.0
      %v5684 = vadd.f32 %v5682, %v5683
      %v5685 = vsel %vm1444, %v5638, 0.0
      %v5686 = vadd.f32 %v5684, %v5685
      %v5687 = vsel %vm1444, %v5639, 0.0
      %v5688 = vadd.f32 %v5686, %v5687
      %v5689 = vsel %vm1444, %v5640, 0.0
      %v5690 = vadd.f32 %v5688, %v5689
      %v5691 = vsel %vm1444, %v5641, 0.0
      %v5692 = vadd.f32 %v5690, %v5691
      %v5693 = vsel %vm1444, %v5642, 0.0
      %v5694 = vadd.f32 %v5692, %v5693
      %v5695 = vsel %vm1444, %v5643, 0.0
      %v5696 = vadd.f32 %v5694, %v5695
      %v5697 = vsel %vm1444, %v5644, 0.0
      %v5698 = vadd.f32 %v5696, %v5697
      %v5699 = vsel %vm1444, %v5645, 0.0
      %v5700 = vadd.f32 %v5698, %v5699
      %v5701 = vsel %vm1444, %v5646, 0.0
      %v5702 = vadd.f32 %v5700, %v5701
      %v5703 = vsel %vm1444, %v5647, 0.0
      %v5704 = vadd.f32 %v5702, %v5703
      %v5705 = vsel %vm1444, %v5648, 0.0
      %v5706 = vadd.f32 %v5704, %v5705
      %v5707 = vsel %vm1444, %v5649, 0.0
      %v5708 = vadd.f32 %v5706, %v5707
      %v5709 = vsel %vm1444, %v5650, 0.0
      %v5710 = vadd.f32 %v5708, %v5709
      %v5711 = vsel %vm1444, %v5651, 0.0
      %v5712 = vadd.f32 %v5710, %v5711
      %v5713 = vsel %vm1444, %v5652, 0.0
      %v5714 = vadd.f32 %v5712, %v5713
      %v5715 = vsel %vm1444, %v5653, 0.0
      %v5716 = vadd.f32 %v5714, %v5715
      %v5717 = vrot.slane %v5716, 4
      %v5718 = vadd.f32 %v5716, %v5717
      %v5719 = vrot.slane %v5718, 2
      %v5720 = vadd.f32 %v5718, %v5719
      %v5721 = vrot.slane %v5720, 1
      %v5722 = vadd.f32 %v5720, %v5721
      %v5723 = vadd.f32 %v5722, 0.0
      %v5724 = vmul.f32 %v5621, 0.00390625
      %v5725 = vmul.f32 %v5723, 0.00390625
      %v5726 = vmul.f32 %v5724, %v5724
      %v5727 = vsub.f32 %v5725, %v5726
      %v5728 = vmax.f32 %v5727, 0.0
      %v5729 = vadd.f32 %v5728, 1e-05
      %v5730 = vrsqrt.pop %v5729
      %v5731 = vld [vmem:[%s5519] sm:$0xff]
      %v5732 = vld [vmem:[%s5519 + $0x8] sm:$0xff]
      %v5733 = vld [vmem:[%s5519 + $0x10] sm:$0xff]
      %v5734 = vld [vmem:[%s5519 + $0x18] sm:$0xff]
      %v5735 = vld [vmem:[%s5519 + $0x20] sm:$0xff]
      %v5736 = vld [vmem:[%s5519 + $0x28] sm:$0xff]
      %v5737 = vld [vmem:[%s5519 + $0x30] sm:$0xff]
      %v5738 = vld [vmem:[%s5519 + $0x38] sm:$0xff]
      %v5739 = vld [vmem:[%s5519 + $0x40] sm:$0xff]
      %v5740 = vld [vmem:[%s5519 + $0x48] sm:$0xff]
      %v5741 = vld [vmem:[%s5519 + $0x50] sm:$0xff]
      %v5742 = vld [vmem:[%s5519 + $0x58] sm:$0xff]
      %v5743 = vld [vmem:[%s5519 + $0x60] sm:$0xff]
      %v5744 = vld [vmem:[%s5519 + $0x68] sm:$0xff]
      %v5745 = vld [vmem:[%s5519 + $0x70] sm:$0xff]
      %v5746 = vld [vmem:[%s5519 + $0x78] sm:$0xff]
      %v5747 = vld [vmem:[%s5519 + $0x80] sm:$0xff]
      %v5748 = vld [vmem:[%s5519 + $0x88] sm:$0xff]
      %v5749 = vld [vmem:[%s5519 + $0x90] sm:$0xff]
      %v5750 = vld [vmem:[%s5519 + $0x98] sm:$0xff]
      %v5751 = vld [vmem:[%s5519 + $0xa0] sm:$0xff]
      %v5752 = vld [vmem:[%s5519 + $0xa8] sm:$0xff]
      %v5753 = vld [vmem:[%s5519 + $0xb0] sm:$0xff]
      %v5754 = vld [vmem:[%s5519 + $0xb8] sm:$0xff]
      %v5755 = vld [vmem:[%s5519 + $0xc0] sm:$0xff]
      %v5756 = vld [vmem:[%s5519 + $0xc8] sm:$0xff]
      %v5757 = vld [vmem:[%s5519 + $0xd0] sm:$0xff]
      %v5758 = vld [vmem:[%s5519 + $0xd8] sm:$0xff]
      %v5759 = vld [vmem:[%s5519 + $0xe0] sm:$0xff]
      %v5760 = vld [vmem:[%s5519 + $0xe8] sm:$0xff]
      %v5761 = vld [vmem:[%s5519 + $0xf0] sm:$0xff]
      %v5762 = vld [vmem:[%s5519 + $0xf8] sm:$0xff]
      %v5763 = vsub.f32 %v5731, %v5724
      %v5764 = vsub.f32 %v5732, %v5724
      %v5765 = vsub.f32 %v5733, %v5724
      %v5766 = vsub.f32 %v5734, %v5724
      %v5767 = vsub.f32 %v5735, %v5724
      %v5768 = vsub.f32 %v5736, %v5724
      %v5769 = vsub.f32 %v5737, %v5724
      %v5770 = vsub.f32 %v5738, %v5724
      %v5771 = vsub.f32 %v5739, %v5724
      %v5772 = vsub.f32 %v5740, %v5724
      %v5773 = vsub.f32 %v5741, %v5724
      %v5774 = vsub.f32 %v5742, %v5724
      %v5775 = vsub.f32 %v5743, %v5724
      %v5776 = vsub.f32 %v5744, %v5724
      %v5777 = vsub.f32 %v5745, %v5724
      %v5778 = vsub.f32 %v5746, %v5724
      %v5779 = vsub.f32 %v5747, %v5724
      %v5780 = vsub.f32 %v5748, %v5724
      %v5781 = vsub.f32 %v5749, %v5724
      %v5782 = vsub.f32 %v5750, %v5724
      %v5783 = vsub.f32 %v5751, %v5724
      %v5784 = vsub.f32 %v5752, %v5724
      %v5785 = vsub.f32 %v5753, %v5724
      %v5786 = vsub.f32 %v5754, %v5724
      %v5787 = vsub.f32 %v5755, %v5724
      %v5788 = vsub.f32 %v5756, %v5724
      %v5789 = vsub.f32 %v5757, %v5724
      %v5790 = vsub.f32 %v5758, %v5724
      %v5791 = vsub.f32 %v5759, %v5724
      %v5792 = vsub.f32 %v5760, %v5724
      %v5793 = vsub.f32 %v5761, %v5724
      %v5794 = vsub.f32 %v5762, %v5724
      %v5795 = vmul.f32 %v5763, %v5730
      %v5796 = vmul.f32 %v5764, %v5730
      %v5797 = vmul.f32 %v5765, %v5730
      %v5798 = vmul.f32 %v5766, %v5730
      %v5799 = vmul.f32 %v5767, %v5730
      %v5800 = vmul.f32 %v5768, %v5730
      %v5801 = vmul.f32 %v5769, %v5730
      %v5802 = vmul.f32 %v5770, %v5730
      %v5803 = vmul.f32 %v5771, %v5730
      %v5804 = vmul.f32 %v5772, %v5730
      %v5805 = vmul.f32 %v5773, %v5730
      %v5806 = vmul.f32 %v5774, %v5730
      %v5807 = vmul.f32 %v5775, %v5730
      %v5808 = vmul.f32 %v5776, %v5730
      %v5809 = vmul.f32 %v5777, %v5730
      %v5810 = vmul.f32 %v5778, %v5730
      %v5811 = vmul.f32 %v5779, %v5730
      %v5812 = vmul.f32 %v5780, %v5730
      %v5813 = vmul.f32 %v5781, %v5730
      %v5814 = vmul.f32 %v5782, %v5730
      %v5815 = vmul.f32 %v5783, %v5730
      %v5816 = vmul.f32 %v5784, %v5730
      %v5817 = vmul.f32 %v5785, %v5730
      %v5818 = vmul.f32 %v5786, %v5730
      %v5819 = vmul.f32 %v5787, %v5730
      %v5820 = vmul.f32 %v5788, %v5730
      %v5821 = vmul.f32 %v5789, %v5730
      %v5822 = vmul.f32 %v5790, %v5730
      %v5823 = vmul.f32 %v5791, %v5730
      %v5824 = vmul.f32 %v5792, %v5730
      %v5825 = vmul.f32 %v5793, %v5730
      %v5826 = vmul.f32 %v5794, %v5730
      %v5827 = vmax.f32 %v5795, 0.0
      %v5828 = vmax.f32 %v5796, 0.0
      %v5829 = vmax.f32 %v5797, 0.0
      %v5830 = vmax.f32 %v5798, 0.0
      %v5831 = vmax.f32 %v5799, 0.0
      %v5832 = vmax.f32 %v5800, 0.0
      %v5833 = vmax.f32 %v5801, 0.0
      %v5834 = vmax.f32 %v5802, 0.0
      %v5835 = vmax.f32 %v5803, 0.0
      %v5836 = vmax.f32 %v5804, 0.0
      %v5837 = vmax.f32 %v5805, 0.0
      %v5838 = vmax.f32 %v5806, 0.0
      %v5839 = vmax.f32 %v5807, 0.0
      %v5840 = vmax.f32 %v5808, 0.0
      %v5841 = vmax.f32 %v5809, 0.0
      %v5842 = vmax.f32 %v5810, 0.0
      %v5843 = vmax.f32 %v5811, 0.0
      %v5844 = vmax.f32 %v5812, 0.0
      %v5845 = vmax.f32 %v5813, 0.0
      %v5846 = vmax.f32 %v5814, 0.0
      %v5847 = vmax.f32 %v5815, 0.0
      %v5848 = vmax.f32 %v5816, 0.0
      %v5849 = vmax.f32 %v5817, 0.0
      %v5850 = vmax.f32 %v5818, 0.0
      %v5851 = vmax.f32 %v5819, 0.0
      %v5852 = vmax.f32 %v5820, 0.0
      %v5853 = vmax.f32 %v5821, 0.0
      %v5854 = vmax.f32 %v5822, 0.0
      %v5855 = vmax.f32 %v5823, 0.0
      %v5856 = vmax.f32 %v5824, 0.0
      %v5857 = vmax.f32 %v5825, 0.0
      %v5858 = vmax.f32 %v5826, 0.0
      %v5859 = vpack.c.bf16 %v5828, %v5827
      %v5860 = vpack.c.bf16 %v5830, %v5829
      %v5861 = vpack.c.bf16 %v5832, %v5831
      %v5862 = vpack.c.bf16 %v5834, %v5833
      %v5863 = vpack.c.bf16 %v5836, %v5835
      %v5864 = vpack.c.bf16 %v5838, %v5837
      %v5865 = vpack.c.bf16 %v5840, %v5839
      %v5866 = vpack.c.bf16 %v5842, %v5841
      %v5867 = vpack.c.bf16 %v5844, %v5843
      %v5868 = vpack.c.bf16 %v5846, %v5845
      %v5869 = vpack.c.bf16 %v5848, %v5847
      %v5870 = vpack.c.bf16 %v5850, %v5849
      %v5871 = vpack.c.bf16 %v5852, %v5851
      %v5872 = vpack.c.bf16 %v5854, %v5853
      %v5873 = vpack.c.bf16 %v5856, %v5855
      %v5874 = vpack.c.bf16 %v5858, %v5857
      %v5891 = vunpack.c.l.b16 %v5859
      %v5892 = vunpack.c.h.b16 %v5859
      %v5893 = vunpack.c.l.b16 %v5860
      %v5894 = vunpack.c.h.b16 %v5860
      %v5895 = vunpack.c.l.b16 %v5861
      %v5896 = vunpack.c.h.b16 %v5861
      %v5897 = vunpack.c.l.b16 %v5862
      %v5898 = vunpack.c.h.b16 %v5862
      %v5899 = vunpack.c.l.b16 %v5863
      %v5900 = vunpack.c.h.b16 %v5863
      %v5901 = vunpack.c.l.b16 %v5864
      %v5902 = vunpack.c.h.b16 %v5864
      %v5903 = vunpack.c.l.b16 %v5865
      %v5904 = vunpack.c.h.b16 %v5865
      %v5905 = vunpack.c.l.b16 %v5866
      %v5906 = vunpack.c.h.b16 %v5866
      %v5907 = vunpack.c.l.b16 %v5867
      %v5908 = vunpack.c.h.b16 %v5867
      %v5909 = vunpack.c.l.b16 %v5868
      %v5910 = vunpack.c.h.b16 %v5868
      %v5911 = vunpack.c.l.b16 %v5869
      %v5912 = vunpack.c.h.b16 %v5869
      %v5913 = vunpack.c.l.b16 %v5870
      %v5914 = vunpack.c.h.b16 %v5870
      %v5915 = vunpack.c.l.b16 %v5871
      %v5916 = vunpack.c.h.b16 %v5871
      %v5917 = vunpack.c.l.b16 %v5872
      %v5918 = vunpack.c.h.b16 %v5872
      %v5919 = vunpack.c.l.b16 %v5873
      %v5920 = vunpack.c.h.b16 %v5873
      %v5921 = vunpack.c.l.b16 %v5874
      %v5922 = vunpack.c.h.b16 %v5874
      %v5923 = vpack.c.b16 %v5891, %v5891
      %v5924 = vpack.c.b16 %v5892, %v5892
      %v5925 = vpack.c.b16 %v5893, %v5893
      %v5926 = vpack.c.b16 %v5894, %v5894
      %v5927 = vpack.c.b16 %v5895, %v5895
      %v5928 = vpack.c.b16 %v5896, %v5896
      %v5929 = vpack.c.b16 %v5897, %v5897
      %v5930 = vpack.c.b16 %v5898, %v5898
      %v5931 = vpack.c.b16 %v5899, %v5899
      %v5932 = vpack.c.b16 %v5900, %v5900
      %v5933 = vpack.c.b16 %v5901, %v5901
      %v5934 = vpack.c.b16 %v5902, %v5902
      %v5935 = vpack.c.b16 %v5903, %v5903
      %v5936 = vpack.c.b16 %v5904, %v5904
      %v5937 = vpack.c.b16 %v5905, %v5905
      %v5938 = vpack.c.b16 %v5906, %v5906
      %v5939 = vpack.c.b16 %v5907, %v5907
      %v5940 = vpack.c.b16 %v5908, %v5908
      %v5941 = vpack.c.b16 %v5909, %v5909
      %v5942 = vpack.c.b16 %v5910, %v5910
      %v5943 = vpack.c.b16 %v5911, %v5911
      %v5944 = vpack.c.b16 %v5912, %v5912
      %v5945 = vpack.c.b16 %v5913, %v5913
      %v5946 = vpack.c.b16 %v5914, %v5914
      %v5947 = vpack.c.b16 %v5915, %v5915
      %v5948 = vpack.c.b16 %v5916, %v5916
      %v5949 = vpack.c.b16 %v5917, %v5917
      %v5950 = vpack.c.b16 %v5918, %v5918
      %v5951 = vpack.c.b16 %v5919, %v5919
      %v5952 = vpack.c.b16 %v5920, %v5920
      %v5953 = vpack.c.b16 %v5921, %v5921
      %v5954 = vpack.c.b16 %v5922, %v5922
      %v5956 = vshrl.u32 %v5923, 16
      %v5958 = vrot.slane %v5956, 7
      %v5959 = vshll.u32 %v5923, 16
      %v5961 = vor.u32 %v5958, %v5959
      %v5962 = vrot.slane %v5958, 4
      %v5964 = vshrl.u32 %v5924, 16
      %v5966 = vrot.slane %v5964, 7
      %v5967 = vshll.u32 %v5924, 16
      %v5969 = vor.u32 %v5966, %v5967
      %v5970 = vsel %vm305, %v5962, %v5969
      %v5971 = vrot.slane %v5966, 4
      %v5973 = vshrl.u32 %v5925, 16
      %v5975 = vrot.slane %v5973, 7
      %v5976 = vshll.u32 %v5925, 16
      %v5978 = vor.u32 %v5975, %v5976
      %v5979 = vrot.slane %v5975, 4
      %v5981 = vshrl.u32 %v5926, 16
      %v5983 = vrot.slane %v5981, 7
      %v5984 = vshll.u32 %v5926, 16
      %v5986 = vor.u32 %v5983, %v5984
      %v5987 = vsel %vm305, %v5979, %v5986
      %v5988 = vrot.slane %v5983, 4
      %v5990 = vshrl.u32 %v5927, 16
      %v5992 = vrot.slane %v5990, 7
      %v5993 = vshll.u32 %v5927, 16
      %v5995 = vor.u32 %v5992, %v5993
      %v5996 = vrot.slane %v5992, 4
      %v5998 = vshrl.u32 %v5928, 16
      %v6000 = vrot.slane %v5998, 7
      %v6001 = vshll.u32 %v5928, 16
      %v6003 = vor.u32 %v6000, %v6001
      %v6004 = vsel %vm305, %v5996, %v6003
      %v6005 = vrot.slane %v6000, 4
      %v6007 = vshrl.u32 %v5929, 16
      %v6009 = vrot.slane %v6007, 7
      %v6010 = vshll.u32 %v5929, 16
      %v6012 = vor.u32 %v6009, %v6010
      %v6013 = vrot.slane %v6009, 4
      %v6015 = vshrl.u32 %v5930, 16
      %v6017 = vrot.slane %v6015, 7
      %v6018 = vshll.u32 %v5930, 16
      %v6020 = vor.u32 %v6017, %v6018
      %v6021 = vsel %vm305, %v6013, %v6020
      %v6022 = vrot.slane %v6017, 4
      %v6024 = vshrl.u32 %v5931, 16
      %v6026 = vrot.slane %v6024, 7
      %v6027 = vshll.u32 %v5931, 16
      %v6029 = vor.u32 %v6026, %v6027
      %v6030 = vrot.slane %v6026, 4
      %v6032 = vshrl.u32 %v5932, 16
      %v6034 = vrot.slane %v6032, 7
      %v6035 = vshll.u32 %v5932, 16
      %v6037 = vor.u32 %v6034, %v6035
      %v6038 = vsel %vm305, %v6030, %v6037
      %v6039 = vrot.slane %v6034, 4
      %v6041 = vshrl.u32 %v5933, 16
      %v6043 = vrot.slane %v6041, 7
      %v6044 = vshll.u32 %v5933, 16
      %v6046 = vor.u32 %v6043, %v6044
      %v6047 = vrot.slane %v6043, 4
      %v6049 = vshrl.u32 %v5934, 16
      %v6051 = vrot.slane %v6049, 7
      %v6052 = vshll.u32 %v5934, 16
      %v6054 = vor.u32 %v6051, %v6052
      %v6055 = vsel %vm305, %v6047, %v6054
      %v6056 = vrot.slane %v6051, 4
      %v6058 = vshrl.u32 %v5935, 16
      %v6060 = vrot.slane %v6058, 7
      %v6061 = vshll.u32 %v5935, 16
      %v6063 = vor.u32 %v6060, %v6061
      %v6064 = vrot.slane %v6060, 4
      %v6066 = vshrl.u32 %v5936, 16
      %v6068 = vrot.slane %v6066, 7
      %v6069 = vshll.u32 %v5936, 16
      %v6071 = vor.u32 %v6068, %v6069
      %v6072 = vsel %vm305, %v6064, %v6071
      %v6073 = vrot.slane %v6068, 4
      %v6075 = vshrl.u32 %v5937, 16
      %v6077 = vrot.slane %v6075, 7
      %v6078 = vshll.u32 %v5937, 16
      %v6080 = vor.u32 %v6077, %v6078
      %v6081 = vrot.slane %v6077, 4
      %v6083 = vshrl.u32 %v5938, 16
      %v6085 = vrot.slane %v6083, 7
      %v6086 = vshll.u32 %v5938, 16
      %v6088 = vor.u32 %v6085, %v6086
      %v6089 = vsel %vm305, %v6081, %v6088
      %v6090 = vrot.slane %v6085, 4
      %v6092 = vshrl.u32 %v5939, 16
      %v6094 = vrot.slane %v6092, 7
      %v6095 = vshll.u32 %v5939, 16
      %v6097 = vor.u32 %v6094, %v6095
      %v6098 = vrot.slane %v6094, 4
      %v6100 = vshrl.u32 %v5940, 16
      %v6102 = vrot.slane %v6100, 7
      %v6103 = vshll.u32 %v5940, 16
      %v6105 = vor.u32 %v6102, %v6103
      %v6106 = vsel %vm305, %v6098, %v6105
      %v6107 = vrot.slane %v6102, 4
      %v6109 = vshrl.u32 %v5941, 16
      %v6111 = vrot.slane %v6109, 7
      %v6112 = vshll.u32 %v5941, 16
      %v6114 = vor.u32 %v6111, %v6112
      %v6115 = vrot.slane %v6111, 4
      %v6117 = vshrl.u32 %v5942, 16
      %v6119 = vrot.slane %v6117, 7
      %v6120 = vshll.u32 %v5942, 16
      %v6122 = vor.u32 %v6119, %v6120
      %v6123 = vsel %vm305, %v6115, %v6122
      %v6124 = vrot.slane %v6119, 4
      %v6126 = vshrl.u32 %v5943, 16
      %v6128 = vrot.slane %v6126, 7
      %v6129 = vshll.u32 %v5943, 16
      %v6131 = vor.u32 %v6128, %v6129
      %v6132 = vrot.slane %v6128, 4
      %v6134 = vshrl.u32 %v5944, 16
      %v6136 = vrot.slane %v6134, 7
      %v6137 = vshll.u32 %v5944, 16
      %v6139 = vor.u32 %v6136, %v6137
      %v6140 = vsel %vm305, %v6132, %v6139
      %v6141 = vrot.slane %v6136, 4
      %v6143 = vshrl.u32 %v5945, 16
      %v6145 = vrot.slane %v6143, 7
      %v6146 = vshll.u32 %v5945, 16
      %v6148 = vor.u32 %v6145, %v6146
      %v6149 = vrot.slane %v6145, 4
      %v6151 = vshrl.u32 %v5946, 16
      %v6153 = vrot.slane %v6151, 7
      %v6154 = vshll.u32 %v5946, 16
      %v6156 = vor.u32 %v6153, %v6154
      %v6157 = vsel %vm305, %v6149, %v6156
      %v6158 = vrot.slane %v6153, 4
      %v6160 = vshrl.u32 %v5947, 16
      %v6162 = vrot.slane %v6160, 7
      %v6163 = vshll.u32 %v5947, 16
      %v6165 = vor.u32 %v6162, %v6163
      %v6166 = vrot.slane %v6162, 4
      %v6168 = vshrl.u32 %v5948, 16
      %v6170 = vrot.slane %v6168, 7
      %v6171 = vshll.u32 %v5948, 16
      %v6173 = vor.u32 %v6170, %v6171
      %v6174 = vsel %vm305, %v6166, %v6173
      %v6175 = vrot.slane %v6170, 4
      %v6177 = vshrl.u32 %v5949, 16
      %v6179 = vrot.slane %v6177, 7
      %v6180 = vshll.u32 %v5949, 16
      %v6182 = vor.u32 %v6179, %v6180
      %v6183 = vrot.slane %v6179, 4
      %v6185 = vshrl.u32 %v5950, 16
      %v6187 = vrot.slane %v6185, 7
      %v6188 = vshll.u32 %v5950, 16
      %v6190 = vor.u32 %v6187, %v6188
      %v6191 = vsel %vm305, %v6183, %v6190
      %v6192 = vrot.slane %v6187, 4
      %v6194 = vshrl.u32 %v5951, 16
      %v6196 = vrot.slane %v6194, 7
      %v6197 = vshll.u32 %v5951, 16
      %v6199 = vor.u32 %v6196, %v6197
      %v6200 = vrot.slane %v6196, 4
      %v6202 = vshrl.u32 %v5952, 16
      %v6204 = vrot.slane %v6202, 7
      %v6205 = vshll.u32 %v5952, 16
      %v6207 = vor.u32 %v6204, %v6205
      %v6208 = vsel %vm305, %v6200, %v6207
      %v6209 = vrot.slane %v6204, 4
      %v6211 = vshrl.u32 %v5953, 16
      %v6213 = vrot.slane %v6211, 7
      %v6214 = vshll.u32 %v5953, 16
      %v6216 = vor.u32 %v6213, %v6214
      %v6217 = vrot.slane %v6213, 4
      %v6219 = vshrl.u32 %v5954, 16
      %v6221 = vrot.slane %v6219, 7
      %v6222 = vshll.u32 %v5954, 16
      %v6224 = vor.u32 %v6221, %v6222
      %v6225 = vsel %vm305, %v6217, %v6224
      %v6226 = vrot.slane %v6221, 4
      %v6275 = vld [vmem:[%s628] sm:$0xf]
      %v6276 = vsel %vm631, %v5961, %v6275
      %6277 = vst [vmem:[%s628] sm:$0xf] %v6276
      %6278 = vst.msk [vmem:[%s628 + $0x4] sm:$0xf] %vm635, %v5970
      %v6279 = vld [vmem:[%s628 + $0x8] sm:$0x1]
      %v6280 = vsel %vm638, %v5971, %v6279
      %6281 = vst [vmem:[%s628 + $0x8] sm:$0x1] %v6280
      %v6282 = vld [vmem:[%s628 + $0xc] sm:$0xf]
      %v6283 = vsel %vm631, %v5978, %v6282
      %6284 = vst [vmem:[%s628 + $0xc] sm:$0xf] %v6283
      %6285 = vst.msk [vmem:[%s628 + $0x10] sm:$0xf] %vm635, %v5987
      %v6286 = vld [vmem:[%s628 + $0x14] sm:$0x1]
      %v6287 = vsel %vm638, %v5988, %v6286
      %6288 = vst [vmem:[%s628 + $0x14] sm:$0x1] %v6287
      %v6289 = vld [vmem:[%s628 + $0x18] sm:$0xf]
      %v6290 = vsel %vm631, %v5995, %v6289
      %6291 = vst [vmem:[%s628 + $0x18] sm:$0xf] %v6290
      %6292 = vst.msk [vmem:[%s628 + $0x1c] sm:$0xf] %vm635, %v6004
      %v6293 = vld [vmem:[%s628 + $0x20] sm:$0x1]
      %v6294 = vsel %vm638, %v6005, %v6293
      %6295 = vst [vmem:[%s628 + $0x20] sm:$0x1] %v6294
      %v6296 = vld [vmem:[%s628 + $0x24] sm:$0xf]
      %v6297 = vsel %vm631, %v6012, %v6296
      %6298 = vst [vmem:[%s628 + $0x24] sm:$0xf] %v6297
      %6299 = vst.msk [vmem:[%s628 + $0x28] sm:$0xf] %vm635, %v6021
      %v6300 = vld [vmem:[%s628 + $0x2c] sm:$0x1]
      %v6301 = vsel %vm638, %v6022, %v6300
      %6302 = vst [vmem:[%s628 + $0x2c] sm:$0x1] %v6301
      %v6303 = vld [vmem:[%s628 + $0x30] sm:$0xf]
      %v6304 = vsel %vm631, %v6029, %v6303
      %6305 = vst [vmem:[%s628 + $0x30] sm:$0xf] %v6304
      %6306 = vst.msk [vmem:[%s628 + $0x34] sm:$0xf] %vm635, %v6038
      %v6307 = vld [vmem:[%s628 + $0x38] sm:$0x1]
      %v6308 = vsel %vm638, %v6039, %v6307
      %6309 = vst [vmem:[%s628 + $0x38] sm:$0x1] %v6308
      %v6310 = vld [vmem:[%s628 + $0x3c] sm:$0xf]
      %v6311 = vsel %vm631, %v6046, %v6310
      %6312 = vst [vmem:[%s628 + $0x3c] sm:$0xf] %v6311
      %6313 = vst.msk [vmem:[%s628 + $0x40] sm:$0xf] %vm635, %v6055
      %v6314 = vld [vmem:[%s628 + $0x44] sm:$0x1]
      %v6315 = vsel %vm638, %v6056, %v6314
      %6316 = vst [vmem:[%s628 + $0x44] sm:$0x1] %v6315
      %v6317 = vld [vmem:[%s628 + $0x48] sm:$0xf]
      %v6318 = vsel %vm631, %v6063, %v6317
      %6319 = vst [vmem:[%s628 + $0x48] sm:$0xf] %v6318
      %6320 = vst.msk [vmem:[%s628 + $0x4c] sm:$0xf] %vm635, %v6072
      %v6321 = vld [vmem:[%s628 + $0x50] sm:$0x1]
      %v6322 = vsel %vm638, %v6073, %v6321
      %6323 = vst [vmem:[%s628 + $0x50] sm:$0x1] %v6322
      %v6324 = vld [vmem:[%s628 + $0x54] sm:$0xf]
      %v6325 = vsel %vm631, %v6080, %v6324
      %6326 = vst [vmem:[%s628 + $0x54] sm:$0xf] %v6325
      %6327 = vst.msk [vmem:[%s628 + $0x58] sm:$0xf] %vm635, %v6089
      %v6328 = vld [vmem:[%s628 + $0x5c] sm:$0x1]
      %v6329 = vsel %vm638, %v6090, %v6328
      %6330 = vst [vmem:[%s628 + $0x5c] sm:$0x1] %v6329
      %v6331 = vld [vmem:[%s628 + $0x60] sm:$0xf]
      %v6332 = vsel %vm631, %v6097, %v6331
      %6333 = vst [vmem:[%s628 + $0x60] sm:$0xf] %v6332
      %6334 = vst.msk [vmem:[%s628 + $0x64] sm:$0xf] %vm635, %v6106
      %v6335 = vld [vmem:[%s628 + $0x68] sm:$0x1]
      %v6336 = vsel %vm638, %v6107, %v6335
      %6337 = vst [vmem:[%s628 + $0x68] sm:$0x1] %v6336
      %v6338 = vld [vmem:[%s628 + $0x6c] sm:$0xf]
      %v6339 = vsel %vm631, %v6114, %v6338
      %6340 = vst [vmem:[%s628 + $0x6c] sm:$0xf] %v6339
      %6341 = vst.msk [vmem:[%s628 + $0x70] sm:$0xf] %vm635, %v6123
      %v6342 = vld [vmem:[%s628 + $0x74] sm:$0x1]
      %v6343 = vsel %vm638, %v6124, %v6342
      %6344 = vst [vmem:[%s628 + $0x74] sm:$0x1] %v6343
      %v6345 = vld [vmem:[%s628 + $0x78] sm:$0xf]
      %v6346 = vsel %vm631, %v6131, %v6345
      %6347 = vst [vmem:[%s628 + $0x78] sm:$0xf] %v6346
      %6348 = vst.msk [vmem:[%s628 + $0x7c] sm:$0xf] %vm635, %v6140
      %v6349 = vld [vmem:[%s628 + $0x80] sm:$0x1]
      %v6350 = vsel %vm638, %v6141, %v6349
      %6351 = vst [vmem:[%s628 + $0x80] sm:$0x1] %v6350
      %v6352 = vld [vmem:[%s628 + $0x84] sm:$0xf]
      %v6353 = vsel %vm631, %v6148, %v6352
      %6354 = vst [vmem:[%s628 + $0x84] sm:$0xf] %v6353
      %6355 = vst.msk [vmem:[%s628 + $0x88] sm:$0xf] %vm635, %v6157
      %v6356 = vld [vmem:[%s628 + $0x8c] sm:$0x1]
      %v6357 = vsel %vm638, %v6158, %v6356
      %6358 = vst [vmem:[%s628 + $0x8c] sm:$0x1] %v6357
      %v6359 = vld [vmem:[%s628 + $0x90] sm:$0xf]
      %v6360 = vsel %vm631, %v6165, %v6359
      %6361 = vst [vmem:[%s628 + $0x90] sm:$0xf] %v6360
      %6362 = vst.msk [vmem:[%s628 + $0x94] sm:$0xf] %vm635, %v6174
      %v6363 = vld [vmem:[%s628 + $0x98] sm:$0x1]
      %v6364 = vsel %vm638, %v6175, %v6363
      %6365 = vst [vmem:[%s628 + $0x98] sm:$0x1] %v6364
      %v6366 = vld [vmem:[%s628 + $0x9c] sm:$0xf]
      %v6367 = vsel %vm631, %v6182, %v6366
      %6368 = vst [vmem:[%s628 + $0x9c] sm:$0xf] %v6367
      %6369 = vst.msk [vmem:[%s628 + $0xa0] sm:$0xf] %vm635, %v6191
      %v6370 = vld [vmem:[%s628 + $0xa4] sm:$0x1]
      %v6371 = vsel %vm638, %v6192, %v6370
      %6372 = vst [vmem:[%s628 + $0xa4] sm:$0x1] %v6371
      %v6373 = vld [vmem:[%s628 + $0xa8] sm:$0xf]
      %v6374 = vsel %vm631, %v6199, %v6373
      %6375 = vst [vmem:[%s628 + $0xa8] sm:$0xf] %v6374
      %6376 = vst.msk [vmem:[%s628 + $0xac] sm:$0xf] %vm635, %v6208
      %v6377 = vld [vmem:[%s628 + $0xb0] sm:$0x1]
      %v6378 = vsel %vm638, %v6209, %v6377
      %6379 = vst [vmem:[%s628 + $0xb0] sm:$0x1] %v6378
      %v6380 = vld [vmem:[%s628 + $0xb4] sm:$0xf]
      %v6381 = vsel %vm631, %v6216, %v6380
      %6382 = vst [vmem:[%s628 + $0xb4] sm:$0xf] %v6381
      %6383 = vst.msk [vmem:[%s628 + $0xb8] sm:$0xf] %vm635, %v6225
      %v6384 = vld [vmem:[%s628 + $0xbc] sm:$0x1]
      %v6385 = vsel %vm638, %v6226, %v6384
      %6386 = vst [vmem:[%s628 + $0xbc] sm:$0x1] %v6385
      %v6387 = vrot.slane %v5956, 4
      %v6388 = vrot.slane %v6387, 4
      %v6389 = vrot.slane %v5973, 4
      %v6390 = vrot.slane %v6389, 4
      %v6391 = vrot.slane %v5990, 4
      %v6392 = vrot.slane %v6391, 4
      %v6393 = vrot.slane %v6007, 4
      %v6394 = vrot.slane %v6393, 4
      %v6395 = vrot.slane %v6024, 4
      %v6396 = vrot.slane %v6395, 4
      %v6397 = vrot.slane %v6041, 4
      %v6398 = vrot.slane %v6397, 4
      %v6399 = vrot.slane %v6058, 4
      %v6400 = vrot.slane %v6399, 4
      %v6401 = vrot.slane %v6075, 4
      %v6402 = vrot.slane %v6401, 4
      %v6403 = vrot.slane %v6092, 4
      %v6404 = vrot.slane %v6403, 4
      %v6405 = vrot.slane %v6109, 4
      %v6406 = vrot.slane %v6405, 4
      %v6407 = vrot.slane %v6126, 4
      %v6408 = vrot.slane %v6407, 4
      %v6409 = vrot.slane %v6143, 4
      %v6410 = vrot.slane %v6409, 4
      %v6411 = vrot.slane %v6160, 4
      %v6412 = vrot.slane %v6411, 4
      %v6413 = vrot.slane %v6177, 4
      %v6414 = vrot.slane %v6413, 4
      %v6415 = vrot.slane %v6194, 4
      %v6416 = vrot.slane %v6415, 4
      %v6417 = vrot.slane %v6211, 4
      %v6418 = vrot.slane %v6417, 4
      %v6435 = vld [vmem:[%s628] sm:$0x1]
      %v6436 = vsel %vm638, %v6388, %v6435
      %6437 = vst [vmem:[%s628] sm:$0x1] %v6436
      %v6438 = vld [vmem:[%s628 + $0xc] sm:$0x1]
      %v6439 = vsel %vm638, %v6390, %v6438
      %6440 = vst [vmem:[%s628 + $0xc] sm:$0x1] %v6439
      %v6441 = vld [vmem:[%s628 + $0x18] sm:$0x1]
      %v6442 = vsel %vm638, %v6392, %v6441
      %6443 = vst [vmem:[%s628 + $0x18] sm:$0x1] %v6442
      %v6444 = vld [vmem:[%s628 + $0x24] sm:$0x1]
      %v6445 = vsel %vm638, %v6394, %v6444
      %6446 = vst [vmem:[%s628 + $0x24] sm:$0x1] %v6445
      %v6447 = vld [vmem:[%s628 + $0x30] sm:$0x1]
      %v6448 = vsel %vm638, %v6396, %v6447
      %6449 = vst [vmem:[%s628 + $0x30] sm:$0x1] %v6448
      %v6450 = vld [vmem:[%s628 + $0x3c] sm:$0x1]
      %v6451 = vsel %vm638, %v6398, %v6450
      %6452 = vst [vmem:[%s628 + $0x3c] sm:$0x1] %v6451
      %v6453 = vld [vmem:[%s628 + $0x48] sm:$0x1]
      %v6454 = vsel %vm638, %v6400, %v6453
      %6455 = vst [vmem:[%s628 + $0x48] sm:$0x1] %v6454
      %v6456 = vld [vmem:[%s628 + $0x54] sm:$0x1]
      %v6457 = vsel %vm638, %v6402, %v6456
      %6458 = vst [vmem:[%s628 + $0x54] sm:$0x1] %v6457
      %v6459 = vld [vmem:[%s628 + $0x60] sm:$0x1]
      %v6460 = vsel %vm638, %v6404, %v6459
      %6461 = vst [vmem:[%s628 + $0x60] sm:$0x1] %v6460
      %v6462 = vld [vmem:[%s628 + $0x6c] sm:$0x1]
      %v6463 = vsel %vm638, %v6406, %v6462
      %6464 = vst [vmem:[%s628 + $0x6c] sm:$0x1] %v6463
      %v6465 = vld [vmem:[%s628 + $0x78] sm:$0x1]
      %v6466 = vsel %vm638, %v6408, %v6465
      %6467 = vst [vmem:[%s628 + $0x78] sm:$0x1] %v6466
      %v6468 = vld [vmem:[%s628 + $0x84] sm:$0x1]
      %v6469 = vsel %vm638, %v6410, %v6468
      %6470 = vst [vmem:[%s628 + $0x84] sm:$0x1] %v6469
      %v6471 = vld [vmem:[%s628 + $0x90] sm:$0x1]
      %v6472 = vsel %vm638, %v6412, %v6471
      %6473 = vst [vmem:[%s628 + $0x90] sm:$0x1] %v6472
      %v6474 = vld [vmem:[%s628 + $0x9c] sm:$0x1]
      %v6475 = vsel %vm638, %v6414, %v6474
      %6476 = vst [vmem:[%s628 + $0x9c] sm:$0x1] %v6475
      %v6477 = vld [vmem:[%s628 + $0xa8] sm:$0x1]
      %v6478 = vsel %vm638, %v6416, %v6477
      %6479 = vst [vmem:[%s628 + $0xa8] sm:$0x1] %v6478
      %v6480 = vld [vmem:[%s628 + $0xb4] sm:$0x1]
      %v6481 = vsel %vm638, %v6418, %v6480
      %6482 = vst [vmem:[%s628 + $0xb4] sm:$0x1] %v6481
      %v6483 = vrot.slane %v5967, 7
      %v6484 = vrot.slane %v6483, 4
      %v6485 = vrot.slane %v5984, 7
      %v6486 = vrot.slane %v6485, 4
      %v6487 = vrot.slane %v6001, 7
      %v6488 = vrot.slane %v6487, 4
      %v6489 = vrot.slane %v6018, 7
      %v6490 = vrot.slane %v6489, 4
      %v6491 = vrot.slane %v6035, 7
      %v6492 = vrot.slane %v6491, 4
      %v6493 = vrot.slane %v6052, 7
      %v6494 = vrot.slane %v6493, 4
      %v6495 = vrot.slane %v6069, 7
      %v6496 = vrot.slane %v6495, 4
      %v6497 = vrot.slane %v6086, 7
      %v6498 = vrot.slane %v6497, 4
      %v6499 = vrot.slane %v6103, 7
      %v6500 = vrot.slane %v6499, 4
      %v6501 = vrot.slane %v6120, 7
      %v6502 = vrot.slane %v6501, 4
      %v6503 = vrot.slane %v6137, 7
      %v6504 = vrot.slane %v6503, 4
      %v6505 = vrot.slane %v6154, 7
      %v6506 = vrot.slane %v6505, 4
      %v6507 = vrot.slane %v6171, 7
      %v6508 = vrot.slane %v6507, 4
      %v6509 = vrot.slane %v6188, 7
      %v6510 = vrot.slane %v6509, 4
      %v6511 = vrot.slane %v6205, 7
      %v6512 = vrot.slane %v6511, 4
      %v6513 = vrot.slane %v6222, 7
      %v6514 = vrot.slane %v6513, 4
      %v6531 = vld [vmem:[%s628 + $0x8] sm:$0x1]
      %v6532 = vsel %vm891, %v6484, %v6531
      %6533 = vst [vmem:[%s628 + $0x8] sm:$0x1] %v6532
      %v6534 = vld [vmem:[%s628 + $0x14] sm:$0x1]
      %v6535 = vsel %vm891, %v6486, %v6534
      %6536 = vst [vmem:[%s628 + $0x14] sm:$0x1] %v6535
      %v6537 = vld [vmem:[%s628 + $0x20] sm:$0x1]
      %v6538 = vsel %vm891, %v6488, %v6537
      %6539 = vst [vmem:[%s628 + $0x20] sm:$0x1] %v6538
      %v6540 = vld [vmem:[%s628 + $0x2c] sm:$0x1]
      %v6541 = vsel %vm891, %v6490, %v6540
      %6542 = vst [vmem:[%s628 + $0x2c] sm:$0x1] %v6541
      %v6543 = vld [vmem:[%s628 + $0x38] sm:$0x1]
      %v6544 = vsel %vm891, %v6492, %v6543
      %6545 = vst [vmem:[%s628 + $0x38] sm:$0x1] %v6544
      %v6546 = vld [vmem:[%s628 + $0x44] sm:$0x1]
      %v6547 = vsel %vm891, %v6494, %v6546
      %6548 = vst [vmem:[%s628 + $0x44] sm:$0x1] %v6547
      %v6549 = vld [vmem:[%s628 + $0x50] sm:$0x1]
      %v6550 = vsel %vm891, %v6496, %v6549
      %6551 = vst [vmem:[%s628 + $0x50] sm:$0x1] %v6550
      %v6552 = vld [vmem:[%s628 + $0x5c] sm:$0x1]
      %v6553 = vsel %vm891, %v6498, %v6552
      %6554 = vst [vmem:[%s628 + $0x5c] sm:$0x1] %v6553
      %v6555 = vld [vmem:[%s628 + $0x68] sm:$0x1]
      %v6556 = vsel %vm891, %v6500, %v6555
      %6557 = vst [vmem:[%s628 + $0x68] sm:$0x1] %v6556
      %v6558 = vld [vmem:[%s628 + $0x74] sm:$0x1]
      %v6559 = vsel %vm891, %v6502, %v6558
      %6560 = vst [vmem:[%s628 + $0x74] sm:$0x1] %v6559
      %v6561 = vld [vmem:[%s628 + $0x80] sm:$0x1]
      %v6562 = vsel %vm891, %v6504, %v6561
      %6563 = vst [vmem:[%s628 + $0x80] sm:$0x1] %v6562
      %v6564 = vld [vmem:[%s628 + $0x8c] sm:$0x1]
      %v6565 = vsel %vm891, %v6506, %v6564
      %6566 = vst [vmem:[%s628 + $0x8c] sm:$0x1] %v6565
      %v6567 = vld [vmem:[%s628 + $0x98] sm:$0x1]
      %v6568 = vsel %vm891, %v6508, %v6567
      %6569 = vst [vmem:[%s628 + $0x98] sm:$0x1] %v6568
      %v6570 = vld [vmem:[%s628 + $0xa4] sm:$0x1]
      %v6571 = vsel %vm891, %v6510, %v6570
      %6572 = vst [vmem:[%s628 + $0xa4] sm:$0x1] %v6571
      %v6573 = vld [vmem:[%s628 + $0xb0] sm:$0x1]
      %v6574 = vsel %vm891, %v6512, %v6573
      %6575 = vst [vmem:[%s628 + $0xb0] sm:$0x1] %v6574
      %v6576 = vld [vmem:[%s628 + $0xbc] sm:$0x1]
      %v6577 = vsel %vm891, %v6514, %v6576
      %6578 = vst [vmem:[%s628 + $0xbc] sm:$0x1] %v6577
      %v6579 = vld [vmem:[%s940] sm:$0xf]
      %v6580 = vld [vmem:[%s940 + $0x4] sm:$0xf]
      %v6581 = vld [vmem:[%s940 + $0x8] sm:$0xf]
      %6582 = vst.msk [vmem:[#allocation2] sm:$0xf] %vm635, %v6579
      %6583 = vst.msk [vmem:[#allocation2 + $0x4] sm:$0xf] %vm635, %v6580
      %6584 = vst.msk [vmem:[#allocation2 + $0x8] sm:$0xf] %vm635, %v6581
      %v6585 = vld [vmem:[%s947] sm:$0xf]
      %v6586 = vld [vmem:[%s947 + $0x4] sm:$0xf]
      %v6587 = vld [vmem:[%s947 + $0x8] sm:$0xf]
      %6588 = vst.msk [vmem:[%s951] sm:$0xf] %vm635, %v6585
      %6589 = vst.msk [vmem:[%s951 + $0x4] sm:$0xf] %vm635, %v6586
      %6590 = vst.msk [vmem:[%s951 + $0x8] sm:$0xf] %vm635, %v6587
      %v6591 = vld [vmem:[%s957] sm:$0xf]
      %v6592 = vld [vmem:[%s957 + $0x4] sm:$0xf]
      %v6593 = vld [vmem:[%s957 + $0xc] sm:$0xf]
      %v6594 = vld [vmem:[%s957 + $0x10] sm:$0xf]
      %v6595 = vld [vmem:[%s957 + $0x18] sm:$0xf]
      %v6596 = vld [vmem:[%s957 + $0x1c] sm:$0xf]
      %v6597 = vld [vmem:[%s957 + $0x24] sm:$0xf]
      %v6598 = vld [vmem:[%s957 + $0x28] sm:$0xf]
      %v6599 = vld [vmem:[%s957 + $0x30] sm:$0xf]
      %v6600 = vld [vmem:[%s957 + $0x34] sm:$0xf]
      %v6601 = vld [vmem:[%s957 + $0x3c] sm:$0xf]
      %v6602 = vld [vmem:[%s957 + $0x40] sm:$0xf]
      %v6603 = vld [vmem:[%s957 + $0x48] sm:$0xf]
      %v6604 = vld [vmem:[%s957 + $0x4c] sm:$0xf]
      %v6605 = vld [vmem:[%s957 + $0x54] sm:$0xf]
      %v6606 = vld [vmem:[%s957 + $0x58] sm:$0xf]
      %v6607 = vld [vmem:[%s957 + $0x60] sm:$0xf]
      %v6608 = vld [vmem:[%s957 + $0x64] sm:$0xf]
      %v6609 = vld [vmem:[%s957 + $0x6c] sm:$0xf]
      %v6610 = vld [vmem:[%s957 + $0x70] sm:$0xf]
      %v6611 = vld [vmem:[%s957 + $0x78] sm:$0xf]
      %v6612 = vld [vmem:[%s957 + $0x7c] sm:$0xf]
      %v6613 = vld [vmem:[%s957 + $0x84] sm:$0xf]
      %v6614 = vld [vmem:[%s957 + $0x88] sm:$0xf]
      %v6615 = vld [vmem:[%s957 + $0x90] sm:$0xf]
      %v6616 = vld [vmem:[%s957 + $0x94] sm:$0xf]
      %v6617 = vld [vmem:[%s957 + $0x9c] sm:$0xf]
      %v6618 = vld [vmem:[%s957 + $0xa0] sm:$0xf]
      %v6619 = vld [vmem:[%s957 + $0xa8] sm:$0xf]
      %v6620 = vld [vmem:[%s957 + $0xac] sm:$0xf]
      %v6621 = vld [vmem:[%s957 + $0xb4] sm:$0xf]
      %v6622 = vld [vmem:[%s957 + $0xb8] sm:$0xf]
      %v6623 = vld [vmem:[%s2] sm:$0x3]
      %v6624 = vld [vmem:[%s957 + $0x8] sm:$0x1]
      %v6625 = vld [vmem:[%s957 + $0x14] sm:$0x1]
      %v6626 = vld [vmem:[%s957 + $0x20] sm:$0x1]
      %v6627 = vld [vmem:[%s957 + $0x2c] sm:$0x1]
      %v6628 = vld [vmem:[%s957 + $0x38] sm:$0x1]
      %v6629 = vld [vmem:[%s957 + $0x44] sm:$0x1]
      %v6630 = vld [vmem:[%s957 + $0x50] sm:$0x1]
      %v6631 = vld [vmem:[%s957 + $0x5c] sm:$0x1]
      %v6632 = vld [vmem:[%s957 + $0x68] sm:$0x1]
      %v6633 = vld [vmem:[%s957 + $0x74] sm:$0x1]
      %v6634 = vld [vmem:[%s957 + $0x80] sm:$0x1]
      %v6635 = vld [vmem:[%s957 + $0x8c] sm:$0x1]
      %v6636 = vld [vmem:[%s957 + $0x98] sm:$0x1]
      %v6637 = vld [vmem:[%s957 + $0xa4] sm:$0x1]
      %v6638 = vld [vmem:[%s957 + $0xb0] sm:$0x1]
      %v6639 = vld [vmem:[%s957 + $0xbc] sm:$0x1]
      %v6641 = vshrl.u32 %v6591, 16
      %v6643 = vrot.slane %v6641, 4
      %v6644 = vshll.u32 %v6591, 16
      %v6646 = vrot.slane %v6644, 5
      %v6647 = vor.u32 %v6643, %v6646
      %v6648 = vrot.slane %v6647, 4
      %v6650 = vshll.u32 %v6592, 16
      %v6652 = vrot.slane %v6650, 5
      %v6653 = vsel %vm1009, %v6648, %v6652
      %v6654 = vshrl.u32 %v6592, 16
      %v6656 = vrot.slane %v6654, 4
      %v6657 = vor.u32 %v6656, %v6652
      %v6658 = vrot.slane %v6657, 4
      %v6660 = vshll.u32 %v6624, 16
      %v6662 = vrot.slane %v6660, 5
      %v6663 = vsel %vm1009, %v6658, %v6662
      %v6665 = vshrl.u32 %v6593, 16
      %v6667 = vrot.slane %v6665, 4
      %v6668 = vshll.u32 %v6593, 16
      %v6670 = vrot.slane %v6668, 5
      %v6671 = vor.u32 %v6667, %v6670
      %v6672 = vrot.slane %v6671, 4
      %v6674 = vshll.u32 %v6594, 16
      %v6676 = vrot.slane %v6674, 5
      %v6677 = vsel %vm1009, %v6672, %v6676
      %v6678 = vshrl.u32 %v6594, 16
      %v6680 = vrot.slane %v6678, 4
      %v6681 = vor.u32 %v6680, %v6676
      %v6682 = vrot.slane %v6681, 4
      %v6684 = vshll.u32 %v6625, 16
      %v6686 = vrot.slane %v6684, 5
      %v6687 = vsel %vm1009, %v6682, %v6686
      %v6689 = vshrl.u32 %v6595, 16
      %v6691 = vrot.slane %v6689, 4
      %v6692 = vshll.u32 %v6595, 16
      %v6694 = vrot.slane %v6692, 5
      %v6695 = vor.u32 %v6691, %v6694
      %v6696 = vrot.slane %v6695, 4
      %v6698 = vshll.u32 %v6596, 16
      %v6700 = vrot.slane %v6698, 5
      %v6701 = vsel %vm1009, %v6696, %v6700
      %v6702 = vshrl.u32 %v6596, 16
      %v6704 = vrot.slane %v6702, 4
      %v6705 = vor.u32 %v6704, %v6700
      %v6706 = vrot.slane %v6705, 4
      %v6708 = vshll.u32 %v6626, 16
      %v6710 = vrot.slane %v6708, 5
      %v6711 = vsel %vm1009, %v6706, %v6710
      %v6713 = vshrl.u32 %v6597, 16
      %v6715 = vrot.slane %v6713, 4
      %v6716 = vshll.u32 %v6597, 16
      %v6718 = vrot.slane %v6716, 5
      %v6719 = vor.u32 %v6715, %v6718
      %v6720 = vrot.slane %v6719, 4
      %v6722 = vshll.u32 %v6598, 16
      %v6724 = vrot.slane %v6722, 5
      %v6725 = vsel %vm1009, %v6720, %v6724
      %v6726 = vshrl.u32 %v6598, 16
      %v6728 = vrot.slane %v6726, 4
      %v6729 = vor.u32 %v6728, %v6724
      %v6730 = vrot.slane %v6729, 4
      %v6732 = vshll.u32 %v6627, 16
      %v6734 = vrot.slane %v6732, 5
      %v6735 = vsel %vm1009, %v6730, %v6734
      %v6737 = vshrl.u32 %v6599, 16
      %v6739 = vrot.slane %v6737, 4
      %v6740 = vshll.u32 %v6599, 16
      %v6742 = vrot.slane %v6740, 5
      %v6743 = vor.u32 %v6739, %v6742
      %v6744 = vrot.slane %v6743, 4
      %v6746 = vshll.u32 %v6600, 16
      %v6748 = vrot.slane %v6746, 5
      %v6749 = vsel %vm1009, %v6744, %v6748
      %v6750 = vshrl.u32 %v6600, 16
      %v6752 = vrot.slane %v6750, 4
      %v6753 = vor.u32 %v6752, %v6748
      %v6754 = vrot.slane %v6753, 4
      %v6756 = vshll.u32 %v6628, 16
      %v6758 = vrot.slane %v6756, 5
      %v6759 = vsel %vm1009, %v6754, %v6758
      %v6761 = vshrl.u32 %v6601, 16
      %v6763 = vrot.slane %v6761, 4
      %v6764 = vshll.u32 %v6601, 16
      %v6766 = vrot.slane %v6764, 5
      %v6767 = vor.u32 %v6763, %v6766
      %v6768 = vrot.slane %v6767, 4
      %v6770 = vshll.u32 %v6602, 16
      %v6772 = vrot.slane %v6770, 5
      %v6773 = vsel %vm1009, %v6768, %v6772
      %v6774 = vshrl.u32 %v6602, 16
      %v6776 = vrot.slane %v6774, 4
      %v6777 = vor.u32 %v6776, %v6772
      %v6778 = vrot.slane %v6777, 4
      %v6780 = vshll.u32 %v6629, 16
      %v6782 = vrot.slane %v6780, 5
      %v6783 = vsel %vm1009, %v6778, %v6782
      %v6785 = vshrl.u32 %v6603, 16
      %v6787 = vrot.slane %v6785, 4
      %v6788 = vshll.u32 %v6603, 16
      %v6790 = vrot.slane %v6788, 5
      %v6791 = vor.u32 %v6787, %v6790
      %v6792 = vrot.slane %v6791, 4
      %v6794 = vshll.u32 %v6604, 16
      %v6796 = vrot.slane %v6794, 5
      %v6797 = vsel %vm1009, %v6792, %v6796
      %v6798 = vshrl.u32 %v6604, 16
      %v6800 = vrot.slane %v6798, 4
      %v6801 = vor.u32 %v6800, %v6796
      %v6802 = vrot.slane %v6801, 4
      %v6804 = vshll.u32 %v6630, 16
      %v6806 = vrot.slane %v6804, 5
      %v6807 = vsel %vm1009, %v6802, %v6806
      %v6809 = vshrl.u32 %v6605, 16
      %v6811 = vrot.slane %v6809, 4
      %v6812 = vshll.u32 %v6605, 16
      %v6814 = vrot.slane %v6812, 5
      %v6815 = vor.u32 %v6811, %v6814
      %v6816 = vrot.slane %v6815, 4
      %v6818 = vshll.u32 %v6606, 16
      %v6820 = vrot.slane %v6818, 5
      %v6821 = vsel %vm1009, %v6816, %v6820
      %v6822 = vshrl.u32 %v6606, 16
      %v6824 = vrot.slane %v6822, 4
      %v6825 = vor.u32 %v6824, %v6820
      %v6826 = vrot.slane %v6825, 4
      %v6828 = vshll.u32 %v6631, 16
      %v6830 = vrot.slane %v6828, 5
      %v6831 = vsel %vm1009, %v6826, %v6830
      %v6833 = vshrl.u32 %v6607, 16
      %v6835 = vrot.slane %v6833, 4
      %v6836 = vshll.u32 %v6607, 16
      %v6838 = vrot.slane %v6836, 5
      %v6839 = vor.u32 %v6835, %v6838
      %v6840 = vrot.slane %v6839, 4
      %v6842 = vshll.u32 %v6608, 16
      %v6844 = vrot.slane %v6842, 5
      %v6845 = vsel %vm1009, %v6840, %v6844
      %v6846 = vshrl.u32 %v6608, 16
      %v6848 = vrot.slane %v6846, 4
      %v6849 = vor.u32 %v6848, %v6844
      %v6850 = vrot.slane %v6849, 4
      %v6852 = vshll.u32 %v6632, 16
      %v6854 = vrot.slane %v6852, 5
      %v6855 = vsel %vm1009, %v6850, %v6854
      %v6857 = vshrl.u32 %v6609, 16
      %v6859 = vrot.slane %v6857, 4
      %v6860 = vshll.u32 %v6609, 16
      %v6862 = vrot.slane %v6860, 5
      %v6863 = vor.u32 %v6859, %v6862
      %v6864 = vrot.slane %v6863, 4
      %v6866 = vshll.u32 %v6610, 16
      %v6868 = vrot.slane %v6866, 5
      %v6869 = vsel %vm1009, %v6864, %v6868
      %v6870 = vshrl.u32 %v6610, 16
      %v6872 = vrot.slane %v6870, 4
      %v6873 = vor.u32 %v6872, %v6868
      %v6874 = vrot.slane %v6873, 4
      %v6876 = vshll.u32 %v6633, 16
      %v6878 = vrot.slane %v6876, 5
      %v6879 = vsel %vm1009, %v6874, %v6878
      %v6881 = vshrl.u32 %v6611, 16
      %v6883 = vrot.slane %v6881, 4
      %v6884 = vshll.u32 %v6611, 16
      %v6886 = vrot.slane %v6884, 5
      %v6887 = vor.u32 %v6883, %v6886
      %v6888 = vrot.slane %v6887, 4
      %v6890 = vshll.u32 %v6612, 16
      %v6892 = vrot.slane %v6890, 5
      %v6893 = vsel %vm1009, %v6888, %v6892
      %v6894 = vshrl.u32 %v6612, 16
      %v6896 = vrot.slane %v6894, 4
      %v6897 = vor.u32 %v6896, %v6892
      %v6898 = vrot.slane %v6897, 4
      %v6900 = vshll.u32 %v6634, 16
      %v6902 = vrot.slane %v6900, 5
      %v6903 = vsel %vm1009, %v6898, %v6902
      %v6905 = vshrl.u32 %v6613, 16
      %v6907 = vrot.slane %v6905, 4
      %v6908 = vshll.u32 %v6613, 16
      %v6910 = vrot.slane %v6908, 5
      %v6911 = vor.u32 %v6907, %v6910
      %v6912 = vrot.slane %v6911, 4
      %v6914 = vshll.u32 %v6614, 16
      %v6916 = vrot.slane %v6914, 5
      %v6917 = vsel %vm1009, %v6912, %v6916
      %v6918 = vshrl.u32 %v6614, 16
      %v6920 = vrot.slane %v6918, 4
      %v6921 = vor.u32 %v6920, %v6916
      %v6922 = vrot.slane %v6921, 4
      %v6924 = vshll.u32 %v6635, 16
      %v6926 = vrot.slane %v6924, 5
      %v6927 = vsel %vm1009, %v6922, %v6926
      %v6929 = vshrl.u32 %v6615, 16
      %v6931 = vrot.slane %v6929, 4
      %v6932 = vshll.u32 %v6615, 16
      %v6934 = vrot.slane %v6932, 5
      %v6935 = vor.u32 %v6931, %v6934
      %v6936 = vrot.slane %v6935, 4
      %v6938 = vshll.u32 %v6616, 16
      %v6940 = vrot.slane %v6938, 5
      %v6941 = vsel %vm1009, %v6936, %v6940
      %v6942 = vshrl.u32 %v6616, 16
      %v6944 = vrot.slane %v6942, 4
      %v6945 = vor.u32 %v6944, %v6940
      %v6946 = vrot.slane %v6945, 4
      %v6948 = vshll.u32 %v6636, 16
      %v6950 = vrot.slane %v6948, 5
      %v6951 = vsel %vm1009, %v6946, %v6950
      %v6953 = vshrl.u32 %v6617, 16
      %v6955 = vrot.slane %v6953, 4
      %v6956 = vshll.u32 %v6617, 16
      %v6958 = vrot.slane %v6956, 5
      %v6959 = vor.u32 %v6955, %v6958
      %v6960 = vrot.slane %v6959, 4
      %v6962 = vshll.u32 %v6618, 16
      %v6964 = vrot.slane %v6962, 5
      %v6965 = vsel %vm1009, %v6960, %v6964
      %v6966 = vshrl.u32 %v6618, 16
      %v6968 = vrot.slane %v6966, 4
      %v6969 = vor.u32 %v6968, %v6964
      %v6970 = vrot.slane %v6969, 4
      %v6972 = vshll.u32 %v6637, 16
      %v6974 = vrot.slane %v6972, 5
      %v6975 = vsel %vm1009, %v6970, %v6974
      %v6977 = vshrl.u32 %v6619, 16
      %v6979 = vrot.slane %v6977, 4
      %v6980 = vshll.u32 %v6619, 16
      %v6982 = vrot.slane %v6980, 5
      %v6983 = vor.u32 %v6979, %v6982
      %v6984 = vrot.slane %v6983, 4
      %v6986 = vshll.u32 %v6620, 16
      %v6988 = vrot.slane %v6986, 5
      %v6989 = vsel %vm1009, %v6984, %v6988
      %v6990 = vshrl.u32 %v6620, 16
      %v6992 = vrot.slane %v6990, 4
      %v6993 = vor.u32 %v6992, %v6988
      %v6994 = vrot.slane %v6993, 4
      %v6996 = vshll.u32 %v6638, 16
      %v6998 = vrot.slane %v6996, 5
      %v6999 = vsel %vm1009, %v6994, %v6998
      %v7001 = vshrl.u32 %v6621, 16
      %v7003 = vrot.slane %v7001, 4
      %v7004 = vshll.u32 %v6621, 16
      %v7006 = vrot.slane %v7004, 5
      %v7007 = vor.u32 %v7003, %v7006
      %v7008 = vrot.slane %v7007, 4
      %v7010 = vshll.u32 %v6622, 16
      %v7012 = vrot.slane %v7010, 5
      %v7013 = vsel %vm1009, %v7008, %v7012
      %v7014 = vshrl.u32 %v6622, 16
      %v7016 = vrot.slane %v7014, 4
      %v7017 = vor.u32 %v7016, %v7012
      %v7018 = vrot.slane %v7017, 4
      %v7020 = vshll.u32 %v6639, 16
      %v7022 = vrot.slane %v7020, 5
      %v7023 = vsel %vm1009, %v7018, %v7022
      %s7024 = scalar_lea.vmem %s2, 2
      %v7025 = vld [vmem:[%s7024] sm:$0x3]
      %v7026 = vunpack.c.l.b16 %v6653
      %v7027 = vunpack.c.l.b16 %v6663
      %v7028 = vunpack.c.l.b16 %v6677
      %v7029 = vunpack.c.l.b16 %v6687
      %v7030 = vunpack.c.l.b16 %v6701
      %v7031 = vunpack.c.l.b16 %v6711
      %v7032 = vunpack.c.l.b16 %v6725
      %v7033 = vunpack.c.l.b16 %v6735
      %v7034 = vunpack.c.l.b16 %v6749
      %v7035 = vunpack.c.l.b16 %v6759
      %v7036 = vunpack.c.l.b16 %v6773
      %v7037 = vunpack.c.l.b16 %v6783
      %v7038 = vunpack.c.l.b16 %v6797
      %v7039 = vunpack.c.l.b16 %v6807
      %v7040 = vunpack.c.l.b16 %v6821
      %v7041 = vunpack.c.l.b16 %v6831
      %v7042 = vunpack.c.l.b16 %v6845
      %v7043 = vunpack.c.l.b16 %v6855
      %v7044 = vunpack.c.l.b16 %v6869
      %v7045 = vunpack.c.l.b16 %v6879
      %v7046 = vunpack.c.l.b16 %v6893
      %v7047 = vunpack.c.l.b16 %v6903
      %v7048 = vunpack.c.l.b16 %v6917
      %v7049 = vunpack.c.l.b16 %v6927
      %v7050 = vunpack.c.l.b16 %v6941
      %v7051 = vunpack.c.l.b16 %v6951
      %v7052 = vunpack.c.l.b16 %v6965
      %v7053 = vunpack.c.l.b16 %v6975
      %v7054 = vunpack.c.l.b16 %v6989
      %v7055 = vunpack.c.l.b16 %v6999
      %v7056 = vunpack.c.l.b16 %v7013
      %v7057 = vunpack.c.l.b16 %v7023
      %v7058 = vpack.c.b16 %v7027, %v7026
      %v7059 = vpack.c.b16 %v7029, %v7028
      %v7060 = vpack.c.b16 %v7031, %v7030
      %v7061 = vpack.c.b16 %v7033, %v7032
      %v7062 = vpack.c.b16 %v7035, %v7034
      %v7063 = vpack.c.b16 %v7037, %v7036
      %v7064 = vpack.c.b16 %v7039, %v7038
      %v7065 = vpack.c.b16 %v7041, %v7040
      %v7066 = vpack.c.b16 %v7043, %v7042
      %v7067 = vpack.c.b16 %v7045, %v7044
      %v7068 = vpack.c.b16 %v7047, %v7046
      %v7069 = vpack.c.b16 %v7049, %v7048
      %v7070 = vpack.c.b16 %v7051, %v7050
      %v7071 = vpack.c.b16 %v7053, %v7052
      %v7072 = vpack.c.b16 %v7055, %v7054
      %v7073 = vpack.c.b16 %v7057, %v7056
      %v7075 = vsel %vm1444, %v7058, 0
      %v7078 = vsel %vm1444, %v7059, 0
      %v7081 = vsel %vm1444, %v7060, 0
      %v7084 = vsel %vm1444, %v7061, 0
      %v7087 = vsel %vm1444, %v7062, 0
      %v7090 = vsel %vm1444, %v7063, 0
      %v7093 = vsel %vm1444, %v7064, 0
      %v7096 = vsel %vm1444, %v7065, 0
      %v7099 = vsel %vm1444, %v7066, 0
      %v7102 = vsel %vm1444, %v7067, 0
      %v7105 = vsel %vm1444, %v7068, 0
      %v7108 = vsel %vm1444, %v7069, 0
      %v7111 = vsel %vm1444, %v7070, 0
      %v7114 = vsel %vm1444, %v7071, 0
      %v7117 = vsel %vm1444, %v7072, 0
      %v7120 = vsel %vm1444, %v7073, 0
      %v7123 = vsel %vm1493, %v7025, 0
      %7125 = vmatprep.subr.bf16.mxu0 0
      %7126 = vmatpush1.bf16.msra.mxu0 0
      %7127 = vmatprep.subr.bf16.mxu0 0
      %7128 = vmatpush1.bf16.msra.mxu0 0
      %7129 = vmatprep.subr.bf16.mxu0 0
      %7130 = vmatpush1.bf16.msra.mxu0 0
      %7131 = vmatprep.subr.bf16.mxu0 0
      %7132 = vmatpush1.bf16.msra.mxu0 0
      %7133 = vmatprep.subr.bf16.mxu0 0
      %7134 = vmatpush1.bf16.msra.mxu0 0
      %7135 = vmatprep.subr.bf16.mxu0 0
      %7136 = vmatpush1.bf16.msra.mxu0 0
      %7137 = vmatprep.subr.bf16.mxu0 0
      %7138 = vmatpush1.bf16.msra.mxu0 0
      %7139 = vmatprep.subr.bf16.mxu0 0
      %7140 = vmatpush1.bf16.msra.mxu0 %v7123
      %7141 = vmatprep.subr.bf16.mxu0 0
      %7142 = vmatpush2.bf16.msra.mxu0 0
      %7143 = vmatprep.subr.bf16.mxu0 0
      %7144 = vmatpush2.bf16.msra.mxu0 0
      %7145 = vmatprep.subr.bf16.mxu0 0
      %7146 = vmatpush2.bf16.msra.mxu0 0
      %7147 = vmatprep.subr.bf16.mxu0 0
      %7148 = vmatpush2.bf16.msra.mxu0 0
      %7149 = vmatprep.subr.bf16.mxu0 0
      %7150 = vmatpush2.bf16.msra.mxu0 0
      %7151 = vmatprep.subr.bf16.mxu0 0
      %7152 = vmatpush2.bf16.msra.mxu0 0
      %7153 = vmatprep.subr.bf16.mxu0 0
      %7154 = vmatpush2.bf16.msra.mxu0 0
      %7155 = vmatprep.subr.bf16.mxu0 0
      %7156 = vmatpush2.bf16.msra.mxu0 0
      %7157 = vmatprep.mubr.bf16.mxu0 0
      %7158 = vmatmul.mubr.bf16.gmra.mxu0 %v7075
      %v7159 = vpop.f32.mrf.mxu0
      %v7160 = vadd.f32 0.0, %v7159
      %v7161 = vpop.f32.mrf.mxu0
      %v7162 = vpop.f32.mrf.mxu0
      %v7163 = vadd.f32 0.0, %v7162
      %v7164 = vpop.f32.mrf.mxu0
      %7165 = vmatprep.mubr.bf16.mxu0 0
      %7166 = vmatmul.mubr.bf16.gmra.mxu0 %v7078
      %v7167 = vpop.f32.mrf.mxu0
      %v7168 = vadd.f32 0.0, %v7167
      %v7169 = vpop.f32.mrf.mxu0
      %v7170 = vpop.f32.mrf.mxu0
      %v7171 = vadd.f32 0.0, %v7170
      %v7172 = vpop.f32.mrf.mxu0
      %7173 = vmatprep.mubr.bf16.mxu0 0
      %7174 = vmatmul.mubr.bf16.gmra.mxu0 %v7081
      %v7175 = vpop.f32.mrf.mxu0
      %v7176 = vadd.f32 0.0, %v7175
      %v7177 = vpop.f32.mrf.mxu0
      %v7178 = vpop.f32.mrf.mxu0
      %v7179 = vadd.f32 0.0, %v7178
      %v7180 = vpop.f32.mrf.mxu0
      %7181 = vmatprep.mubr.bf16.mxu0 0
      %7182 = vmatmul.mubr.bf16.gmra.mxu0 %v7084
      %v7183 = vpop.f32.mrf.mxu0
      %v7184 = vadd.f32 0.0, %v7183
      %v7185 = vpop.f32.mrf.mxu0
      %v7186 = vpop.f32.mrf.mxu0
      %v7187 = vadd.f32 0.0, %v7186
      %v7188 = vpop.f32.mrf.mxu0
      %7189 = vmatprep.mubr.bf16.mxu0 0
      %7190 = vmatmul.mubr.bf16.gmra.mxu0 %v7087
      %v7191 = vpop.f32.mrf.mxu0
      %v7192 = vadd.f32 0.0, %v7191
      %v7193 = vpop.f32.mrf.mxu0
      %v7194 = vpop.f32.mrf.mxu0
      %v7195 = vadd.f32 0.0, %v7194
      %v7196 = vpop.f32.mrf.mxu0
      %7197 = vmatprep.mubr.bf16.mxu0 0
      %7198 = vmatmul.mubr.bf16.gmra.mxu0 %v7090
      %v7199 = vpop.f32.mrf.mxu0
      %v7200 = vadd.f32 0.0, %v7199
      %v7201 = vpop.f32.mrf.mxu0
      %v7202 = vpop.f32.mrf.mxu0
      %v7203 = vadd.f32 0.0, %v7202
      %v7204 = vpop.f32.mrf.mxu0
      %7205 = vmatprep.mubr.bf16.mxu0 0
      %7206 = vmatmul.mubr.bf16.gmra.mxu0 %v7093
      %v7207 = vpop.f32.mrf.mxu0
      %v7208 = vadd.f32 0.0, %v7207
      %v7209 = vpop.f32.mrf.mxu0
      %v7210 = vpop.f32.mrf.mxu0
      %v7211 = vadd.f32 0.0, %v7210
      %v7212 = vpop.f32.mrf.mxu0
      %7213 = vmatprep.mubr.bf16.mxu0 0
      %7214 = vmatmul.mubr.bf16.gmra.mxu0 %v7096
      %v7215 = vpop.f32.mrf.mxu0
      %v7216 = vadd.f32 0.0, %v7215
      %v7217 = vpop.f32.mrf.mxu0
      %v7218 = vpop.f32.mrf.mxu0
      %v7219 = vadd.f32 0.0, %v7218
      %v7220 = vpop.f32.mrf.mxu0
      %7221 = vmatprep.mubr.bf16.mxu0 0
      %7222 = vmatmul.mubr.bf16.gmra.mxu0 %v7099
      %v7223 = vpop.f32.mrf.mxu0
      %v7224 = vadd.f32 0.0, %v7223
      %v7225 = vpop.f32.mrf.mxu0
      %v7226 = vpop.f32.mrf.mxu0
      %v7227 = vadd.f32 0.0, %v7226
      %v7228 = vpop.f32.mrf.mxu0
      %7229 = vmatprep.mubr.bf16.mxu0 0
      %7230 = vmatmul.mubr.bf16.gmra.mxu0 %v7102
      %v7231 = vpop.f32.mrf.mxu0
      %v7232 = vadd.f32 0.0, %v7231
      %v7233 = vpop.f32.mrf.mxu0
      %v7234 = vpop.f32.mrf.mxu0
      %v7235 = vadd.f32 0.0, %v7234
      %v7236 = vpop.f32.mrf.mxu0
      %7237 = vmatprep.mubr.bf16.mxu0 0
      %7238 = vmatmul.mubr.bf16.gmra.mxu0 %v7105
      %v7239 = vpop.f32.mrf.mxu0
      %v7240 = vadd.f32 0.0, %v7239
      %v7241 = vpop.f32.mrf.mxu0
      %v7242 = vpop.f32.mrf.mxu0
      %v7243 = vadd.f32 0.0, %v7242
      %v7244 = vpop.f32.mrf.mxu0
      %7245 = vmatprep.mubr.bf16.mxu0 0
      %7246 = vmatmul.mubr.bf16.gmra.mxu0 %v7108
      %v7247 = vpop.f32.mrf.mxu0
      %v7248 = vadd.f32 0.0, %v7247
      %v7249 = vpop.f32.mrf.mxu0
      %v7250 = vpop.f32.mrf.mxu0
      %v7251 = vadd.f32 0.0, %v7250
      %v7252 = vpop.f32.mrf.mxu0
      %7253 = vmatprep.mubr.bf16.mxu0 0
      %7254 = vmatmul.mubr.bf16.gmra.mxu0 %v7111
      %v7255 = vpop.f32.mrf.mxu0
      %v7256 = vadd.f32 0.0, %v7255
      %v7257 = vpop.f32.mrf.mxu0
      %v7258 = vpop.f32.mrf.mxu0
      %v7259 = vadd.f32 0.0, %v7258
      %v7260 = vpop.f32.mrf.mxu0
      %7261 = vmatprep.mubr.bf16.mxu0 0
      %7262 = vmatmul.mubr.bf16.gmra.mxu0 %v7114
      %v7263 = vpop.f32.mrf.mxu0
      %v7264 = vadd.f32 0.0, %v7263
      %v7265 = vpop.f32.mrf.mxu0
      %v7266 = vpop.f32.mrf.mxu0
      %v7267 = vadd.f32 0.0, %v7266
      %v7268 = vpop.f32.mrf.mxu0
      %7269 = vmatprep.mubr.bf16.mxu0 0
      %7270 = vmatmul.mubr.bf16.gmra.mxu0 %v7117
      %v7271 = vpop.f32.mrf.mxu0
      %v7272 = vadd.f32 0.0, %v7271
      %v7273 = vpop.f32.mrf.mxu0
      %v7274 = vpop.f32.mrf.mxu0
      %v7275 = vadd.f32 0.0, %v7274
      %v7276 = vpop.f32.mrf.mxu0
      %7277 = vmatprep.mubr.bf16.mxu0 0
      %7278 = vmatmul.mubr.bf16.gmra.mxu0 %v7120
      %v7279 = vpop.f32.mrf.mxu0
      %v7280 = vadd.f32 0.0, %v7279
      %v7281 = vpop.f32.mrf.mxu0
      %v7282 = vpop.f32.mrf.mxu0
      %v7283 = vadd.f32 0.0, %v7282
      %v7284 = vpop.f32.mrf.mxu0
      %7285 = vdwg.mxu0
      %v7318 = vunpack.c.l.b16 %v6591
      %v7319 = vunpack.c.l.b16 %v6592
      %v7320 = vunpack.c.l.b16 %v6593
      %v7321 = vunpack.c.l.b16 %v6594
      %v7322 = vunpack.c.l.b16 %v6595
      %v7323 = vunpack.c.l.b16 %v6596
      %v7324 = vunpack.c.l.b16 %v6597
      %v7325 = vunpack.c.l.b16 %v6598
      %v7326 = vunpack.c.l.b16 %v6599
      %v7327 = vunpack.c.l.b16 %v6600
      %v7328 = vunpack.c.l.b16 %v6601
      %v7329 = vunpack.c.l.b16 %v6602
      %v7330 = vunpack.c.l.b16 %v6603
      %v7331 = vunpack.c.l.b16 %v6604
      %v7332 = vunpack.c.l.b16 %v6605
      %v7333 = vunpack.c.l.b16 %v6606
      %v7334 = vunpack.c.l.b16 %v6607
      %v7335 = vunpack.c.l.b16 %v6608
      %v7336 = vunpack.c.l.b16 %v6609
      %v7337 = vunpack.c.l.b16 %v6610
      %v7338 = vunpack.c.l.b16 %v6611
      %v7339 = vunpack.c.l.b16 %v6612
      %v7340 = vunpack.c.l.b16 %v6613
      %v7341 = vunpack.c.l.b16 %v6614
      %v7342 = vunpack.c.l.b16 %v6615
      %v7343 = vunpack.c.l.b16 %v6616
      %v7344 = vunpack.c.l.b16 %v6617
      %v7345 = vunpack.c.l.b16 %v6618
      %v7346 = vunpack.c.l.b16 %v6619
      %v7347 = vunpack.c.l.b16 %v6620
      %v7348 = vunpack.c.l.b16 %v6621
      %v7349 = vunpack.c.l.b16 %v6622
      %v7350 = vpack.c.b16 %v7319, %v7318
      %v7351 = vpack.c.b16 %v7321, %v7320
      %v7352 = vpack.c.b16 %v7323, %v7322
      %v7353 = vpack.c.b16 %v7325, %v7324
      %v7354 = vpack.c.b16 %v7327, %v7326
      %v7355 = vpack.c.b16 %v7329, %v7328
      %v7356 = vpack.c.b16 %v7331, %v7330
      %v7357 = vpack.c.b16 %v7333, %v7332
      %v7358 = vpack.c.b16 %v7335, %v7334
      %v7359 = vpack.c.b16 %v7337, %v7336
      %v7360 = vpack.c.b16 %v7339, %v7338
      %v7361 = vpack.c.b16 %v7341, %v7340
      %v7362 = vpack.c.b16 %v7343, %v7342
      %v7363 = vpack.c.b16 %v7345, %v7344
      %v7364 = vpack.c.b16 %v7347, %v7346
      %v7365 = vpack.c.b16 %v7349, %v7348
      %v7367 = vsel %vm1444, %v7350, 0
      %v7370 = vsel %vm1444, %v7351, 0
      %v7373 = vsel %vm1444, %v7352, 0
      %v7376 = vsel %vm1444, %v7353, 0
      %v7379 = vsel %vm1444, %v7354, 0
      %v7382 = vsel %vm1444, %v7355, 0
      %v7385 = vsel %vm1444, %v7356, 0
      %v7388 = vsel %vm1444, %v7357, 0
      %v7391 = vsel %vm1444, %v7358, 0
      %v7394 = vsel %vm1444, %v7359, 0
      %v7397 = vsel %vm1444, %v7360, 0
      %v7400 = vsel %vm1444, %v7361, 0
      %v7403 = vsel %vm1444, %v7362, 0
      %v7406 = vsel %vm1444, %v7363, 0
      %v7409 = vsel %vm1444, %v7364, 0
      %v7412 = vsel %vm1444, %v7365, 0
      %v7415 = vsel %vm1493, %v6623, 0
      %7417 = vmatprep.subr.bf16.mxu0 0
      %7418 = vmatpush1.bf16.msra.mxu0 0
      %7419 = vmatprep.subr.bf16.mxu0 0
      %7420 = vmatpush1.bf16.msra.mxu0 0
      %7421 = vmatprep.subr.bf16.mxu0 0
      %7422 = vmatpush1.bf16.msra.mxu0 0
      %7423 = vmatprep.subr.bf16.mxu0 0
      %7424 = vmatpush1.bf16.msra.mxu0 0
      %7425 = vmatprep.subr.bf16.mxu0 0
      %7426 = vmatpush1.bf16.msra.mxu0 0
      %7427 = vmatprep.subr.bf16.mxu0 0
      %7428 = vmatpush1.bf16.msra.mxu0 0
      %7429 = vmatprep.subr.bf16.mxu0 0
      %7430 = vmatpush1.bf16.msra.mxu0 0
      %7431 = vmatprep.subr.bf16.mxu0 0
      %7432 = vmatpush1.bf16.msra.mxu0 %v7415
      %7433 = vmatprep.subr.bf16.mxu0 0
      %7434 = vmatpush2.bf16.msra.mxu0 0
      %7435 = vmatprep.subr.bf16.mxu0 0
      %7436 = vmatpush2.bf16.msra.mxu0 0
      %7437 = vmatprep.subr.bf16.mxu0 0
      %7438 = vmatpush2.bf16.msra.mxu0 0
      %7439 = vmatprep.subr.bf16.mxu0 0
      %7440 = vmatpush2.bf16.msra.mxu0 0
      %7441 = vmatprep.subr.bf16.mxu0 0
      %7442 = vmatpush2.bf16.msra.mxu0 0
      %7443 = vmatprep.subr.bf16.mxu0 0
      %7444 = vmatpush2.bf16.msra.mxu0 0
      %7445 = vmatprep.subr.bf16.mxu0 0
      %7446 = vmatpush2.bf16.msra.mxu0 0
      %7447 = vmatprep.subr.bf16.mxu0 0
      %7448 = vmatpush2.bf16.msra.mxu0 0
      %7449 = vmatprep.mubr.bf16.mxu0 0
      %7450 = vmatmul.mubr.bf16.gmra.mxu0 %v7367
      %v7451 = vpop.f32.mrf.mxu0
      %v7452 = vadd.f32 %v7160, %v7451
      %v7453 = vpop.f32.mrf.mxu0
      %v7454 = vpop.f32.mrf.mxu0
      %v7455 = vadd.f32 %v7163, %v7454
      %v7456 = vpop.f32.mrf.mxu0
      %7457 = vmatprep.mubr.bf16.mxu0 0
      %7458 = vmatmul.mubr.bf16.gmra.mxu0 %v7370
      %v7459 = vpop.f32.mrf.mxu0
      %v7460 = vadd.f32 %v7168, %v7459
      %v7461 = vpop.f32.mrf.mxu0
      %v7462 = vpop.f32.mrf.mxu0
      %v7463 = vadd.f32 %v7171, %v7462
      %v7464 = vpop.f32.mrf.mxu0
      %7465 = vmatprep.mubr.bf16.mxu0 0
      %7466 = vmatmul.mubr.bf16.gmra.mxu0 %v7373
      %v7467 = vpop.f32.mrf.mxu0
      %v7468 = vadd.f32 %v7176, %v7467
      %v7469 = vpop.f32.mrf.mxu0
      %v7470 = vpop.f32.mrf.mxu0
      %v7471 = vadd.f32 %v7179, %v7470
      %v7472 = vpop.f32.mrf.mxu0
      %7473 = vmatprep.mubr.bf16.mxu0 0
      %7474 = vmatmul.mubr.bf16.gmra.mxu0 %v7376
      %v7475 = vpop.f32.mrf.mxu0
      %v7476 = vadd.f32 %v7184, %v7475
      %v7477 = vpop.f32.mrf.mxu0
      %v7478 = vpop.f32.mrf.mxu0
      %v7479 = vadd.f32 %v7187, %v7478
      %v7480 = vpop.f32.mrf.mxu0
      %7481 = vmatprep.mubr.bf16.mxu0 0
      %7482 = vmatmul.mubr.bf16.gmra.mxu0 %v7379
      %v7483 = vpop.f32.mrf.mxu0
      %v7484 = vadd.f32 %v7192, %v7483
      %v7485 = vpop.f32.mrf.mxu0
      %v7486 = vpop.f32.mrf.mxu0
      %v7487 = vadd.f32 %v7195, %v7486
      %v7488 = vpop.f32.mrf.mxu0
      %7489 = vmatprep.mubr.bf16.mxu0 0
      %7490 = vmatmul.mubr.bf16.gmra.mxu0 %v7382
      %v7491 = vpop.f32.mrf.mxu0
      %v7492 = vadd.f32 %v7200, %v7491
      %v7493 = vpop.f32.mrf.mxu0
      %v7494 = vpop.f32.mrf.mxu0
      %v7495 = vadd.f32 %v7203, %v7494
      %v7496 = vpop.f32.mrf.mxu0
      %7497 = vmatprep.mubr.bf16.mxu0 0
      %7498 = vmatmul.mubr.bf16.gmra.mxu0 %v7385
      %v7499 = vpop.f32.mrf.mxu0
      %v7500 = vadd.f32 %v7208, %v7499
      %v7501 = vpop.f32.mrf.mxu0
      %v7502 = vpop.f32.mrf.mxu0
      %v7503 = vadd.f32 %v7211, %v7502
      %v7504 = vpop.f32.mrf.mxu0
      %7505 = vmatprep.mubr.bf16.mxu0 0
      %7506 = vmatmul.mubr.bf16.gmra.mxu0 %v7388
      %v7507 = vpop.f32.mrf.mxu0
      %v7508 = vadd.f32 %v7216, %v7507
      %v7509 = vpop.f32.mrf.mxu0
      %v7510 = vpop.f32.mrf.mxu0
      %v7511 = vadd.f32 %v7219, %v7510
      %v7512 = vpop.f32.mrf.mxu0
      %7513 = vmatprep.mubr.bf16.mxu0 0
      %7514 = vmatmul.mubr.bf16.gmra.mxu0 %v7391
      %v7515 = vpop.f32.mrf.mxu0
      %v7516 = vadd.f32 %v7224, %v7515
      %v7517 = vpop.f32.mrf.mxu0
      %v7518 = vpop.f32.mrf.mxu0
      %v7519 = vadd.f32 %v7227, %v7518
      %v7520 = vpop.f32.mrf.mxu0
      %7521 = vmatprep.mubr.bf16.mxu0 0
      %7522 = vmatmul.mubr.bf16.gmra.mxu0 %v7394
      %v7523 = vpop.f32.mrf.mxu0
      %v7524 = vadd.f32 %v7232, %v7523
      %v7525 = vpop.f32.mrf.mxu0
      %v7526 = vpop.f32.mrf.mxu0
      %v7527 = vadd.f32 %v7235, %v7526
      %v7528 = vpop.f32.mrf.mxu0
      %7529 = vmatprep.mubr.bf16.mxu0 0
      %7530 = vmatmul.mubr.bf16.gmra.mxu0 %v7397
      %v7531 = vpop.f32.mrf.mxu0
      %v7532 = vadd.f32 %v7240, %v7531
      %v7533 = vpop.f32.mrf.mxu0
      %v7534 = vpop.f32.mrf.mxu0
      %v7535 = vadd.f32 %v7243, %v7534
      %v7536 = vpop.f32.mrf.mxu0
      %7537 = vmatprep.mubr.bf16.mxu0 0
      %7538 = vmatmul.mubr.bf16.gmra.mxu0 %v7400
      %v7539 = vpop.f32.mrf.mxu0
      %v7540 = vadd.f32 %v7248, %v7539
      %v7541 = vpop.f32.mrf.mxu0
      %v7542 = vpop.f32.mrf.mxu0
      %v7543 = vadd.f32 %v7251, %v7542
      %v7544 = vpop.f32.mrf.mxu0
      %7545 = vmatprep.mubr.bf16.mxu0 0
      %7546 = vmatmul.mubr.bf16.gmra.mxu0 %v7403
      %v7547 = vpop.f32.mrf.mxu0
      %v7548 = vadd.f32 %v7256, %v7547
      %v7549 = vpop.f32.mrf.mxu0
      %v7550 = vpop.f32.mrf.mxu0
      %v7551 = vadd.f32 %v7259, %v7550
      %v7552 = vpop.f32.mrf.mxu0
      %7553 = vmatprep.mubr.bf16.mxu0 0
      %7554 = vmatmul.mubr.bf16.gmra.mxu0 %v7406
      %v7555 = vpop.f32.mrf.mxu0
      %v7556 = vadd.f32 %v7264, %v7555
      %v7557 = vpop.f32.mrf.mxu0
      %v7558 = vpop.f32.mrf.mxu0
      %v7559 = vadd.f32 %v7267, %v7558
      %v7560 = vpop.f32.mrf.mxu0
      %7561 = vmatprep.mubr.bf16.mxu0 0
      %7562 = vmatmul.mubr.bf16.gmra.mxu0 %v7409
      %v7563 = vpop.f32.mrf.mxu0
      %v7564 = vadd.f32 %v7272, %v7563
      %v7565 = vpop.f32.mrf.mxu0
      %v7566 = vpop.f32.mrf.mxu0
      %v7567 = vadd.f32 %v7275, %v7566
      %v7568 = vpop.f32.mrf.mxu0
      %7569 = vmatprep.mubr.bf16.mxu0 0
      %7570 = vmatmul.mubr.bf16.gmra.mxu0 %v7412
      %v7571 = vpop.f32.mrf.mxu0
      %v7572 = vadd.f32 %v7280, %v7571
      %v7573 = vpop.f32.mrf.mxu0
      %v7574 = vpop.f32.mrf.mxu0
      %v7575 = vadd.f32 %v7283, %v7574
      %v7576 = vpop.f32.mrf.mxu0
      %7577 = vdwg.mxu0
      %v7578 = vld [vmem:[%s957] sm:$0xe]
      %v7579 = vld [vmem:[%s957 + $0xc] sm:$0xe]
      %v7580 = vld [vmem:[%s957 + $0x18] sm:$0xe]
      %v7581 = vld [vmem:[%s957 + $0x24] sm:$0xe]
      %v7582 = vld [vmem:[%s957 + $0x30] sm:$0xe]
      %v7583 = vld [vmem:[%s957 + $0x3c] sm:$0xe]
      %v7584 = vld [vmem:[%s957 + $0x48] sm:$0xe]
      %v7585 = vld [vmem:[%s957 + $0x54] sm:$0xe]
      %v7586 = vld [vmem:[%s957 + $0x60] sm:$0xe]
      %v7587 = vld [vmem:[%s957 + $0x6c] sm:$0xe]
      %v7588 = vld [vmem:[%s957 + $0x78] sm:$0xe]
      %v7589 = vld [vmem:[%s957 + $0x84] sm:$0xe]
      %v7590 = vld [vmem:[%s957 + $0x90] sm:$0xe]
      %v7591 = vld [vmem:[%s957 + $0x9c] sm:$0xe]
      %v7592 = vld [vmem:[%s957 + $0xa8] sm:$0xe]
      %v7593 = vld [vmem:[%s957 + $0xb4] sm:$0xe]
      %v7626 = vrot.slane %v7578, 5
      %v7627 = vrot.slane %v7626, 4
      %v7628 = vrot.slane %v6592, 5
      %v7629 = vsel %vm2000, %v7627, %v7628
      %v7630 = vrot.slane %v7628, 4
      %v7631 = vrot.slane %v6624, 5
      %v7632 = vsel %vm2000, %v7630, %v7631
      %v7633 = vrot.slane %v7579, 5
      %v7634 = vrot.slane %v7633, 4
      %v7635 = vrot.slane %v6594, 5
      %v7636 = vsel %vm2000, %v7634, %v7635
      %v7637 = vrot.slane %v7635, 4
      %v7638 = vrot.slane %v6625, 5
      %v7639 = vsel %vm2000, %v7637, %v7638
      %v7640 = vrot.slane %v7580, 5
      %v7641 = vrot.slane %v7640, 4
      %v7642 = vrot.slane %v6596, 5
      %v7643 = vsel %vm2000, %v7641, %v7642
      %v7644 = vrot.slane %v7642, 4
      %v7645 = vrot.slane %v6626, 5
      %v7646 = vsel %vm2000, %v7644, %v7645
      %v7647 = vrot.slane %v7581, 5
      %v7648 = vrot.slane %v7647, 4
      %v7649 = vrot.slane %v6598, 5
      %v7650 = vsel %vm2000, %v7648, %v7649
      %v7651 = vrot.slane %v7649, 4
      %v7652 = vrot.slane %v6627, 5
      %v7653 = vsel %vm2000, %v7651, %v7652
      %v7654 = vrot.slane %v7582, 5
      %v7655 = vrot.slane %v7654, 4
      %v7656 = vrot.slane %v6600, 5
      %v7657 = vsel %vm2000, %v7655, %v7656
      %v7658 = vrot.slane %v7656, 4
      %v7659 = vrot.slane %v6628, 5
      %v7660 = vsel %vm2000, %v7658, %v7659
      %v7661 = vrot.slane %v7583, 5
      %v7662 = vrot.slane %v7661, 4
      %v7663 = vrot.slane %v6602, 5
      %v7664 = vsel %vm2000, %v7662, %v7663
      %v7665 = vrot.slane %v7663, 4
      %v7666 = vrot.slane %v6629, 5
      %v7667 = vsel %vm2000, %v7665, %v7666
      %v7668 = vrot.slane %v7584, 5
      %v7669 = vrot.slane %v7668, 4
      %v7670 = vrot.slane %v6604, 5
      %v7671 = vsel %vm2000, %v7669, %v7670
      %v7672 = vrot.slane %v7670, 4
      %v7673 = vrot.slane %v6630, 5
      %v7674 = vsel %vm2000, %v7672, %v7673
      %v7675 = vrot.slane %v7585, 5
      %v7676 = vrot.slane %v7675, 4
      %v7677 = vrot.slane %v6606, 5
      %v7678 = vsel %vm2000, %v7676, %v7677
      %v7679 = vrot.slane %v7677, 4
      %v7680 = vrot.slane %v6631, 5
      %v7681 = vsel %vm2000, %v7679, %v7680
      %v7682 = vrot.slane %v7586, 5
      %v7683 = vrot.slane %v7682, 4
      %v7684 = vrot.slane %v6608, 5
      %v7685 = vsel %vm2000, %v7683, %v7684
      %v7686 = vrot.slane %v7684, 4
      %v7687 = vrot.slane %v6632, 5
      %v7688 = vsel %vm2000, %v7686, %v7687
      %v7689 = vrot.slane %v7587, 5
      %v7690 = vrot.slane %v7689, 4
      %v7691 = vrot.slane %v6610, 5
      %v7692 = vsel %vm2000, %v7690, %v7691
      %v7693 = vrot.slane %v7691, 4
      %v7694 = vrot.slane %v6633, 5
      %v7695 = vsel %vm2000, %v7693, %v7694
      %v7696 = vrot.slane %v7588, 5
      %v7697 = vrot.slane %v7696, 4
      %v7698 = vrot.slane %v6612, 5
      %v7699 = vsel %vm2000, %v7697, %v7698
      %v7700 = vrot.slane %v7698, 4
      %v7701 = vrot.slane %v6634, 5
      %v7702 = vsel %vm2000, %v7700, %v7701
      %v7703 = vrot.slane %v7589, 5
      %v7704 = vrot.slane %v7703, 4
      %v7705 = vrot.slane %v6614, 5
      %v7706 = vsel %vm2000, %v7704, %v7705
      %v7707 = vrot.slane %v7705, 4
      %v7708 = vrot.slane %v6635, 5
      %v7709 = vsel %vm2000, %v7707, %v7708
      %v7710 = vrot.slane %v7590, 5
      %v7711 = vrot.slane %v7710, 4
      %v7712 = vrot.slane %v6616, 5
      %v7713 = vsel %vm2000, %v7711, %v7712
      %v7714 = vrot.slane %v7712, 4
      %v7715 = vrot.slane %v6636, 5
      %v7716 = vsel %vm2000, %v7714, %v7715
      %v7717 = vrot.slane %v7591, 5
      %v7718 = vrot.slane %v7717, 4
      %v7719 = vrot.slane %v6618, 5
      %v7720 = vsel %vm2000, %v7718, %v7719
      %v7721 = vrot.slane %v7719, 4
      %v7722 = vrot.slane %v6637, 5
      %v7723 = vsel %vm2000, %v7721, %v7722
      %v7724 = vrot.slane %v7592, 5
      %v7725 = vrot.slane %v7724, 4
      %v7726 = vrot.slane %v6620, 5
      %v7727 = vsel %vm2000, %v7725, %v7726
      %v7728 = vrot.slane %v7726, 4
      %v7729 = vrot.slane %v6638, 5
      %v7730 = vsel %vm2000, %v7728, %v7729
      %v7731 = vrot.slane %v7593, 5
      %v7732 = vrot.slane %v7731, 4
      %v7733 = vrot.slane %v6622, 5
      %v7734 = vsel %vm2000, %v7732, %v7733
      %v7735 = vrot.slane %v7733, 4
      %v7736 = vrot.slane %v6639, 5
      %v7737 = vsel %vm2000, %v7735, %v7736
      %s7738 = scalar_lea.vmem %s2, 4
      %v7739 = vld [vmem:[%s7738] sm:$0x3]
      %v7740 = vunpack.c.l.b16 %v7629
      %v7741 = vunpack.c.l.b16 %v7632
      %v7742 = vunpack.c.l.b16 %v7636
      %v7743 = vunpack.c.l.b16 %v7639
      %v7744 = vunpack.c.l.b16 %v7643
      %v7745 = vunpack.c.l.b16 %v7646
      %v7746 = vunpack.c.l.b16 %v7650
      %v7747 = vunpack.c.l.b16 %v7653
      %v7748 = vunpack.c.l.b16 %v7657
      %v7749 = vunpack.c.l.b16 %v7660
      %v7750 = vunpack.c.l.b16 %v7664
      %v7751 = vunpack.c.l.b16 %v7667
      %v7752 = vunpack.c.l.b16 %v7671
      %v7753 = vunpack.c.l.b16 %v7674
      %v7754 = vunpack.c.l.b16 %v7678
      %v7755 = vunpack.c.l.b16 %v7681
      %v7756 = vunpack.c.l.b16 %v7685
      %v7757 = vunpack.c.l.b16 %v7688
      %v7758 = vunpack.c.l.b16 %v7692
      %v7759 = vunpack.c.l.b16 %v7695
      %v7760 = vunpack.c.l.b16 %v7699
      %v7761 = vunpack.c.l.b16 %v7702
      %v7762 = vunpack.c.l.b16 %v7706
      %v7763 = vunpack.c.l.b16 %v7709
      %v7764 = vunpack.c.l.b16 %v7713
      %v7765 = vunpack.c.l.b16 %v7716
      %v7766 = vunpack.c.l.b16 %v7720
      %v7767 = vunpack.c.l.b16 %v7723
      %v7768 = vunpack.c.l.b16 %v7727
      %v7769 = vunpack.c.l.b16 %v7730
      %v7770 = vunpack.c.l.b16 %v7734
      %v7771 = vunpack.c.l.b16 %v7737
      %v7772 = vpack.c.b16 %v7741, %v7740
      %v7773 = vpack.c.b16 %v7743, %v7742
      %v7774 = vpack.c.b16 %v7745, %v7744
      %v7775 = vpack.c.b16 %v7747, %v7746
      %v7776 = vpack.c.b16 %v7749, %v7748
      %v7777 = vpack.c.b16 %v7751, %v7750
      %v7778 = vpack.c.b16 %v7753, %v7752
      %v7779 = vpack.c.b16 %v7755, %v7754
      %v7780 = vpack.c.b16 %v7757, %v7756
      %v7781 = vpack.c.b16 %v7759, %v7758
      %v7782 = vpack.c.b16 %v7761, %v7760
      %v7783 = vpack.c.b16 %v7763, %v7762
      %v7784 = vpack.c.b16 %v7765, %v7764
      %v7785 = vpack.c.b16 %v7767, %v7766
      %v7786 = vpack.c.b16 %v7769, %v7768
      %v7787 = vpack.c.b16 %v7771, %v7770
      %v7789 = vsel %vm1444, %v7772, 0
      %v7792 = vsel %vm1444, %v7773, 0
      %v7795 = vsel %vm1444, %v7774, 0
      %v7798 = vsel %vm1444, %v7775, 0
      %v7801 = vsel %vm1444, %v7776, 0
      %v7804 = vsel %vm1444, %v7777, 0
      %v7807 = vsel %vm1444, %v7778, 0
      %v7810 = vsel %vm1444, %v7779, 0
      %v7813 = vsel %vm1444, %v7780, 0
      %v7816 = vsel %vm1444, %v7781, 0
      %v7819 = vsel %vm1444, %v7782, 0
      %v7822 = vsel %vm1444, %v7783, 0
      %v7825 = vsel %vm1444, %v7784, 0
      %v7828 = vsel %vm1444, %v7785, 0
      %v7831 = vsel %vm1444, %v7786, 0
      %v7834 = vsel %vm1444, %v7787, 0
      %v7837 = vsel %vm1493, %v7739, 0
      %7839 = vmatprep.subr.bf16.mxu0 0
      %7840 = vmatpush1.bf16.msra.mxu0 0
      %7841 = vmatprep.subr.bf16.mxu0 0
      %7842 = vmatpush1.bf16.msra.mxu0 0
      %7843 = vmatprep.subr.bf16.mxu0 0
      %7844 = vmatpush1.bf16.msra.mxu0 0
      %7845 = vmatprep.subr.bf16.mxu0 0
      %7846 = vmatpush1.bf16.msra.mxu0 0
      %7847 = vmatprep.subr.bf16.mxu0 0
      %7848 = vmatpush1.bf16.msra.mxu0 0
      %7849 = vmatprep.subr.bf16.mxu0 0
      %7850 = vmatpush1.bf16.msra.mxu0 0
      %7851 = vmatprep.subr.bf16.mxu0 0
      %7852 = vmatpush1.bf16.msra.mxu0 0
      %7853 = vmatprep.subr.bf16.mxu0 0
      %7854 = vmatpush1.bf16.msra.mxu0 %v7837
      %7855 = vmatprep.subr.bf16.mxu0 0
      %7856 = vmatpush2.bf16.msra.mxu0 0
      %7857 = vmatprep.subr.bf16.mxu0 0
      %7858 = vmatpush2.bf16.msra.mxu0 0
      %7859 = vmatprep.subr.bf16.mxu0 0
      %7860 = vmatpush2.bf16.msra.mxu0 0
      %7861 = vmatprep.subr.bf16.mxu0 0
      %7862 = vmatpush2.bf16.msra.mxu0 0
      %7863 = vmatprep.subr.bf16.mxu0 0
      %7864 = vmatpush2.bf16.msra.mxu0 0
      %7865 = vmatprep.subr.bf16.mxu0 0
      %7866 = vmatpush2.bf16.msra.mxu0 0
      %7867 = vmatprep.subr.bf16.mxu0 0
      %7868 = vmatpush2.bf16.msra.mxu0 0
      %7869 = vmatprep.subr.bf16.mxu0 0
      %7870 = vmatpush2.bf16.msra.mxu0 0
      %7871 = vmatprep.mubr.bf16.mxu0 0
      %7872 = vmatmul.mubr.bf16.gmra.mxu0 %v7789
      %v7873 = vpop.f32.mrf.mxu0
      %v7874 = vadd.f32 0.0, %v7873
      %v7875 = vpop.f32.mrf.mxu0
      %v7876 = vpop.f32.mrf.mxu0
      %v7877 = vadd.f32 0.0, %v7876
      %v7878 = vpop.f32.mrf.mxu0
      %7879 = vmatprep.mubr.bf16.mxu0 0
      %7880 = vmatmul.mubr.bf16.gmra.mxu0 %v7792
      %v7881 = vpop.f32.mrf.mxu0
      %v7882 = vadd.f32 0.0, %v7881
      %v7883 = vpop.f32.mrf.mxu0
      %v7884 = vpop.f32.mrf.mxu0
      %v7885 = vadd.f32 0.0, %v7884
      %v7886 = vpop.f32.mrf.mxu0
      %7887 = vmatprep.mubr.bf16.mxu0 0
      %7888 = vmatmul.mubr.bf16.gmra.mxu0 %v7795
      %v7889 = vpop.f32.mrf.mxu0
      %v7890 = vadd.f32 0.0, %v7889
      %v7891 = vpop.f32.mrf.mxu0
      %v7892 = vpop.f32.mrf.mxu0
      %v7893 = vadd.f32 0.0, %v7892
      %v7894 = vpop.f32.mrf.mxu0
      %7895 = vmatprep.mubr.bf16.mxu0 0
      %7896 = vmatmul.mubr.bf16.gmra.mxu0 %v7798
      %v7897 = vpop.f32.mrf.mxu0
      %v7898 = vadd.f32 0.0, %v7897
      %v7899 = vpop.f32.mrf.mxu0
      %v7900 = vpop.f32.mrf.mxu0
      %v7901 = vadd.f32 0.0, %v7900
      %v7902 = vpop.f32.mrf.mxu0
      %7903 = vmatprep.mubr.bf16.mxu0 0
      %7904 = vmatmul.mubr.bf16.gmra.mxu0 %v7801
      %v7905 = vpop.f32.mrf.mxu0
      %v7906 = vadd.f32 0.0, %v7905
      %v7907 = vpop.f32.mrf.mxu0
      %v7908 = vpop.f32.mrf.mxu0
      %v7909 = vadd.f32 0.0, %v7908
      %v7910 = vpop.f32.mrf.mxu0
      %7911 = vmatprep.mubr.bf16.mxu0 0
      %7912 = vmatmul.mubr.bf16.gmra.mxu0 %v7804
      %v7913 = vpop.f32.mrf.mxu0
      %v7914 = vadd.f32 0.0, %v7913
      %v7915 = vpop.f32.mrf.mxu0
      %v7916 = vpop.f32.mrf.mxu0
      %v7917 = vadd.f32 0.0, %v7916
      %v7918 = vpop.f32.mrf.mxu0
      %7919 = vmatprep.mubr.bf16.mxu0 0
      %7920 = vmatmul.mubr.bf16.gmra.mxu0 %v7807
      %v7921 = vpop.f32.mrf.mxu0
      %v7922 = vadd.f32 0.0, %v7921
      %v7923 = vpop.f32.mrf.mxu0
      %v7924 = vpop.f32.mrf.mxu0
      %v7925 = vadd.f32 0.0, %v7924
      %v7926 = vpop.f32.mrf.mxu0
      %7927 = vmatprep.mubr.bf16.mxu0 0
      %7928 = vmatmul.mubr.bf16.gmra.mxu0 %v7810
      %v7929 = vpop.f32.mrf.mxu0
      %v7930 = vadd.f32 0.0, %v7929
      %v7931 = vpop.f32.mrf.mxu0
      %v7932 = vpop.f32.mrf.mxu0
      %v7933 = vadd.f32 0.0, %v7932
      %v7934 = vpop.f32.mrf.mxu0
      %7935 = vmatprep.mubr.bf16.mxu0 0
      %7936 = vmatmul.mubr.bf16.gmra.mxu0 %v7813
      %v7937 = vpop.f32.mrf.mxu0
      %v7938 = vadd.f32 0.0, %v7937
      %v7939 = vpop.f32.mrf.mxu0
      %v7940 = vpop.f32.mrf.mxu0
      %v7941 = vadd.f32 0.0, %v7940
      %v7942 = vpop.f32.mrf.mxu0
      %7943 = vmatprep.mubr.bf16.mxu0 0
      %7944 = vmatmul.mubr.bf16.gmra.mxu0 %v7816
      %v7945 = vpop.f32.mrf.mxu0
      %v7946 = vadd.f32 0.0, %v7945
      %v7947 = vpop.f32.mrf.mxu0
      %v7948 = vpop.f32.mrf.mxu0
      %v7949 = vadd.f32 0.0, %v7948
      %v7950 = vpop.f32.mrf.mxu0
      %7951 = vmatprep.mubr.bf16.mxu0 0
      %7952 = vmatmul.mubr.bf16.gmra.mxu0 %v7819
      %v7953 = vpop.f32.mrf.mxu0
      %v7954 = vadd.f32 0.0, %v7953
      %v7955 = vpop.f32.mrf.mxu0
      %v7956 = vpop.f32.mrf.mxu0
      %v7957 = vadd.f32 0.0, %v7956
      %v7958 = vpop.f32.mrf.mxu0
      %7959 = vmatprep.mubr.bf16.mxu0 0
      %7960 = vmatmul.mubr.bf16.gmra.mxu0 %v7822
      %v7961 = vpop.f32.mrf.mxu0
      %v7962 = vadd.f32 0.0, %v7961
      %v7963 = vpop.f32.mrf.mxu0
      %v7964 = vpop.f32.mrf.mxu0
      %v7965 = vadd.f32 0.0, %v7964
      %v7966 = vpop.f32.mrf.mxu0
      %7967 = vmatprep.mubr.bf16.mxu0 0
      %7968 = vmatmul.mubr.bf16.gmra.mxu0 %v7825
      %v7969 = vpop.f32.mrf.mxu0
      %v7970 = vadd.f32 0.0, %v7969
      %v7971 = vpop.f32.mrf.mxu0
      %v7972 = vpop.f32.mrf.mxu0
      %v7973 = vadd.f32 0.0, %v7972
      %v7974 = vpop.f32.mrf.mxu0
      %7975 = vmatprep.mubr.bf16.mxu0 0
      %7976 = vmatmul.mubr.bf16.gmra.mxu0 %v7828
      %v7977 = vpop.f32.mrf.mxu0
      %v7978 = vadd.f32 0.0, %v7977
      %v7979 = vpop.f32.mrf.mxu0
      %v7980 = vpop.f32.mrf.mxu0
      %v7981 = vadd.f32 0.0, %v7980
      %v7982 = vpop.f32.mrf.mxu0
      %7983 = vmatprep.mubr.bf16.mxu0 0
      %7984 = vmatmul.mubr.bf16.gmra.mxu0 %v7831
      %v7985 = vpop.f32.mrf.mxu0
      %v7986 = vadd.f32 0.0, %v7985
      %v7987 = vpop.f32.mrf.mxu0
      %v7988 = vpop.f32.mrf.mxu0
      %v7989 = vadd.f32 0.0, %v7988
      %v7990 = vpop.f32.mrf.mxu0
      %7991 = vmatprep.mubr.bf16.mxu0 0
      %7992 = vmatmul.mubr.bf16.gmra.mxu0 %v7834
      %v7993 = vpop.f32.mrf.mxu0
      %v7994 = vadd.f32 0.0, %v7993
      %v7995 = vpop.f32.mrf.mxu0
      %v7996 = vpop.f32.mrf.mxu0
      %v7997 = vadd.f32 0.0, %v7996
      %v7998 = vpop.f32.mrf.mxu0
      %7999 = vdwg.mxu0
      %v8000 = vadd.f32 %v7452, %v7874
      %v8001 = vadd.f32 %v7455, %v7877
      %v8002 = vadd.f32 %v7460, %v7882
      %v8003 = vadd.f32 %v7463, %v7885
      %v8004 = vadd.f32 %v7468, %v7890
      %v8005 = vadd.f32 %v7471, %v7893
      %v8006 = vadd.f32 %v7476, %v7898
      %v8007 = vadd.f32 %v7479, %v7901
      %v8008 = vadd.f32 %v7484, %v7906
      %v8009 = vadd.f32 %v7487, %v7909
      %v8010 = vadd.f32 %v7492, %v7914
      %v8011 = vadd.f32 %v7495, %v7917
      %v8012 = vadd.f32 %v7500, %v7922
      %v8013 = vadd.f32 %v7503, %v7925
      %v8014 = vadd.f32 %v7508, %v7930
      %v8015 = vadd.f32 %v7511, %v7933
      %v8016 = vadd.f32 %v7516, %v7938
      %v8017 = vadd.f32 %v7519, %v7941
      %v8018 = vadd.f32 %v7524, %v7946
      %v8019 = vadd.f32 %v7527, %v7949
      %v8020 = vadd.f32 %v7532, %v7954
      %v8021 = vadd.f32 %v7535, %v7957
      %v8022 = vadd.f32 %v7540, %v7962
      %v8023 = vadd.f32 %v7543, %v7965
      %v8024 = vadd.f32 %v7548, %v7970
      %v8025 = vadd.f32 %v7551, %v7973
      %v8026 = vadd.f32 %v7556, %v7978
      %v8027 = vadd.f32 %v7559, %v7981
      %v8028 = vadd.f32 %v7564, %v7986
      %v8029 = vadd.f32 %v7567, %v7989
      %v8030 = vadd.f32 %v7572, %v7994
      %v8031 = vadd.f32 %v7575, %v7997
      %v8032 = vld [vmem:[%s628] sm:$0xf]
      %v8033 = vld [vmem:[%s628 + $0x4] sm:$0xf]
      %v8034 = vld [vmem:[%s628 + $0xc] sm:$0xf]
      %v8035 = vld [vmem:[%s628 + $0x10] sm:$0xf]
      %v8036 = vld [vmem:[%s628 + $0x18] sm:$0xf]
      %v8037 = vld [vmem:[%s628 + $0x1c] sm:$0xf]
      %v8038 = vld [vmem:[%s628 + $0x24] sm:$0xf]
      %v8039 = vld [vmem:[%s628 + $0x28] sm:$0xf]
      %v8040 = vld [vmem:[%s628 + $0x30] sm:$0xf]
      %v8041 = vld [vmem:[%s628 + $0x34] sm:$0xf]
      %v8042 = vld [vmem:[%s628 + $0x3c] sm:$0xf]
      %v8043 = vld [vmem:[%s628 + $0x40] sm:$0xf]
      %v8044 = vld [vmem:[%s628 + $0x48] sm:$0xf]
      %v8045 = vld [vmem:[%s628 + $0x4c] sm:$0xf]
      %v8046 = vld [vmem:[%s628 + $0x54] sm:$0xf]
      %v8047 = vld [vmem:[%s628 + $0x58] sm:$0xf]
      %v8048 = vld [vmem:[%s628 + $0x60] sm:$0xf]
      %v8049 = vld [vmem:[%s628 + $0x64] sm:$0xf]
      %v8050 = vld [vmem:[%s628 + $0x6c] sm:$0xf]
      %v8051 = vld [vmem:[%s628 + $0x70] sm:$0xf]
      %v8052 = vld [vmem:[%s628 + $0x78] sm:$0xf]
      %v8053 = vld [vmem:[%s628 + $0x7c] sm:$0xf]
      %v8054 = vld [vmem:[%s628 + $0x84] sm:$0xf]
      %v8055 = vld [vmem:[%s628 + $0x88] sm:$0xf]
      %v8056 = vld [vmem:[%s628 + $0x90] sm:$0xf]
      %v8057 = vld [vmem:[%s628 + $0x94] sm:$0xf]
      %v8058 = vld [vmem:[%s628 + $0x9c] sm:$0xf]
      %v8059 = vld [vmem:[%s628 + $0xa0] sm:$0xf]
      %v8060 = vld [vmem:[%s628 + $0xa8] sm:$0xf]
      %v8061 = vld [vmem:[%s628 + $0xac] sm:$0xf]
      %v8062 = vld [vmem:[%s628 + $0xb4] sm:$0xf]
      %v8063 = vld [vmem:[%s628 + $0xb8] sm:$0xf]
      %s8064 = scalar_lea.vmem %s2, 6
      %v8065 = vld [vmem:[%s8064] sm:$0x3]
      %v8098 = vunpack.c.l.b16 %v8032
      %v8099 = vunpack.c.l.b16 %v8033
      %v8100 = vunpack.c.l.b16 %v8034
      %v8101 = vunpack.c.l.b16 %v8035
      %v8102 = vunpack.c.l.b16 %v8036
      %v8103 = vunpack.c.l.b16 %v8037
      %v8104 = vunpack.c.l.b16 %v8038
      %v8105 = vunpack.c.l.b16 %v8039
      %v8106 = vunpack.c.l.b16 %v8040
      %v8107 = vunpack.c.l.b16 %v8041
      %v8108 = vunpack.c.l.b16 %v8042
      %v8109 = vunpack.c.l.b16 %v8043
      %v8110 = vunpack.c.l.b16 %v8044
      %v8111 = vunpack.c.l.b16 %v8045
      %v8112 = vunpack.c.l.b16 %v8046
      %v8113 = vunpack.c.l.b16 %v8047
      %v8114 = vunpack.c.l.b16 %v8048
      %v8115 = vunpack.c.l.b16 %v8049
      %v8116 = vunpack.c.l.b16 %v8050
      %v8117 = vunpack.c.l.b16 %v8051
      %v8118 = vunpack.c.l.b16 %v8052
      %v8119 = vunpack.c.l.b16 %v8053
      %v8120 = vunpack.c.l.b16 %v8054
      %v8121 = vunpack.c.l.b16 %v8055
      %v8122 = vunpack.c.l.b16 %v8056
      %v8123 = vunpack.c.l.b16 %v8057
      %v8124 = vunpack.c.l.b16 %v8058
      %v8125 = vunpack.c.l.b16 %v8059
      %v8126 = vunpack.c.l.b16 %v8060
      %v8127 = vunpack.c.l.b16 %v8061
      %v8128 = vunpack.c.l.b16 %v8062
      %v8129 = vunpack.c.l.b16 %v8063
      %v8130 = vpack.c.b16 %v8099, %v8098
      %v8131 = vpack.c.b16 %v8101, %v8100
      %v8132 = vpack.c.b16 %v8103, %v8102
      %v8133 = vpack.c.b16 %v8105, %v8104
      %v8134 = vpack.c.b16 %v8107, %v8106
      %v8135 = vpack.c.b16 %v8109, %v8108
      %v8136 = vpack.c.b16 %v8111, %v8110
      %v8137 = vpack.c.b16 %v8113, %v8112
      %v8138 = vpack.c.b16 %v8115, %v8114
      %v8139 = vpack.c.b16 %v8117, %v8116
      %v8140 = vpack.c.b16 %v8119, %v8118
      %v8141 = vpack.c.b16 %v8121, %v8120
      %v8142 = vpack.c.b16 %v8123, %v8122
      %v8143 = vpack.c.b16 %v8125, %v8124
      %v8144 = vpack.c.b16 %v8127, %v8126
      %v8145 = vpack.c.b16 %v8129, %v8128
      %v8147 = vsel %vm1444, %v8130, 0
      %v8150 = vsel %vm1444, %v8131, 0
      %v8153 = vsel %vm1444, %v8132, 0
      %v8156 = vsel %vm1444, %v8133, 0
      %v8159 = vsel %vm1444, %v8134, 0
      %v8162 = vsel %vm1444, %v8135, 0
      %v8165 = vsel %vm1444, %v8136, 0
      %v8168 = vsel %vm1444, %v8137, 0
      %v8171 = vsel %vm1444, %v8138, 0
      %v8174 = vsel %vm1444, %v8139, 0
      %v8177 = vsel %vm1444, %v8140, 0
      %v8180 = vsel %vm1444, %v8141, 0
      %v8183 = vsel %vm1444, %v8142, 0
      %v8186 = vsel %vm1444, %v8143, 0
      %v8189 = vsel %vm1444, %v8144, 0
      %v8192 = vsel %vm1444, %v8145, 0
      %v8195 = vsel %vm1493, %v8065, 0
      %8197 = vmatprep.subr.bf16.mxu0 0
      %8198 = vmatpush1.bf16.msra.mxu0 0
      %8199 = vmatprep.subr.bf16.mxu0 0
      %8200 = vmatpush1.bf16.msra.mxu0 0
      %8201 = vmatprep.subr.bf16.mxu0 0
      %8202 = vmatpush1.bf16.msra.mxu0 0
      %8203 = vmatprep.subr.bf16.mxu0 0
      %8204 = vmatpush1.bf16.msra.mxu0 0
      %8205 = vmatprep.subr.bf16.mxu0 0
      %8206 = vmatpush1.bf16.msra.mxu0 0
      %8207 = vmatprep.subr.bf16.mxu0 0
      %8208 = vmatpush1.bf16.msra.mxu0 0
      %8209 = vmatprep.subr.bf16.mxu0 0
      %8210 = vmatpush1.bf16.msra.mxu0 0
      %8211 = vmatprep.subr.bf16.mxu0 0
      %8212 = vmatpush1.bf16.msra.mxu0 %v8195
      %8213 = vmatprep.subr.bf16.mxu0 0
      %8214 = vmatpush2.bf16.msra.mxu0 0
      %8215 = vmatprep.subr.bf16.mxu0 0
      %8216 = vmatpush2.bf16.msra.mxu0 0
      %8217 = vmatprep.subr.bf16.mxu0 0
      %8218 = vmatpush2.bf16.msra.mxu0 0
      %8219 = vmatprep.subr.bf16.mxu0 0
      %8220 = vmatpush2.bf16.msra.mxu0 0
      %8221 = vmatprep.subr.bf16.mxu0 0
      %8222 = vmatpush2.bf16.msra.mxu0 0
      %8223 = vmatprep.subr.bf16.mxu0 0
      %8224 = vmatpush2.bf16.msra.mxu0 0
      %8225 = vmatprep.subr.bf16.mxu0 0
      %8226 = vmatpush2.bf16.msra.mxu0 0
      %8227 = vmatprep.subr.bf16.mxu0 0
      %8228 = vmatpush2.bf16.msra.mxu0 0
      %8229 = vmatprep.mubr.bf16.mxu0 0
      %8230 = vmatmul.mubr.bf16.gmra.mxu0 %v8147
      %v8231 = vpop.f32.mrf.mxu0
      %v8232 = vadd.f32 0.0, %v8231
      %v8233 = vpop.f32.mrf.mxu0
      %v8234 = vpop.f32.mrf.mxu0
      %v8235 = vadd.f32 0.0, %v8234
      %v8236 = vpop.f32.mrf.mxu0
      %8237 = vmatprep.mubr.bf16.mxu0 0
      %8238 = vmatmul.mubr.bf16.gmra.mxu0 %v8150
      %v8239 = vpop.f32.mrf.mxu0
      %v8240 = vadd.f32 0.0, %v8239
      %v8241 = vpop.f32.mrf.mxu0
      %v8242 = vpop.f32.mrf.mxu0
      %v8243 = vadd.f32 0.0, %v8242
      %v8244 = vpop.f32.mrf.mxu0
      %8245 = vmatprep.mubr.bf16.mxu0 0
      %8246 = vmatmul.mubr.bf16.gmra.mxu0 %v8153
      %v8247 = vpop.f32.mrf.mxu0
      %v8248 = vadd.f32 0.0, %v8247
      %v8249 = vpop.f32.mrf.mxu0
      %v8250 = vpop.f32.mrf.mxu0
      %v8251 = vadd.f32 0.0, %v8250
      %v8252 = vpop.f32.mrf.mxu0
      %8253 = vmatprep.mubr.bf16.mxu0 0
      %8254 = vmatmul.mubr.bf16.gmra.mxu0 %v8156
      %v8255 = vpop.f32.mrf.mxu0
      %v8256 = vadd.f32 0.0, %v8255
      %v8257 = vpop.f32.mrf.mxu0
      %v8258 = vpop.f32.mrf.mxu0
      %v8259 = vadd.f32 0.0, %v8258
      %v8260 = vpop.f32.mrf.mxu0
      %8261 = vmatprep.mubr.bf16.mxu0 0
      %8262 = vmatmul.mubr.bf16.gmra.mxu0 %v8159
      %v8263 = vpop.f32.mrf.mxu0
      %v8264 = vadd.f32 0.0, %v8263
      %v8265 = vpop.f32.mrf.mxu0
      %v8266 = vpop.f32.mrf.mxu0
      %v8267 = vadd.f32 0.0, %v8266
      %v8268 = vpop.f32.mrf.mxu0
      %8269 = vmatprep.mubr.bf16.mxu0 0
      %8270 = vmatmul.mubr.bf16.gmra.mxu0 %v8162
      %v8271 = vpop.f32.mrf.mxu0
      %v8272 = vadd.f32 0.0, %v8271
      %v8273 = vpop.f32.mrf.mxu0
      %v8274 = vpop.f32.mrf.mxu0
      %v8275 = vadd.f32 0.0, %v8274
      %v8276 = vpop.f32.mrf.mxu0
      %8277 = vmatprep.mubr.bf16.mxu0 0
      %8278 = vmatmul.mubr.bf16.gmra.mxu0 %v8165
      %v8279 = vpop.f32.mrf.mxu0
      %v8280 = vadd.f32 0.0, %v8279
      %v8281 = vpop.f32.mrf.mxu0
      %v8282 = vpop.f32.mrf.mxu0
      %v8283 = vadd.f32 0.0, %v8282
      %v8284 = vpop.f32.mrf.mxu0
      %8285 = vmatprep.mubr.bf16.mxu0 0
      %8286 = vmatmul.mubr.bf16.gmra.mxu0 %v8168
      %v8287 = vpop.f32.mrf.mxu0
      %v8288 = vadd.f32 0.0, %v8287
      %v8289 = vpop.f32.mrf.mxu0
      %v8290 = vpop.f32.mrf.mxu0
      %v8291 = vadd.f32 0.0, %v8290
      %v8292 = vpop.f32.mrf.mxu0
      %8293 = vmatprep.mubr.bf16.mxu0 0
      %8294 = vmatmul.mubr.bf16.gmra.mxu0 %v8171
      %v8295 = vpop.f32.mrf.mxu0
      %v8296 = vadd.f32 0.0, %v8295
      %v8297 = vpop.f32.mrf.mxu0
      %v8298 = vpop.f32.mrf.mxu0
      %v8299 = vadd.f32 0.0, %v8298
      %v8300 = vpop.f32.mrf.mxu0
      %8301 = vmatprep.mubr.bf16.mxu0 0
      %8302 = vmatmul.mubr.bf16.gmra.mxu0 %v8174
      %v8303 = vpop.f32.mrf.mxu0
      %v8304 = vadd.f32 0.0, %v8303
      %v8305 = vpop.f32.mrf.mxu0
      %v8306 = vpop.f32.mrf.mxu0
      %v8307 = vadd.f32 0.0, %v8306
      %v8308 = vpop.f32.mrf.mxu0
      %8309 = vmatprep.mubr.bf16.mxu0 0
      %8310 = vmatmul.mubr.bf16.gmra.mxu0 %v8177
      %v8311 = vpop.f32.mrf.mxu0
      %v8312 = vadd.f32 0.0, %v8311
      %v8313 = vpop.f32.mrf.mxu0
      %v8314 = vpop.f32.mrf.mxu0
      %v8315 = vadd.f32 0.0, %v8314
      %v8316 = vpop.f32.mrf.mxu0
      %8317 = vmatprep.mubr.bf16.mxu0 0
      %8318 = vmatmul.mubr.bf16.gmra.mxu0 %v8180
      %v8319 = vpop.f32.mrf.mxu0
      %v8320 = vadd.f32 0.0, %v8319
      %v8321 = vpop.f32.mrf.mxu0
      %v8322 = vpop.f32.mrf.mxu0
      %v8323 = vadd.f32 0.0, %v8322
      %v8324 = vpop.f32.mrf.mxu0
      %8325 = vmatprep.mubr.bf16.mxu0 0
      %8326 = vmatmul.mubr.bf16.gmra.mxu0 %v8183
      %v8327 = vpop.f32.mrf.mxu0
      %v8328 = vadd.f32 0.0, %v8327
      %v8329 = vpop.f32.mrf.mxu0
      %v8330 = vpop.f32.mrf.mxu0
      %v8331 = vadd.f32 0.0, %v8330
      %v8332 = vpop.f32.mrf.mxu0
      %8333 = vmatprep.mubr.bf16.mxu0 0
      %8334 = vmatmul.mubr.bf16.gmra.mxu0 %v8186
      %v8335 = vpop.f32.mrf.mxu0
      %v8336 = vadd.f32 0.0, %v8335
      %v8337 = vpop.f32.mrf.mxu0
      %v8338 = vpop.f32.mrf.mxu0
      %v8339 = vadd.f32 0.0, %v8338
      %v8340 = vpop.f32.mrf.mxu0
      %8341 = vmatprep.mubr.bf16.mxu0 0
      %8342 = vmatmul.mubr.bf16.gmra.mxu0 %v8189
      %v8343 = vpop.f32.mrf.mxu0
      %v8344 = vadd.f32 0.0, %v8343
      %v8345 = vpop.f32.mrf.mxu0
      %v8346 = vpop.f32.mrf.mxu0
      %v8347 = vadd.f32 0.0, %v8346
      %v8348 = vpop.f32.mrf.mxu0
      %8349 = vmatprep.mubr.bf16.mxu0 0
      %8350 = vmatmul.mubr.bf16.gmra.mxu0 %v8192
      %v8351 = vpop.f32.mrf.mxu0
      %v8352 = vadd.f32 0.0, %v8351
      %v8353 = vpop.f32.mrf.mxu0
      %v8354 = vpop.f32.mrf.mxu0
      %v8355 = vadd.f32 0.0, %v8354
      %v8356 = vpop.f32.mrf.mxu0
      %8357 = vdwg.mxu0
      %v8358 = vadd.f32 %v8000, %v8232
      %v8359 = vadd.f32 %v8001, %v8235
      %v8360 = vadd.f32 %v8002, %v8240
      %v8361 = vadd.f32 %v8003, %v8243
      %v8362 = vadd.f32 %v8004, %v8248
      %v8363 = vadd.f32 %v8005, %v8251
      %v8364 = vadd.f32 %v8006, %v8256
      %v8365 = vadd.f32 %v8007, %v8259
      %v8366 = vadd.f32 %v8008, %v8264
      %v8367 = vadd.f32 %v8009, %v8267
      %v8368 = vadd.f32 %v8010, %v8272
      %v8369 = vadd.f32 %v8011, %v8275
      %v8370 = vadd.f32 %v8012, %v8280
      %v8371 = vadd.f32 %v8013, %v8283
      %v8372 = vadd.f32 %v8014, %v8288
      %v8373 = vadd.f32 %v8015, %v8291
      %v8374 = vadd.f32 %v8016, %v8296
      %v8375 = vadd.f32 %v8017, %v8299
      %v8376 = vadd.f32 %v8018, %v8304
      %v8377 = vadd.f32 %v8019, %v8307
      %v8378 = vadd.f32 %v8020, %v8312
      %v8379 = vadd.f32 %v8021, %v8315
      %v8380 = vadd.f32 %v8022, %v8320
      %v8381 = vadd.f32 %v8023, %v8323
      %v8382 = vadd.f32 %v8024, %v8328
      %v8383 = vadd.f32 %v8025, %v8331
      %v8384 = vadd.f32 %v8026, %v8336
      %v8385 = vadd.f32 %v8027, %v8339
      %v8386 = vadd.f32 %v8028, %v8344
      %v8387 = vadd.f32 %v8029, %v8347
      %v8388 = vadd.f32 %v8030, %v8352
      %v8389 = vadd.f32 %v8031, %v8355
      %v8390 = vld [vmem:[%s628] sm:$0xf]
      %v8391 = vld [vmem:[%s628 + $0x4] sm:$0xf]
      %v8392 = vld [vmem:[%s628 + $0x8] sm:$0x1]
      %v8393 = vld [vmem:[%s628 + $0xc] sm:$0xf]
      %v8394 = vld [vmem:[%s628 + $0x10] sm:$0xf]
      %v8395 = vld [vmem:[%s628 + $0x14] sm:$0x1]
      %v8396 = vld [vmem:[%s628 + $0x18] sm:$0xf]
      %v8397 = vld [vmem:[%s628 + $0x1c] sm:$0xf]
      %v8398 = vld [vmem:[%s628 + $0x20] sm:$0x1]
      %v8399 = vld [vmem:[%s628 + $0x24] sm:$0xf]
      %v8400 = vld [vmem:[%s628 + $0x28] sm:$0xf]
      %v8401 = vld [vmem:[%s628 + $0x2c] sm:$0x1]
      %v8402 = vld [vmem:[%s628 + $0x30] sm:$0xf]
      %v8403 = vld [vmem:[%s628 + $0x34] sm:$0xf]
      %v8404 = vld [vmem:[%s628 + $0x38] sm:$0x1]
      %v8405 = vld [vmem:[%s628 + $0x3c] sm:$0xf]
      %v8406 = vld [vmem:[%s628 + $0x40] sm:$0xf]
      %v8407 = vld [vmem:[%s628 + $0x44] sm:$0x1]
      %v8408 = vld [vmem:[%s628 + $0x48] sm:$0xf]
      %v8409 = vld [vmem:[%s628 + $0x4c] sm:$0xf]
      %v8410 = vld [vmem:[%s628 + $0x50] sm:$0x1]
      %v8411 = vld [vmem:[%s628 + $0x54] sm:$0xf]
      %v8412 = vld [vmem:[%s628 + $0x58] sm:$0xf]
      %v8413 = vld [vmem:[%s628 + $0x5c] sm:$0x1]
      %v8414 = vld [vmem:[%s628 + $0x60] sm:$0xf]
      %v8415 = vld [vmem:[%s628 + $0x64] sm:$0xf]
      %v8416 = vld [vmem:[%s628 + $0x68] sm:$0x1]
      %v8417 = vld [vmem:[%s628 + $0x6c] sm:$0xf]
      %v8418 = vld [vmem:[%s628 + $0x70] sm:$0xf]
      %v8419 = vld [vmem:[%s628 + $0x74] sm:$0x1]
      %v8420 = vld [vmem:[%s628 + $0x78] sm:$0xf]
      %v8421 = vld [vmem:[%s628 + $0x7c] sm:$0xf]
      %v8422 = vld [vmem:[%s628 + $0x80] sm:$0x1]
      %v8423 = vld [vmem:[%s628 + $0x84] sm:$0xf]
      %v8424 = vld [vmem:[%s628 + $0x88] sm:$0xf]
      %v8425 = vld [vmem:[%s628 + $0x8c] sm:$0x1]
      %v8426 = vld [vmem:[%s628 + $0x90] sm:$0xf]
      %v8427 = vld [vmem:[%s628 + $0x94] sm:$0xf]
      %v8428 = vld [vmem:[%s628 + $0x98] sm:$0x1]
      %v8429 = vld [vmem:[%s628 + $0x9c] sm:$0xf]
      %v8430 = vld [vmem:[%s628 + $0xa0] sm:$0xf]
      %v8431 = vld [vmem:[%s628 + $0xa4] sm:$0x1]
      %v8432 = vld [vmem:[%s628 + $0xa8] sm:$0xf]
      %v8433 = vld [vmem:[%s628 + $0xac] sm:$0xf]
      %v8434 = vld [vmem:[%s628 + $0xb0] sm:$0x1]
      %v8435 = vld [vmem:[%s628 + $0xb4] sm:$0xf]
      %v8436 = vld [vmem:[%s628 + $0xb8] sm:$0xf]
      %v8437 = vld [vmem:[%s628 + $0xbc] sm:$0x1]
      %v8439 = vshrl.u32 %v8390, 16
      %v8441 = vrot.slane %v8439, 4
      %v8442 = vshll.u32 %v8390, 16
      %v8444 = vrot.slane %v8442, 5
      %v8445 = vor.u32 %v8441, %v8444
      %v8446 = vrot.slane %v8445, 4
      %v8448 = vshll.u32 %v8391, 16
      %v8450 = vrot.slane %v8448, 5
      %v8451 = vsel %vm1009, %v8446, %v8450
      %v8452 = vshrl.u32 %v8391, 16
      %v8454 = vrot.slane %v8452, 4
      %v8455 = vor.u32 %v8454, %v8450
      %v8456 = vrot.slane %v8455, 4
      %v8458 = vshll.u32 %v8392, 16
      %v8460 = vrot.slane %v8458, 5
      %v8461 = vsel %vm1009, %v8456, %v8460
      %v8463 = vshrl.u32 %v8393, 16
      %v8465 = vrot.slane %v8463, 4
      %v8466 = vshll.u32 %v8393, 16
      %v8468 = vrot.slane %v8466, 5
      %v8469 = vor.u32 %v8465, %v8468
      %v8470 = vrot.slane %v8469, 4
      %v8472 = vshll.u32 %v8394, 16
      %v8474 = vrot.slane %v8472, 5
      %v8475 = vsel %vm1009, %v8470, %v8474
      %v8476 = vshrl.u32 %v8394, 16
      %v8478 = vrot.slane %v8476, 4
      %v8479 = vor.u32 %v8478, %v8474
      %v8480 = vrot.slane %v8479, 4
      %v8482 = vshll.u32 %v8395, 16
      %v8484 = vrot.slane %v8482, 5
      %v8485 = vsel %vm1009, %v8480, %v8484
      %v8487 = vshrl.u32 %v8396, 16
      %v8489 = vrot.slane %v8487, 4
      %v8490 = vshll.u32 %v8396, 16
      %v8492 = vrot.slane %v8490, 5
      %v8493 = vor.u32 %v8489, %v8492
      %v8494 = vrot.slane %v8493, 4
      %v8496 = vshll.u32 %v8397, 16
      %v8498 = vrot.slane %v8496, 5
      %v8499 = vsel %vm1009, %v8494, %v8498
      %v8500 = vshrl.u32 %v8397, 16
      %v8502 = vrot.slane %v8500, 4
      %v8503 = vor.u32 %v8502, %v8498
      %v8504 = vrot.slane %v8503, 4
      %v8506 = vshll.u32 %v8398, 16
      %v8508 = vrot.slane %v8506, 5
      %v8509 = vsel %vm1009, %v8504, %v8508
      %v8511 = vshrl.u32 %v8399, 16
      %v8513 = vrot.slane %v8511, 4
      %v8514 = vshll.u32 %v8399, 16
      %v8516 = vrot.slane %v8514, 5
      %v8517 = vor.u32 %v8513, %v8516
      %v8518 = vrot.slane %v8517, 4
      %v8520 = vshll.u32 %v8400, 16
      %v8522 = vrot.slane %v8520, 5
      %v8523 = vsel %vm1009, %v8518, %v8522
      %v8524 = vshrl.u32 %v8400, 16
      %v8526 = vrot.slane %v8524, 4
      %v8527 = vor.u32 %v8526, %v8522
      %v8528 = vrot.slane %v8527, 4
      %v8530 = vshll.u32 %v8401, 16
      %v8532 = vrot.slane %v8530, 5
      %v8533 = vsel %vm1009, %v8528, %v8532
      %v8535 = vshrl.u32 %v8402, 16
      %v8537 = vrot.slane %v8535, 4
      %v8538 = vshll.u32 %v8402, 16
      %v8540 = vrot.slane %v8538, 5
      %v8541 = vor.u32 %v8537, %v8540
      %v8542 = vrot.slane %v8541, 4
      %v8544 = vshll.u32 %v8403, 16
      %v8546 = vrot.slane %v8544, 5
      %v8547 = vsel %vm1009, %v8542, %v8546
      %v8548 = vshrl.u32 %v8403, 16
      %v8550 = vrot.slane %v8548, 4
      %v8551 = vor.u32 %v8550, %v8546
      %v8552 = vrot.slane %v8551, 4
      %v8554 = vshll.u32 %v8404, 16
      %v8556 = vrot.slane %v8554, 5
      %v8557 = vsel %vm1009, %v8552, %v8556
      %v8559 = vshrl.u32 %v8405, 16
      %v8561 = vrot.slane %v8559, 4
      %v8562 = vshll.u32 %v8405, 16
      %v8564 = vrot.slane %v8562, 5
      %v8565 = vor.u32 %v8561, %v8564
      %v8566 = vrot.slane %v8565, 4
      %v8568 = vshll.u32 %v8406, 16
      %v8570 = vrot.slane %v8568, 5
      %v8571 = vsel %vm1009, %v8566, %v8570
      %v8572 = vshrl.u32 %v8406, 16
      %v8574 = vrot.slane %v8572, 4
      %v8575 = vor.u32 %v8574, %v8570
      %v8576 = vrot.slane %v8575, 4
      %v8578 = vshll.u32 %v8407, 16
      %v8580 = vrot.slane %v8578, 5
      %v8581 = vsel %vm1009, %v8576, %v8580
      %v8583 = vshrl.u32 %v8408, 16
      %v8585 = vrot.slane %v8583, 4
      %v8586 = vshll.u32 %v8408, 16
      %v8588 = vrot.slane %v8586, 5
      %v8589 = vor.u32 %v8585, %v8588
      %v8590 = vrot.slane %v8589, 4
      %v8592 = vshll.u32 %v8409, 16
      %v8594 = vrot.slane %v8592, 5
      %v8595 = vsel %vm1009, %v8590, %v8594
      %v8596 = vshrl.u32 %v8409, 16
      %v8598 = vrot.slane %v8596, 4
      %v8599 = vor.u32 %v8598, %v8594
      %v8600 = vrot.slane %v8599, 4
      %v8602 = vshll.u32 %v8410, 16
      %v8604 = vrot.slane %v8602, 5
      %v8605 = vsel %vm1009, %v8600, %v8604
      %v8607 = vshrl.u32 %v8411, 16
      %v8609 = vrot.slane %v8607, 4
      %v8610 = vshll.u32 %v8411, 16
      %v8612 = vrot.slane %v8610, 5
      %v8613 = vor.u32 %v8609, %v8612
      %v8614 = vrot.slane %v8613, 4
      %v8616 = vshll.u32 %v8412, 16
      %v8618 = vrot.slane %v8616, 5
      %v8619 = vsel %vm1009, %v8614, %v8618
      %v8620 = vshrl.u32 %v8412, 16
      %v8622 = vrot.slane %v8620, 4
      %v8623 = vor.u32 %v8622, %v8618
      %v8624 = vrot.slane %v8623, 4
      %v8626 = vshll.u32 %v8413, 16
      %v8628 = vrot.slane %v8626, 5
      %v8629 = vsel %vm1009, %v8624, %v8628
      %v8631 = vshrl.u32 %v8414, 16
      %v8633 = vrot.slane %v8631, 4
      %v8634 = vshll.u32 %v8414, 16
      %v8636 = vrot.slane %v8634, 5
      %v8637 = vor.u32 %v8633, %v8636
      %v8638 = vrot.slane %v8637, 4
      %v8640 = vshll.u32 %v8415, 16
      %v8642 = vrot.slane %v8640, 5
      %v8643 = vsel %vm1009, %v8638, %v8642
      %v8644 = vshrl.u32 %v8415, 16
      %v8646 = vrot.slane %v8644, 4
      %v8647 = vor.u32 %v8646, %v8642
      %v8648 = vrot.slane %v8647, 4
      %v8650 = vshll.u32 %v8416, 16
      %v8652 = vrot.slane %v8650, 5
      %v8653 = vsel %vm1009, %v8648, %v8652
      %v8655 = vshrl.u32 %v8417, 16
      %v8657 = vrot.slane %v8655, 4
      %v8658 = vshll.u32 %v8417, 16
      %v8660 = vrot.slane %v8658, 5
      %v8661 = vor.u32 %v8657, %v8660
      %v8662 = vrot.slane %v8661, 4
      %v8664 = vshll.u32 %v8418, 16
      %v8666 = vrot.slane %v8664, 5
      %v8667 = vsel %vm1009, %v8662, %v8666
      %v8668 = vshrl.u32 %v8418, 16
      %v8670 = vrot.slane %v8668, 4
      %v8671 = vor.u32 %v8670, %v8666
      %v8672 = vrot.slane %v8671, 4
      %v8674 = vshll.u32 %v8419, 16
      %v8676 = vrot.slane %v8674, 5
      %v8677 = vsel %vm1009, %v8672, %v8676
      %v8679 = vshrl.u32 %v8420, 16
      %v8681 = vrot.slane %v8679, 4
      %v8682 = vshll.u32 %v8420, 16
      %v8684 = vrot.slane %v8682, 5
      %v8685 = vor.u32 %v8681, %v8684
      %v8686 = vrot.slane %v8685, 4
      %v8688 = vshll.u32 %v8421, 16
      %v8690 = vrot.slane %v8688, 5
      %v8691 = vsel %vm1009, %v8686, %v8690
      %v8692 = vshrl.u32 %v8421, 16
      %v8694 = vrot.slane %v8692, 4
      %v8695 = vor.u32 %v8694, %v8690
      %v8696 = vrot.slane %v8695, 4
      %v8698 = vshll.u32 %v8422, 16
      %v8700 = vrot.slane %v8698, 5
      %v8701 = vsel %vm1009, %v8696, %v8700
      %v8703 = vshrl.u32 %v8423, 16
      %v8705 = vrot.slane %v8703, 4
      %v8706 = vshll.u32 %v8423, 16
      %v8708 = vrot.slane %v8706, 5
      %v8709 = vor.u32 %v8705, %v8708
      %v8710 = vrot.slane %v8709, 4
      %v8712 = vshll.u32 %v8424, 16
      %v8714 = vrot.slane %v8712, 5
      %v8715 = vsel %vm1009, %v8710, %v8714
      %v8716 = vshrl.u32 %v8424, 16
      %v8718 = vrot.slane %v8716, 4
      %v8719 = vor.u32 %v8718, %v8714
      %v8720 = vrot.slane %v8719, 4
      %v8722 = vshll.u32 %v8425, 16
      %v8724 = vrot.slane %v8722, 5
      %v8725 = vsel %vm1009, %v8720, %v8724
      %v8727 = vshrl.u32 %v8426, 16
      %v8729 = vrot.slane %v8727, 4
      %v8730 = vshll.u32 %v8426, 16
      %v8732 = vrot.slane %v8730, 5
      %v8733 = vor.u32 %v8729, %v8732
      %v8734 = vrot.slane %v8733, 4
      %v8736 = vshll.u32 %v8427, 16
      %v8738 = vrot.slane %v8736, 5
      %v8739 = vsel %vm1009, %v8734, %v8738
      %v8740 = vshrl.u32 %v8427, 16
      %v8742 = vrot.slane %v8740, 4
      %v8743 = vor.u32 %v8742, %v8738
      %v8744 = vrot.slane %v8743, 4
      %v8746 = vshll.u32 %v8428, 16
      %v8748 = vrot.slane %v8746, 5
      %v8749 = vsel %vm1009, %v8744, %v8748
      %v8751 = vshrl.u32 %v8429, 16
      %v8753 = vrot.slane %v8751, 4
      %v8754 = vshll.u32 %v8429, 16
      %v8756 = vrot.slane %v8754, 5
      %v8757 = vor.u32 %v8753, %v8756
      %v8758 = vrot.slane %v8757, 4
      %v8760 = vshll.u32 %v8430, 16
      %v8762 = vrot.slane %v8760, 5
      %v8763 = vsel %vm1009, %v8758, %v8762
      %v8764 = vshrl.u32 %v8430, 16
      %v8766 = vrot.slane %v8764, 4
      %v8767 = vor.u32 %v8766, %v8762
      %v8768 = vrot.slane %v8767, 4
      %v8770 = vshll.u32 %v8431, 16
      %v8772 = vrot.slane %v8770, 5
      %v8773 = vsel %vm1009, %v8768, %v8772
      %v8775 = vshrl.u32 %v8432, 16
      %v8777 = vrot.slane %v8775, 4
      %v8778 = vshll.u32 %v8432, 16
      %v8780 = vrot.slane %v8778, 5
      %v8781 = vor.u32 %v8777, %v8780
      %v8782 = vrot.slane %v8781, 4
      %v8784 = vshll.u32 %v8433, 16
      %v8786 = vrot.slane %v8784, 5
      %v8787 = vsel %vm1009, %v8782, %v8786
      %v8788 = vshrl.u32 %v8433, 16
      %v8790 = vrot.slane %v8788, 4
      %v8791 = vor.u32 %v8790, %v8786
      %v8792 = vrot.slane %v8791, 4
      %v8794 = vshll.u32 %v8434, 16
      %v8796 = vrot.slane %v8794, 5
      %v8797 = vsel %vm1009, %v8792, %v8796
      %v8799 = vshrl.u32 %v8435, 16
      %v8801 = vrot.slane %v8799, 4
      %v8802 = vshll.u32 %v8435, 16
      %v8804 = vrot.slane %v8802, 5
      %v8805 = vor.u32 %v8801, %v8804
      %v8806 = vrot.slane %v8805, 4
      %v8808 = vshll.u32 %v8436, 16
      %v8810 = vrot.slane %v8808, 5
      %v8811 = vsel %vm1009, %v8806, %v8810
      %v8812 = vshrl.u32 %v8436, 16
      %v8814 = vrot.slane %v8812, 4
      %v8815 = vor.u32 %v8814, %v8810
      %v8816 = vrot.slane %v8815, 4
      %v8818 = vshll.u32 %v8437, 16
      %v8820 = vrot.slane %v8818, 5
      %v8821 = vsel %vm1009, %v8816, %v8820
      %s8822 = scalar_lea.vmem %s2, 8
      %v8823 = vld [vmem:[%s8822] sm:$0x3]
      %v8824 = vunpack.c.l.b16 %v8451
      %v8825 = vunpack.c.l.b16 %v8461
      %v8826 = vunpack.c.l.b16 %v8475
      %v8827 = vunpack.c.l.b16 %v8485
      %v8828 = vunpack.c.l.b16 %v8499
      %v8829 = vunpack.c.l.b16 %v8509
      %v8830 = vunpack.c.l.b16 %v8523
      %v8831 = vunpack.c.l.b16 %v8533
      %v8832 = vunpack.c.l.b16 %v8547
      %v8833 = vunpack.c.l.b16 %v8557
      %v8834 = vunpack.c.l.b16 %v8571
      %v8835 = vunpack.c.l.b16 %v8581
      %v8836 = vunpack.c.l.b16 %v8595
      %v8837 = vunpack.c.l.b16 %v8605
      %v8838 = vunpack.c.l.b16 %v8619
      %v8839 = vunpack.c.l.b16 %v8629
      %v8840 = vunpack.c.l.b16 %v8643
      %v8841 = vunpack.c.l.b16 %v8653
      %v8842 = vunpack.c.l.b16 %v8667
      %v8843 = vunpack.c.l.b16 %v8677
      %v8844 = vunpack.c.l.b16 %v8691
      %v8845 = vunpack.c.l.b16 %v8701
      %v8846 = vunpack.c.l.b16 %v8715
      %v8847 = vunpack.c.l.b16 %v8725
      %v8848 = vunpack.c.l.b16 %v8739
      %v8849 = vunpack.c.l.b16 %v8749
      %v8850 = vunpack.c.l.b16 %v8763
      %v8851 = vunpack.c.l.b16 %v8773
      %v8852 = vunpack.c.l.b16 %v8787
      %v8853 = vunpack.c.l.b16 %v8797
      %v8854 = vunpack.c.l.b16 %v8811
      %v8855 = vunpack.c.l.b16 %v8821
      %v8856 = vpack.c.b16 %v8825, %v8824
      %v8857 = vpack.c.b16 %v8827, %v8826
      %v8858 = vpack.c.b16 %v8829, %v8828
      %v8859 = vpack.c.b16 %v8831, %v8830
      %v8860 = vpack.c.b16 %v8833, %v8832
      %v8861 = vpack.c.b16 %v8835, %v8834
      %v8862 = vpack.c.b16 %v8837, %v8836
      %v8863 = vpack.c.b16 %v8839, %v8838
      %v8864 = vpack.c.b16 %v8841, %v8840
      %v8865 = vpack.c.b16 %v8843, %v8842
      %v8866 = vpack.c.b16 %v8845, %v8844
      %v8867 = vpack.c.b16 %v8847, %v8846
      %v8868 = vpack.c.b16 %v8849, %v8848
      %v8869 = vpack.c.b16 %v8851, %v8850
      %v8870 = vpack.c.b16 %v8853, %v8852
      %v8871 = vpack.c.b16 %v8855, %v8854
      %v8873 = vsel %vm1444, %v8856, 0
      %v8876 = vsel %vm1444, %v8857, 0
      %v8879 = vsel %vm1444, %v8858, 0
      %v8882 = vsel %vm1444, %v8859, 0
      %v8885 = vsel %vm1444, %v8860, 0
      %v8888 = vsel %vm1444, %v8861, 0
      %v8891 = vsel %vm1444, %v8862, 0
      %v8894 = vsel %vm1444, %v8863, 0
      %v8897 = vsel %vm1444, %v8864, 0
      %v8900 = vsel %vm1444, %v8865, 0
      %v8903 = vsel %vm1444, %v8866, 0
      %v8906 = vsel %vm1444, %v8867, 0
      %v8909 = vsel %vm1444, %v8868, 0
      %v8912 = vsel %vm1444, %v8869, 0
      %v8915 = vsel %vm1444, %v8870, 0
      %v8918 = vsel %vm1444, %v8871, 0
      %v8921 = vsel %vm1493, %v8823, 0
      %8923 = vmatprep.subr.bf16.mxu0 0
      %8924 = vmatpush1.bf16.msra.mxu0 0
      %8925 = vmatprep.subr.bf16.mxu0 0
      %8926 = vmatpush1.bf16.msra.mxu0 0
      %8927 = vmatprep.subr.bf16.mxu0 0
      %8928 = vmatpush1.bf16.msra.mxu0 0
      %8929 = vmatprep.subr.bf16.mxu0 0
      %8930 = vmatpush1.bf16.msra.mxu0 0
      %8931 = vmatprep.subr.bf16.mxu0 0
      %8932 = vmatpush1.bf16.msra.mxu0 0
      %8933 = vmatprep.subr.bf16.mxu0 0
      %8934 = vmatpush1.bf16.msra.mxu0 0
      %8935 = vmatprep.subr.bf16.mxu0 0
      %8936 = vmatpush1.bf16.msra.mxu0 0
      %8937 = vmatprep.subr.bf16.mxu0 0
      %8938 = vmatpush1.bf16.msra.mxu0 %v8921
      %8939 = vmatprep.subr.bf16.mxu0 0
      %8940 = vmatpush2.bf16.msra.mxu0 0
      %8941 = vmatprep.subr.bf16.mxu0 0
      %8942 = vmatpush2.bf16.msra.mxu0 0
      %8943 = vmatprep.subr.bf16.mxu0 0
      %8944 = vmatpush2.bf16.msra.mxu0 0
      %8945 = vmatprep.subr.bf16.mxu0 0
      %8946 = vmatpush2.bf16.msra.mxu0 0
      %8947 = vmatprep.subr.bf16.mxu0 0
      %8948 = vmatpush2.bf16.msra.mxu0 0
      %8949 = vmatprep.subr.bf16.mxu0 0
      %8950 = vmatpush2.bf16.msra.mxu0 0
      %8951 = vmatprep.subr.bf16.mxu0 0
      %8952 = vmatpush2.bf16.msra.mxu0 0
      %8953 = vmatprep.subr.bf16.mxu0 0
      %8954 = vmatpush2.bf16.msra.mxu0 0
      %8955 = vmatprep.mubr.bf16.mxu0 0
      %8956 = vmatmul.mubr.bf16.gmra.mxu0 %v8873
      %v8957 = vpop.f32.mrf.mxu0
      %v8958 = vadd.f32 0.0, %v8957
      %v8959 = vpop.f32.mrf.mxu0
      %v8960 = vpop.f32.mrf.mxu0
      %v8961 = vadd.f32 0.0, %v8960
      %v8962 = vpop.f32.mrf.mxu0
      %8963 = vmatprep.mubr.bf16.mxu0 0
      %8964 = vmatmul.mubr.bf16.gmra.mxu0 %v8876
      %v8965 = vpop.f32.mrf.mxu0
      %v8966 = vadd.f32 0.0, %v8965
      %v8967 = vpop.f32.mrf.mxu0
      %v8968 = vpop.f32.mrf.mxu0
      %v8969 = vadd.f32 0.0, %v8968
      %v8970 = vpop.f32.mrf.mxu0
      %8971 = vmatprep.mubr.bf16.mxu0 0
      %8972 = vmatmul.mubr.bf16.gmra.mxu0 %v8879
      %v8973 = vpop.f32.mrf.mxu0
      %v8974 = vadd.f32 0.0, %v8973
      %v8975 = vpop.f32.mrf.mxu0
      %v8976 = vpop.f32.mrf.mxu0
      %v8977 = vadd.f32 0.0, %v8976
      %v8978 = vpop.f32.mrf.mxu0
      %8979 = vmatprep.mubr.bf16.mxu0 0
      %8980 = vmatmul.mubr.bf16.gmra.mxu0 %v8882
      %v8981 = vpop.f32.mrf.mxu0
      %v8982 = vadd.f32 0.0, %v8981
      %v8983 = vpop.f32.mrf.mxu0
      %v8984 = vpop.f32.mrf.mxu0
      %v8985 = vadd.f32 0.0, %v8984
      %v8986 = vpop.f32.mrf.mxu0
      %8987 = vmatprep.mubr.bf16.mxu0 0
      %8988 = vmatmul.mubr.bf16.gmra.mxu0 %v8885
      %v8989 = vpop.f32.mrf.mxu0
      %v8990 = vadd.f32 0.0, %v8989
      %v8991 = vpop.f32.mrf.mxu0
      %v8992 = vpop.f32.mrf.mxu0
      %v8993 = vadd.f32 0.0, %v8992
      %v8994 = vpop.f32.mrf.mxu0
      %8995 = vmatprep.mubr.bf16.mxu0 0
      %8996 = vmatmul.mubr.bf16.gmra.mxu0 %v8888
      %v8997 = vpop.f32.mrf.mxu0
      %v8998 = vadd.f32 0.0, %v8997
      %v8999 = vpop.f32.mrf.mxu0
      %v9000 = vpop.f32.mrf.mxu0
      %v9001 = vadd.f32 0.0, %v9000
      %v9002 = vpop.f32.mrf.mxu0
      %9003 = vmatprep.mubr.bf16.mxu0 0
      %9004 = vmatmul.mubr.bf16.gmra.mxu0 %v8891
      %v9005 = vpop.f32.mrf.mxu0
      %v9006 = vadd.f32 0.0, %v9005
      %v9007 = vpop.f32.mrf.mxu0
      %v9008 = vpop.f32.mrf.mxu0
      %v9009 = vadd.f32 0.0, %v9008
      %v9010 = vpop.f32.mrf.mxu0
      %9011 = vmatprep.mubr.bf16.mxu0 0
      %9012 = vmatmul.mubr.bf16.gmra.mxu0 %v8894
      %v9013 = vpop.f32.mrf.mxu0
      %v9014 = vadd.f32 0.0, %v9013
      %v9015 = vpop.f32.mrf.mxu0
      %v9016 = vpop.f32.mrf.mxu0
      %v9017 = vadd.f32 0.0, %v9016
      %v9018 = vpop.f32.mrf.mxu0
      %9019 = vmatprep.mubr.bf16.mxu0 0
      %9020 = vmatmul.mubr.bf16.gmra.mxu0 %v8897
      %v9021 = vpop.f32.mrf.mxu0
      %v9022 = vadd.f32 0.0, %v9021
      %v9023 = vpop.f32.mrf.mxu0
      %v9024 = vpop.f32.mrf.mxu0
      %v9025 = vadd.f32 0.0, %v9024
      %v9026 = vpop.f32.mrf.mxu0
      %9027 = vmatprep.mubr.bf16.mxu0 0
      %9028 = vmatmul.mubr.bf16.gmra.mxu0 %v8900
      %v9029 = vpop.f32.mrf.mxu0
      %v9030 = vadd.f32 0.0, %v9029
      %v9031 = vpop.f32.mrf.mxu0
      %v9032 = vpop.f32.mrf.mxu0
      %v9033 = vadd.f32 0.0, %v9032
      %v9034 = vpop.f32.mrf.mxu0
      %9035 = vmatprep.mubr.bf16.mxu0 0
      %9036 = vmatmul.mubr.bf16.gmra.mxu0 %v8903
      %v9037 = vpop.f32.mrf.mxu0
      %v9038 = vadd.f32 0.0, %v9037
      %v9039 = vpop.f32.mrf.mxu0
      %v9040 = vpop.f32.mrf.mxu0
      %v9041 = vadd.f32 0.0, %v9040
      %v9042 = vpop.f32.mrf.mxu0
      %9043 = vmatprep.mubr.bf16.mxu0 0
      %9044 = vmatmul.mubr.bf16.gmra.mxu0 %v8906
      %v9045 = vpop.f32.mrf.mxu0
      %v9046 = vadd.f32 0.0, %v9045
      %v9047 = vpop.f32.mrf.mxu0
      %v9048 = vpop.f32.mrf.mxu0
      %v9049 = vadd.f32 0.0, %v9048
      %v9050 = vpop.f32.mrf.mxu0
      %9051 = vmatprep.mubr.bf16.mxu0 0
      %9052 = vmatmul.mubr.bf16.gmra.mxu0 %v8909
      %v9053 = vpop.f32.mrf.mxu0
      %v9054 = vadd.f32 0.0, %v9053
      %v9055 = vpop.f32.mrf.mxu0
      %v9056 = vpop.f32.mrf.mxu0
      %v9057 = vadd.f32 0.0, %v9056
      %v9058 = vpop.f32.mrf.mxu0
      %9059 = vmatprep.mubr.bf16.mxu0 0
      %9060 = vmatmul.mubr.bf16.gmra.mxu0 %v8912
      %v9061 = vpop.f32.mrf.mxu0
      %v9062 = vadd.f32 0.0, %v9061
      %v9063 = vpop.f32.mrf.mxu0
      %v9064 = vpop.f32.mrf.mxu0
      %v9065 = vadd.f32 0.0, %v9064
      %v9066 = vpop.f32.mrf.mxu0
      %9067 = vmatprep.mubr.bf16.mxu0 0
      %9068 = vmatmul.mubr.bf16.gmra.mxu0 %v8915
      %v9069 = vpop.f32.mrf.mxu0
      %v9070 = vadd.f32 0.0, %v9069
      %v9071 = vpop.f32.mrf.mxu0
      %v9072 = vpop.f32.mrf.mxu0
      %v9073 = vadd.f32 0.0, %v9072
      %v9074 = vpop.f32.mrf.mxu0
      %9075 = vmatprep.mubr.bf16.mxu0 0
      %9076 = vmatmul.mubr.bf16.gmra.mxu0 %v8918
      %v9077 = vpop.f32.mrf.mxu0
      %v9078 = vadd.f32 0.0, %v9077
      %v9079 = vpop.f32.mrf.mxu0
      %v9080 = vpop.f32.mrf.mxu0
      %v9081 = vadd.f32 0.0, %v9080
      %v9082 = vpop.f32.mrf.mxu0
      %9083 = vdwg.mxu0
      %v9084 = vadd.f32 %v8358, %v8958
      %v9085 = vadd.f32 %v8359, %v8961
      %v9086 = vadd.f32 %v8360, %v8966
      %v9087 = vadd.f32 %v8361, %v8969
      %v9088 = vadd.f32 %v8362, %v8974
      %v9089 = vadd.f32 %v8363, %v8977
      %v9090 = vadd.f32 %v8364, %v8982
      %v9091 = vadd.f32 %v8365, %v8985
      %v9092 = vadd.f32 %v8366, %v8990
      %v9093 = vadd.f32 %v8367, %v8993
      %v9094 = vadd.f32 %v8368, %v8998
      %v9095 = vadd.f32 %v8369, %v9001
      %v9096 = vadd.f32 %v8370, %v9006
      %v9097 = vadd.f32 %v8371, %v9009
      %v9098 = vadd.f32 %v8372, %v9014
      %v9099 = vadd.f32 %v8373, %v9017
      %v9100 = vadd.f32 %v8374, %v9022
      %v9101 = vadd.f32 %v8375, %v9025
      %v9102 = vadd.f32 %v8376, %v9030
      %v9103 = vadd.f32 %v8377, %v9033
      %v9104 = vadd.f32 %v8378, %v9038
      %v9105 = vadd.f32 %v8379, %v9041
      %v9106 = vadd.f32 %v8380, %v9046
      %v9107 = vadd.f32 %v8381, %v9049
      %v9108 = vadd.f32 %v8382, %v9054
      %v9109 = vadd.f32 %v8383, %v9057
      %v9110 = vadd.f32 %v8384, %v9062
      %v9111 = vadd.f32 %v8385, %v9065
      %v9112 = vadd.f32 %v8386, %v9070
      %v9113 = vadd.f32 %v8387, %v9073
      %v9114 = vadd.f32 %v8388, %v9078
      %v9115 = vadd.f32 %v8389, %v9081
      %v9116 = vld [vmem:[%s628] sm:$0xe]
      %v9117 = vld [vmem:[%s628 + $0xc] sm:$0xe]
      %v9118 = vld [vmem:[%s628 + $0x18] sm:$0xe]
      %v9119 = vld [vmem:[%s628 + $0x24] sm:$0xe]
      %v9120 = vld [vmem:[%s628 + $0x30] sm:$0xe]
      %v9121 = vld [vmem:[%s628 + $0x3c] sm:$0xe]
      %v9122 = vld [vmem:[%s628 + $0x48] sm:$0xe]
      %v9123 = vld [vmem:[%s628 + $0x54] sm:$0xe]
      %v9124 = vld [vmem:[%s628 + $0x60] sm:$0xe]
      %v9125 = vld [vmem:[%s628 + $0x6c] sm:$0xe]
      %v9126 = vld [vmem:[%s628 + $0x78] sm:$0xe]
      %v9127 = vld [vmem:[%s628 + $0x84] sm:$0xe]
      %v9128 = vld [vmem:[%s628 + $0x90] sm:$0xe]
      %v9129 = vld [vmem:[%s628 + $0x9c] sm:$0xe]
      %v9130 = vld [vmem:[%s628 + $0xa8] sm:$0xe]
      %v9131 = vld [vmem:[%s628 + $0xb4] sm:$0xe]
      %v9180 = vrot.slane %v9116, 5
      %v9181 = vrot.slane %v9180, 4
      %v9182 = vrot.slane %v8391, 5
      %v9183 = vsel %vm2000, %v9181, %v9182
      %v9184 = vrot.slane %v9182, 4
      %v9185 = vrot.slane %v8392, 5
      %v9186 = vsel %vm2000, %v9184, %v9185
      %v9187 = vrot.slane %v9117, 5
      %v9188 = vrot.slane %v9187, 4
      %v9189 = vrot.slane %v8394, 5
      %v9190 = vsel %vm2000, %v9188, %v9189
      %v9191 = vrot.slane %v9189, 4
      %v9192 = vrot.slane %v8395, 5
      %v9193 = vsel %vm2000, %v9191, %v9192
      %v9194 = vrot.slane %v9118, 5
      %v9195 = vrot.slane %v9194, 4
      %v9196 = vrot.slane %v8397, 5
      %v9197 = vsel %vm2000, %v9195, %v9196
      %v9198 = vrot.slane %v9196, 4
      %v9199 = vrot.slane %v8398, 5
      %v9200 = vsel %vm2000, %v9198, %v9199
      %v9201 = vrot.slane %v9119, 5
      %v9202 = vrot.slane %v9201, 4
      %v9203 = vrot.slane %v8400, 5
      %v9204 = vsel %vm2000, %v9202, %v9203
      %v9205 = vrot.slane %v9203, 4
      %v9206 = vrot.slane %v8401, 5
      %v9207 = vsel %vm2000, %v9205, %v9206
      %v9208 = vrot.slane %v9120, 5
      %v9209 = vrot.slane %v9208, 4
      %v9210 = vrot.slane %v8403, 5
      %v9211 = vsel %vm2000, %v9209, %v9210
      %v9212 = vrot.slane %v9210, 4
      %v9213 = vrot.slane %v8404, 5
      %v9214 = vsel %vm2000, %v9212, %v9213
      %v9215 = vrot.slane %v9121, 5
      %v9216 = vrot.slane %v9215, 4
      %v9217 = vrot.slane %v8406, 5
      %v9218 = vsel %vm2000, %v9216, %v9217
      %v9219 = vrot.slane %v9217, 4
      %v9220 = vrot.slane %v8407, 5
      %v9221 = vsel %vm2000, %v9219, %v9220
      %v9222 = vrot.slane %v9122, 5
      %v9223 = vrot.slane %v9222, 4
      %v9224 = vrot.slane %v8409, 5
      %v9225 = vsel %vm2000, %v9223, %v9224
      %v9226 = vrot.slane %v9224, 4
      %v9227 = vrot.slane %v8410, 5
      %v9228 = vsel %vm2000, %v9226, %v9227
      %v9229 = vrot.slane %v9123, 5
      %v9230 = vrot.slane %v9229, 4
      %v9231 = vrot.slane %v8412, 5
      %v9232 = vsel %vm2000, %v9230, %v9231
      %v9233 = vrot.slane %v9231, 4
      %v9234 = vrot.slane %v8413, 5
      %v9235 = vsel %vm2000, %v9233, %v9234
      %v9236 = vrot.slane %v9124, 5
      %v9237 = vrot.slane %v9236, 4
      %v9238 = vrot.slane %v8415, 5
      %v9239 = vsel %vm2000, %v9237, %v9238
      %v9240 = vrot.slane %v9238, 4
      %v9241 = vrot.slane %v8416, 5
      %v9242 = vsel %vm2000, %v9240, %v9241
      %v9243 = vrot.slane %v9125, 5
      %v9244 = vrot.slane %v9243, 4
      %v9245 = vrot.slane %v8418, 5
      %v9246 = vsel %vm2000, %v9244, %v9245
      %v9247 = vrot.slane %v9245, 4
      %v9248 = vrot.slane %v8419, 5
      %v9249 = vsel %vm2000, %v9247, %v9248
      %v9250 = vrot.slane %v9126, 5
      %v9251 = vrot.slane %v9250, 4
      %v9252 = vrot.slane %v8421, 5
      %v9253 = vsel %vm2000, %v9251, %v9252
      %v9254 = vrot.slane %v9252, 4
      %v9255 = vrot.slane %v8422, 5
      %v9256 = vsel %vm2000, %v9254, %v9255
      %v9257 = vrot.slane %v9127, 5
      %v9258 = vrot.slane %v9257, 4
      %v9259 = vrot.slane %v8424, 5
      %v9260 = vsel %vm2000, %v9258, %v9259
      %v9261 = vrot.slane %v9259, 4
      %v9262 = vrot.slane %v8425, 5
      %v9263 = vsel %vm2000, %v9261, %v9262
      %v9264 = vrot.slane %v9128, 5
      %v9265 = vrot.slane %v9264, 4
      %v9266 = vrot.slane %v8427, 5
      %v9267 = vsel %vm2000, %v9265, %v9266
      %v9268 = vrot.slane %v9266, 4
      %v9269 = vrot.slane %v8428, 5
      %v9270 = vsel %vm2000, %v9268, %v9269
      %v9271 = vrot.slane %v9129, 5
      %v9272 = vrot.slane %v9271, 4
      %v9273 = vrot.slane %v8430, 5
      %v9274 = vsel %vm2000, %v9272, %v9273
      %v9275 = vrot.slane %v9273, 4
      %v9276 = vrot.slane %v8431, 5
      %v9277 = vsel %vm2000, %v9275, %v9276
      %v9278 = vrot.slane %v9130, 5
      %v9279 = vrot.slane %v9278, 4
      %v9280 = vrot.slane %v8433, 5
      %v9281 = vsel %vm2000, %v9279, %v9280
      %v9282 = vrot.slane %v9280, 4
      %v9283 = vrot.slane %v8434, 5
      %v9284 = vsel %vm2000, %v9282, %v9283
      %v9285 = vrot.slane %v9131, 5
      %v9286 = vrot.slane %v9285, 4
      %v9287 = vrot.slane %v8436, 5
      %v9288 = vsel %vm2000, %v9286, %v9287
      %v9289 = vrot.slane %v9287, 4
      %v9290 = vrot.slane %v8437, 5
      %v9291 = vsel %vm2000, %v9289, %v9290
      %s9292 = scalar_lea.vmem %s2, 10
      %v9293 = vld [vmem:[%s9292] sm:$0x3]
      %v9294 = vunpack.c.l.b16 %v9183
      %v9295 = vunpack.c.l.b16 %v9186
      %v9296 = vunpack.c.l.b16 %v9190
      %v9297 = vunpack.c.l.b16 %v9193
      %v9298 = vunpack.c.l.b16 %v9197
      %v9299 = vunpack.c.l.b16 %v9200
      %v9300 = vunpack.c.l.b16 %v9204
      %v9301 = vunpack.c.l.b16 %v9207
      %v9302 = vunpack.c.l.b16 %v9211
      %v9303 = vunpack.c.l.b16 %v9214
      %v9304 = vunpack.c.l.b16 %v9218
      %v9305 = vunpack.c.l.b16 %v9221
      %v9306 = vunpack.c.l.b16 %v9225
      %v9307 = vunpack.c.l.b16 %v9228
      %v9308 = vunpack.c.l.b16 %v9232
      %v9309 = vunpack.c.l.b16 %v9235
      %v9310 = vunpack.c.l.b16 %v9239
      %v9311 = vunpack.c.l.b16 %v9242
      %v9312 = vunpack.c.l.b16 %v9246
      %v9313 = vunpack.c.l.b16 %v9249
      %v9314 = vunpack.c.l.b16 %v9253
      %v9315 = vunpack.c.l.b16 %v9256
      %v9316 = vunpack.c.l.b16 %v9260
      %v9317 = vunpack.c.l.b16 %v9263
      %v9318 = vunpack.c.l.b16 %v9267
      %v9319 = vunpack.c.l.b16 %v9270
      %v9320 = vunpack.c.l.b16 %v9274
      %v9321 = vunpack.c.l.b16 %v9277
      %v9322 = vunpack.c.l.b16 %v9281
      %v9323 = vunpack.c.l.b16 %v9284
      %v9324 = vunpack.c.l.b16 %v9288
      %v9325 = vunpack.c.l.b16 %v9291
      %v9326 = vpack.c.b16 %v9295, %v9294
      %v9327 = vpack.c.b16 %v9297, %v9296
      %v9328 = vpack.c.b16 %v9299, %v9298
      %v9329 = vpack.c.b16 %v9301, %v9300
      %v9330 = vpack.c.b16 %v9303, %v9302
      %v9331 = vpack.c.b16 %v9305, %v9304
      %v9332 = vpack.c.b16 %v9307, %v9306
      %v9333 = vpack.c.b16 %v9309, %v9308
      %v9334 = vpack.c.b16 %v9311, %v9310
      %v9335 = vpack.c.b16 %v9313, %v9312
      %v9336 = vpack.c.b16 %v9315, %v9314
      %v9337 = vpack.c.b16 %v9317, %v9316
      %v9338 = vpack.c.b16 %v9319, %v9318
      %v9339 = vpack.c.b16 %v9321, %v9320
      %v9340 = vpack.c.b16 %v9323, %v9322
      %v9341 = vpack.c.b16 %v9325, %v9324
      %v9343 = vsel %vm1444, %v9326, 0
      %v9346 = vsel %vm1444, %v9327, 0
      %v9349 = vsel %vm1444, %v9328, 0
      %v9352 = vsel %vm1444, %v9329, 0
      %v9355 = vsel %vm1444, %v9330, 0
      %v9358 = vsel %vm1444, %v9331, 0
      %v9361 = vsel %vm1444, %v9332, 0
      %v9364 = vsel %vm1444, %v9333, 0
      %v9367 = vsel %vm1444, %v9334, 0
      %v9370 = vsel %vm1444, %v9335, 0
      %v9373 = vsel %vm1444, %v9336, 0
      %v9376 = vsel %vm1444, %v9337, 0
      %v9379 = vsel %vm1444, %v9338, 0
      %v9382 = vsel %vm1444, %v9339, 0
      %v9385 = vsel %vm1444, %v9340, 0
      %v9388 = vsel %vm1444, %v9341, 0
      %v9391 = vsel %vm1493, %v9293, 0
      %9393 = vmatprep.subr.bf16.mxu0 0
      %9394 = vmatpush1.bf16.msra.mxu0 0
      %9395 = vmatprep.subr.bf16.mxu0 0
      %9396 = vmatpush1.bf16.msra.mxu0 0
      %9397 = vmatprep.subr.bf16.mxu0 0
      %9398 = vmatpush1.bf16.msra.mxu0 0
      %9399 = vmatprep.subr.bf16.mxu0 0
      %9400 = vmatpush1.bf16.msra.mxu0 0
      %9401 = vmatprep.subr.bf16.mxu0 0
      %9402 = vmatpush1.bf16.msra.mxu0 0
      %9403 = vmatprep.subr.bf16.mxu0 0
      %9404 = vmatpush1.bf16.msra.mxu0 0
      %9405 = vmatprep.subr.bf16.mxu0 0
      %9406 = vmatpush1.bf16.msra.mxu0 0
      %9407 = vmatprep.subr.bf16.mxu0 0
      %9408 = vmatpush1.bf16.msra.mxu0 %v9391
      %9409 = vmatprep.subr.bf16.mxu0 0
      %9410 = vmatpush2.bf16.msra.mxu0 0
      %9411 = vmatprep.subr.bf16.mxu0 0
      %9412 = vmatpush2.bf16.msra.mxu0 0
      %9413 = vmatprep.subr.bf16.mxu0 0
      %9414 = vmatpush2.bf16.msra.mxu0 0
      %9415 = vmatprep.subr.bf16.mxu0 0
      %9416 = vmatpush2.bf16.msra.mxu0 0
      %9417 = vmatprep.subr.bf16.mxu0 0
      %9418 = vmatpush2.bf16.msra.mxu0 0
      %9419 = vmatprep.subr.bf16.mxu0 0
      %9420 = vmatpush2.bf16.msra.mxu0 0
      %9421 = vmatprep.subr.bf16.mxu0 0
      %9422 = vmatpush2.bf16.msra.mxu0 0
      %9423 = vmatprep.subr.bf16.mxu0 0
      %9424 = vmatpush2.bf16.msra.mxu0 0
      %9425 = vmatprep.mubr.bf16.mxu0 0
      %9426 = vmatmul.mubr.bf16.gmra.mxu0 %v9343
      %v9427 = vpop.f32.mrf.mxu0
      %v9428 = vadd.f32 0.0, %v9427
      %v9429 = vpop.f32.mrf.mxu0
      %v9430 = vpop.f32.mrf.mxu0
      %v9431 = vadd.f32 0.0, %v9430
      %v9432 = vpop.f32.mrf.mxu0
      %9433 = vmatprep.mubr.bf16.mxu0 0
      %9434 = vmatmul.mubr.bf16.gmra.mxu0 %v9346
      %v9435 = vpop.f32.mrf.mxu0
      %v9436 = vadd.f32 0.0, %v9435
      %v9437 = vpop.f32.mrf.mxu0
      %v9438 = vpop.f32.mrf.mxu0
      %v9439 = vadd.f32 0.0, %v9438
      %v9440 = vpop.f32.mrf.mxu0
      %9441 = vmatprep.mubr.bf16.mxu0 0
      %9442 = vmatmul.mubr.bf16.gmra.mxu0 %v9349
      %v9443 = vpop.f32.mrf.mxu0
      %v9444 = vadd.f32 0.0, %v9443
      %v9445 = vpop.f32.mrf.mxu0
      %v9446 = vpop.f32.mrf.mxu0
      %v9447 = vadd.f32 0.0, %v9446
      %v9448 = vpop.f32.mrf.mxu0
      %9449 = vmatprep.mubr.bf16.mxu0 0
      %9450 = vmatmul.mubr.bf16.gmra.mxu0 %v9352
      %v9451 = vpop.f32.mrf.mxu0
      %v9452 = vadd.f32 0.0, %v9451
      %v9453 = vpop.f32.mrf.mxu0
      %v9454 = vpop.f32.mrf.mxu0
      %v9455 = vadd.f32 0.0, %v9454
      %v9456 = vpop.f32.mrf.mxu0
      %9457 = vmatprep.mubr.bf16.mxu0 0
      %9458 = vmatmul.mubr.bf16.gmra.mxu0 %v9355
      %v9459 = vpop.f32.mrf.mxu0
      %v9460 = vadd.f32 0.0, %v9459
      %v9461 = vpop.f32.mrf.mxu0
      %v9462 = vpop.f32.mrf.mxu0
      %v9463 = vadd.f32 0.0, %v9462
      %v9464 = vpop.f32.mrf.mxu0
      %9465 = vmatprep.mubr.bf16.mxu0 0
      %9466 = vmatmul.mubr.bf16.gmra.mxu0 %v9358
      %v9467 = vpop.f32.mrf.mxu0
      %v9468 = vadd.f32 0.0, %v9467
      %v9469 = vpop.f32.mrf.mxu0
      %v9470 = vpop.f32.mrf.mxu0
      %v9471 = vadd.f32 0.0, %v9470
      %v9472 = vpop.f32.mrf.mxu0
      %9473 = vmatprep.mubr.bf16.mxu0 0
      %9474 = vmatmul.mubr.bf16.gmra.mxu0 %v9361
      %v9475 = vpop.f32.mrf.mxu0
      %v9476 = vadd.f32 0.0, %v9475
      %v9477 = vpop.f32.mrf.mxu0
      %v9478 = vpop.f32.mrf.mxu0
      %v9479 = vadd.f32 0.0, %v9478
      %v9480 = vpop.f32.mrf.mxu0
      %9481 = vmatprep.mubr.bf16.mxu0 0
      %9482 = vmatmul.mubr.bf16.gmra.mxu0 %v9364
      %v9483 = vpop.f32.mrf.mxu0
      %v9484 = vadd.f32 0.0, %v9483
      %v9485 = vpop.f32.mrf.mxu0
      %v9486 = vpop.f32.mrf.mxu0
      %v9487 = vadd.f32 0.0, %v9486
      %v9488 = vpop.f32.mrf.mxu0
      %9489 = vmatprep.mubr.bf16.mxu0 0
      %9490 = vmatmul.mubr.bf16.gmra.mxu0 %v9367
      %v9491 = vpop.f32.mrf.mxu0
      %v9492 = vadd.f32 0.0, %v9491
      %v9493 = vpop.f32.mrf.mxu0
      %v9494 = vpop.f32.mrf.mxu0
      %v9495 = vadd.f32 0.0, %v9494
      %v9496 = vpop.f32.mrf.mxu0
      %9497 = vmatprep.mubr.bf16.mxu0 0
      %9498 = vmatmul.mubr.bf16.gmra.mxu0 %v9370
      %v9499 = vpop.f32.mrf.mxu0
      %v9500 = vadd.f32 0.0, %v9499
      %v9501 = vpop.f32.mrf.mxu0
      %v9502 = vpop.f32.mrf.mxu0
      %v9503 = vadd.f32 0.0, %v9502
      %v9504 = vpop.f32.mrf.mxu0
      %9505 = vmatprep.mubr.bf16.mxu0 0
      %9506 = vmatmul.mubr.bf16.gmra.mxu0 %v9373
      %v9507 = vpop.f32.mrf.mxu0
      %v9508 = vadd.f32 0.0, %v9507
      %v9509 = vpop.f32.mrf.mxu0
      %v9510 = vpop.f32.mrf.mxu0
      %v9511 = vadd.f32 0.0, %v9510
      %v9512 = vpop.f32.mrf.mxu0
      %9513 = vmatprep.mubr.bf16.mxu0 0
      %9514 = vmatmul.mubr.bf16.gmra.mxu0 %v9376
      %v9515 = vpop.f32.mrf.mxu0
      %v9516 = vadd.f32 0.0, %v9515
      %v9517 = vpop.f32.mrf.mxu0
      %v9518 = vpop.f32.mrf.mxu0
      %v9519 = vadd.f32 0.0, %v9518
      %v9520 = vpop.f32.mrf.mxu0
      %9521 = vmatprep.mubr.bf16.mxu0 0
      %9522 = vmatmul.mubr.bf16.gmra.mxu0 %v9379
      %v9523 = vpop.f32.mrf.mxu0
      %v9524 = vadd.f32 0.0, %v9523
      %v9525 = vpop.f32.mrf.mxu0
      %v9526 = vpop.f32.mrf.mxu0
      %v9527 = vadd.f32 0.0, %v9526
      %v9528 = vpop.f32.mrf.mxu0
      %9529 = vmatprep.mubr.bf16.mxu0 0
      %9530 = vmatmul.mubr.bf16.gmra.mxu0 %v9382
      %v9531 = vpop.f32.mrf.mxu0
      %v9532 = vadd.f32 0.0, %v9531
      %v9533 = vpop.f32.mrf.mxu0
      %v9534 = vpop.f32.mrf.mxu0
      %v9535 = vadd.f32 0.0, %v9534
      %v9536 = vpop.f32.mrf.mxu0
      %9537 = vmatprep.mubr.bf16.mxu0 0
      %9538 = vmatmul.mubr.bf16.gmra.mxu0 %v9385
      %v9539 = vpop.f32.mrf.mxu0
      %v9540 = vadd.f32 0.0, %v9539
      %v9541 = vpop.f32.mrf.mxu0
      %v9542 = vpop.f32.mrf.mxu0
      %v9543 = vadd.f32 0.0, %v9542
      %v9544 = vpop.f32.mrf.mxu0
      %9545 = vmatprep.mubr.bf16.mxu0 0
      %9546 = vmatmul.mubr.bf16.gmra.mxu0 %v9388
      %v9547 = vpop.f32.mrf.mxu0
      %v9548 = vadd.f32 0.0, %v9547
      %v9549 = vpop.f32.mrf.mxu0
      %v9550 = vpop.f32.mrf.mxu0
      %v9551 = vadd.f32 0.0, %v9550
      %v9552 = vpop.f32.mrf.mxu0
      %9553 = vdwg.mxu0
      %v9554 = vadd.f32 %v9084, %v9428
      %v9555 = vadd.f32 %v9085, %v9431
      %v9556 = vadd.f32 %v9086, %v9436
      %v9557 = vadd.f32 %v9087, %v9439
      %v9558 = vadd.f32 %v9088, %v9444
      %v9559 = vadd.f32 %v9089, %v9447
      %v9560 = vadd.f32 %v9090, %v9452
      %v9561 = vadd.f32 %v9091, %v9455
      %v9562 = vadd.f32 %v9092, %v9460
      %v9563 = vadd.f32 %v9093, %v9463
      %v9564 = vadd.f32 %v9094, %v9468
      %v9565 = vadd.f32 %v9095, %v9471
      %v9566 = vadd.f32 %v9096, %v9476
      %v9567 = vadd.f32 %v9097, %v9479
      %v9568 = vadd.f32 %v9098, %v9484
      %v9569 = vadd.f32 %v9099, %v9487
      %v9570 = vadd.f32 %v9100, %v9492
      %v9571 = vadd.f32 %v9101, %v9495
      %v9572 = vadd.f32 %v9102, %v9500
      %v9573 = vadd.f32 %v9103, %v9503
      %v9574 = vadd.f32 %v9104, %v9508
      %v9575 = vadd.f32 %v9105, %v9511
      %v9576 = vadd.f32 %v9106, %v9516
      %v9577 = vadd.f32 %v9107, %v9519
      %v9578 = vadd.f32 %v9108, %v9524
      %v9579 = vadd.f32 %v9109, %v9527
      %v9580 = vadd.f32 %v9110, %v9532
      %v9581 = vadd.f32 %v9111, %v9535
      %v9582 = vadd.f32 %v9112, %v9540
      %v9583 = vadd.f32 %v9113, %v9543
      %v9584 = vadd.f32 %v9114, %v9548
      %v9585 = vadd.f32 %v9115, %v9551
      %v9586 = vld [vmem:[%s3964] sm:$0xf]
      %v9587 = vld [vmem:[%s3964 + $0x4] sm:$0xf]
      %v9588 = vld [vmem:[%s3964 + $0xc] sm:$0xf]
      %v9589 = vld [vmem:[%s3964 + $0x10] sm:$0xf]
      %v9590 = vld [vmem:[%s3964 + $0x18] sm:$0xf]
      %v9591 = vld [vmem:[%s3964 + $0x1c] sm:$0xf]
      %v9592 = vld [vmem:[%s3964 + $0x24] sm:$0xf]
      %v9593 = vld [vmem:[%s3964 + $0x28] sm:$0xf]
      %v9594 = vld [vmem:[%s3964 + $0x30] sm:$0xf]
      %v9595 = vld [vmem:[%s3964 + $0x34] sm:$0xf]
      %v9596 = vld [vmem:[%s3964 + $0x3c] sm:$0xf]
      %v9597 = vld [vmem:[%s3964 + $0x40] sm:$0xf]
      %v9598 = vld [vmem:[%s3964 + $0x48] sm:$0xf]
      %v9599 = vld [vmem:[%s3964 + $0x4c] sm:$0xf]
      %v9600 = vld [vmem:[%s3964 + $0x54] sm:$0xf]
      %v9601 = vld [vmem:[%s3964 + $0x58] sm:$0xf]
      %v9602 = vld [vmem:[%s3964 + $0x60] sm:$0xf]
      %v9603 = vld [vmem:[%s3964 + $0x64] sm:$0xf]
      %v9604 = vld [vmem:[%s3964 + $0x6c] sm:$0xf]
      %v9605 = vld [vmem:[%s3964 + $0x70] sm:$0xf]
      %v9606 = vld [vmem:[%s3964 + $0x78] sm:$0xf]
      %v9607 = vld [vmem:[%s3964 + $0x7c] sm:$0xf]
      %v9608 = vld [vmem:[%s3964 + $0x84] sm:$0xf]
      %v9609 = vld [vmem:[%s3964 + $0x88] sm:$0xf]
      %v9610 = vld [vmem:[%s3964 + $0x90] sm:$0xf]
      %v9611 = vld [vmem:[%s3964 + $0x94] sm:$0xf]
      %v9612 = vld [vmem:[%s3964 + $0x9c] sm:$0xf]
      %v9613 = vld [vmem:[%s3964 + $0xa0] sm:$0xf]
      %v9614 = vld [vmem:[%s3964 + $0xa8] sm:$0xf]
      %v9615 = vld [vmem:[%s3964 + $0xac] sm:$0xf]
      %v9616 = vld [vmem:[%s3964 + $0xb4] sm:$0xf]
      %v9617 = vld [vmem:[%s3964 + $0xb8] sm:$0xf]
      %s9618 = scalar_lea.vmem %s2, 12
      %v9619 = vld [vmem:[%s9618] sm:$0x3]
      %v9652 = vunpack.c.l.b16 %v9586
      %v9653 = vunpack.c.l.b16 %v9587
      %v9654 = vunpack.c.l.b16 %v9588
      %v9655 = vunpack.c.l.b16 %v9589
      %v9656 = vunpack.c.l.b16 %v9590
      %v9657 = vunpack.c.l.b16 %v9591
      %v9658 = vunpack.c.l.b16 %v9592
      %v9659 = vunpack.c.l.b16 %v9593
      %v9660 = vunpack.c.l.b16 %v9594
      %v9661 = vunpack.c.l.b16 %v9595
      %v9662 = vunpack.c.l.b16 %v9596
      %v9663 = vunpack.c.l.b16 %v9597
      %v9664 = vunpack.c.l.b16 %v9598
      %v9665 = vunpack.c.l.b16 %v9599
      %v9666 = vunpack.c.l.b16 %v9600
      %v9667 = vunpack.c.l.b16 %v9601
      %v9668 = vunpack.c.l.b16 %v9602
      %v9669 = vunpack.c.l.b16 %v9603
      %v9670 = vunpack.c.l.b16 %v9604
      %v9671 = vunpack.c.l.b16 %v9605
      %v9672 = vunpack.c.l.b16 %v9606
      %v9673 = vunpack.c.l.b16 %v9607
      %v9674 = vunpack.c.l.b16 %v9608
      %v9675 = vunpack.c.l.b16 %v9609
      %v9676 = vunpack.c.l.b16 %v9610
      %v9677 = vunpack.c.l.b16 %v9611
      %v9678 = vunpack.c.l.b16 %v9612
      %v9679 = vunpack.c.l.b16 %v9613
      %v9680 = vunpack.c.l.b16 %v9614
      %v9681 = vunpack.c.l.b16 %v9615
      %v9682 = vunpack.c.l.b16 %v9616
      %v9683 = vunpack.c.l.b16 %v9617
      %v9684 = vpack.c.b16 %v9653, %v9652
      %v9685 = vpack.c.b16 %v9655, %v9654
      %v9686 = vpack.c.b16 %v9657, %v9656
      %v9687 = vpack.c.b16 %v9659, %v9658
      %v9688 = vpack.c.b16 %v9661, %v9660
      %v9689 = vpack.c.b16 %v9663, %v9662
      %v9690 = vpack.c.b16 %v9665, %v9664
      %v9691 = vpack.c.b16 %v9667, %v9666
      %v9692 = vpack.c.b16 %v9669, %v9668
      %v9693 = vpack.c.b16 %v9671, %v9670
      %v9694 = vpack.c.b16 %v9673, %v9672
      %v9695 = vpack.c.b16 %v9675, %v9674
      %v9696 = vpack.c.b16 %v9677, %v9676
      %v9697 = vpack.c.b16 %v9679, %v9678
      %v9698 = vpack.c.b16 %v9681, %v9680
      %v9699 = vpack.c.b16 %v9683, %v9682
      %v9701 = vsel %vm1444, %v9684, 0
      %v9704 = vsel %vm1444, %v9685, 0
      %v9707 = vsel %vm1444, %v9686, 0
      %v9710 = vsel %vm1444, %v9687, 0
      %v9713 = vsel %vm1444, %v9688, 0
      %v9716 = vsel %vm1444, %v9689, 0
      %v9719 = vsel %vm1444, %v9690, 0
      %v9722 = vsel %vm1444, %v9691, 0
      %v9725 = vsel %vm1444, %v9692, 0
      %v9728 = vsel %vm1444, %v9693, 0
      %v9731 = vsel %vm1444, %v9694, 0
      %v9734 = vsel %vm1444, %v9695, 0
      %v9737 = vsel %vm1444, %v9696, 0
      %v9740 = vsel %vm1444, %v9697, 0
      %v9743 = vsel %vm1444, %v9698, 0
      %v9746 = vsel %vm1444, %v9699, 0
      %v9749 = vsel %vm1493, %v9619, 0
      %9751 = vmatprep.subr.bf16.mxu0 0
      %9752 = vmatpush1.bf16.msra.mxu0 0
      %9753 = vmatprep.subr.bf16.mxu0 0
      %9754 = vmatpush1.bf16.msra.mxu0 0
      %9755 = vmatprep.subr.bf16.mxu0 0
      %9756 = vmatpush1.bf16.msra.mxu0 0
      %9757 = vmatprep.subr.bf16.mxu0 0
      %9758 = vmatpush1.bf16.msra.mxu0 0
      %9759 = vmatprep.subr.bf16.mxu0 0
      %9760 = vmatpush1.bf16.msra.mxu0 0
      %9761 = vmatprep.subr.bf16.mxu0 0
      %9762 = vmatpush1.bf16.msra.mxu0 0
      %9763 = vmatprep.subr.bf16.mxu0 0
      %9764 = vmatpush1.bf16.msra.mxu0 0
      %9765 = vmatprep.subr.bf16.mxu0 0
      %9766 = vmatpush1.bf16.msra.mxu0 %v9749
      %9767 = vmatprep.subr.bf16.mxu0 0
      %9768 = vmatpush2.bf16.msra.mxu0 0
      %9769 = vmatprep.subr.bf16.mxu0 0
      %9770 = vmatpush2.bf16.msra.mxu0 0
      %9771 = vmatprep.subr.bf16.mxu0 0
      %9772 = vmatpush2.bf16.msra.mxu0 0
      %9773 = vmatprep.subr.bf16.mxu0 0
      %9774 = vmatpush2.bf16.msra.mxu0 0
      %9775 = vmatprep.subr.bf16.mxu0 0
      %9776 = vmatpush2.bf16.msra.mxu0 0
      %9777 = vmatprep.subr.bf16.mxu0 0
      %9778 = vmatpush2.bf16.msra.mxu0 0
      %9779 = vmatprep.subr.bf16.mxu0 0
      %9780 = vmatpush2.bf16.msra.mxu0 0
      %9781 = vmatprep.subr.bf16.mxu0 0
      %9782 = vmatpush2.bf16.msra.mxu0 0
      %9783 = vmatprep.mubr.bf16.mxu0 0
      %9784 = vmatmul.mubr.bf16.gmra.mxu0 %v9701
      %v9785 = vpop.f32.mrf.mxu0
      %v9786 = vadd.f32 0.0, %v9785
      %v9787 = vpop.f32.mrf.mxu0
      %v9788 = vpop.f32.mrf.mxu0
      %v9789 = vadd.f32 0.0, %v9788
      %v9790 = vpop.f32.mrf.mxu0
      %9791 = vmatprep.mubr.bf16.mxu0 0
      %9792 = vmatmul.mubr.bf16.gmra.mxu0 %v9704
      %v9793 = vpop.f32.mrf.mxu0
      %v9794 = vadd.f32 0.0, %v9793
      %v9795 = vpop.f32.mrf.mxu0
      %v9796 = vpop.f32.mrf.mxu0
      %v9797 = vadd.f32 0.0, %v9796
      %v9798 = vpop.f32.mrf.mxu0
      %9799 = vmatprep.mubr.bf16.mxu0 0
      %9800 = vmatmul.mubr.bf16.gmra.mxu0 %v9707
      %v9801 = vpop.f32.mrf.mxu0
      %v9802 = vadd.f32 0.0, %v9801
      %v9803 = vpop.f32.mrf.mxu0
      %v9804 = vpop.f32.mrf.mxu0
      %v9805 = vadd.f32 0.0, %v9804
      %v9806 = vpop.f32.mrf.mxu0
      %9807 = vmatprep.mubr.bf16.mxu0 0
      %9808 = vmatmul.mubr.bf16.gmra.mxu0 %v9710
      %v9809 = vpop.f32.mrf.mxu0
      %v9810 = vadd.f32 0.0, %v9809
      %v9811 = vpop.f32.mrf.mxu0
      %v9812 = vpop.f32.mrf.mxu0
      %v9813 = vadd.f32 0.0, %v9812
      %v9814 = vpop.f32.mrf.mxu0
      %9815 = vmatprep.mubr.bf16.mxu0 0
      %9816 = vmatmul.mubr.bf16.gmra.mxu0 %v9713
      %v9817 = vpop.f32.mrf.mxu0
      %v9818 = vadd.f32 0.0, %v9817
      %v9819 = vpop.f32.mrf.mxu0
      %v9820 = vpop.f32.mrf.mxu0
      %v9821 = vadd.f32 0.0, %v9820
      %v9822 = vpop.f32.mrf.mxu0
      %9823 = vmatprep.mubr.bf16.mxu0 0
      %9824 = vmatmul.mubr.bf16.gmra.mxu0 %v9716
      %v9825 = vpop.f32.mrf.mxu0
      %v9826 = vadd.f32 0.0, %v9825
      %v9827 = vpop.f32.mrf.mxu0
      %v9828 = vpop.f32.mrf.mxu0
      %v9829 = vadd.f32 0.0, %v9828
      %v9830 = vpop.f32.mrf.mxu0
      %9831 = vmatprep.mubr.bf16.mxu0 0
      %9832 = vmatmul.mubr.bf16.gmra.mxu0 %v9719
      %v9833 = vpop.f32.mrf.mxu0
      %v9834 = vadd.f32 0.0, %v9833
      %v9835 = vpop.f32.mrf.mxu0
      %v9836 = vpop.f32.mrf.mxu0
      %v9837 = vadd.f32 0.0, %v9836
      %v9838 = vpop.f32.mrf.mxu0
      %9839 = vmatprep.mubr.bf16.mxu0 0
      %9840 = vmatmul.mubr.bf16.gmra.mxu0 %v9722
      %v9841 = vpop.f32.mrf.mxu0
      %v9842 = vadd.f32 0.0, %v9841
      %v9843 = vpop.f32.mrf.mxu0
      %v9844 = vpop.f32.mrf.mxu0
      %v9845 = vadd.f32 0.0, %v9844
      %v9846 = vpop.f32.mrf.mxu0
      %9847 = vmatprep.mubr.bf16.mxu0 0
      %9848 = vmatmul.mubr.bf16.gmra.mxu0 %v9725
      %v9849 = vpop.f32.mrf.mxu0
      %v9850 = vadd.f32 0.0, %v9849
      %v9851 = vpop.f32.mrf.mxu0
      %v9852 = vpop.f32.mrf.mxu0
      %v9853 = vadd.f32 0.0, %v9852
      %v9854 = vpop.f32.mrf.mxu0
      %9855 = vmatprep.mubr.bf16.mxu0 0
      %9856 = vmatmul.mubr.bf16.gmra.mxu0 %v9728
      %v9857 = vpop.f32.mrf.mxu0
      %v9858 = vadd.f32 0.0, %v9857
      %v9859 = vpop.f32.mrf.mxu0
      %v9860 = vpop.f32.mrf.mxu0
      %v9861 = vadd.f32 0.0, %v9860
      %v9862 = vpop.f32.mrf.mxu0
      %9863 = vmatprep.mubr.bf16.mxu0 0
      %9864 = vmatmul.mubr.bf16.gmra.mxu0 %v9731
      %v9865 = vpop.f32.mrf.mxu0
      %v9866 = vadd.f32 0.0, %v9865
      %v9867 = vpop.f32.mrf.mxu0
      %v9868 = vpop.f32.mrf.mxu0
      %v9869 = vadd.f32 0.0, %v9868
      %v9870 = vpop.f32.mrf.mxu0
      %9871 = vmatprep.mubr.bf16.mxu0 0
      %9872 = vmatmul.mubr.bf16.gmra.mxu0 %v9734
      %v9873 = vpop.f32.mrf.mxu0
      %v9874 = vadd.f32 0.0, %v9873
      %v9875 = vpop.f32.mrf.mxu0
      %v9876 = vpop.f32.mrf.mxu0
      %v9877 = vadd.f32 0.0, %v9876
      %v9878 = vpop.f32.mrf.mxu0
      %9879 = vmatprep.mubr.bf16.mxu0 0
      %9880 = vmatmul.mubr.bf16.gmra.mxu0 %v9737
      %v9881 = vpop.f32.mrf.mxu0
      %v9882 = vadd.f32 0.0, %v9881
      %v9883 = vpop.f32.mrf.mxu0
      %v9884 = vpop.f32.mrf.mxu0
      %v9885 = vadd.f32 0.0, %v9884
      %v9886 = vpop.f32.mrf.mxu0
      %9887 = vmatprep.mubr.bf16.mxu0 0
      %9888 = vmatmul.mubr.bf16.gmra.mxu0 %v9740
      %v9889 = vpop.f32.mrf.mxu0
      %v9890 = vadd.f32 0.0, %v9889
      %v9891 = vpop.f32.mrf.mxu0
      %v9892 = vpop.f32.mrf.mxu0
      %v9893 = vadd.f32 0.0, %v9892
      %v9894 = vpop.f32.mrf.mxu0
      %9895 = vmatprep.mubr.bf16.mxu0 0
      %9896 = vmatmul.mubr.bf16.gmra.mxu0 %v9743
      %v9897 = vpop.f32.mrf.mxu0
      %v9898 = vadd.f32 0.0, %v9897
      %v9899 = vpop.f32.mrf.mxu0
      %v9900 = vpop.f32.mrf.mxu0
      %v9901 = vadd.f32 0.0, %v9900
      %v9902 = vpop.f32.mrf.mxu0
      %9903 = vmatprep.mubr.bf16.mxu0 0
      %9904 = vmatmul.mubr.bf16.gmra.mxu0 %v9746
      %v9905 = vpop.f32.mrf.mxu0
      %v9906 = vadd.f32 0.0, %v9905
      %v9907 = vpop.f32.mrf.mxu0
      %v9908 = vpop.f32.mrf.mxu0
      %v9909 = vadd.f32 0.0, %v9908
      %v9910 = vpop.f32.mrf.mxu0
      %9911 = vdwg.mxu0
      %v9912 = vadd.f32 %v9554, %v9786
      %v9913 = vadd.f32 %v9555, %v9789
      %v9914 = vadd.f32 %v9556, %v9794
      %v9915 = vadd.f32 %v9557, %v9797
      %v9916 = vadd.f32 %v9558, %v9802
      %v9917 = vadd.f32 %v9559, %v9805
      %v9918 = vadd.f32 %v9560, %v9810
      %v9919 = vadd.f32 %v9561, %v9813
      %v9920 = vadd.f32 %v9562, %v9818
      %v9921 = vadd.f32 %v9563, %v9821
      %v9922 = vadd.f32 %v9564, %v9826
      %v9923 = vadd.f32 %v9565, %v9829
      %v9924 = vadd.f32 %v9566, %v9834
      %v9925 = vadd.f32 %v9567, %v9837
      %v9926 = vadd.f32 %v9568, %v9842
      %v9927 = vadd.f32 %v9569, %v9845
      %v9928 = vadd.f32 %v9570, %v9850
      %v9929 = vadd.f32 %v9571, %v9853
      %v9930 = vadd.f32 %v9572, %v9858
      %v9931 = vadd.f32 %v9573, %v9861
      %v9932 = vadd.f32 %v9574, %v9866
      %v9933 = vadd.f32 %v9575, %v9869
      %v9934 = vadd.f32 %v9576, %v9874
      %v9935 = vadd.f32 %v9577, %v9877
      %v9936 = vadd.f32 %v9578, %v9882
      %v9937 = vadd.f32 %v9579, %v9885
      %v9938 = vadd.f32 %v9580, %v9890
      %v9939 = vadd.f32 %v9581, %v9893
      %v9940 = vadd.f32 %v9582, %v9898
      %v9941 = vadd.f32 %v9583, %v9901
      %v9942 = vadd.f32 %v9584, %v9906
      %v9943 = vadd.f32 %v9585, %v9909
      %v9944 = vld [vmem:[%s3964] sm:$0xf]
      %v9945 = vld [vmem:[%s3964 + $0x4] sm:$0xf]
      %v9946 = vld [vmem:[%s3964 + $0x8] sm:$0x1]
      %v9947 = vld [vmem:[%s3964 + $0xc] sm:$0xf]
      %v9948 = vld [vmem:[%s3964 + $0x10] sm:$0xf]
      %v9949 = vld [vmem:[%s3964 + $0x14] sm:$0x1]
      %v9950 = vld [vmem:[%s3964 + $0x18] sm:$0xf]
      %v9951 = vld [vmem:[%s3964 + $0x1c] sm:$0xf]
      %v9952 = vld [vmem:[%s3964 + $0x20] sm:$0x1]
      %v9953 = vld [vmem:[%s3964 + $0x24] sm:$0xf]
      %v9954 = vld [vmem:[%s3964 + $0x28] sm:$0xf]
      %v9955 = vld [vmem:[%s3964 + $0x2c] sm:$0x1]
      %v9956 = vld [vmem:[%s3964 + $0x30] sm:$0xf]
      %v9957 = vld [vmem:[%s3964 + $0x34] sm:$0xf]
      %v9958 = vld [vmem:[%s3964 + $0x38] sm:$0x1]
      %v9959 = vld [vmem:[%s3964 + $0x3c] sm:$0xf]
      %v9960 = vld [vmem:[%s3964 + $0x40] sm:$0xf]
      %v9961 = vld [vmem:[%s3964 + $0x44] sm:$0x1]
      %v9962 = vld [vmem:[%s3964 + $0x48] sm:$0xf]
      %v9963 = vld [vmem:[%s3964 + $0x4c] sm:$0xf]
      %v9964 = vld [vmem:[%s3964 + $0x50] sm:$0x1]
      %v9965 = vld [vmem:[%s3964 + $0x54] sm:$0xf]
      %v9966 = vld [vmem:[%s3964 + $0x58] sm:$0xf]
      %v9967 = vld [vmem:[%s3964 + $0x5c] sm:$0x1]
      %v9968 = vld [vmem:[%s3964 + $0x60] sm:$0xf]
      %v9969 = vld [vmem:[%s3964 + $0x64] sm:$0xf]
      %v9970 = vld [vmem:[%s3964 + $0x68] sm:$0x1]
      %v9971 = vld [vmem:[%s3964 + $0x6c] sm:$0xf]
      %v9972 = vld [vmem:[%s3964 + $0x70] sm:$0xf]
      %v9973 = vld [vmem:[%s3964 + $0x74] sm:$0x1]
      %v9974 = vld [vmem:[%s3964 + $0x78] sm:$0xf]
      %v9975 = vld [vmem:[%s3964 + $0x7c] sm:$0xf]
      %v9976 = vld [vmem:[%s3964 + $0x80] sm:$0x1]
      %v9977 = vld [vmem:[%s3964 + $0x84] sm:$0xf]
      %v9978 = vld [vmem:[%s3964 + $0x88] sm:$0xf]
      %v9979 = vld [vmem:[%s3964 + $0x8c] sm:$0x1]
      %v9980 = vld [vmem:[%s3964 + $0x90] sm:$0xf]
      %v9981 = vld [vmem:[%s3964 + $0x94] sm:$0xf]
      %v9982 = vld [vmem:[%s3964 + $0x98] sm:$0x1]
      %v9983 = vld [vmem:[%s3964 + $0x9c] sm:$0xf]
      %v9984 = vld [vmem:[%s3964 + $0xa0] sm:$0xf]
      %v9985 = vld [vmem:[%s3964 + $0xa4] sm:$0x1]
      %v9986 = vld [vmem:[%s3964 + $0xa8] sm:$0xf]
      %v9987 = vld [vmem:[%s3964 + $0xac] sm:$0xf]
      %v9988 = vld [vmem:[%s3964 + $0xb0] sm:$0x1]
      %v9989 = vld [vmem:[%s3964 + $0xb4] sm:$0xf]
      %v9990 = vld [vmem:[%s3964 + $0xb8] sm:$0xf]
      %v9991 = vld [vmem:[%s3964 + $0xbc] sm:$0x1]
      %v9993 = vshrl.u32 %v9944, 16
      %v9995 = vrot.slane %v9993, 4
      %v9996 = vshll.u32 %v9944, 16
      %v9998 = vrot.slane %v9996, 5
      %v9999 = vor.u32 %v9995, %v9998
      %v10000 = vrot.slane %v9999, 4
      %v10002 = vshll.u32 %v9945, 16
      %v10004 = vrot.slane %v10002, 5
      %v10005 = vsel %vm1009, %v10000, %v10004
      %v10006 = vshrl.u32 %v9945, 16
      %v10008 = vrot.slane %v10006, 4
      %v10009 = vor.u32 %v10008, %v10004
      %v10010 = vrot.slane %v10009, 4
      %v10012 = vshll.u32 %v9946, 16
      %v10014 = vrot.slane %v10012, 5
      %v10015 = vsel %vm1009, %v10010, %v10014
      %v10017 = vshrl.u32 %v9947, 16
      %v10019 = vrot.slane %v10017, 4
      %v10020 = vshll.u32 %v9947, 16
      %v10022 = vrot.slane %v10020, 5
      %v10023 = vor.u32 %v10019, %v10022
      %v10024 = vrot.slane %v10023, 4
      %v10026 = vshll.u32 %v9948, 16
      %v10028 = vrot.slane %v10026, 5
      %v10029 = vsel %vm1009, %v10024, %v10028
      %v10030 = vshrl.u32 %v9948, 16
      %v10032 = vrot.slane %v10030, 4
      %v10033 = vor.u32 %v10032, %v10028
      %v10034 = vrot.slane %v10033, 4
      %v10036 = vshll.u32 %v9949, 16
      %v10038 = vrot.slane %v10036, 5
      %v10039 = vsel %vm1009, %v10034, %v10038
      %v10041 = vshrl.u32 %v9950, 16
      %v10043 = vrot.slane %v10041, 4
      %v10044 = vshll.u32 %v9950, 16
      %v10046 = vrot.slane %v10044, 5
      %v10047 = vor.u32 %v10043, %v10046
      %v10048 = vrot.slane %v10047, 4
      %v10050 = vshll.u32 %v9951, 16
      %v10052 = vrot.slane %v10050, 5
      %v10053 = vsel %vm1009, %v10048, %v10052
      %v10054 = vshrl.u32 %v9951, 16
      %v10056 = vrot.slane %v10054, 4
      %v10057 = vor.u32 %v10056, %v10052
      %v10058 = vrot.slane %v10057, 4
      %v10060 = vshll.u32 %v9952, 16
      %v10062 = vrot.slane %v10060, 5
      %v10063 = vsel %vm1009, %v10058, %v10062
      %v10065 = vshrl.u32 %v9953, 16
      %v10067 = vrot.slane %v10065, 4
      %v10068 = vshll.u32 %v9953, 16
      %v10070 = vrot.slane %v10068, 5
      %v10071 = vor.u32 %v10067, %v10070
      %v10072 = vrot.slane %v10071, 4
      %v10074 = vshll.u32 %v9954, 16
      %v10076 = vrot.slane %v10074, 5
      %v10077 = vsel %vm1009, %v10072, %v10076
      %v10078 = vshrl.u32 %v9954, 16
      %v10080 = vrot.slane %v10078, 4
      %v10081 = vor.u32 %v10080, %v10076
      %v10082 = vrot.slane %v10081, 4
      %v10084 = vshll.u32 %v9955, 16
      %v10086 = vrot.slane %v10084, 5
      %v10087 = vsel %vm1009, %v10082, %v10086
      %v10089 = vshrl.u32 %v9956, 16
      %v10091 = vrot.slane %v10089, 4
      %v10092 = vshll.u32 %v9956, 16
      %v10094 = vrot.slane %v10092, 5
      %v10095 = vor.u32 %v10091, %v10094
      %v10096 = vrot.slane %v10095, 4
      %v10098 = vshll.u32 %v9957, 16
      %v10100 = vrot.slane %v10098, 5
      %v10101 = vsel %vm1009, %v10096, %v10100
      %v10102 = vshrl.u32 %v9957, 16
      %v10104 = vrot.slane %v10102, 4
      %v10105 = vor.u32 %v10104, %v10100
      %v10106 = vrot.slane %v10105, 4
      %v10108 = vshll.u32 %v9958, 16
      %v10110 = vrot.slane %v10108, 5
      %v10111 = vsel %vm1009, %v10106, %v10110
      %v10113 = vshrl.u32 %v9959, 16
      %v10115 = vrot.slane %v10113, 4
      %v10116 = vshll.u32 %v9959, 16
      %v10118 = vrot.slane %v10116, 5
      %v10119 = vor.u32 %v10115, %v10118
      %v10120 = vrot.slane %v10119, 4
      %v10122 = vshll.u32 %v9960, 16
      %v10124 = vrot.slane %v10122, 5
      %v10125 = vsel %vm1009, %v10120, %v10124
      %v10126 = vshrl.u32 %v9960, 16
      %v10128 = vrot.slane %v10126, 4
      %v10129 = vor.u32 %v10128, %v10124
      %v10130 = vrot.slane %v10129, 4
      %v10132 = vshll.u32 %v9961, 16
      %v10134 = vrot.slane %v10132, 5
      %v10135 = vsel %vm1009, %v10130, %v10134
      %v10137 = vshrl.u32 %v9962, 16
      %v10139 = vrot.slane %v10137, 4
      %v10140 = vshll.u32 %v9962, 16
      %v10142 = vrot.slane %v10140, 5
      %v10143 = vor.u32 %v10139, %v10142
      %v10144 = vrot.slane %v10143, 4
      %v10146 = vshll.u32 %v9963, 16
      %v10148 = vrot.slane %v10146, 5
      %v10149 = vsel %vm1009, %v10144, %v10148
      %v10150 = vshrl.u32 %v9963, 16
      %v10152 = vrot.slane %v10150, 4
      %v10153 = vor.u32 %v10152, %v10148
      %v10154 = vrot.slane %v10153, 4
      %v10156 = vshll.u32 %v9964, 16
      %v10158 = vrot.slane %v10156, 5
      %v10159 = vsel %vm1009, %v10154, %v10158
      %v10161 = vshrl.u32 %v9965, 16
      %v10163 = vrot.slane %v10161, 4
      %v10164 = vshll.u32 %v9965, 16
      %v10166 = vrot.slane %v10164, 5
      %v10167 = vor.u32 %v10163, %v10166
      %v10168 = vrot.slane %v10167, 4
      %v10170 = vshll.u32 %v9966, 16
      %v10172 = vrot.slane %v10170, 5
      %v10173 = vsel %vm1009, %v10168, %v10172
      %v10174 = vshrl.u32 %v9966, 16
      %v10176 = vrot.slane %v10174, 4
      %v10177 = vor.u32 %v10176, %v10172
      %v10178 = vrot.slane %v10177, 4
      %v10180 = vshll.u32 %v9967, 16
      %v10182 = vrot.slane %v10180, 5
      %v10183 = vsel %vm1009, %v10178, %v10182
      %v10185 = vshrl.u32 %v9968, 16
      %v10187 = vrot.slane %v10185, 4
      %v10188 = vshll.u32 %v9968, 16
      %v10190 = vrot.slane %v10188, 5
      %v10191 = vor.u32 %v10187, %v10190
      %v10192 = vrot.slane %v10191, 4
      %v10194 = vshll.u32 %v9969, 16
      %v10196 = vrot.slane %v10194, 5
      %v10197 = vsel %vm1009, %v10192, %v10196
      %v10198 = vshrl.u32 %v9969, 16
      %v10200 = vrot.slane %v10198, 4
      %v10201 = vor.u32 %v10200, %v10196
      %v10202 = vrot.slane %v10201, 4
      %v10204 = vshll.u32 %v9970, 16
      %v10206 = vrot.slane %v10204, 5
      %v10207 = vsel %vm1009, %v10202, %v10206
      %v10209 = vshrl.u32 %v9971, 16
      %v10211 = vrot.slane %v10209, 4
      %v10212 = vshll.u32 %v9971, 16
      %v10214 = vrot.slane %v10212, 5
      %v10215 = vor.u32 %v10211, %v10214
      %v10216 = vrot.slane %v10215, 4
      %v10218 = vshll.u32 %v9972, 16
      %v10220 = vrot.slane %v10218, 5
      %v10221 = vsel %vm1009, %v10216, %v10220
      %v10222 = vshrl.u32 %v9972, 16
      %v10224 = vrot.slane %v10222, 4
      %v10225 = vor.u32 %v10224, %v10220
      %v10226 = vrot.slane %v10225, 4
      %v10228 = vshll.u32 %v9973, 16
      %v10230 = vrot.slane %v10228, 5
      %v10231 = vsel %vm1009, %v10226, %v10230
      %v10233 = vshrl.u32 %v9974, 16
      %v10235 = vrot.slane %v10233, 4
      %v10236 = vshll.u32 %v9974, 16
      %v10238 = vrot.slane %v10236, 5
      %v10239 = vor.u32 %v10235, %v10238
      %v10240 = vrot.slane %v10239, 4
      %v10242 = vshll.u32 %v9975, 16
      %v10244 = vrot.slane %v10242, 5
      %v10245 = vsel %vm1009, %v10240, %v10244
      %v10246 = vshrl.u32 %v9975, 16
      %v10248 = vrot.slane %v10246, 4
      %v10249 = vor.u32 %v10248, %v10244
      %v10250 = vrot.slane %v10249, 4
      %v10252 = vshll.u32 %v9976, 16
      %v10254 = vrot.slane %v10252, 5
      %v10255 = vsel %vm1009, %v10250, %v10254
      %v10257 = vshrl.u32 %v9977, 16
      %v10259 = vrot.slane %v10257, 4
      %v10260 = vshll.u32 %v9977, 16
      %v10262 = vrot.slane %v10260, 5
      %v10263 = vor.u32 %v10259, %v10262
      %v10264 = vrot.slane %v10263, 4
      %v10266 = vshll.u32 %v9978, 16
      %v10268 = vrot.slane %v10266, 5
      %v10269 = vsel %vm1009, %v10264, %v10268
      %v10270 = vshrl.u32 %v9978, 16
      %v10272 = vrot.slane %v10270, 4
      %v10273 = vor.u32 %v10272, %v10268
      %v10274 = vrot.slane %v10273, 4
      %v10276 = vshll.u32 %v9979, 16
      %v10278 = vrot.slane %v10276, 5
      %v10279 = vsel %vm1009, %v10274, %v10278
      %v10281 = vshrl.u32 %v9980, 16
      %v10283 = vrot.slane %v10281, 4
      %v10284 = vshll.u32 %v9980, 16
      %v10286 = vrot.slane %v10284, 5
      %v10287 = vor.u32 %v10283, %v10286
      %v10288 = vrot.slane %v10287, 4
      %v10290 = vshll.u32 %v9981, 16
      %v10292 = vrot.slane %v10290, 5
      %v10293 = vsel %vm1009, %v10288, %v10292
      %v10294 = vshrl.u32 %v9981, 16
      %v10296 = vrot.slane %v10294, 4
      %v10297 = vor.u32 %v10296, %v10292
      %v10298 = vrot.slane %v10297, 4
      %v10300 = vshll.u32 %v9982, 16
      %v10302 = vrot.slane %v10300, 5
      %v10303 = vsel %vm1009, %v10298, %v10302
      %v10305 = vshrl.u32 %v9983, 16
      %v10307 = vrot.slane %v10305, 4
      %v10308 = vshll.u32 %v9983, 16
      %v10310 = vrot.slane %v10308, 5
      %v10311 = vor.u32 %v10307, %v10310
      %v10312 = vrot.slane %v10311, 4
      %v10314 = vshll.u32 %v9984, 16
      %v10316 = vrot.slane %v10314, 5
      %v10317 = vsel %vm1009, %v10312, %v10316
      %v10318 = vshrl.u32 %v9984, 16
      %v10320 = vrot.slane %v10318, 4
      %v10321 = vor.u32 %v10320, %v10316
      %v10322 = vrot.slane %v10321, 4
      %v10324 = vshll.u32 %v9985, 16
      %v10326 = vrot.slane %v10324, 5
      %v10327 = vsel %vm1009, %v10322, %v10326
      %v10329 = vshrl.u32 %v9986, 16
      %v10331 = vrot.slane %v10329, 4
      %v10332 = vshll.u32 %v9986, 16
      %v10334 = vrot.slane %v10332, 5
      %v10335 = vor.u32 %v10331, %v10334
      %v10336 = vrot.slane %v10335, 4
      %v10338 = vshll.u32 %v9987, 16
      %v10340 = vrot.slane %v10338, 5
      %v10341 = vsel %vm1009, %v10336, %v10340
      %v10342 = vshrl.u32 %v9987, 16
      %v10344 = vrot.slane %v10342, 4
      %v10345 = vor.u32 %v10344, %v10340
      %v10346 = vrot.slane %v10345, 4
      %v10348 = vshll.u32 %v9988, 16
      %v10350 = vrot.slane %v10348, 5
      %v10351 = vsel %vm1009, %v10346, %v10350
      %v10353 = vshrl.u32 %v9989, 16
      %v10355 = vrot.slane %v10353, 4
      %v10356 = vshll.u32 %v9989, 16
      %v10358 = vrot.slane %v10356, 5
      %v10359 = vor.u32 %v10355, %v10358
      %v10360 = vrot.slane %v10359, 4
      %v10362 = vshll.u32 %v9990, 16
      %v10364 = vrot.slane %v10362, 5
      %v10365 = vsel %vm1009, %v10360, %v10364
      %v10366 = vshrl.u32 %v9990, 16
      %v10368 = vrot.slane %v10366, 4
      %v10369 = vor.u32 %v10368, %v10364
      %v10370 = vrot.slane %v10369, 4
      %v10372 = vshll.u32 %v9991, 16
      %v10374 = vrot.slane %v10372, 5
      %v10375 = vsel %vm1009, %v10370, %v10374
      %s10376 = scalar_lea.vmem %s2, 14
      %v10377 = vld [vmem:[%s10376] sm:$0x3]
      %v10378 = vunpack.c.l.b16 %v10005
      %v10379 = vunpack.c.l.b16 %v10015
      %v10380 = vunpack.c.l.b16 %v10029
      %v10381 = vunpack.c.l.b16 %v10039
      %v10382 = vunpack.c.l.b16 %v10053
      %v10383 = vunpack.c.l.b16 %v10063
      %v10384 = vunpack.c.l.b16 %v10077
      %v10385 = vunpack.c.l.b16 %v10087
      %v10386 = vunpack.c.l.b16 %v10101
      %v10387 = vunpack.c.l.b16 %v10111
      %v10388 = vunpack.c.l.b16 %v10125
      %v10389 = vunpack.c.l.b16 %v10135
      %v10390 = vunpack.c.l.b16 %v10149
      %v10391 = vunpack.c.l.b16 %v10159
      %v10392 = vunpack.c.l.b16 %v10173
      %v10393 = vunpack.c.l.b16 %v10183
      %v10394 = vunpack.c.l.b16 %v10197
      %v10395 = vunpack.c.l.b16 %v10207
      %v10396 = vunpack.c.l.b16 %v10221
      %v10397 = vunpack.c.l.b16 %v10231
      %v10398 = vunpack.c.l.b16 %v10245
      %v10399 = vunpack.c.l.b16 %v10255
      %v10400 = vunpack.c.l.b16 %v10269
      %v10401 = vunpack.c.l.b16 %v10279
      %v10402 = vunpack.c.l.b16 %v10293
      %v10403 = vunpack.c.l.b16 %v10303
      %v10404 = vunpack.c.l.b16 %v10317
      %v10405 = vunpack.c.l.b16 %v10327
      %v10406 = vunpack.c.l.b16 %v10341
      %v10407 = vunpack.c.l.b16 %v10351
      %v10408 = vunpack.c.l.b16 %v10365
      %v10409 = vunpack.c.l.b16 %v10375
      %v10410 = vpack.c.b16 %v10379, %v10378
      %v10411 = vpack.c.b16 %v10381, %v10380
      %v10412 = vpack.c.b16 %v10383, %v10382
      %v10413 = vpack.c.b16 %v10385, %v10384
      %v10414 = vpack.c.b16 %v10387, %v10386
      %v10415 = vpack.c.b16 %v10389, %v10388
      %v10416 = vpack.c.b16 %v10391, %v10390
      %v10417 = vpack.c.b16 %v10393, %v10392
      %v10418 = vpack.c.b16 %v10395, %v10394
      %v10419 = vpack.c.b16 %v10397, %v10396
      %v10420 = vpack.c.b16 %v10399, %v10398
      %v10421 = vpack.c.b16 %v10401, %v10400
      %v10422 = vpack.c.b16 %v10403, %v10402
      %v10423 = vpack.c.b16 %v10405, %v10404
      %v10424 = vpack.c.b16 %v10407, %v10406
      %v10425 = vpack.c.b16 %v10409, %v10408
      %v10427 = vsel %vm1444, %v10410, 0
      %v10430 = vsel %vm1444, %v10411, 0
      %v10433 = vsel %vm1444, %v10412, 0
      %v10436 = vsel %vm1444, %v10413, 0
      %v10439 = vsel %vm1444, %v10414, 0
      %v10442 = vsel %vm1444, %v10415, 0
      %v10445 = vsel %vm1444, %v10416, 0
      %v10448 = vsel %vm1444, %v10417, 0
      %v10451 = vsel %vm1444, %v10418, 0
      %v10454 = vsel %vm1444, %v10419, 0
      %v10457 = vsel %vm1444, %v10420, 0
      %v10460 = vsel %vm1444, %v10421, 0
      %v10463 = vsel %vm1444, %v10422, 0
      %v10466 = vsel %vm1444, %v10423, 0
      %v10469 = vsel %vm1444, %v10424, 0
      %v10472 = vsel %vm1444, %v10425, 0
      %v10475 = vsel %vm1493, %v10377, 0
      %10477 = vmatprep.subr.bf16.mxu0 0
      %10478 = vmatpush1.bf16.msra.mxu0 0
      %10479 = vmatprep.subr.bf16.mxu0 0
      %10480 = vmatpush1.bf16.msra.mxu0 0
      %10481 = vmatprep.subr.bf16.mxu0 0
      %10482 = vmatpush1.bf16.msra.mxu0 0
      %10483 = vmatprep.subr.bf16.mxu0 0
      %10484 = vmatpush1.bf16.msra.mxu0 0
      %10485 = vmatprep.subr.bf16.mxu0 0
      %10486 = vmatpush1.bf16.msra.mxu0 0
      %10487 = vmatprep.subr.bf16.mxu0 0
      %10488 = vmatpush1.bf16.msra.mxu0 0
      %10489 = vmatprep.subr.bf16.mxu0 0
      %10490 = vmatpush1.bf16.msra.mxu0 0
      %10491 = vmatprep.subr.bf16.mxu0 0
      %10492 = vmatpush1.bf16.msra.mxu0 %v10475
      %10493 = vmatprep.subr.bf16.mxu0 0
      %10494 = vmatpush2.bf16.msra.mxu0 0
      %10495 = vmatprep.subr.bf16.mxu0 0
      %10496 = vmatpush2.bf16.msra.mxu0 0
      %10497 = vmatprep.subr.bf16.mxu0 0
      %10498 = vmatpush2.bf16.msra.mxu0 0
      %10499 = vmatprep.subr.bf16.mxu0 0
      %10500 = vmatpush2.bf16.msra.mxu0 0
      %10501 = vmatprep.subr.bf16.mxu0 0
      %10502 = vmatpush2.bf16.msra.mxu0 0
      %10503 = vmatprep.subr.bf16.mxu0 0
      %10504 = vmatpush2.bf16.msra.mxu0 0
      %10505 = vmatprep.subr.bf16.mxu0 0
      %10506 = vmatpush2.bf16.msra.mxu0 0
      %10507 = vmatprep.subr.bf16.mxu0 0
      %10508 = vmatpush2.bf16.msra.mxu0 0
      %10509 = vmatprep.mubr.bf16.mxu0 0
      %10510 = vmatmul.mubr.bf16.gmra.mxu0 %v10427
      %v10511 = vpop.f32.mrf.mxu0
      %v10512 = vadd.f32 0.0, %v10511
      %v10513 = vpop.f32.mrf.mxu0
      %v10514 = vpop.f32.mrf.mxu0
      %v10515 = vadd.f32 0.0, %v10514
      %v10516 = vpop.f32.mrf.mxu0
      %10517 = vmatprep.mubr.bf16.mxu0 0
      %10518 = vmatmul.mubr.bf16.gmra.mxu0 %v10430
      %v10519 = vpop.f32.mrf.mxu0
      %v10520 = vadd.f32 0.0, %v10519
      %v10521 = vpop.f32.mrf.mxu0
      %v10522 = vpop.f32.mrf.mxu0
      %v10523 = vadd.f32 0.0, %v10522
      %v10524 = vpop.f32.mrf.mxu0
      %10525 = vmatprep.mubr.bf16.mxu0 0
      %10526 = vmatmul.mubr.bf16.gmra.mxu0 %v10433
      %v10527 = vpop.f32.mrf.mxu0
      %v10528 = vadd.f32 0.0, %v10527
      %v10529 = vpop.f32.mrf.mxu0
      %v10530 = vpop.f32.mrf.mxu0
      %v10531 = vadd.f32 0.0, %v10530
      %v10532 = vpop.f32.mrf.mxu0
      %10533 = vmatprep.mubr.bf16.mxu0 0
      %10534 = vmatmul.mubr.bf16.gmra.mxu0 %v10436
      %v10535 = vpop.f32.mrf.mxu0
      %v10536 = vadd.f32 0.0, %v10535
      %v10537 = vpop.f32.mrf.mxu0
      %v10538 = vpop.f32.mrf.mxu0
      %v10539 = vadd.f32 0.0, %v10538
      %v10540 = vpop.f32.mrf.mxu0
      %10541 = vmatprep.mubr.bf16.mxu0 0
      %10542 = vmatmul.mubr.bf16.gmra.mxu0 %v10439
      %v10543 = vpop.f32.mrf.mxu0
      %v10544 = vadd.f32 0.0, %v10543
      %v10545 = vpop.f32.mrf.mxu0
      %v10546 = vpop.f32.mrf.mxu0
      %v10547 = vadd.f32 0.0, %v10546
      %v10548 = vpop.f32.mrf.mxu0
      %10549 = vmatprep.mubr.bf16.mxu0 0
      %10550 = vmatmul.mubr.bf16.gmra.mxu0 %v10442
      %v10551 = vpop.f32.mrf.mxu0
      %v10552 = vadd.f32 0.0, %v10551
      %v10553 = vpop.f32.mrf.mxu0
      %v10554 = vpop.f32.mrf.mxu0
      %v10555 = vadd.f32 0.0, %v10554
      %v10556 = vpop.f32.mrf.mxu0
      %10557 = vmatprep.mubr.bf16.mxu0 0
      %10558 = vmatmul.mubr.bf16.gmra.mxu0 %v10445
      %v10559 = vpop.f32.mrf.mxu0
      %v10560 = vadd.f32 0.0, %v10559
      %v10561 = vpop.f32.mrf.mxu0
      %v10562 = vpop.f32.mrf.mxu0
      %v10563 = vadd.f32 0.0, %v10562
      %v10564 = vpop.f32.mrf.mxu0
      %10565 = vmatprep.mubr.bf16.mxu0 0
      %10566 = vmatmul.mubr.bf16.gmra.mxu0 %v10448
      %v10567 = vpop.f32.mrf.mxu0
      %v10568 = vadd.f32 0.0, %v10567
      %v10569 = vpop.f32.mrf.mxu0
      %v10570 = vpop.f32.mrf.mxu0
      %v10571 = vadd.f32 0.0, %v10570
      %v10572 = vpop.f32.mrf.mxu0
      %10573 = vmatprep.mubr.bf16.mxu0 0
      %10574 = vmatmul.mubr.bf16.gmra.mxu0 %v10451
      %v10575 = vpop.f32.mrf.mxu0
      %v10576 = vadd.f32 0.0, %v10575
      %v10577 = vpop.f32.mrf.mxu0
      %v10578 = vpop.f32.mrf.mxu0
      %v10579 = vadd.f32 0.0, %v10578
      %v10580 = vpop.f32.mrf.mxu0
      %10581 = vmatprep.mubr.bf16.mxu0 0
      %10582 = vmatmul.mubr.bf16.gmra.mxu0 %v10454
      %v10583 = vpop.f32.mrf.mxu0
      %v10584 = vadd.f32 0.0, %v10583
      %v10585 = vpop.f32.mrf.mxu0
      %v10586 = vpop.f32.mrf.mxu0
      %v10587 = vadd.f32 0.0, %v10586
      %v10588 = vpop.f32.mrf.mxu0
      %10589 = vmatprep.mubr.bf16.mxu0 0
      %10590 = vmatmul.mubr.bf16.gmra.mxu0 %v10457
      %v10591 = vpop.f32.mrf.mxu0
      %v10592 = vadd.f32 0.0, %v10591
      %v10593 = vpop.f32.mrf.mxu0
      %v10594 = vpop.f32.mrf.mxu0
      %v10595 = vadd.f32 0.0, %v10594
      %v10596 = vpop.f32.mrf.mxu0
      %10597 = vmatprep.mubr.bf16.mxu0 0
      %10598 = vmatmul.mubr.bf16.gmra.mxu0 %v10460
      %v10599 = vpop.f32.mrf.mxu0
      %v10600 = vadd.f32 0.0, %v10599
      %v10601 = vpop.f32.mrf.mxu0
      %v10602 = vpop.f32.mrf.mxu0
      %v10603 = vadd.f32 0.0, %v10602
      %v10604 = vpop.f32.mrf.mxu0
      %10605 = vmatprep.mubr.bf16.mxu0 0
      %10606 = vmatmul.mubr.bf16.gmra.mxu0 %v10463
      %v10607 = vpop.f32.mrf.mxu0
      %v10608 = vadd.f32 0.0, %v10607
      %v10609 = vpop.f32.mrf.mxu0
      %v10610 = vpop.f32.mrf.mxu0
      %v10611 = vadd.f32 0.0, %v10610
      %v10612 = vpop.f32.mrf.mxu0
      %10613 = vmatprep.mubr.bf16.mxu0 0
      %10614 = vmatmul.mubr.bf16.gmra.mxu0 %v10466
      %v10615 = vpop.f32.mrf.mxu0
      %v10616 = vadd.f32 0.0, %v10615
      %v10617 = vpop.f32.mrf.mxu0
      %v10618 = vpop.f32.mrf.mxu0
      %v10619 = vadd.f32 0.0, %v10618
      %v10620 = vpop.f32.mrf.mxu0
      %10621 = vmatprep.mubr.bf16.mxu0 0
      %10622 = vmatmul.mubr.bf16.gmra.mxu0 %v10469
      %v10623 = vpop.f32.mrf.mxu0
      %v10624 = vadd.f32 0.0, %v10623
      %v10625 = vpop.f32.mrf.mxu0
      %v10626 = vpop.f32.mrf.mxu0
      %v10627 = vadd.f32 0.0, %v10626
      %v10628 = vpop.f32.mrf.mxu0
      %10629 = vmatprep.mubr.bf16.mxu0 0
      %10630 = vmatmul.mubr.bf16.gmra.mxu0 %v10472
      %v10631 = vpop.f32.mrf.mxu0
      %v10632 = vadd.f32 0.0, %v10631
      %v10633 = vpop.f32.mrf.mxu0
      %v10634 = vpop.f32.mrf.mxu0
      %v10635 = vadd.f32 0.0, %v10634
      %v10636 = vpop.f32.mrf.mxu0
      %10637 = vdwg.mxu0
      %v10638 = vadd.f32 %v9912, %v10512
      %v10639 = vadd.f32 %v9913, %v10515
      %v10640 = vadd.f32 %v9914, %v10520
      %v10641 = vadd.f32 %v9915, %v10523
      %v10642 = vadd.f32 %v9916, %v10528
      %v10643 = vadd.f32 %v9917, %v10531
      %v10644 = vadd.f32 %v9918, %v10536
      %v10645 = vadd.f32 %v9919, %v10539
      %v10646 = vadd.f32 %v9920, %v10544
      %v10647 = vadd.f32 %v9921, %v10547
      %v10648 = vadd.f32 %v9922, %v10552
      %v10649 = vadd.f32 %v9923, %v10555
      %v10650 = vadd.f32 %v9924, %v10560
      %v10651 = vadd.f32 %v9925, %v10563
      %v10652 = vadd.f32 %v9926, %v10568
      %v10653 = vadd.f32 %v9927, %v10571
      %v10654 = vadd.f32 %v9928, %v10576
      %v10655 = vadd.f32 %v9929, %v10579
      %v10656 = vadd.f32 %v9930, %v10584
      %v10657 = vadd.f32 %v9931, %v10587
      %v10658 = vadd.f32 %v9932, %v10592
      %v10659 = vadd.f32 %v9933, %v10595
      %v10660 = vadd.f32 %v9934, %v10600
      %v10661 = vadd.f32 %v9935, %v10603
      %v10662 = vadd.f32 %v9936, %v10608
      %v10663 = vadd.f32 %v9937, %v10611
      %v10664 = vadd.f32 %v9938, %v10616
      %v10665 = vadd.f32 %v9939, %v10619
      %v10666 = vadd.f32 %v9940, %v10624
      %v10667 = vadd.f32 %v9941, %v10627
      %v10668 = vadd.f32 %v9942, %v10632
      %v10669 = vadd.f32 %v9943, %v10635
      %v10670 = vld [vmem:[%s3964] sm:$0xe]
      %v10671 = vld [vmem:[%s3964 + $0xc] sm:$0xe]
      %v10672 = vld [vmem:[%s3964 + $0x18] sm:$0xe]
      %v10673 = vld [vmem:[%s3964 + $0x24] sm:$0xe]
      %v10674 = vld [vmem:[%s3964 + $0x30] sm:$0xe]
      %v10675 = vld [vmem:[%s3964 + $0x3c] sm:$0xe]
      %v10676 = vld [vmem:[%s3964 + $0x48] sm:$0xe]
      %v10677 = vld [vmem:[%s3964 + $0x54] sm:$0xe]
      %v10678 = vld [vmem:[%s3964 + $0x60] sm:$0xe]
      %v10679 = vld [vmem:[%s3964 + $0x6c] sm:$0xe]
      %v10680 = vld [vmem:[%s3964 + $0x78] sm:$0xe]
      %v10681 = vld [vmem:[%s3964 + $0x84] sm:$0xe]
      %v10682 = vld [vmem:[%s3964 + $0x90] sm:$0xe]
      %v10683 = vld [vmem:[%s3964 + $0x9c] sm:$0xe]
      %v10684 = vld [vmem:[%s3964 + $0xa8] sm:$0xe]
      %v10685 = vld [vmem:[%s3964 + $0xb4] sm:$0xe]
      %v10734 = vrot.slane %v10670, 5
      %v10735 = vrot.slane %v10734, 4
      %v10736 = vrot.slane %v9945, 5
      %v10737 = vsel %vm2000, %v10735, %v10736
      %v10738 = vrot.slane %v10736, 4
      %v10739 = vrot.slane %v9946, 5
      %v10740 = vsel %vm2000, %v10738, %v10739
      %v10741 = vrot.slane %v10671, 5
      %v10742 = vrot.slane %v10741, 4
      %v10743 = vrot.slane %v9948, 5
      %v10744 = vsel %vm2000, %v10742, %v10743
      %v10745 = vrot.slane %v10743, 4
      %v10746 = vrot.slane %v9949, 5
      %v10747 = vsel %vm2000, %v10745, %v10746
      %v10748 = vrot.slane %v10672, 5
      %v10749 = vrot.slane %v10748, 4
      %v10750 = vrot.slane %v9951, 5
      %v10751 = vsel %vm2000, %v10749, %v10750
      %v10752 = vrot.slane %v10750, 4
      %v10753 = vrot.slane %v9952, 5
      %v10754 = vsel %vm2000, %v10752, %v10753
      %v10755 = vrot.slane %v10673, 5
      %v10756 = vrot.slane %v10755, 4
      %v10757 = vrot.slane %v9954, 5
      %v10758 = vsel %vm2000, %v10756, %v10757
      %v10759 = vrot.slane %v10757, 4
      %v10760 = vrot.slane %v9955, 5
      %v10761 = vsel %vm2000, %v10759, %v10760
      %v10762 = vrot.slane %v10674, 5
      %v10763 = vrot.slane %v10762, 4
      %v10764 = vrot.slane %v9957, 5
      %v10765 = vsel %vm2000, %v10763, %v10764
      %v10766 = vrot.slane %v10764, 4
      %v10767 = vrot.slane %v9958, 5
      %v10768 = vsel %vm2000, %v10766, %v10767
      %v10769 = vrot.slane %v10675, 5
      %v10770 = vrot.slane %v10769, 4
      %v10771 = vrot.slane %v9960, 5
      %v10772 = vsel %vm2000, %v10770, %v10771
      %v10773 = vrot.slane %v10771, 4
      %v10774 = vrot.slane %v9961, 5
      %v10775 = vsel %vm2000, %v10773, %v10774
      %v10776 = vrot.slane %v10676, 5
      %v10777 = vrot.slane %v10776, 4
      %v10778 = vrot.slane %v9963, 5
      %v10779 = vsel %vm2000, %v10777, %v10778
      %v10780 = vrot.slane %v10778, 4
      %v10781 = vrot.slane %v9964, 5
      %v10782 = vsel %vm2000, %v10780, %v10781
      %v10783 = vrot.slane %v10677, 5
      %v10784 = vrot.slane %v10783, 4
      %v10785 = vrot.slane %v9966, 5
      %v10786 = vsel %vm2000, %v10784, %v10785
      %v10787 = vrot.slane %v10785, 4
      %v10788 = vrot.slane %v9967, 5
      %v10789 = vsel %vm2000, %v10787, %v10788
      %v10790 = vrot.slane %v10678, 5
      %v10791 = vrot.slane %v10790, 4
      %v10792 = vrot.slane %v9969, 5
      %v10793 = vsel %vm2000, %v10791, %v10792
      %v10794 = vrot.slane %v10792, 4
      %v10795 = vrot.slane %v9970, 5
      %v10796 = vsel %vm2000, %v10794, %v10795
      %v10797 = vrot.slane %v10679, 5
      %v10798 = vrot.slane %v10797, 4
      %v10799 = vrot.slane %v9972, 5
      %v10800 = vsel %vm2000, %v10798, %v10799
      %v10801 = vrot.slane %v10799, 4
      %v10802 = vrot.slane %v9973, 5
      %v10803 = vsel %vm2000, %v10801, %v10802
      %v10804 = vrot.slane %v10680, 5
      %v10805 = vrot.slane %v10804, 4
      %v10806 = vrot.slane %v9975, 5
      %v10807 = vsel %vm2000, %v10805, %v10806
      %v10808 = vrot.slane %v10806, 4
      %v10809 = vrot.slane %v9976, 5
      %v10810 = vsel %vm2000, %v10808, %v10809
      %v10811 = vrot.slane %v10681, 5
      %v10812 = vrot.slane %v10811, 4
      %v10813 = vrot.slane %v9978, 5
      %v10814 = vsel %vm2000, %v10812, %v10813
      %v10815 = vrot.slane %v10813, 4
      %v10816 = vrot.slane %v9979, 5
      %v10817 = vsel %vm2000, %v10815, %v10816
      %v10818 = vrot.slane %v10682, 5
      %v10819 = vrot.slane %v10818, 4
      %v10820 = vrot.slane %v9981, 5
      %v10821 = vsel %vm2000, %v10819, %v10820
      %v10822 = vrot.slane %v10820, 4
      %v10823 = vrot.slane %v9982, 5
      %v10824 = vsel %vm2000, %v10822, %v10823
      %v10825 = vrot.slane %v10683, 5
      %v10826 = vrot.slane %v10825, 4
      %v10827 = vrot.slane %v9984, 5
      %v10828 = vsel %vm2000, %v10826, %v10827
      %v10829 = vrot.slane %v10827, 4
      %v10830 = vrot.slane %v9985, 5
      %v10831 = vsel %vm2000, %v10829, %v10830
      %v10832 = vrot.slane %v10684, 5
      %v10833 = vrot.slane %v10832, 4
      %v10834 = vrot.slane %v9987, 5
      %v10835 = vsel %vm2000, %v10833, %v10834
      %v10836 = vrot.slane %v10834, 4
      %v10837 = vrot.slane %v9988, 5
      %v10838 = vsel %vm2000, %v10836, %v10837
      %v10839 = vrot.slane %v10685, 5
      %v10840 = vrot.slane %v10839, 4
      %v10841 = vrot.slane %v9990, 5
      %v10842 = vsel %vm2000, %v10840, %v10841
      %v10843 = vrot.slane %v10841, 4
      %v10844 = vrot.slane %v9991, 5
      %v10845 = vsel %vm2000, %v10843, %v10844
      %s10846 = scalar_lea.vmem %s2, 16
      %v10847 = vld [vmem:[%s10846] sm:$0x3]
      %v10848 = vunpack.c.l.b16 %v10737
      %v10849 = vunpack.c.l.b16 %v10740
      %v10850 = vunpack.c.l.b16 %v10744
      %v10851 = vunpack.c.l.b16 %v10747
      %v10852 = vunpack.c.l.b16 %v10751
      %v10853 = vunpack.c.l.b16 %v10754
      %v10854 = vunpack.c.l.b16 %v10758
      %v10855 = vunpack.c.l.b16 %v10761
      %v10856 = vunpack.c.l.b16 %v10765
      %v10857 = vunpack.c.l.b16 %v10768
      %v10858 = vunpack.c.l.b16 %v10772
      %v10859 = vunpack.c.l.b16 %v10775
      %v10860 = vunpack.c.l.b16 %v10779
      %v10861 = vunpack.c.l.b16 %v10782
      %v10862 = vunpack.c.l.b16 %v10786
      %v10863 = vunpack.c.l.b16 %v10789
      %v10864 = vunpack.c.l.b16 %v10793
      %v10865 = vunpack.c.l.b16 %v10796
      %v10866 = vunpack.c.l.b16 %v10800
      %v10867 = vunpack.c.l.b16 %v10803
      %v10868 = vunpack.c.l.b16 %v10807
      %v10869 = vunpack.c.l.b16 %v10810
      %v10870 = vunpack.c.l.b16 %v10814
      %v10871 = vunpack.c.l.b16 %v10817
      %v10872 = vunpack.c.l.b16 %v10821
      %v10873 = vunpack.c.l.b16 %v10824
      %v10874 = vunpack.c.l.b16 %v10828
      %v10875 = vunpack.c.l.b16 %v10831
      %v10876 = vunpack.c.l.b16 %v10835
      %v10877 = vunpack.c.l.b16 %v10838
      %v10878 = vunpack.c.l.b16 %v10842
      %v10879 = vunpack.c.l.b16 %v10845
      %v10880 = vpack.c.b16 %v10849, %v10848
      %v10881 = vpack.c.b16 %v10851, %v10850
      %v10882 = vpack.c.b16 %v10853, %v10852
      %v10883 = vpack.c.b16 %v10855, %v10854
      %v10884 = vpack.c.b16 %v10857, %v10856
      %v10885 = vpack.c.b16 %v10859, %v10858
      %v10886 = vpack.c.b16 %v10861, %v10860
      %v10887 = vpack.c.b16 %v10863, %v10862
      %v10888 = vpack.c.b16 %v10865, %v10864
      %v10889 = vpack.c.b16 %v10867, %v10866
      %v10890 = vpack.c.b16 %v10869, %v10868
      %v10891 = vpack.c.b16 %v10871, %v10870
      %v10892 = vpack.c.b16 %v10873, %v10872
      %v10893 = vpack.c.b16 %v10875, %v10874
      %v10894 = vpack.c.b16 %v10877, %v10876
      %v10895 = vpack.c.b16 %v10879, %v10878
      %v10897 = vsel %vm1444, %v10880, 0
      %v10900 = vsel %vm1444, %v10881, 0
      %v10903 = vsel %vm1444, %v10882, 0
      %v10906 = vsel %vm1444, %v10883, 0
      %v10909 = vsel %vm1444, %v10884, 0
      %v10912 = vsel %vm1444, %v10885, 0
      %v10915 = vsel %vm1444, %v10886, 0
      %v10918 = vsel %vm1444, %v10887, 0
      %v10921 = vsel %vm1444, %v10888, 0
      %v10924 = vsel %vm1444, %v10889, 0
      %v10927 = vsel %vm1444, %v10890, 0
      %v10930 = vsel %vm1444, %v10891, 0
      %v10933 = vsel %vm1444, %v10892, 0
      %v10936 = vsel %vm1444, %v10893, 0
      %v10939 = vsel %vm1444, %v10894, 0
      %v10942 = vsel %vm1444, %v10895, 0
      %v10945 = vsel %vm1493, %v10847, 0
      %10947 = vmatprep.subr.bf16.mxu0 0
      %10948 = vmatpush1.bf16.msra.mxu0 0
      %10949 = vmatprep.subr.bf16.mxu0 0
      %10950 = vmatpush1.bf16.msra.mxu0 0
      %10951 = vmatprep.subr.bf16.mxu0 0
      %10952 = vmatpush1.bf16.msra.mxu0 0
      %10953 = vmatprep.subr.bf16.mxu0 0
      %10954 = vmatpush1.bf16.msra.mxu0 0
      %10955 = vmatprep.subr.bf16.mxu0 0
      %10956 = vmatpush1.bf16.msra.mxu0 0
      %10957 = vmatprep.subr.bf16.mxu0 0
      %10958 = vmatpush1.bf16.msra.mxu0 0
      %10959 = vmatprep.subr.bf16.mxu0 0
      %10960 = vmatpush1.bf16.msra.mxu0 0
      %10961 = vmatprep.subr.bf16.mxu0 0
      %10962 = vmatpush1.bf16.msra.mxu0 %v10945
      %10963 = vmatprep.subr.bf16.mxu0 0
      %10964 = vmatpush2.bf16.msra.mxu0 0
      %10965 = vmatprep.subr.bf16.mxu0 0
      %10966 = vmatpush2.bf16.msra.mxu0 0
      %10967 = vmatprep.subr.bf16.mxu0 0
      %10968 = vmatpush2.bf16.msra.mxu0 0
      %10969 = vmatprep.subr.bf16.mxu0 0
      %10970 = vmatpush2.bf16.msra.mxu0 0
      %10971 = vmatprep.subr.bf16.mxu0 0
      %10972 = vmatpush2.bf16.msra.mxu0 0
      %10973 = vmatprep.subr.bf16.mxu0 0
      %10974 = vmatpush2.bf16.msra.mxu0 0
      %10975 = vmatprep.subr.bf16.mxu0 0
      %10976 = vmatpush2.bf16.msra.mxu0 0
      %10977 = vmatprep.subr.bf16.mxu0 0
      %10978 = vmatpush2.bf16.msra.mxu0 0
      %10979 = vmatprep.mubr.bf16.mxu0 0
      %10980 = vmatmul.mubr.bf16.gmra.mxu0 %v10897
      %v10981 = vpop.f32.mrf.mxu0
      %v10982 = vadd.f32 0.0, %v10981
      %v10983 = vpop.f32.mrf.mxu0
      %v10984 = vpop.f32.mrf.mxu0
      %v10985 = vadd.f32 0.0, %v10984
      %v10986 = vpop.f32.mrf.mxu0
      %10987 = vmatprep.mubr.bf16.mxu0 0
      %10988 = vmatmul.mubr.bf16.gmra.mxu0 %v10900
      %v10989 = vpop.f32.mrf.mxu0
      %v10990 = vadd.f32 0.0, %v10989
      %v10991 = vpop.f32.mrf.mxu0
      %v10992 = vpop.f32.mrf.mxu0
      %v10993 = vadd.f32 0.0, %v10992
      %v10994 = vpop.f32.mrf.mxu0
      %10995 = vmatprep.mubr.bf16.mxu0 0
      %10996 = vmatmul.mubr.bf16.gmra.mxu0 %v10903
      %v10997 = vpop.f32.mrf.mxu0
      %v10998 = vadd.f32 0.0, %v10997
      %v10999 = vpop.f32.mrf.mxu0
      %v11000 = vpop.f32.mrf.mxu0
      %v11001 = vadd.f32 0.0, %v11000
      %v11002 = vpop.f32.mrf.mxu0
      %11003 = vmatprep.mubr.bf16.mxu0 0
      %11004 = vmatmul.mubr.bf16.gmra.mxu0 %v10906
      %v11005 = vpop.f32.mrf.mxu0
      %v11006 = vadd.f32 0.0, %v11005
      %v11007 = vpop.f32.mrf.mxu0
      %v11008 = vpop.f32.mrf.mxu0
      %v11009 = vadd.f32 0.0, %v11008
      %v11010 = vpop.f32.mrf.mxu0
      %11011 = vmatprep.mubr.bf16.mxu0 0
      %11012 = vmatmul.mubr.bf16.gmra.mxu0 %v10909
      %v11013 = vpop.f32.mrf.mxu0
      %v11014 = vadd.f32 0.0, %v11013
      %v11015 = vpop.f32.mrf.mxu0
      %v11016 = vpop.f32.mrf.mxu0
      %v11017 = vadd.f32 0.0, %v11016
      %v11018 = vpop.f32.mrf.mxu0
      %11019 = vmatprep.mubr.bf16.mxu0 0
      %11020 = vmatmul.mubr.bf16.gmra.mxu0 %v10912
      %v11021 = vpop.f32.mrf.mxu0
      %v11022 = vadd.f32 0.0, %v11021
      %v11023 = vpop.f32.mrf.mxu0
      %v11024 = vpop.f32.mrf.mxu0
      %v11025 = vadd.f32 0.0, %v11024
      %v11026 = vpop.f32.mrf.mxu0
      %11027 = vmatprep.mubr.bf16.mxu0 0
      %11028 = vmatmul.mubr.bf16.gmra.mxu0 %v10915
      %v11029 = vpop.f32.mrf.mxu0
      %v11030 = vadd.f32 0.0, %v11029
      %v11031 = vpop.f32.mrf.mxu0
      %v11032 = vpop.f32.mrf.mxu0
      %v11033 = vadd.f32 0.0, %v11032
      %v11034 = vpop.f32.mrf.mxu0
      %11035 = vmatprep.mubr.bf16.mxu0 0
      %11036 = vmatmul.mubr.bf16.gmra.mxu0 %v10918
      %v11037 = vpop.f32.mrf.mxu0
      %v11038 = vadd.f32 0.0, %v11037
      %v11039 = vpop.f32.mrf.mxu0
      %v11040 = vpop.f32.mrf.mxu0
      %v11041 = vadd.f32 0.0, %v11040
      %v11042 = vpop.f32.mrf.mxu0
      %11043 = vmatprep.mubr.bf16.mxu0 0
      %11044 = vmatmul.mubr.bf16.gmra.mxu0 %v10921
      %v11045 = vpop.f32.mrf.mxu0
      %v11046 = vadd.f32 0.0, %v11045
      %v11047 = vpop.f32.mrf.mxu0
      %v11048 = vpop.f32.mrf.mxu0
      %v11049 = vadd.f32 0.0, %v11048
      %v11050 = vpop.f32.mrf.mxu0
      %11051 = vmatprep.mubr.bf16.mxu0 0
      %11052 = vmatmul.mubr.bf16.gmra.mxu0 %v10924
      %v11053 = vpop.f32.mrf.mxu0
      %v11054 = vadd.f32 0.0, %v11053
      %v11055 = vpop.f32.mrf.mxu0
      %v11056 = vpop.f32.mrf.mxu0
      %v11057 = vadd.f32 0.0, %v11056
      %v11058 = vpop.f32.mrf.mxu0
      %11059 = vmatprep.mubr.bf16.mxu0 0
      %11060 = vmatmul.mubr.bf16.gmra.mxu0 %v10927
      %v11061 = vpop.f32.mrf.mxu0
      %v11062 = vadd.f32 0.0, %v11061
      %v11063 = vpop.f32.mrf.mxu0
      %v11064 = vpop.f32.mrf.mxu0
      %v11065 = vadd.f32 0.0, %v11064
      %v11066 = vpop.f32.mrf.mxu0
      %11067 = vmatprep.mubr.bf16.mxu0 0
      %11068 = vmatmul.mubr.bf16.gmra.mxu0 %v10930
      %v11069 = vpop.f32.mrf.mxu0
      %v11070 = vadd.f32 0.0, %v11069
      %v11071 = vpop.f32.mrf.mxu0
      %v11072 = vpop.f32.mrf.mxu0
      %v11073 = vadd.f32 0.0, %v11072
      %v11074 = vpop.f32.mrf.mxu0
      %11075 = vmatprep.mubr.bf16.mxu0 0
      %11076 = vmatmul.mubr.bf16.gmra.mxu0 %v10933
      %v11077 = vpop.f32.mrf.mxu0
      %v11078 = vadd.f32 0.0, %v11077
      %v11079 = vpop.f32.mrf.mxu0
      %v11080 = vpop.f32.mrf.mxu0
      %v11081 = vadd.f32 0.0, %v11080
      %v11082 = vpop.f32.mrf.mxu0
      %11083 = vmatprep.mubr.bf16.mxu0 0
      %11084 = vmatmul.mubr.bf16.gmra.mxu0 %v10936
      %v11085 = vpop.f32.mrf.mxu0
      %v11086 = vadd.f32 0.0, %v11085
      %v11087 = vpop.f32.mrf.mxu0
      %v11088 = vpop.f32.mrf.mxu0
      %v11089 = vadd.f32 0.0, %v11088
      %v11090 = vpop.f32.mrf.mxu0
      %11091 = vmatprep.mubr.bf16.mxu0 0
      %11092 = vmatmul.mubr.bf16.gmra.mxu0 %v10939
      %v11093 = vpop.f32.mrf.mxu0
      %v11094 = vadd.f32 0.0, %v11093
      %v11095 = vpop.f32.mrf.mxu0
      %v11096 = vpop.f32.mrf.mxu0
      %v11097 = vadd.f32 0.0, %v11096
      %v11098 = vpop.f32.mrf.mxu0
      %11099 = vmatprep.mubr.bf16.mxu0 0
      %11100 = vmatmul.mubr.bf16.gmra.mxu0 %v10942
      %v11101 = vpop.f32.mrf.mxu0
      %v11102 = vadd.f32 0.0, %v11101
      %v11103 = vpop.f32.mrf.mxu0
      %v11104 = vpop.f32.mrf.mxu0
      %v11105 = vadd.f32 0.0, %v11104
      %v11106 = vpop.f32.mrf.mxu0
      %11107 = vdwg.mxu0
      %v11108 = vadd.f32 %v10638, %v10982
      %v11109 = vadd.f32 %v10639, %v10985
      %v11110 = vadd.f32 %v10640, %v10990
      %v11111 = vadd.f32 %v10641, %v10993
      %v11112 = vadd.f32 %v10642, %v10998
      %v11113 = vadd.f32 %v10643, %v11001
      %v11114 = vadd.f32 %v10644, %v11006
      %v11115 = vadd.f32 %v10645, %v11009
      %v11116 = vadd.f32 %v10646, %v11014
      %v11117 = vadd.f32 %v10647, %v11017
      %v11118 = vadd.f32 %v10648, %v11022
      %v11119 = vadd.f32 %v10649, %v11025
      %v11120 = vadd.f32 %v10650, %v11030
      %v11121 = vadd.f32 %v10651, %v11033
      %v11122 = vadd.f32 %v10652, %v11038
      %v11123 = vadd.f32 %v10653, %v11041
      %v11124 = vadd.f32 %v10654, %v11046
      %v11125 = vadd.f32 %v10655, %v11049
      %v11126 = vadd.f32 %v10656, %v11054
      %v11127 = vadd.f32 %v10657, %v11057
      %v11128 = vadd.f32 %v10658, %v11062
      %v11129 = vadd.f32 %v10659, %v11065
      %v11130 = vadd.f32 %v10660, %v11070
      %v11131 = vadd.f32 %v10661, %v11073
      %v11132 = vadd.f32 %v10662, %v11078
      %v11133 = vadd.f32 %v10663, %v11081
      %v11134 = vadd.f32 %v10664, %v11086
      %v11135 = vadd.f32 %v10665, %v11089
      %v11136 = vadd.f32 %v10666, %v11094
      %v11137 = vadd.f32 %v10667, %v11097
      %v11138 = vadd.f32 %v10668, %v11102
      %v11139 = vadd.f32 %v10669, %v11105
      %11140 = vst.msk [vmem:[%s5519] sm:$0xff] %vm1444, %v11108
      %11141 = vst.msk [vmem:[%s5519 + $0x8] sm:$0xff] %vm1444, %v11109
      %11142 = vst.msk [vmem:[%s5519 + $0x10] sm:$0xff] %vm1444, %v11110
      %11143 = vst.msk [vmem:[%s5519 + $0x18] sm:$0xff] %vm1444, %v11111
      %11144 = vst.msk [vmem:[%s5519 + $0x20] sm:$0xff] %vm1444, %v11112
      %11145 = vst.msk [vmem:[%s5519 + $0x28] sm:$0xff] %vm1444, %v11113
      %11146 = vst.msk [vmem:[%s5519 + $0x30] sm:$0xff] %vm1444, %v11114
      %11147 = vst.msk [vmem:[%s5519 + $0x38] sm:$0xff] %vm1444, %v11115
      %11148 = vst.msk [vmem:[%s5519 + $0x40] sm:$0xff] %vm1444, %v11116
      %11149 = vst.msk [vmem:[%s5519 + $0x48] sm:$0xff] %vm1444, %v11117
      %11150 = vst.msk [vmem:[%s5519 + $0x50] sm:$0xff] %vm1444, %v11118
      %11151 = vst.msk [vmem:[%s5519 + $0x58] sm:$0xff] %vm1444, %v11119
      %11152 = vst.msk [vmem:[%s5519 + $0x60] sm:$0xff] %vm1444, %v11120
      %11153 = vst.msk [vmem:[%s5519 + $0x68] sm:$0xff] %vm1444, %v11121
      %11154 = vst.msk [vmem:[%s5519 + $0x70] sm:$0xff] %vm1444, %v11122
      %11155 = vst.msk [vmem:[%s5519 + $0x78] sm:$0xff] %vm1444, %v11123
      %11156 = vst.msk [vmem:[%s5519 + $0x80] sm:$0xff] %vm1444, %v11124
      %11157 = vst.msk [vmem:[%s5519 + $0x88] sm:$0xff] %vm1444, %v11125
      %11158 = vst.msk [vmem:[%s5519 + $0x90] sm:$0xff] %vm1444, %v11126
      %11159 = vst.msk [vmem:[%s5519 + $0x98] sm:$0xff] %vm1444, %v11127
      %11160 = vst.msk [vmem:[%s5519 + $0xa0] sm:$0xff] %vm1444, %v11128
      %11161 = vst.msk [vmem:[%s5519 + $0xa8] sm:$0xff] %vm1444, %v11129
      %11162 = vst.msk [vmem:[%s5519 + $0xb0] sm:$0xff] %vm1444, %v11130
      %11163 = vst.msk [vmem:[%s5519 + $0xb8] sm:$0xff] %vm1444, %v11131
      %11164 = vst.msk [vmem:[%s5519 + $0xc0] sm:$0xff] %vm1444, %v11132
      %11165 = vst.msk [vmem:[%s5519 + $0xc8] sm:$0xff] %vm1444, %v11133
      %11166 = vst.msk [vmem:[%s5519 + $0xd0] sm:$0xff] %vm1444, %v11134
      %11167 = vst.msk [vmem:[%s5519 + $0xd8] sm:$0xff] %vm1444, %v11135
      %11168 = vst.msk [vmem:[%s5519 + $0xe0] sm:$0xff] %vm1444, %v11136
      %11169 = vst.msk [vmem:[%s5519 + $0xe8] sm:$0xff] %vm1444, %v11137
      %11170 = vst.msk [vmem:[%s5519 + $0xf0] sm:$0xff] %vm1444, %v11138
      %11171 = vst.msk [vmem:[%s5519 + $0xf8] sm:$0xff] %vm1444, %v11139
      %v11172 = vsel %vm1444, %v11108, 0.0
      %v11173 = vsel %vm1444, %v11109, 0.0
      %v11174 = vadd.f32 %v11172, %v11173
      %v11175 = vsel %vm1444, %v11110, 0.0
      %v11176 = vadd.f32 %v11174, %v11175
      %v11177 = vsel %vm1444, %v11111, 0.0
      %v11178 = vadd.f32 %v11176, %v11177
      %v11179 = vsel %vm1444, %v11112, 0.0
      %v11180 = vadd.f32 %v11178, %v11179
      %v11181 = vsel %vm1444, %v11113, 0.0
      %v11182 = vadd.f32 %v11180, %v11181
      %v11183 = vsel %vm1444, %v11114, 0.0
      %v11184 = vadd.f32 %v11182, %v11183
      %v11185 = vsel %vm1444, %v11115, 0.0
      %v11186 = vadd.f32 %v11184, %v11185
      %v11187 = vsel %vm1444, %v11116, 0.0
      %v11188 = vadd.f32 %v11186, %v11187
      %v11189 = vsel %vm1444, %v11117, 0.0
      %v11190 = vadd.f32 %v11188, %v11189
      %v11191 = vsel %vm1444, %v11118, 0.0
      %v11192 = vadd.f32 %v11190, %v11191
      %v11193 = vsel %vm1444, %v11119, 0.0
      %v11194 = vadd.f32 %v11192, %v11193
      %v11195 = vsel %vm1444, %v11120, 0.0
      %v11196 = vadd.f32 %v11194, %v11195
      %v11197 = vsel %vm1444, %v11121, 0.0
      %v11198 = vadd.f32 %v11196, %v11197
      %v11199 = vsel %vm1444, %v11122, 0.0
      %v11200 = vadd.f32 %v11198, %v11199
      %v11201 = vsel %vm1444, %v11123, 0.0
      %v11202 = vadd.f32 %v11200, %v11201
      %v11203 = vsel %vm1444, %v11124, 0.0
      %v11204 = vadd.f32 %v11202, %v11203
      %v11205 = vsel %vm1444, %v11125, 0.0
      %v11206 = vadd.f32 %v11204, %v11205
      %v11207 = vsel %vm1444, %v11126, 0.0
      %v11208 = vadd.f32 %v11206, %v11207
      %v11209 = vsel %vm1444, %v11127, 0.0
      %v11210 = vadd.f32 %v11208, %v11209
      %v11211 = vsel %vm1444, %v11128, 0.0
      %v11212 = vadd.f32 %v11210, %v11211
      %v11213 = vsel %vm1444, %v11129, 0.0
      %v11214 = vadd.f32 %v11212, %v11213
      %v11215 = vsel %vm1444, %v11130, 0.0
      %v11216 = vadd.f32 %v11214, %v11215
      %v11217 = vsel %vm1444, %v11131, 0.0
      %v11218 = vadd.f32 %v11216, %v11217
      %v11219 = vsel %vm1444, %v11132, 0.0
      %v11220 = vadd.f32 %v11218, %v11219
      %v11221 = vsel %vm1444, %v11133, 0.0
      %v11222 = vadd.f32 %v11220, %v11221
      %v11223 = vsel %vm1444, %v11134, 0.0
      %v11224 = vadd.f32 %v11222, %v11223
      %v11225 = vsel %vm1444, %v11135, 0.0
      %v11226 = vadd.f32 %v11224, %v11225
      %v11227 = vsel %vm1444, %v11136, 0.0
      %v11228 = vadd.f32 %v11226, %v11227
      %v11229 = vsel %vm1444, %v11137, 0.0
      %v11230 = vadd.f32 %v11228, %v11229
      %v11231 = vsel %vm1444, %v11138, 0.0
      %v11232 = vadd.f32 %v11230, %v11231
      %v11233 = vsel %vm1444, %v11139, 0.0
      %v11234 = vadd.f32 %v11232, %v11233
      %v11235 = vrot.slane %v11234, 4
      %v11236 = vadd.f32 %v11234, %v11235
      %v11237 = vrot.slane %v11236, 2
      %v11238 = vadd.f32 %v11236, %v11237
      %v11239 = vrot.slane %v11238, 1
      %v11240 = vadd.f32 %v11238, %v11239
      %v11241 = vadd.f32 %v11240, 0.0
      %v11242 = vmul.f32 %v11108, %v11108
      %v11243 = vmul.f32 %v11109, %v11109
      %v11244 = vmul.f32 %v11110, %v11110
      %v11245 = vmul.f32 %v11111, %v11111
      %v11246 = vmul.f32 %v11112, %v11112
      %v11247 = vmul.f32 %v11113, %v11113
      %v11248 = vmul.f32 %v11114, %v11114
      %v11249 = vmul.f32 %v11115, %v11115
      %v11250 = vmul.f32 %v11116, %v11116
      %v11251 = vmul.f32 %v11117, %v11117
      %v11252 = vmul.f32 %v11118, %v11118
      %v11253 = vmul.f32 %v11119, %v11119
      %v11254 = vmul.f32 %v11120, %v11120
      %v11255 = vmul.f32 %v11121, %v11121
      %v11256 = vmul.f32 %v11122, %v11122
      %v11257 = vmul.f32 %v11123, %v11123
      %v11258 = vmul.f32 %v11124, %v11124
      %v11259 = vmul.f32 %v11125, %v11125
      %v11260 = vmul.f32 %v11126, %v11126
      %v11261 = vmul.f32 %v11127, %v11127
      %v11262 = vmul.f32 %v11128, %v11128
      %v11263 = vmul.f32 %v11129, %v11129
      %v11264 = vmul.f32 %v11130, %v11130
      %v11265 = vmul.f32 %v11131, %v11131
      %v11266 = vmul.f32 %v11132, %v11132
      %v11267 = vmul.f32 %v11133, %v11133
      %v11268 = vmul.f32 %v11134, %v11134
      %v11269 = vmul.f32 %v11135, %v11135
      %v11270 = vmul.f32 %v11136, %v11136
      %v11271 = vmul.f32 %v11137, %v11137
      %v11272 = vmul.f32 %v11138, %v11138
      %v11273 = vmul.f32 %v11139, %v11139
      %v11274 = vsel %vm1444, %v11242, 0.0
      %v11275 = vsel %vm1444, %v11243, 0.0
      %v11276 = vadd.f32 %v11274, %v11275
      %v11277 = vsel %vm1444, %v11244, 0.0
      %v11278 = vadd.f32 %v11276, %v11277
      %v11279 = vsel %vm1444, %v11245, 0.0
      %v11280 = vadd.f32 %v11278, %v11279
      %v11281 = vsel %vm1444, %v11246, 0.0
      %v11282 = vadd.f32 %v11280, %v11281
      %v11283 = vsel %vm1444, %v11247, 0.0
      %v11284 = vadd.f32 %v11282, %v11283
      %v11285 = vsel %vm1444, %v11248, 0.0
      %v11286 = vadd.f32 %v11284, %v11285
      %v11287 = vsel %vm1444, %v11249, 0.0
      %v11288 = vadd.f32 %v11286, %v11287
      %v11289 = vsel %vm1444, %v11250, 0.0
      %v11290 = vadd.f32 %v11288, %v11289
      %v11291 = vsel %vm1444, %v11251, 0.0
      %v11292 = vadd.f32 %v11290, %v11291
      %v11293 = vsel %vm1444, %v11252, 0.0
      %v11294 = vadd.f32 %v11292, %v11293
      %v11295 = vsel %vm1444, %v11253, 0.0
      %v11296 = vadd.f32 %v11294, %v11295
      %v11297 = vsel %vm1444, %v11254, 0.0
      %v11298 = vadd.f32 %v11296, %v11297
      %v11299 = vsel %vm1444, %v11255, 0.0
      %v11300 = vadd.f32 %v11298, %v11299
      %v11301 = vsel %vm1444, %v11256, 0.0
      %v11302 = vadd.f32 %v11300, %v11301
      %v11303 = vsel %vm1444, %v11257, 0.0
      %v11304 = vadd.f32 %v11302, %v11303
      %v11305 = vsel %vm1444, %v11258, 0.0
      %v11306 = vadd.f32 %v11304, %v11305
      %v11307 = vsel %vm1444, %v11259, 0.0
      %v11308 = vadd.f32 %v11306, %v11307
      %v11309 = vsel %vm1444, %v11260, 0.0
      %v11310 = vadd.f32 %v11308, %v11309
      %v11311 = vsel %vm1444, %v11261, 0.0
      %v11312 = vadd.f32 %v11310, %v11311
      %v11313 = vsel %vm1444, %v11262, 0.0
      %v11314 = vadd.f32 %v11312, %v11313
      %v11315 = vsel %vm1444, %v11263, 0.0
      %v11316 = vadd.f32 %v11314, %v11315
      %v11317 = vsel %vm1444, %v11264, 0.0
      %v11318 = vadd.f32 %v11316, %v11317
      %v11319 = vsel %vm1444, %v11265, 0.0
      %v11320 = vadd.f32 %v11318, %v11319
      %v11321 = vsel %vm1444, %v11266, 0.0
      %v11322 = vadd.f32 %v11320, %v11321
      %v11323 = vsel %vm1444, %v11267, 0.0
      %v11324 = vadd.f32 %v11322, %v11323
      %v11325 = vsel %vm1444, %v11268, 0.0
      %v11326 = vadd.f32 %v11324, %v11325
      %v11327 = vsel %vm1444, %v11269, 0.0
      %v11328 = vadd.f32 %v11326, %v11327
      %v11329 = vsel %vm1444, %v11270, 0.0
      %v11330 = vadd.f32 %v11328, %v11329
      %v11331 = vsel %vm1444, %v11271, 0.0
      %v11332 = vadd.f32 %v11330, %v11331
      %v11333 = vsel %vm1444, %v11272, 0.0
      %v11334 = vadd.f32 %v11332, %v11333
      %v11335 = vsel %vm1444, %v11273, 0.0
      %v11336 = vadd.f32 %v11334, %v11335
      %v11337 = vrot.slane %v11336, 4
      %v11338 = vadd.f32 %v11336, %v11337
      %v11339 = vrot.slane %v11338, 2
      %v11340 = vadd.f32 %v11338, %v11339
      %v11341 = vrot.slane %v11340, 1
      %v11342 = vadd.f32 %v11340, %v11341
      %v11343 = vadd.f32 %v11342, 0.0
      %v11344 = vmul.f32 %v11241, 0.00390625
      %v11345 = vmul.f32 %v11343, 0.00390625
      %v11346 = vmul.f32 %v11344, %v11344
      %v11347 = vsub.f32 %v11345, %v11346
      %v11348 = vmax.f32 %v11347, 0.0
      %v11349 = vadd.f32 %v11348, 1e-05
      %v11350 = vrsqrt.pop %v11349
      %v11351 = vld [vmem:[%s5519] sm:$0xff]
      %v11352 = vld [vmem:[%s5519 + $0x8] sm:$0xff]
      %v11353 = vld [vmem:[%s5519 + $0x10] sm:$0xff]
      %v11354 = vld [vmem:[%s5519 + $0x18] sm:$0xff]
      %v11355 = vld [vmem:[%s5519 + $0x20] sm:$0xff]
      %v11356 = vld [vmem:[%s5519 + $0x28] sm:$0xff]
      %v11357 = vld [vmem:[%s5519 + $0x30] sm:$0xff]
      %v11358 = vld [vmem:[%s5519 + $0x38] sm:$0xff]
      %v11359 = vld [vmem:[%s5519 + $0x40] sm:$0xff]
      %v11360 = vld [vmem:[%s5519 + $0x48] sm:$0xff]
      %v11361 = vld [vmem:[%s5519 + $0x50] sm:$0xff]
      %v11362 = vld [vmem:[%s5519 + $0x58] sm:$0xff]
      %v11363 = vld [vmem:[%s5519 + $0x60] sm:$0xff]
      %v11364 = vld [vmem:[%s5519 + $0x68] sm:$0xff]
      %v11365 = vld [vmem:[%s5519 + $0x70] sm:$0xff]
      %v11366 = vld [vmem:[%s5519 + $0x78] sm:$0xff]
      %v11367 = vld [vmem:[%s5519 + $0x80] sm:$0xff]
      %v11368 = vld [vmem:[%s5519 + $0x88] sm:$0xff]
      %v11369 = vld [vmem:[%s5519 + $0x90] sm:$0xff]
      %v11370 = vld [vmem:[%s5519 + $0x98] sm:$0xff]
      %v11371 = vld [vmem:[%s5519 + $0xa0] sm:$0xff]
      %v11372 = vld [vmem:[%s5519 + $0xa8] sm:$0xff]
      %v11373 = vld [vmem:[%s5519 + $0xb0] sm:$0xff]
      %v11374 = vld [vmem:[%s5519 + $0xb8] sm:$0xff]
      %v11375 = vld [vmem:[%s5519 + $0xc0] sm:$0xff]
      %v11376 = vld [vmem:[%s5519 + $0xc8] sm:$0xff]
      %v11377 = vld [vmem:[%s5519 + $0xd0] sm:$0xff]
      %v11378 = vld [vmem:[%s5519 + $0xd8] sm:$0xff]
      %v11379 = vld [vmem:[%s5519 + $0xe0] sm:$0xff]
      %v11380 = vld [vmem:[%s5519 + $0xe8] sm:$0xff]
      %v11381 = vld [vmem:[%s5519 + $0xf0] sm:$0xff]
      %v11382 = vld [vmem:[%s5519 + $0xf8] sm:$0xff]
      %v11383 = vld [vmem:[%s173] sm:$0xff]
      %v11384 = vld [vmem:[%s173 + $0x8] sm:$0xff]
      %v11385 = vld [vmem:[%s173 + $0x10] sm:$0xff]
      %v11386 = vld [vmem:[%s173 + $0x18] sm:$0xff]
      %v11387 = vld [vmem:[%s173 + $0x20] sm:$0xff]
      %v11388 = vld [vmem:[%s173 + $0x28] sm:$0xff]
      %v11389 = vld [vmem:[%s173 + $0x30] sm:$0xff]
      %v11390 = vld [vmem:[%s173 + $0x38] sm:$0xff]
      %v11391 = vld [vmem:[%s173 + $0x40] sm:$0xff]
      %v11392 = vld [vmem:[%s173 + $0x48] sm:$0xff]
      %v11393 = vld [vmem:[%s173 + $0x50] sm:$0xff]
      %v11394 = vld [vmem:[%s173 + $0x58] sm:$0xff]
      %v11395 = vld [vmem:[%s173 + $0x60] sm:$0xff]
      %v11396 = vld [vmem:[%s173 + $0x68] sm:$0xff]
      %v11397 = vld [vmem:[%s173 + $0x70] sm:$0xff]
      %v11398 = vld [vmem:[%s173 + $0x78] sm:$0xff]
      %v11399 = vld [vmem:[%s173 + $0x80] sm:$0xff]
      %v11400 = vld [vmem:[%s173 + $0x88] sm:$0xff]
      %v11401 = vld [vmem:[%s173 + $0x90] sm:$0xff]
      %v11402 = vld [vmem:[%s173 + $0x98] sm:$0xff]
      %v11403 = vld [vmem:[%s173 + $0xa0] sm:$0xff]
      %v11404 = vld [vmem:[%s173 + $0xa8] sm:$0xff]
      %v11405 = vld [vmem:[%s173 + $0xb0] sm:$0xff]
      %v11406 = vld [vmem:[%s173 + $0xb8] sm:$0xff]
      %v11407 = vld [vmem:[%s173 + $0xc0] sm:$0xff]
      %v11408 = vld [vmem:[%s173 + $0xc8] sm:$0xff]
      %v11409 = vld [vmem:[%s173 + $0xd0] sm:$0xff]
      %v11410 = vld [vmem:[%s173 + $0xd8] sm:$0xff]
      %v11411 = vld [vmem:[%s173 + $0xe0] sm:$0xff]
      %v11412 = vld [vmem:[%s173 + $0xe8] sm:$0xff]
      %v11413 = vld [vmem:[%s173 + $0xf0] sm:$0xff]
      %v11414 = vld [vmem:[%s173 + $0xf8] sm:$0xff]
      %v11415 = vsub.f32 %v11351, %v11344
      %v11416 = vsub.f32 %v11352, %v11344
      %v11417 = vsub.f32 %v11353, %v11344
      %v11418 = vsub.f32 %v11354, %v11344
      %v11419 = vsub.f32 %v11355, %v11344
      %v11420 = vsub.f32 %v11356, %v11344
      %v11421 = vsub.f32 %v11357, %v11344
      %v11422 = vsub.f32 %v11358, %v11344
      %v11423 = vsub.f32 %v11359, %v11344
      %v11424 = vsub.f32 %v11360, %v11344
      %v11425 = vsub.f32 %v11361, %v11344
      %v11426 = vsub.f32 %v11362, %v11344
      %v11427 = vsub.f32 %v11363, %v11344
      %v11428 = vsub.f32 %v11364, %v11344
      %v11429 = vsub.f32 %v11365, %v11344
      %v11430 = vsub.f32 %v11366, %v11344
      %v11431 = vsub.f32 %v11367, %v11344
      %v11432 = vsub.f32 %v11368, %v11344
      %v11433 = vsub.f32 %v11369, %v11344
      %v11434 = vsub.f32 %v11370, %v11344
      %v11435 = vsub.f32 %v11371, %v11344
      %v11436 = vsub.f32 %v11372, %v11344
      %v11437 = vsub.f32 %v11373, %v11344
      %v11438 = vsub.f32 %v11374, %v11344
      %v11439 = vsub.f32 %v11375, %v11344
      %v11440 = vsub.f32 %v11376, %v11344
      %v11441 = vsub.f32 %v11377, %v11344
      %v11442 = vsub.f32 %v11378, %v11344
      %v11443 = vsub.f32 %v11379, %v11344
      %v11444 = vsub.f32 %v11380, %v11344
      %v11445 = vsub.f32 %v11381, %v11344
      %v11446 = vsub.f32 %v11382, %v11344
      %v11447 = vmul.f32 %v11415, %v11350
      %v11448 = vmul.f32 %v11416, %v11350
      %v11449 = vmul.f32 %v11417, %v11350
      %v11450 = vmul.f32 %v11418, %v11350
      %v11451 = vmul.f32 %v11419, %v11350
      %v11452 = vmul.f32 %v11420, %v11350
      %v11453 = vmul.f32 %v11421, %v11350
      %v11454 = vmul.f32 %v11422, %v11350
      %v11455 = vmul.f32 %v11423, %v11350
      %v11456 = vmul.f32 %v11424, %v11350
      %v11457 = vmul.f32 %v11425, %v11350
      %v11458 = vmul.f32 %v11426, %v11350
      %v11459 = vmul.f32 %v11427, %v11350
      %v11460 = vmul.f32 %v11428, %v11350
      %v11461 = vmul.f32 %v11429, %v11350
      %v11462 = vmul.f32 %v11430, %v11350
      %v11463 = vmul.f32 %v11431, %v11350
      %v11464 = vmul.f32 %v11432, %v11350
      %v11465 = vmul.f32 %v11433, %v11350
      %v11466 = vmul.f32 %v11434, %v11350
      %v11467 = vmul.f32 %v11435, %v11350
      %v11468 = vmul.f32 %v11436, %v11350
      %v11469 = vmul.f32 %v11437, %v11350
      %v11470 = vmul.f32 %v11438, %v11350
      %v11471 = vmul.f32 %v11439, %v11350
      %v11472 = vmul.f32 %v11440, %v11350
      %v11473 = vmul.f32 %v11441, %v11350
      %v11474 = vmul.f32 %v11442, %v11350
      %v11475 = vmul.f32 %v11443, %v11350
      %v11476 = vmul.f32 %v11444, %v11350
      %v11477 = vmul.f32 %v11445, %v11350
      %v11478 = vmul.f32 %v11446, %v11350
      %v11479 = vadd.f32 %v11383, %v11447
      %v11480 = vadd.f32 %v11384, %v11448
      %v11481 = vadd.f32 %v11385, %v11449
      %v11482 = vadd.f32 %v11386, %v11450
      %v11483 = vadd.f32 %v11387, %v11451
      %v11484 = vadd.f32 %v11388, %v11452
      %v11485 = vadd.f32 %v11389, %v11453
      %v11486 = vadd.f32 %v11390, %v11454
      %v11487 = vadd.f32 %v11391, %v11455
      %v11488 = vadd.f32 %v11392, %v11456
      %v11489 = vadd.f32 %v11393, %v11457
      %v11490 = vadd.f32 %v11394, %v11458
      %v11491 = vadd.f32 %v11395, %v11459
      %v11492 = vadd.f32 %v11396, %v11460
      %v11493 = vadd.f32 %v11397, %v11461
      %v11494 = vadd.f32 %v11398, %v11462
      %v11495 = vadd.f32 %v11399, %v11463
      %v11496 = vadd.f32 %v11400, %v11464
      %v11497 = vadd.f32 %v11401, %v11465
      %v11498 = vadd.f32 %v11402, %v11466
      %v11499 = vadd.f32 %v11403, %v11467
      %v11500 = vadd.f32 %v11404, %v11468
      %v11501 = vadd.f32 %v11405, %v11469
      %v11502 = vadd.f32 %v11406, %v11470
      %v11503 = vadd.f32 %v11407, %v11471
      %v11504 = vadd.f32 %v11408, %v11472
      %v11505 = vadd.f32 %v11409, %v11473
      %v11506 = vadd.f32 %v11410, %v11474
      %v11507 = vadd.f32 %v11411, %v11475
      %v11508 = vadd.f32 %v11412, %v11476
      %v11509 = vadd.f32 %v11413, %v11477
      %v11510 = vadd.f32 %v11414, %v11478
      %s11511 = scalar_lea.vmem %s170, %s172
      %11512 = vst.msk [vmem:[%s11511] sm:$0xff] %vm1444, %v11479
      %11513 = vst.msk [vmem:[%s11511 + $0x8] sm:$0xff] %vm1444, %v11480
      %11514 = vst.msk [vmem:[%s11511 + $0x10] sm:$0xff] %vm1444, %v11481
      %11515 = vst.msk [vmem:[%s11511 + $0x18] sm:$0xff] %vm1444, %v11482
      %11516 = vst.msk [vmem:[%s11511 + $0x20] sm:$0xff] %vm1444, %v11483
      %11517 = vst.msk [vmem:[%s11511 + $0x28] sm:$0xff] %vm1444, %v11484
      %11518 = vst.msk [vmem:[%s11511 + $0x30] sm:$0xff] %vm1444, %v11485
      %11519 = vst.msk [vmem:[%s11511 + $0x38] sm:$0xff] %vm1444, %v11486
      %11520 = vst.msk [vmem:[%s11511 + $0x40] sm:$0xff] %vm1444, %v11487
      %11521 = vst.msk [vmem:[%s11511 + $0x48] sm:$0xff] %vm1444, %v11488
      %11522 = vst.msk [vmem:[%s11511 + $0x50] sm:$0xff] %vm1444, %v11489
      %11523 = vst.msk [vmem:[%s11511 + $0x58] sm:$0xff] %vm1444, %v11490
      %11524 = vst.msk [vmem:[%s11511 + $0x60] sm:$0xff] %vm1444, %v11491
      %11525 = vst.msk [vmem:[%s11511 + $0x68] sm:$0xff] %vm1444, %v11492
      %11526 = vst.msk [vmem:[%s11511 + $0x70] sm:$0xff] %vm1444, %v11493
      %11527 = vst.msk [vmem:[%s11511 + $0x78] sm:$0xff] %vm1444, %v11494
      %11528 = vst.msk [vmem:[%s11511 + $0x80] sm:$0xff] %vm1444, %v11495
      %11529 = vst.msk [vmem:[%s11511 + $0x88] sm:$0xff] %vm1444, %v11496
      %11530 = vst.msk [vmem:[%s11511 + $0x90] sm:$0xff] %vm1444, %v11497
      %11531 = vst.msk [vmem:[%s11511 + $0x98] sm:$0xff] %vm1444, %v11498
      %11532 = vst.msk [vmem:[%s11511 + $0xa0] sm:$0xff] %vm1444, %v11499
      %11533 = vst.msk [vmem:[%s11511 + $0xa8] sm:$0xff] %vm1444, %v11500
      %11534 = vst.msk [vmem:[%s11511 + $0xb0] sm:$0xff] %vm1444, %v11501
      %11535 = vst.msk [vmem:[%s11511 + $0xb8] sm:$0xff] %vm1444, %v11502
      %11536 = vst.msk [vmem:[%s11511 + $0xc0] sm:$0xff] %vm1444, %v11503
      %11537 = vst.msk [vmem:[%s11511 + $0xc8] sm:$0xff] %vm1444, %v11504
      %11538 = vst.msk [vmem:[%s11511 + $0xd0] sm:$0xff] %vm1444, %v11505
      %11539 = vst.msk [vmem:[%s11511 + $0xd8] sm:$0xff] %vm1444, %v11506
      %11540 = vst.msk [vmem:[%s11511 + $0xe0] sm:$0xff] %vm1444, %v11507
      %11541 = vst.msk [vmem:[%s11511 + $0xe8] sm:$0xff] %vm1444, %v11508
      %11542 = vst.msk [vmem:[%s11511 + $0xf0] sm:$0xff] %vm1444, %v11509
      %11543 = vst.msk [vmem:[%s11511 + $0xf8] sm:$0xff] %vm1444, %v11510
      %p11544 = scmp.lt.s32.totalorder %s14, 1
      %s11545 = scalar_select %p11544, %s14, 1
      %s11546 = smul.addr %s11545, 32
      %s11547 = smul.addr %s11546, 8
      %s11548 = scalar_lea.vmem %s3, %s11547
      // Predicated region
      $region33: #{tpu_custom_call.1} parent=31 // pred_check
        %p11549 = pneg %p100
      $region34: #{tpu_custom_call.1} parent=31 // pred_check_branch
        %11551 = sbr.rel (%p11549) target = $region36
      $region35: #{tpu_custom_call.1} parent=31 // pred_region
        _
      $region36: #{tpu_custom_call.1} parent=31 // pred_fallthru
        _
    $region32: #{tpu_custom_call.1} parent=5 // pred_fallthru
      _
    %p11552 = scmp.le.s32.totalorder 2, %s9
    // Predicated region
    $region37: #{tpu_custom_call.1} parent=5 // pred_check
      %p11553 = pneg %p11552
    $region38: #{tpu_custom_call.1} parent=5 // pred_check_branch
      %11555 = sbr.rel (%p11553) target = $region40
    $region39: #{tpu_custom_call.1} parent=5 // pred_region
      %s11556 = ssub.s32 %s9, 2
      // Predicated region
      $region41: #{tpu_custom_call.1} parent=39 // pred_check
        %p11557 = pneg %p106
      $region42: #{tpu_custom_call.1} parent=39 // pred_check_branch
        %11559 = sbr.rel (%p11557) target = $region44
      $region43: #{tpu_custom_call.1} parent=39 // pred_region
        %p11560 = scmp.lt.s32.totalorder %s15, 1
        %s11561 = scalar_select %p11560, %s15, 1
        %s11562 = smul.addr %s11561, 32
        %s11563 = smul.addr %s11562, 8
        %s11564 = scalar_lea.vmem %s3, %s11563
      $region44: #{tpu_custom_call.1} parent=39 // pred_fallthru
        _
    $region40: #{tpu_custom_call.1} parent=5 // pred_fallthru
      _
  $region6: #{tpu_custom_call.1} parent=0 // loop_footer
    %s13 = sadd.s32 1, %s9
  $region7: #{tpu_custom_call.1} parent=0 // loop_footer_branch
    %8 = sbr.rel target = $region3
  $region8: #{tpu_custom_call.1} parent=0 // loop_exit
    _

</llo_original>
